<compile_context>
chip_gen: v7x
topology: tpu7x:2x2x1
jax: 0.10.0
libtpu: 0.0.40
codegen_flags: <defaults>
</compile_context>

<pallas_src>
import functools

import jax
import jax.numpy as jnp
from jax import lax
from jax.experimental import pallas as pl
from jax.experimental.pallas import tpu as pltpu

_LANE = 128
_BF16_SUBLANE = 16  # bf16 native sublane tile height


def _round_up(x, m):
    return ((x + m - 1) // m) * m


def _pick_row_tile(h, w_in, target_m=4096):
    """Largest divisor th of h with th*w_in <= target_m (matmul rows per tile)."""
    best = 1
    for th in range(1, h + 1):
        if h % th == 0 and th * w_in <= target_m:
            best = th
    return best


# ----------------------------- Pallas kernels ------------------------------ #
def _conv_stats_kernel(xp_ref, w_ref, b_ref, y_ref, s1_ref, s2_ref, acc_ref,
                       *, th, w_in, w_real, w_store):
    """Phase 1: 3x3 conv on one row tile + bias, plus BN partial sums.

    xp_ref : (H+2, Wi, Cin_p) bf16   zero-padded full image (resident per batch)
    w_ref  : (3, 3, Cin_p, Cout_p) bf16
    b_ref  : (1, Cout_p) f32
    y_ref  : (th, Wo, Cout_p) bf16   pre-BN conv output tile
    s1_ref : (1, Cout_p) f32         per-tile sum(y)      (from f32, pre-cast)
    s2_ref : (1, Cout_p) f32         per-tile sum(y*y)
    acc_ref: (th*Wi, Cout_p) f32     VMEM accumulator for the 9-tap sum
    """
    t = pl.program_id(1)
    row0 = t * th
    m = th * w_in
    c_out_p = acc_ref.shape[-1]

    # 9-tap conv = 3 aligned full-width matmuls per kh; the kw shift is folded
    # into the flattened M dimension with an XLU sublane rotate of the f32
    # result:  out_flat[i] += z[i + kw]  <=>  roll(z, -kw) == roll(z, m - kw).
    # Wrap-around rows only land in discarded columns (Wi >= Wo + 8).
    for kh in range(3):
        rows = xp_ref[pl.ds(row0 + kh, th), :, :]           # (th, Wi, Cin_p) bf16
        lhs = rows.reshape(m, rows.shape[-1])                # layout-preserving view
        part = jnp.dot(lhs, w_ref[kh, 0], preferred_element_type=jnp.float32)
        for kw in (1, 2):
            z = jnp.dot(lhs, w_ref[kh, kw], preferred_element_type=jnp.float32)
            part = part + pltpu.roll(z, m - kw, 0)           # == jnp.roll(z, -kw, 0)
        if kh == 0:
            acc_ref[...] = part
        else:
            acc_ref[...] += part

    acc = acc_ref[...].reshape(th, w_in, c_out_p)
    y = acc[:, :w_store, :] + b_ref[...]                     # (th, Wo, Cout_p) f32

    # BN partial statistics from the f32 accumulator (before the bf16 cast),
    # excluding any junk columns beyond the real output width.
    if w_store != w_real:
        col = lax.broadcasted_iota(jnp.int32, (th, w_store, c_out_p), 1)
        y_stat = jnp.where(col < w_real, y, 0.0)
    else:
        y_stat = y
    yf = y_stat.reshape(th * w_store, c_out_p)
    s1_ref[...] = jnp.sum(yf, axis=0, keepdims=True)
    s2_ref[...] = jnp.sum(yf * yf, axis=0, keepdims=True)

    y_ref[...] = y.astype(y_ref.dtype)


def _bn_relu_kernel(y_ref, sc_ref, sh_ref, o_ref):
    """Phase 2: y * scale + shift (precomputed global-BN affine) then ReLU."""
    y = y_ref[...].astype(jnp.float32)
    o_ref[...] = jnp.maximum(y * sc_ref[...] + sh_ref[...], 0.0).astype(o_ref.dtype)


# --------------------------- fused layer wrapper ---------------------------- #
def _conv_bn_relu_layer(x, w, b, gamma, beta, *, eps=1e-5, out_dtype=jnp.float32):
    """One Conv(3x3, pad=1) + BatchNorm2d(batch stats) + ReLU layer.

    x : (N, H, W, C_stored) NHWC; channels beyond the true C_in are zero.
    w : (C_out, C_in_true, 3, 3) f32;  b/gamma/beta : (C_out,) f32.
    Returns (N, H, W, C_out_p) out_dtype; channels >= C_out are exactly zero.
    """
    n, h, wdim, c_stored = x.shape
    c_out = w.shape[0]
    c_in_p = _round_up(c_stored, _LANE)
    c_out_p = _round_up(c_out, _LANE)

    # Width geometry: Wi = padded-input width (multiple of the bf16 sublane tile
    # so the in-kernel flatten is a pure view and rolls never corrupt real
    # columns), Wo = stored conv-output width (multiple of 8 for dense stores).
    w_in = _round_up(wdim + 2, _BF16_SUBLANE)
    w_store = _round_up(wdim, 8)

    # bf16 activation in HBM (halves DMA bytes; matches the reference's bf16
    # conv operands); channel + spatial zero padding (pads are exact zeros).
    xb = x.astype(jnp.bfloat16)
    xp = jnp.pad(xb, ((0, 0), (1, 1), (1, w_in - wdim - 1),
                      (0, c_in_p - c_stored)))

    wk = jnp.transpose(w, (2, 3, 1, 0))                      # (3,3,Cin_true,Cout)
    wk = jnp.pad(wk, ((0, 0), (0, 0),
                      (0, c_in_p - wk.shape[2]), (0, c_out_p - c_out)))
    wk = wk.astype(jnp.bfloat16)
    b2 = jnp.pad(b, (0, c_out_p - c_out)).reshape(1, c_out_p)
    g2 = jnp.pad(gamma, (0, c_out_p - c_out)).reshape(1, c_out_p)   # pad gamma = 0
    bt2 = jnp.pad(beta, (0, c_out_p - c_out)).reshape(1, c_out_p)   # pad beta  = 0

    th = _pick_row_tile(h, w_in)
    n_t = h // th
    m_tile = th * w_in
    m_total = n * h * wdim
    grid = (n, n_t)

    # Working set here is a few MiB; 40 MiB cap leaves headroom on v7x (64 MiB).
    vmem_cap = 40 * 1024 * 1024
    cparams1 = pltpu.CompilerParams(
        dimension_semantics=("parallel", "arbitrary"), vmem_limit_bytes=vmem_cap)
    cparams2 = pltpu.CompilerParams(
        dimension_semantics=("parallel", "parallel"), vmem_limit_bytes=vmem_cap)

    # ---- phase 1: conv + bias + per-tile BN partial statistics --------------
    cost1 = pl.CostEstimate(
        flops=int(2 * 9 * n * n_t * m_tile * c_in_p * c_out_p),
        transcendentals=0,
        bytes_accessed=int(xp.size * 2 + wk.size * 2 + b2.size * 4
                           + n * h * w_store * c_out_p * 2
                           + 2 * n * n_t * c_out_p * 4),
    )
    y, s1, s2 = pl.pallas_call(
        functools.partial(_conv_stats_kernel, th=th, w_in=w_in,
                          w_real=wdim, w_store=w_store),
        out_shape=(
            jax.ShapeDtypeStruct((n, h, w_store, c_out_p), jnp.bfloat16),
            jax.ShapeDtypeStruct((n * n_t, 1, c_out_p), jnp.float32),
            jax.ShapeDtypeStruct((n * n_t, 1, c_out_p), jnp.float32),
        ),
        grid=grid,
        in_specs=[
            # full padded image per batch element; block index ignores the tile
            # axis so it stays resident in VMEM across the inner grid loop.
            pl.BlockSpec((None, h + 2, w_in, c_in_p), lambda bi, ti: (bi, 0, 0, 0)),
            pl.BlockSpec((3, 3, c_in_p, c_out_p), lambda bi, ti: (0, 0, 0, 0)),
            pl.BlockSpec((1, c_out_p), lambda bi, ti: (0, 0)),
        ],
        out_specs=(
            pl.BlockSpec((None, th, w_store, c_out_p),
                         lambda bi, ti: (bi, ti, 0, 0)),
            pl.BlockSpec((None, 1, c_out_p), lambda bi, ti: (bi * n_t + ti, 0, 0)),
            pl.BlockSpec((None, 1, c_out_p), lambda bi, ti: (bi * n_t + ti, 0, 0)),
        ),
        scratch_shapes=[pltpu.VMEM((m_tile, c_out_p), jnp.float32)],
        compiler_params=cparams1,
        cost_estimate=cost1,
    )(xp, wk, b2)

    # ---- tiny cross-tile reduction + BN affine precompute (XLA) -------------
    inv_m = 1.0 / float(m_total)
    mean = jnp.sum(s1, axis=0) * inv_m                        # (1, Cout_p)
    var = jnp.maximum(jnp.sum(s2, axis=0) * inv_m - mean * mean, 0.0)
    scale = g2 * lax.rsqrt(var + eps)                         # pad channels -> 0
    shift = bt2 - mean * scale

    # ---- phase 2: y * scale + shift, ReLU (bandwidth-bound) -----------------
    cost2 = pl.CostEstimate(
        flops=int(3 * n * h * w_store * c_out_p),
        transcendentals=0,
        bytes_accessed=int(n * h * w_store * c_out_p
                           * (2 + jnp.dtype(out_dtype).itemsize)
                           + 2 * c_out_p * 4),
    )
    out = pl.pallas_call(
        _bn_relu_kernel,
        out_shape=jax.ShapeDtypeStruct((n, h, w_store, c_out_p), out_dtype),
        grid=grid,
        in_specs=[
            pl.BlockSpec((None, th, w_store, c_out_p),
                         lambda bi, ti: (bi, ti, 0, 0)),
            pl.BlockSpec((1, c_out_p), lambda bi, ti: (0, 0)),
            pl.BlockSpec((1, c_out_p), lambda bi, ti: (0, 0)),
        ],
        out_specs=pl.BlockSpec((None, th, w_store, c_out_p),
                               lambda bi, ti: (bi, ti, 0, 0)),
        compiler_params=cparams2,
        cost_estimate=cost2,
    )(y, scale, shift)

    return out[:, :, :wdim, :]            # drop stored-width padding (keep Cout_p)


def conv_block_forward(x_nchw, params):
    """ConvBlock forward. x_nchw: (N, Cin, H, W) f32 -> (N, Cout, H, W) f32."""
    x = jnp.transpose(x_nchw, (0, 2, 3, 1))           # NHWC end-to-end
    c_out = params[-1][0].shape[0]
    for li, (w, b, g, beta) in enumerate(params):
        last = li == len(params) - 1
        # Inter-layer activation stays bf16 (what the next conv consumes);
        # the final layer emits f32.
        x = _conv_bn_relu_layer(x, w, b, g, beta,
                                out_dtype=jnp.float32 if last else jnp.bfloat16)
    x = x[..., :c_out]                                # drop lane padding
    return jnp.transpose(x, (0, 3, 1, 2))             # -> NCHW


# --------------------------- pure-JAX reference ----------------------------- #
def _ref_forward(x_nchw, params, eps=1e-5):
    """Reference with the same mixed precision as the kernels: conv operands in
    bf16 (f32 accumulation), the pre-BN conv output stored as bf16 (stats from
    f32), BatchNorm in training mode (biased variance) + affine + ReLU in f32."""
    x = x_nchw
    for (w, b, g, beta) in params:
        y = lax.conv_general_dilated(
            x.astype(jnp.bfloat16), w.astype(jnp.bfloat16),
            window_strides=(1, 1), padding=((1, 1), (1, 1)),
            dimension_numbers=("NCHW", "OIHW", "NCHW"),
            preferred_element_type=jnp.float32,
        ) + b[None, :, None, None]
        mean = y.mean(axis=(0, 2, 3), keepdims=True)
        var = y.var(axis=(0, 2, 3), keepdims=True)            # biased (training BN)
        yq = y.astype(jnp.bfloat16).astype(jnp.float32)       # kernel stores y bf16
        y2 = ((yq - mean) * lax.rsqrt(var + eps) * g[None, :, None, None]
              + beta[None, :, None, None])
        x = jnp.maximum(y2, 0.0)
    return x


# --------------------------- deterministic init ------------------------------ #
def _init_conv(key, cin, cout):
    k1, k2 = jax.random.split(key)
    bound = 1.0 / (cin * 9) ** 0.5                            # PyTorch-style bound
    w = jax.random.uniform(k1, (cout, cin, 3, 3), jnp.float32, -bound, bound)
    b = jax.random.uniform(k2, (cout,), jnp.float32, -bound, bound)
    return w, b


def make_conv_block_params(key, in_filters, out_filters):
    k1, k2 = jax.random.split(key)
    w1, b1 = _init_conv(k1, in_filters, out_filters)
    w2, b2 = _init_conv(k2, out_filters, out_filters)
    g1 = jnp.ones((out_filters,), jnp.float32)                # BN gamma init = 1
    bt1 = jnp.zeros((out_filters,), jnp.float32)              # BN beta  init = 0
    g2 = jnp.ones((out_filters,), jnp.float32)
    bt2 = jnp.zeros((out_filters,), jnp.float32)
    return [(w1, b1, g1, bt1), (w2, b2, g2, bt2)]


if __name__ == "__main__":
    key = jax.random.PRNGKey(0)
    k_x, k_p = jax.random.split(key)

    N, Cin, Cout, HW = 2, 4, 8, 16
    x = jax.random.normal(k_x, (N, Cin, HW, HW), jnp.float32)
    params = make_conv_block_params(k_p, Cin, Cout)

    fwd = jax.jit(conv_block_forward)
    out = jax.block_until_ready(fwd(x, params))

    ref = _ref_forward(x, params)
    assert out.shape == (N, Cout, HW, HW), out.shape
    # bf16 storage of the pre-BN intermediate => up to ~1 bf16 ulp of divergence
    # where the (different) f32 reduction orders interact with rounding, hence
    # a bf16-scale tolerance (BN statistics themselves are accumulated in f32).
    assert jnp.allclose(out, ref, atol=2e-2, rtol=2e-2), (
        float(jnp.max(jnp.abs(out - ref)))
    )

    print("KERNEL_OK")
</pallas_src>

<mosaic_0001>
module attributes {stable_mosaic.version = 11 : i64} {
  func.func @_conv_stats_kernel(%arg0: i32, %arg1: i32, %arg2: memref<1x18x32x128xbf16, #tpu.memory_space<vmem>>, %arg3: memref<3x3x128x128xbf16, #tpu.memory_space<vmem>>, %arg4: memref<1x128xf32, #tpu.memory_space<vmem>>, %arg5: memref<1x16x16x128xbf16, #tpu.memory_space<vmem>>, %arg6: memref<1x1x128xf32, #tpu.memory_space<vmem>>, %arg7: memref<1x1x128xf32, #tpu.memory_space<vmem>>, %arg8: memref<512x128xf32, #tpu.memory_space<vmem>>) attributes {dimension_semantics = [#tpu.dimension_semantics<parallel>, #tpu.dimension_semantics<arbitrary>], iteration_bounds = array<i64: 2, 1>, scalar_prefetch = 0 : i64, scratch_operands = 1 : i64, tpu.core_type = #tpu.core_type<tc>, window_params = [{transform_indices = @transform_0, window_bounds = array<i64: 1, 18, 32, 128>}, {pipeline_mode = #tpu.pipeline_mode<synchronous>, transform_indices = @transform_1, window_bounds = array<i64: 3, 3, 128, 128>}, {pipeline_mode = #tpu.pipeline_mode<synchronous>, transform_indices = @transform_2, window_bounds = array<i64: 1, 128>}, {transform_indices = @transform_3, window_bounds = array<i64: 1, 16, 16, 128>}, {transform_indices = @transform_4, window_bounds = array<i64: 1, 1, 128>}, {transform_indices = @transform_5, window_bounds = array<i64: 1, 1, 128>}]} {
    %c16_i32 = arith.constant 16 : i32
    %0 = arith.muli %arg1, %c16_i32 : i32
    %c0_i32 = arith.constant 0 : i32
    %1 = arith.addi %0, %c0_i32 : i32
    %c0 = arith.constant 0 : index
    %2 = arith.index_cast %1 : i32 to index
    %c0_0 = arith.constant 0 : index
    %c0_1 = arith.constant 0 : index
    %3 = vector.load %arg2[%c0, %2, %c0_0, %c0_1] : memref<1x18x32x128xbf16, #tpu.memory_space<vmem>>, vector<1x16x32x128xbf16>
    %4 = vector.shape_cast %3 : vector<1x16x32x128xbf16> to vector<16x32x128xbf16>
    %5 = vector.shape_cast %4 : vector<16x32x128xbf16> to vector<512x128xbf16>
    %c0_2 = arith.constant 0 : index
    %c0_3 = arith.constant 0 : index
    %c0_4 = arith.constant 0 : index
    %c0_5 = arith.constant 0 : index
    %6 = vector.load %arg3[%c0_2, %c0_3, %c0_4, %c0_5] : memref<3x3x128x128xbf16, #tpu.memory_space<vmem>>, vector<1x1x128x128xbf16>
    %7 = vector.shape_cast %6 : vector<1x1x128x128xbf16> to vector<128x128xbf16>
    %cst = arith.constant dense<0.000000e+00> : vector<512x128xf32>
    %8 = tpu.matmul %5, %7, %cst {dimension_numbers = #tpu.dot_dimension_numbers<[1], [0], [0], [1], [0, 0, 1, 1], [], []>} : vector<512x128xbf16>, vector<128x128xbf16>, vector<512x128xf32> -> vector<512x128xf32>
    %c0_6 = arith.constant 0 : index
    %c1 = arith.constant 1 : index
    %c0_7 = arith.constant 0 : index
    %c0_8 = arith.constant 0 : index
    %9 = vector.load %arg3[%c0_6, %c1, %c0_7, %c0_8] : memref<3x3x128x128xbf16, #tpu.memory_space<vmem>>, vector<1x1x128x128xbf16>
    %10 = vector.shape_cast %9 : vector<1x1x128x128xbf16> to vector<128x128xbf16>
    %cst_9 = arith.constant dense<0.000000e+00> : vector<512x128xf32>
    %11 = tpu.matmul %5, %10, %cst_9 {dimension_numbers = #tpu.dot_dimension_numbers<[1], [0], [0], [1], [0, 0, 1, 1], [], []>} : vector<512x128xbf16>, vector<128x128xbf16>, vector<512x128xf32> -> vector<512x128xf32>
    %c511_i32 = arith.constant 511 : i32
    %12 = tpu.dynamic_rotate %11 by %c511_i32 dim 0 : vector<512x128xf32>, i32 -> vector<512x128xf32>
    %13 = arith.addf %8, %12 : vector<512x128xf32>
    %c0_10 = arith.constant 0 : index
    %c2 = arith.constant 2 : index
    %c0_11 = arith.constant 0 : index
    %c0_12 = arith.constant 0 : index
    %14 = vector.load %arg3[%c0_10, %c2, %c0_11, %c0_12] : memref<3x3x128x128xbf16, #tpu.memory_space<vmem>>, vector<1x1x128x128xbf16>
    %15 = vector.shape_cast %14 : vector<1x1x128x128xbf16> to vector<128x128xbf16>
    %cst_13 = arith.constant dense<0.000000e+00> : vector<512x128xf32>
    %16 = tpu.matmul %5, %15, %cst_13 {dimension_numbers = #tpu.dot_dimension_numbers<[1], [0], [0], [1], [0, 0, 1, 1], [], []>} : vector<512x128xbf16>, vector<128x128xbf16>, vector<512x128xf32> -> vector<512x128xf32>
    %c510_i32 = arith.constant 510 : i32
    %17 = tpu.dynamic_rotate %16 by %c510_i32 dim 0 : vector<512x128xf32>, i32 -> vector<512x128xf32>
    %18 = arith.addf %13, %17 : vector<512x128xf32>
    %c0_14 = arith.constant 0 : index
    %c0_15 = arith.constant 0 : index
    %19 = vector.load %arg8[%c0_14, %c0_15] : memref<512x128xf32, #tpu.memory_space<vmem>>, vector<512x128xf32>
    tpu.vector_store %arg8[%c0_14, %c0_15], %18 {strides = array<i32>} : memref<512x128xf32, #tpu.memory_space<vmem>>, vector<512x128xf32>,
    %c1_i32 = arith.constant 1 : i32
    %20 = arith.addi %0, %c1_i32 : i32
    %c0_16 = arith.constant 0 : index
    %21 = arith.index_cast %20 : i32 to index
    %c0_17 = arith.constant 0 : index
    %c0_18 = arith.constant 0 : index
    %22 = vector.load %arg2[%c0_16, %21, %c0_17, %c0_18] : memref<1x18x32x128xbf16, #tpu.memory_space<vmem>>, vector<1x16x32x128xbf16>
    %23 = vector.shape_cast %22 : vector<1x16x32x128xbf16> to vector<16x32x128xbf16>
    %24 = vector.shape_cast %23 : vector<16x32x128xbf16> to vector<512x128xbf16>
    %c1_19 = arith.constant 1 : index
    %c0_20 = arith.constant 0 : index
    %c0_21 = arith.constant 0 : index
    %c0_22 = arith.constant 0 : index
    %25 = vector.load %arg3[%c1_19, %c0_20, %c0_21, %c0_22] : memref<3x3x128x128xbf16, #tpu.memory_space<vmem>>, vector<1x1x128x128xbf16>
    %26 = vector.shape_cast %25 : vector<1x1x128x128xbf16> to vector<128x128xbf16>
    %cst_23 = arith.constant dense<0.000000e+00> : vector<512x128xf32>
    %27 = tpu.matmul %24, %26, %cst_23 {dimension_numbers = #tpu.dot_dimension_numbers<[1], [0], [0], [1], [0, 0, 1, 1], [], []>} : vector<512x128xbf16>, vector<128x128xbf16>, vector<512x128xf32> -> vector<512x128xf32>
    %c1_24 = arith.constant 1 : index
    %c1_25 = arith.constant 1 : index
    %c0_26 = arith.constant 0 : index
    %c0_27 = arith.constant 0 : index
    %28 = vector.load %arg3[%c1_24, %c1_25, %c0_26, %c0_27] : memref<3x3x128x128xbf16, #tpu.memory_space<vmem>>, vector<1x1x128x128xbf16>
    %29 = vector.shape_cast %28 : vector<1x1x128x128xbf16> to vector<128x128xbf16>
    %cst_28 = arith.constant dense<0.000000e+00> : vector<512x128xf32>
    %30 = tpu.matmul %24, %29, %cst_28 {dimension_numbers = #tpu.dot_dimension_numbers<[1], [0], [0], [1], [0, 0, 1, 1], [], []>} : vector<512x128xbf16>, vector<128x128xbf16>, vector<512x128xf32> -> vector<512x128xf32>
    %c511_i32_29 = arith.constant 511 : i32
    %31 = tpu.dynamic_rotate %30 by %c511_i32_29 dim 0 : vector<512x128xf32>, i32 -> vector<512x128xf32>
    %32 = arith.addf %27, %31 : vector<512x128xf32>
    %c1_30 = arith.constant 1 : index
    %c2_31 = arith.constant 2 : index
    %c0_32 = arith.constant 0 : index
    %c0_33 = arith.constant 0 : index
    %33 = vector.load %arg3[%c1_30, %c2_31, %c0_32, %c0_33] : memref<3x3x128x128xbf16, #tpu.memory_space<vmem>>, vector<1x1x128x128xbf16>
    %34 = vector.shape_cast %33 : vector<1x1x128x128xbf16> to vector<128x128xbf16>
    %cst_34 = arith.constant dense<0.000000e+00> : vector<512x128xf32>
    %35 = tpu.matmul %24, %34, %cst_34 {dimension_numbers = #tpu.dot_dimension_numbers<[1], [0], [0], [1], [0, 0, 1, 1], [], []>} : vector<512x128xbf16>, vector<128x128xbf16>, vector<512x128xf32> -> vector<512x128xf32>
    %c510_i32_35 = arith.constant 510 : i32
    %36 = tpu.dynamic_rotate %35 by %c510_i32_35 dim 0 : vector<512x128xf32>, i32 -> vector<512x128xf32>
    %37 = arith.addf %32, %36 : vector<512x128xf32>
    %c0_36 = arith.constant 0 : index
    %c0_37 = arith.constant 0 : index
    %38 = vector.load %arg8[%c0_36, %c0_37] : memref<512x128xf32, #tpu.memory_space<vmem>>, vector<512x128xf32>
    %39 = arith.addf %38, %37 : vector<512x128xf32>
    %c0_38 = arith.constant 0 : index
    %c0_39 = arith.constant 0 : index
    %40 = vector.load %arg8[%c0_38, %c0_39] : memref<512x128xf32, #tpu.memory_space<vmem>>, vector<512x128xf32>
    tpu.vector_store %arg8[%c0_38, %c0_39], %39 {strides = array<i32>} : memref<512x128xf32, #tpu.memory_space<vmem>>, vector<512x128xf32>,
    %c2_i32 = arith.constant 2 : i32
    %41 = arith.addi %0, %c2_i32 : i32
    %c0_40 = arith.constant 0 : index
    %42 = arith.index_cast %41 : i32 to index
    %c0_41 = arith.constant 0 : index
    %c0_42 = arith.constant 0 : index
    %43 = vector.load %arg2[%c0_40, %42, %c0_41, %c0_42] : memref<1x18x32x128xbf16, #tpu.memory_space<vmem>>, vector<1x16x32x128xbf16>
    %44 = vector.shape_cast %43 : vector<1x16x32x128xbf16> to vector<16x32x128xbf16>
    %45 = vector.shape_cast %44 : vector<16x32x128xbf16> to vector<512x128xbf16>
    %c2_43 = arith.constant 2 : index
    %c0_44 = arith.constant 0 : index
    %c0_45 = arith.constant 0 : index
    %c0_46 = arith.constant 0 : index
    %46 = vector.load %arg3[%c2_43, %c0_44, %c0_45, %c0_46] : memref<3x3x128x128xbf16, #tpu.memory_space<vmem>>, vector<1x1x128x128xbf16>
    %47 = vector.shape_cast %46 : vector<1x1x128x128xbf16> to vector<128x128xbf16>
    %cst_47 = arith.constant dense<0.000000e+00> : vector<512x128xf32>
    %48 = tpu.matmul %45, %47, %cst_47 {dimension_numbers = #tpu.dot_dimension_numbers<[1], [0], [0], [1], [0, 0, 1, 1], [], []>} : vector<512x128xbf16>, vector<128x128xbf16>, vector<512x128xf32> -> vector<512x128xf32>
    %c2_48 = arith.constant 2 : index
    %c1_49 = arith.constant 1 : index
    %c0_50 = arith.constant 0 : index
    %c0_51 = arith.constant 0 : index
    %49 = vector.load %arg3[%c2_48, %c1_49, %c0_50, %c0_51] : memref<3x3x128x128xbf16, #tpu.memory_space<vmem>>, vector<1x1x128x128xbf16>
    %50 = vector.shape_cast %49 : vector<1x1x128x128xbf16> to vector<128x128xbf16>
    %cst_52 = arith.constant dense<0.000000e+00> : vector<512x128xf32>
    %51 = tpu.matmul %45, %50, %cst_52 {dimension_numbers = #tpu.dot_dimension_numbers<[1], [0], [0], [1], [0, 0, 1, 1], [], []>} : vector<512x128xbf16>, vector<128x128xbf16>, vector<512x128xf32> -> vector<512x128xf32>
    %c511_i32_53 = arith.constant 511 : i32
    %52 = tpu.dynamic_rotate %51 by %c511_i32_53 dim 0 : vector<512x128xf32>, i32 -> vector<512x128xf32>
    %53 = arith.addf %48, %52 : vector<512x128xf32>
    %c2_54 = arith.constant 2 : index
    %c2_55 = arith.constant 2 : index
    %c0_56 = arith.constant 0 : index
    %c0_57 = arith.constant 0 : index
    %54 = vector.load %arg3[%c2_54, %c2_55, %c0_56, %c0_57] : memref<3x3x128x128xbf16, #tpu.memory_space<vmem>>, vector<1x1x128x128xbf16>
    %55 = vector.shape_cast %54 : vector<1x1x128x128xbf16> to vector<128x128xbf16>
    %cst_58 = arith.constant dense<0.000000e+00> : vector<512x128xf32>
    %56 = tpu.matmul %45, %55, %cst_58 {dimension_numbers = #tpu.dot_dimension_numbers<[1], [0], [0], [1], [0, 0, 1, 1], [], []>} : vector<512x128xbf16>, vector<128x128xbf16>, vector<512x128xf32> -> vector<512x128xf32>
    %c510_i32_59 = arith.constant 510 : i32
    %57 = tpu.dynamic_rotate %56 by %c510_i32_59 dim 0 : vector<512x128xf32>, i32 -> vector<512x128xf32>
    %58 = arith.addf %53, %57 : vector<512x128xf32>
    %c0_60 = arith.constant 0 : index
    %c0_61 = arith.constant 0 : index
    %59 = vector.load %arg8[%c0_60, %c0_61] : memref<512x128xf32, #tpu.memory_space<vmem>>, vector<512x128xf32>
    %60 = arith.addf %59, %58 : vector<512x128xf32>
    %c0_62 = arith.constant 0 : index
    %c0_63 = arith.constant 0 : index
    %61 = vector.load %arg8[%c0_62, %c0_63] : memref<512x128xf32, #tpu.memory_space<vmem>>, vector<512x128xf32>
    tpu.vector_store %arg8[%c0_62, %c0_63], %60 {strides = array<i32>} : memref<512x128xf32, #tpu.memory_space<vmem>>, vector<512x128xf32>,
    %c0_64 = arith.constant 0 : index
    %c0_65 = arith.constant 0 : index
    %62 = vector.load %arg8[%c0_64, %c0_65] : memref<512x128xf32, #tpu.memory_space<vmem>>, vector<512x128xf32>
    %63 = vector.shape_cast %62 : vector<512x128xf32> to vector<16x32x128xf32>
    %64 = vector.extract_strided_slice %63 {offsets = [0, 0, 0], sizes = [16, 16, 128], strides = [1, 1, 1]} : vector<16x32x128xf32> to vector<16x16x128xf32>
    %c0_66 = arith.constant 0 : index
    %c0_67 = arith.constant 0 : index
    %65 = vector.load %arg4[%c0_66, %c0_67] : memref<1x128xf32, #tpu.memory_space<vmem>>, vector<1x128xf32>
    %66 = vector.shape_cast %65 : vector<1x128xf32> to vector<1x1x128xf32>
    %67 = vector.broadcast %66 : vector<1x1x128xf32> to vector<16x16x128xf32>
    %68 = arith.addf %64, %67 : vector<16x16x128xf32>
    %69 = vector.shape_cast %68 : vector<16x16x128xf32> to vector<256x128xf32>
    %cst_68 = arith.constant dense<0.000000e+00> : vector<128xf32>
    %70 = vector.multi_reduction <add>, %69, %cst_68 [0] : vector<256x128xf32> to vector<128xf32>
    %71 = vector.shape_cast %70 : vector<128xf32> to vector<1x128xf32>
    %c0_69 = arith.constant 0 : index
    %c0_70 = arith.constant 0 : index
    %c0_71 = arith.constant 0 : index
    %72 = vector.load %arg6[%c0_69, %c0_70, %c0_71] : memref<1x1x128xf32, #tpu.memory_space<vmem>>, vector<1x1x128xf32>
    %73 = vector.shape_cast %72 : vector<1x1x128xf32> to vector<1x128xf32>
    %74 = vector.shape_cast %71 : vector<1x128xf32> to vector<1x1x128xf32>
    tpu.vector_store %arg6[%c0_69, %c0_70, %c0_71], %74 {strides = array<i32>} : memref<1x1x128xf32, #tpu.memory_space<vmem>>, vector<1x1x128xf32>,
    %75 = arith.mulf %69, %69 : vector<256x128xf32>
    %cst_72 = arith.constant dense<0.000000e+00> : vector<128xf32>
    %76 = vector.multi_reduction <add>, %75, %cst_72 [0] : vector<256x128xf32> to vector<128xf32>
    %77 = vector.shape_cast %76 : vector<128xf32> to vector<1x128xf32>
    %c0_73 = arith.constant 0 : index
    %c0_74 = arith.constant 0 : index
    %c0_75 = arith.constant 0 : index
    %78 = vector.load %arg7[%c0_73, %c0_74, %c0_75] : memref<1x1x128xf32, #tpu.memory_space<vmem>>, vector<1x1x128xf32>
    %79 = vector.shape_cast %78 : vector<1x1x128xf32> to vector<1x128xf32>
    %80 = vector.shape_cast %77 : vector<1x128xf32> to vector<1x1x128xf32>
    tpu.vector_store %arg7[%c0_73, %c0_74, %c0_75], %80 {strides = array<i32>} : memref<1x1x128xf32, #tpu.memory_space<vmem>>, vector<1x1x128xf32>,
    %81 = arith.truncf %68 : vector<16x16x128xf32> to vector<16x16x128xbf16>
    %c0_76 = arith.constant 0 : index
    %c0_77 = arith.constant 0 : index
    %c0_78 = arith.constant 0 : index
    %c0_79 = arith.constant 0 : index
    %82 = vector.load %arg5[%c0_76, %c0_77, %c0_78, %c0_79] : memref<1x16x16x128xbf16, #tpu.memory_space<vmem>>, vector<1x16x16x128xbf16>
    %83 = vector.shape_cast %82 : vector<1x16x16x128xbf16> to vector<16x16x128xbf16>
    %84 = vector.shape_cast %81 : vector<16x16x128xbf16> to vector<1x16x16x128xbf16>
    tpu.vector_store %arg5[%c0_76, %c0_77, %c0_78, %c0_79], %84 {strides = array<i32>} : memref<1x16x16x128xbf16, #tpu.memory_space<vmem>>, vector<1x16x16x128xbf16>,
    return
  }
  func.func @transform_0(%arg0: i32, %arg1: i32) -> (i32, i32, i32, i32) {
    %c0_i32 = arith.constant 0 : i32
    %c0_i32_0 = arith.constant 0 : i32
    %c0_i32_1 = arith.constant 0 : i32
    %c0_i32_2 = arith.constant 0 : i32
    return %arg0, %c0_i32, %c0_i32_0, %c0_i32_1 : i32, i32, i32, i32
  }
  func.func @transform_1(%arg0: i32, %arg1: i32) -> (i32, i32, i32, i32) {
    %c0_i32 = arith.constant 0 : i32
    %c0_i32_0 = arith.constant 0 : i32
    %c0_i32_1 = arith.constant 0 : i32
    %c0_i32_2 = arith.constant 0 : i32
    %c0_i32_3 = arith.constant 0 : i32
    return %c0_i32, %c0_i32_0, %c0_i32_1, %c0_i32_2 : i32, i32, i32, i32
  }
  func.func @transform_2(%arg0: i32, %arg1: i32) -> (i32, i32) {
    %c0_i32 = arith.constant 0 : i32
    %c0_i32_0 = arith.constant 0 : i32
    %c0_i32_1 = arith.constant 0 : i32
    return %c0_i32, %c0_i32_0 : i32, i32
  }
  func.func @transform_3(%arg0: i32, %arg1: i32) -> (i32, i32, i32, i32) {
    %c0_i32 = arith.constant 0 : i32
    %c0_i32_0 = arith.constant 0 : i32
    %c0_i32_1 = arith.constant 0 : i32
    return %arg0, %arg1, %c0_i32, %c0_i32_0 : i32, i32, i32, i32
  }
  func.func @transform_4(%arg0: i32, %arg1: i32) -> (i32, i32, i32) {
    %c1_i32 = arith.constant 1 : i32
    %0 = arith.muli %arg0, %c1_i32 : i32
    %1 = arith.addi %0, %arg1 : i32
    %c0_i32 = arith.constant 0 : i32
    %c0_i32_0 = arith.constant 0 : i32
    %c0_i32_1 = arith.constant 0 : i32
    return %1, %c0_i32, %c0_i32_0 : i32, i32, i32
  }
  func.func @transform_5(%arg0: i32, %arg1: i32) -> (i32, i32, i32) {
    %c1_i32 = arith.constant 1 : i32
    %0 = arith.muli %arg0, %c1_i32 : i32
    %1 = arith.addi %0, %arg1 : i32
    %c0_i32 = arith.constant 0 : i32
    %c0_i32_0 = arith.constant 0 : i32
    %c0_i32_1 = arith.constant 0 : i32
    return %1, %c0_i32, %c0_i32_0 : i32, i32, i32
  }
}

module attributes {stable_mosaic.version = 11 : i64} {
  func.func @_bn_relu_kernel(%arg0: i32, %arg1: i32, %arg2: memref<1x16x16x128xbf16, #tpu.memory_space<vmem>>, %arg3: memref<1x128xf32, #tpu.memory_space<vmem>>, %arg4: memref<1x128xf32, #tpu.memory_space<vmem>>, %arg5: memref<1x16x16x128xbf16, #tpu.memory_space<vmem>>) attributes {dimension_semantics = [#tpu.dimension_semantics<parallel>, #tpu.dimension_semantics<parallel>], iteration_bounds = array<i64: 2, 1>, scalar_prefetch = 0 : i64, scratch_operands = 0 : i64, tpu.core_type = #tpu.core_type<tc>, window_params = [{transform_indices = @transform_0, window_bounds = array<i64: 1, 16, 16, 128>}, {pipeline_mode = #tpu.pipeline_mode<synchronous>, transform_indices = @transform_1, window_bounds = array<i64: 1, 128>}, {pipeline_mode = #tpu.pipeline_mode<synchronous>, transform_indices = @transform_2, window_bounds = array<i64: 1, 128>}, {transform_indices = @transform_3, window_bounds = array<i64: 1, 16, 16, 128>}]} {
    %c0 = arith.constant 0 : index
    %c0_0 = arith.constant 0 : index
    %c0_1 = arith.constant 0 : index
    %c0_2 = arith.constant 0 : index
    %0 = vector.load %arg2[%c0, %c0_0, %c0_1, %c0_2] : memref<1x16x16x128xbf16, #tpu.memory_space<vmem>>, vector<1x16x16x128xbf16>
    %1 = vector.shape_cast %0 : vector<1x16x16x128xbf16> to vector<16x16x128xbf16>
    %2 = arith.extf %1 : vector<16x16x128xbf16> to vector<16x16x128xf32>
    %c0_3 = arith.constant 0 : index
    %c0_4 = arith.constant 0 : index
    %3 = vector.load %arg3[%c0_3, %c0_4] : memref<1x128xf32, #tpu.memory_space<vmem>>, vector<1x128xf32>
    %4 = vector.shape_cast %3 : vector<1x128xf32> to vector<1x1x128xf32>
    %5 = vector.broadcast %4 : vector<1x1x128xf32> to vector<16x16x128xf32>
    %6 = arith.mulf %2, %5 : vector<16x16x128xf32>
    %c0_5 = arith.constant 0 : index
    %c0_6 = arith.constant 0 : index
    %7 = vector.load %arg4[%c0_5, %c0_6] : memref<1x128xf32, #tpu.memory_space<vmem>>, vector<1x128xf32>
    %8 = vector.shape_cast %7 : vector<1x128xf32> to vector<1x1x128xf32>
    %9 = vector.broadcast %8 : vector<1x1x128xf32> to vector<16x16x128xf32>
    %10 = arith.addf %6, %9 : vector<16x16x128xf32>
    %cst = arith.constant 0.000000e+00 : f32
    %11 = vector.broadcast %cst : f32 to vector<16x16x128xf32>
    %12 = arith.maximumf %10, %11 : vector<16x16x128xf32>
    %13 = arith.truncf %12 : vector<16x16x128xf32> to vector<16x16x128xbf16>
    %c0_7 = arith.constant 0 : index
    %c0_8 = arith.constant 0 : index
    %c0_9 = arith.constant 0 : index
    %c0_10 = arith.constant 0 : index
    %14 = vector.load %arg5[%c0_7, %c0_8, %c0_9, %c0_10] : memref<1x16x16x128xbf16, #tpu.memory_space<vmem>>, vector<1x16x16x128xbf16>
    %15 = vector.shape_cast %14 : vector<1x16x16x128xbf16> to vector<16x16x128xbf16>
    %16 = vector.shape_cast %13 : vector<16x16x128xbf16> to vector<1x16x16x128xbf16>
    tpu.vector_store %arg5[%c0_7, %c0_8, %c0_9, %c0_10], %16 {strides = array<i32>} : memref<1x16x16x128xbf16, #tpu.memory_space<vmem>>, vector<1x16x16x128xbf16>,
    return
  }
  func.func @transform_0(%arg0: i32, %arg1: i32) -> (i32, i32, i32, i32) {
    %c0_i32 = arith.constant 0 : i32
    %c0_i32_0 = arith.constant 0 : i32
    %c0_i32_1 = arith.constant 0 : i32
    return %arg0, %arg1, %c0_i32, %c0_i32_0 : i32, i32, i32, i32
  }
  func.func @transform_1(%arg0: i32, %arg1: i32) -> (i32, i32) {
    %c0_i32 = arith.constant 0 : i32
    %c0_i32_0 = arith.constant 0 : i32
    %c0_i32_1 = arith.constant 0 : i32
    return %c0_i32, %c0_i32_0 : i32, i32
  }
  func.func @transform_2(%arg0: i32, %arg1: i32) -> (i32, i32) {
    %c0_i32 = arith.constant 0 : i32
    %c0_i32_0 = arith.constant 0 : i32
    %c0_i32_1 = arith.constant 0 : i32
    return %c0_i32, %c0_i32_0 : i32, i32
  }
  func.func @transform_3(%arg0: i32, %arg1: i32) -> (i32, i32, i32, i32) {
    %c0_i32 = arith.constant 0 : i32
    %c0_i32_0 = arith.constant 0 : i32
    %c0_i32_1 = arith.constant 0 : i32
    return %arg0, %arg1, %c0_i32, %c0_i32_0 : i32, i32, i32, i32
  }
}

module attributes {stable_mosaic.version = 11 : i64} {
  func.func @_bn_relu_kernel(%arg0: i32, %arg1: i32, %arg2: memref<1x16x16x128xbf16, #tpu.memory_space<vmem>>, %arg3: memref<1x128xf32, #tpu.memory_space<vmem>>, %arg4: memref<1x128xf32, #tpu.memory_space<vmem>>, %arg5: memref<1x16x16x128xf32, #tpu.memory_space<vmem>>) attributes {dimension_semantics = [#tpu.dimension_semantics<parallel>, #tpu.dimension_semantics<parallel>], iteration_bounds = array<i64: 2, 1>, scalar_prefetch = 0 : i64, scratch_operands = 0 : i64, tpu.core_type = #tpu.core_type<tc>, window_params = [{transform_indices = @transform_0, window_bounds = array<i64: 1, 16, 16, 128>}, {pipeline_mode = #tpu.pipeline_mode<synchronous>, transform_indices = @transform_1, window_bounds = array<i64: 1, 128>}, {pipeline_mode = #tpu.pipeline_mode<synchronous>, transform_indices = @transform_2, window_bounds = array<i64: 1, 128>}, {transform_indices = @transform_3, window_bounds = array<i64: 1, 16, 16, 128>}]} {
    %c0 = arith.constant 0 : index
    %c0_0 = arith.constant 0 : index
    %c0_1 = arith.constant 0 : index
    %c0_2 = arith.constant 0 : index
    %0 = vector.load %arg2[%c0, %c0_0, %c0_1, %c0_2] : memref<1x16x16x128xbf16, #tpu.memory_space<vmem>>, vector<1x16x16x128xbf16>
    %1 = vector.shape_cast %0 : vector<1x16x16x128xbf16> to vector<16x16x128xbf16>
    %2 = arith.extf %1 : vector<16x16x128xbf16> to vector<16x16x128xf32>
    %c0_3 = arith.constant 0 : index
    %c0_4 = arith.constant 0 : index
    %3 = vector.load %arg3[%c0_3, %c0_4] : memref<1x128xf32, #tpu.memory_space<vmem>>, vector<1x128xf32>
    %4 = vector.shape_cast %3 : vector<1x128xf32> to vector<1x1x128xf32>
    %5 = vector.broadcast %4 : vector<1x1x128xf32> to vector<16x16x128xf32>
    %6 = arith.mulf %2, %5 : vector<16x16x128xf32>
    %c0_5 = arith.constant 0 : index
    %c0_6 = arith.constant 0 : index
    %7 = vector.load %arg4[%c0_5, %c0_6] : memref<1x128xf32, #tpu.memory_space<vmem>>, vector<1x128xf32>
    %8 = vector.shape_cast %7 : vector<1x128xf32> to vector<1x1x128xf32>
    %9 = vector.broadcast %8 : vector<1x1x128xf32> to vector<16x16x128xf32>
    %10 = arith.addf %6, %9 : vector<16x16x128xf32>
    %cst = arith.constant 0.000000e+00 : f32
    %11 = vector.broadcast %cst : f32 to vector<16x16x128xf32>
    %12 = arith.maximumf %10, %11 : vector<16x16x128xf32>
    %c0_7 = arith.constant 0 : index
    %c0_8 = arith.constant 0 : index
    %c0_9 = arith.constant 0 : index
    %c0_10 = arith.constant 0 : index
    %13 = vector.load %arg5[%c0_7, %c0_8, %c0_9, %c0_10] : memref<1x16x16x128xf32, #tpu.memory_space<vmem>>, vector<1x16x16x128xf32>
    %14 = vector.shape_cast %13 : vector<1x16x16x128xf32> to vector<16x16x128xf32>
    %15 = vector.shape_cast %12 : vector<16x16x128xf32> to vector<1x16x16x128xf32>
    tpu.vector_store %arg5[%c0_7, %c0_8, %c0_9, %c0_10], %15 {strides = array<i32>} : memref<1x16x16x128xf32, #tpu.memory_space<vmem>>, vector<1x16x16x128xf32>,
    return
  }
  func.func @transform_0(%arg0: i32, %arg1: i32) -> (i32, i32, i32, i32) {
    %c0_i32 = arith.constant 0 : i32
    %c0_i32_0 = arith.constant 0 : i32
    %c0_i32_1 = arith.constant 0 : i32
    return %arg0, %arg1, %c0_i32, %c0_i32_0 : i32, i32, i32, i32
  }
  func.func @transform_1(%arg0: i32, %arg1: i32) -> (i32, i32) {
    %c0_i32 = arith.constant 0 : i32
    %c0_i32_0 = arith.constant 0 : i32
    %c0_i32_1 = arith.constant 0 : i32
    return %c0_i32, %c0_i32_0 : i32, i32
  }
  func.func @transform_2(%arg0: i32, %arg1: i32) -> (i32, i32) {
    %c0_i32 = arith.constant 0 : i32
    %c0_i32_0 = arith.constant 0 : i32
    %c0_i32_1 = arith.constant 0 : i32
    return %c0_i32, %c0_i32_0 : i32, i32
  }
  func.func @transform_3(%arg0: i32, %arg1: i32) -> (i32, i32, i32, i32) {
    %c0_i32 = arith.constant 0 : i32
    %c0_i32_0 = arith.constant 0 : i32
    %c0_i32_1 = arith.constant 0 : i32
    return %arg0, %arg1, %c0_i32, %c0_i32_0 : i32, i32, i32, i32
  }
}

</mosaic_0001>

<llo_original>
// kernel: conv_block_forward.7
$region0: #{conv_block_forward.7}
  #allocation0 [shape = 'u32[]', space=smem, size = 0x4, offset = 0x4, fixed_abs, tag = 'smem constant byte address 0x4 - core index']
  #allocation1 [shape = 'u32[144,128]{1,0:T(1,128)}', space=vmem, size = 0x12000, scoped, tag = 'internal scratch']
  %s0 = inlined_call_operand.vmem [shape: bf16[2,16,16,128], index: 0, kind: input, shape index: {}]
  %s1 = inlined_call_operand.vmem [shape: f32[1,128], index: 1, kind: input, shape index: {}]
  %s2 = inlined_call_operand.vmem [shape: f32[1,128], index: 2, kind: input, shape index: {}]
  %s3 = inlined_call_operand.vmem [shape: f32[2,16,16,128], index: 3, kind: output, shape index: {}]
  %s4 = sld [smem:[#allocation0]]
  $region45: #{conv_block_forward.7} parent=0
    _
  %s6 = ssub.s32 1, %s4
  %s7 = scalar_select 0, %s6, %s4
  loop: start=0, step=1, limit=4
  $region2: #{conv_block_forward.7} parent=0 // loop_pre_header
    _
  $region3: #{conv_block_forward.7} parent=0 // loop_header
    %s9 = sphi 0, %s13
    %p10 = scmp.ge.s32.totalorder %s9, 4
    %s16 = sphi 0, %s28
    %s17 = sphi 0, %s24
    %s18 = sphi 0, %s16
    %s19 = sphi 0, %s17
    %s20 = sphi 0, %s18
    %s21 = sphi 0, %s19
    %s33 = sphi 0, %s35
    %s36 = sphi 0, %s33
    %s37 = sphi 0, %s36
    %s53 = sphi 0, %s37
    %s57 = sphi 0, %s57
    %s59 = sphi 0, %s57
    %s60 = sphi 0, %s59
    %s74 = sphi 0, %s60
    %s78 = sphi 0, %s78
    %s80 = sphi 0, %s78
    %s81 = sphi 0, %s80
    %s95 = sphi 0, %s81
    %s103 = sphi 0, %s105
    %s106 = sphi 0, %s103
    %s107 = sphi 0, %s106
    %s123 = sphi 0, %s107
  $region4: #{conv_block_forward.7} parent=0 // loop_header_branch
    %12 = sbr.rel (%p10) target = $region8
  $region5: #{conv_block_forward.7} parent=0 // loop_body
    %s14 = ssub.s32 %s9, 1
    %s15 = ssub.s32 %s9, 2
    %s22 = sadd.s32 1, %s17
    %p23 = scmp.ge.s32.totalorder %s22, 1
    %s24 = scalar_select %p23, 0, %s22
    %s25 = sadd.s32 1, %s16
    %s26 = scalar_select %p23, %s25, %s16
    %p27 = scmp.ge.s32.totalorder %s26, 2
    %s28 = scalar_select %p27, 0, %s26
    %s29 = ssub.s32 %s16, %s28
    %s30 = ssub.s32 %s17, %s24
    %s31 = sor.u32 %s29, %s30
    %p32 = scmp.eq.s32.totalorder %s31, 0
    %s34 = sadd.s32 %s33, 1
    %s35 = scalar_select %p32, %s33, %s34
    %p38 = pneg %p32
    %p39 = scmp.eq.s32.totalorder %s9, 1
    %p40 = por %p38, %p39
    %p41 = scmp.ne.s32.totalorder %s33, %s36
    %p42 = scmp.eq.s32.totalorder %s9, 0
    %p43 = por %p41, %p42
    %p44 = scmp.ne.s32.totalorder %s33, %s36
    %p45 = scmp.eq.s32.totalorder %s14, 1
    %p46 = por %p44, %p45
    %p47 = scmp.ne.s32.totalorder %s36, %s37
    %p48 = scmp.eq.s32.totalorder %s14, 0
    %p49 = por %p47, %p48
    %p50 = scmp.ne.s32.totalorder %s36, %s37
    %p51 = scmp.eq.s32.totalorder %s15, 1
    %p52 = por %p50, %p51
    %p54 = scmp.ne.s32.totalorder %s37, %s53
    %p55 = scmp.eq.s32.totalorder %s15, 0
    %p56 = por %p54, %p55
    %s58 = sadd.s32 %s57, 1
    %p61 = scmp.eq.s32.totalorder %s9, 1
    %p62 = scmp.ne.s32.totalorder %s57, %s59
    %p63 = scmp.eq.s32.totalorder %s9, 0
    %p64 = por %p62, %p63
    %p65 = scmp.ne.s32.totalorder %s57, %s59
    %p66 = scmp.eq.s32.totalorder %s14, 1
    %p67 = por %p65, %p66
    %p68 = scmp.ne.s32.totalorder %s59, %s60
    %p69 = scmp.eq.s32.totalorder %s14, 0
    %p70 = por %p68, %p69
    %p71 = scmp.ne.s32.totalorder %s59, %s60
    %p72 = scmp.eq.s32.totalorder %s15, 1
    %p73 = por %p71, %p72
    %p75 = scmp.ne.s32.totalorder %s60, %s74
    %p76 = scmp.eq.s32.totalorder %s15, 0
    %p77 = por %p75, %p76
    %s79 = sadd.s32 %s78, 1
    %p82 = scmp.eq.s32.totalorder %s9, 1
    %p83 = scmp.ne.s32.totalorder %s78, %s80
    %p84 = scmp.eq.s32.totalorder %s9, 0
    %p85 = por %p83, %p84
    %p86 = scmp.ne.s32.totalorder %s78, %s80
    %p87 = scmp.eq.s32.totalorder %s14, 1
    %p88 = por %p86, %p87
    %p89 = scmp.ne.s32.totalorder %s80, %s81
    %p90 = scmp.eq.s32.totalorder %s14, 0
    %p91 = por %p89, %p90
    %p92 = scmp.ne.s32.totalorder %s80, %s81
    %p93 = scmp.eq.s32.totalorder %s15, 1
    %p94 = por %p92, %p93
    %p96 = scmp.ne.s32.totalorder %s81, %s95
    %p97 = scmp.eq.s32.totalorder %s15, 0
    %p98 = por %p96, %p97
    %s99 = ssub.s32 %s16, %s28
    %s100 = ssub.s32 %s17, %s24
    %s101 = sor.u32 %s99, %s100
    %p102 = scmp.eq.s32.totalorder %s101, 0
    %s104 = sadd.s32 %s103, 1
    %s105 = scalar_select %p102, %s103, %s104
    %p108 = pneg %p102
    %p109 = scmp.eq.s32.totalorder %s9, 1
    %p110 = por %p108, %p109
    %p111 = scmp.ne.s32.totalorder %s103, %s106
    %p112 = scmp.eq.s32.totalorder %s9, 0
    %p113 = por %p111, %p112
    %p114 = scmp.ne.s32.totalorder %s103, %s106
    %p115 = scmp.eq.s32.totalorder %s14, 1
    %p116 = por %p114, %p115
    %p117 = scmp.ne.s32.totalorder %s106, %s107
    %p118 = scmp.eq.s32.totalorder %s14, 0
    %p119 = por %p117, %p118
    %p120 = scmp.ne.s32.totalorder %s106, %s107
    %p121 = scmp.eq.s32.totalorder %s15, 1
    %p122 = por %p120, %p121
    %p124 = scmp.ne.s32.totalorder %s107, %s123
    %p125 = scmp.eq.s32.totalorder %s15, 0
    %p126 = por %p124, %p125
    %p127 = scmp.le.s32.totalorder 1, %s9
    %p128 = scmp.lt.s32.totalorder %s9, 3
    %p129 = pnand %p127, %p128
    %p130 = pneg %p129
    // Predicated region
    $region9: #{conv_block_forward.7} parent=5 // pred_check
      _
    $region10: #{conv_block_forward.7} parent=5 // pred_check_branch
      %132 = sbr.rel (%p129) target = $region12
    $region11: #{conv_block_forward.7} parent=5 // pred_region
      %s133 = ssub.s32 %s9, 1
      // Predicated region
      $region13: #{conv_block_forward.7} parent=11 // pred_check
        %p134 = pneg %p70
      $region14: #{conv_block_forward.7} parent=11 // pred_check_branch
        %136 = sbr.rel (%p134) target = $region16
      $region15: #{conv_block_forward.7} parent=11 // pred_region
        _
      $region16: #{conv_block_forward.7} parent=11 // pred_fallthru
        _
      // Predicated region
      $region17: #{conv_block_forward.7} parent=11 // pred_check
        %p137 = pneg %p91
      $region18: #{conv_block_forward.7} parent=11 // pred_check_branch
        %139 = sbr.rel (%p137) target = $region20
      $region19: #{conv_block_forward.7} parent=11 // pred_region
        _
      $region20: #{conv_block_forward.7} parent=11 // pred_fallthru
        _
    $region12: #{conv_block_forward.7} parent=5 // pred_fallthru
      _
    %p140 = scmp.lt.s32.totalorder %s9, 2
    // Predicated region
    $region21: #{conv_block_forward.7} parent=5 // pred_check
      %p141 = pneg %p140
    $region22: #{conv_block_forward.7} parent=5 // pred_check_branch
      %143 = sbr.rel (%p141) target = $region24
    $region23: #{conv_block_forward.7} parent=5 // pred_region
      // Predicated region
      $region25: #{conv_block_forward.7} parent=23 // pred_check
        %p144 = pneg %p43
      $region26: #{conv_block_forward.7} parent=23 // pred_check_branch
        %146 = sbr.rel (%p144) target = $region28
      $region27: #{conv_block_forward.7} parent=23 // pred_region
        %s147 = smul.u32 16, %s17
        %p148 = scmp.lt.s32.totalorder %s16, 1
        %s149 = scalar_select %p148, %s16, 1
        %p150 = scmp.lt.s32.totalorder %s147, 15
        %s151 = scalar_select %p150, %s147, 15
        %s152 = smul.addr %s151, 2
        %s153 = smul.addr %s149, 32
        %s154 = sadd.s32 %s152, %s153
        %s155 = smul.addr %s154, 4
        %s156 = scalar_lea.vmem %s0, %s155
        %s157 = smul.u32 16, %s17
      $region28: #{conv_block_forward.7} parent=23 // pred_fallthru
        _
    $region24: #{conv_block_forward.7} parent=5 // pred_fallthru
      _
    %p158 = scmp.le.s32.totalorder 1, %s9
    %p159 = scmp.lt.s32.totalorder %s9, 3
    %p160 = pnand %p158, %p159
    %p161 = pneg %p160
    // Predicated region
    $region29: #{conv_block_forward.7} parent=5 // pred_check
      _
    $region30: #{conv_block_forward.7} parent=5 // pred_check_branch
      %163 = sbr.rel (%p160) target = $region32
    $region31: #{conv_block_forward.7} parent=5 // pred_region
      %s164 = ssub.s32 %s9, 1
      %s165 = smul.u32 16, %s19
      %p166 = scmp.lt.s32.totalorder %s18, 1
      %s167 = scalar_select %p166, %s18, 1
      %p168 = scmp.lt.s32.totalorder %s165, 15
      %s169 = scalar_select %p168, %s165, 15
      %s170 = smul.addr %s169, 2
      %s171 = smul.addr %s167, 32
      %s172 = sadd.s32 %s170, %s171
      %s173 = smul.addr %s172, 4
      %s174 = scalar_lea.vmem %s0, %s173
      %p175 = pneg %p49
      %p176 = pneg %p46
      %p177 = pneg %p70
      %p178 = pneg %p67
      %p179 = pneg %p91
      %p180 = pneg %p88
      %p181 = pneg %p119
      %p182 = pneg %p116
      %s183 = smul.u32 16, %s19
      %p184 = scmp.lt.s32.totalorder %s18, 1
      %s185 = scalar_select %p184, %s18, 1
      %p186 = scmp.lt.s32.totalorder %s183, 15
      %s187 = scalar_select %p186, %s183, 15
      %s188 = smul.addr %s187, 2
      %s189 = smul.addr %s185, 32
      %s190 = sadd.s32 %s188, %s189
      %s191 = smul.addr %s190, 8
      %s192 = scalar_lea.vmem %s3, %s191
      %s193 = smul.u32 16, %s19
      %p194 = scmp.lt.s32.totalorder %s18, 1
      %s195 = scalar_select %p194, %s18, 1
      %p196 = scmp.lt.s32.totalorder %s193, 15
      %s197 = scalar_select %p196, %s193, 15
      %s198 = smul.addr %s197, 2
      %s199 = smul.addr %s195, 32
      %s200 = sadd.s32 %s198, %s199
      %s201 = smul.addr %s200, 4
      %s202 = scalar_lea.vmem %s0, %s201
      %s203 = smul.u32 16, %s19
      %s204 = smul.u32 16, %s19
      %p205 = scmp.lt.s32.totalorder %s18, 1
      %s206 = scalar_select %p205, %s18, 1
      %p207 = scmp.lt.s32.totalorder %s204, 15
      %s208 = scalar_select %p207, %s204, 15
      %s209 = smul.addr %s208, 2
      %s210 = smul.addr %s206, 32
      %s211 = sadd.s32 %s209, %s210
      %s212 = smul.addr %s211, 8
      %s213 = scalar_lea.vmem %s3, %s212
      %s214 = smul.u32 16, %s19
      %v215 = vld [vmem:[%s202] sm:$0xf]
      %v216 = vld [vmem:[%s202 + $0x4] sm:$0xf]
      %v217 = vld [vmem:[%s202 + $0x8] sm:$0xf]
      %v218 = vld [vmem:[%s202 + $0xc] sm:$0xf]
      %v219 = vld [vmem:[%s202 + $0x10] sm:$0xf]
      %v220 = vld [vmem:[%s202 + $0x14] sm:$0xf]
      %v221 = vld [vmem:[%s202 + $0x18] sm:$0xf]
      %v222 = vld [vmem:[%s202 + $0x1c] sm:$0xf]
      %v223 = vld [vmem:[%s202 + $0x20] sm:$0xf]
      %v224 = vld [vmem:[%s202 + $0x24] sm:$0xf]
      %v225 = vld [vmem:[%s202 + $0x28] sm:$0xf]
      %v226 = vld [vmem:[%s202 + $0x2c] sm:$0xf]
      %v227 = vld [vmem:[%s202 + $0x30] sm:$0xf]
      %v228 = vld [vmem:[%s202 + $0x34] sm:$0xf]
      %v229 = vld [vmem:[%s202 + $0x38] sm:$0xf]
      %v230 = vld [vmem:[%s202 + $0x3c] sm:$0xf]
      %v231 = vld [vmem:[%s202 + $0x40] sm:$0xf]
      %v232 = vld [vmem:[%s202 + $0x44] sm:$0xf]
      %v233 = vld [vmem:[%s202 + $0x48] sm:$0xf]
      %v234 = vld [vmem:[%s202 + $0x4c] sm:$0xf]
      %v235 = vld [vmem:[%s202 + $0x50] sm:$0xf]
      %v236 = vld [vmem:[%s202 + $0x54] sm:$0xf]
      %v237 = vld [vmem:[%s202 + $0x58] sm:$0xf]
      %v238 = vld [vmem:[%s202 + $0x5c] sm:$0xf]
      %v239 = vld [vmem:[%s202 + $0x60] sm:$0xf]
      %v240 = vld [vmem:[%s202 + $0x64] sm:$0xf]
      %v241 = vld [vmem:[%s202 + $0x68] sm:$0xf]
      %v242 = vld [vmem:[%s202 + $0x6c] sm:$0xf]
      %v243 = vld [vmem:[%s202 + $0x70] sm:$0xf]
      %v244 = vld [vmem:[%s202 + $0x74] sm:$0xf]
      %v245 = vld [vmem:[%s202 + $0x78] sm:$0xf]
      %v246 = vld [vmem:[%s202 + $0x7c] sm:$0xf]
      %v247 = vunpack.c.l.bf16 %v215
      %v248 = vunpack.c.l.bf16 %v216
      %v249 = vunpack.c.l.bf16 %v217
      %v250 = vunpack.c.l.bf16 %v218
      %v251 = vunpack.c.l.bf16 %v219
      %v252 = vunpack.c.l.bf16 %v220
      %v253 = vunpack.c.l.bf16 %v221
      %v254 = vunpack.c.l.bf16 %v222
      %v255 = vunpack.c.l.bf16 %v223
      %v256 = vunpack.c.l.bf16 %v224
      %v257 = vunpack.c.l.bf16 %v225
      %v258 = vunpack.c.l.bf16 %v226
      %v259 = vunpack.c.l.bf16 %v227
      %v260 = vunpack.c.l.bf16 %v228
      %v261 = vunpack.c.l.bf16 %v229
      %v262 = vunpack.c.l.bf16 %v230
      %v263 = vunpack.c.l.bf16 %v231
      %v264 = vunpack.c.l.bf16 %v232
      %v265 = vunpack.c.l.bf16 %v233
      %v266 = vunpack.c.l.bf16 %v234
      %v267 = vunpack.c.l.bf16 %v235
      %v268 = vunpack.c.l.bf16 %v236
      %v269 = vunpack.c.l.bf16 %v237
      %v270 = vunpack.c.l.bf16 %v238
      %v271 = vunpack.c.l.bf16 %v239
      %v272 = vunpack.c.l.bf16 %v240
      %v273 = vunpack.c.l.bf16 %v241
      %v274 = vunpack.c.l.bf16 %v242
      %v275 = vunpack.c.l.bf16 %v243
      %v276 = vunpack.c.l.bf16 %v244
      %v277 = vunpack.c.l.bf16 %v245
      %v278 = vunpack.c.l.bf16 %v246
      %v279 = vld [vmem:[%s1] sm:$0x1]
      %v281 = vlaneseq
      %v282 = vshrl.u32 %v281, 7
      %v283 = vsub.s32 0, %v282
      %v284 = vrot.slane %v279, %v283
      %v286 = vmul.f32 %v247, %v284
      %v287 = vmul.f32 %v248, %v284
      %v288 = vmul.f32 %v249, %v284
      %v289 = vmul.f32 %v250, %v284
      %v290 = vmul.f32 %v251, %v284
      %v291 = vmul.f32 %v252, %v284
      %v292 = vmul.f32 %v253, %v284
      %v293 = vmul.f32 %v254, %v284
      %v294 = vmul.f32 %v255, %v284
      %v295 = vmul.f32 %v256, %v284
      %v296 = vmul.f32 %v257, %v284
      %v297 = vmul.f32 %v258, %v284
      %v298 = vmul.f32 %v259, %v284
      %v299 = vmul.f32 %v260, %v284
      %v300 = vmul.f32 %v261, %v284
      %v301 = vmul.f32 %v262, %v284
      %v302 = vmul.f32 %v263, %v284
      %v303 = vmul.f32 %v264, %v284
      %v304 = vmul.f32 %v265, %v284
      %v305 = vmul.f32 %v266, %v284
      %v306 = vmul.f32 %v267, %v284
      %v307 = vmul.f32 %v268, %v284
      %v308 = vmul.f32 %v269, %v284
      %v309 = vmul.f32 %v270, %v284
      %v310 = vmul.f32 %v271, %v284
      %v311 = vmul.f32 %v272, %v284
      %v312 = vmul.f32 %v273, %v284
      %v313 = vmul.f32 %v274, %v284
      %v314 = vmul.f32 %v275, %v284
      %v315 = vmul.f32 %v276, %v284
      %v316 = vmul.f32 %v277, %v284
      %v317 = vmul.f32 %v278, %v284
      %v318 = vld [vmem:[%s2] sm:$0x1]
      %v320 = vlaneseq
      %v321 = vshrl.u32 %v320, 7
      %v322 = vsub.s32 0, %v321
      %v323 = vrot.slane %v318, %v322
      %v325 = vadd.f32 %v286, %v323
      %v326 = vadd.f32 %v287, %v323
      %v327 = vadd.f32 %v288, %v323
      %v328 = vadd.f32 %v289, %v323
      %v329 = vadd.f32 %v290, %v323
      %v330 = vadd.f32 %v291, %v323
      %v331 = vadd.f32 %v292, %v323
      %v332 = vadd.f32 %v293, %v323
      %v333 = vadd.f32 %v294, %v323
      %v334 = vadd.f32 %v295, %v323
      %v335 = vadd.f32 %v296, %v323
      %v336 = vadd.f32 %v297, %v323
      %v337 = vadd.f32 %v298, %v323
      %v338 = vadd.f32 %v299, %v323
      %v339 = vadd.f32 %v300, %v323
      %v340 = vadd.f32 %v301, %v323
      %v341 = vadd.f32 %v302, %v323
      %v342 = vadd.f32 %v303, %v323
      %v343 = vadd.f32 %v304, %v323
      %v344 = vadd.f32 %v305, %v323
      %v345 = vadd.f32 %v306, %v323
      %v346 = vadd.f32 %v307, %v323
      %v347 = vadd.f32 %v308, %v323
      %v348 = vadd.f32 %v309, %v323
      %v349 = vadd.f32 %v310, %v323
      %v350 = vadd.f32 %v311, %v323
      %v351 = vadd.f32 %v312, %v323
      %v352 = vadd.f32 %v313, %v323
      %v353 = vadd.f32 %v314, %v323
      %v354 = vadd.f32 %v315, %v323
      %v355 = vadd.f32 %v316, %v323
      %v356 = vadd.f32 %v317, %v323
      %v357 = vmax.f32 %v325, 0.0
      %v358 = vmax.f32 %v326, 0.0
      %v359 = vmax.f32 %v327, 0.0
      %v360 = vmax.f32 %v328, 0.0
      %v361 = vmax.f32 %v329, 0.0
      %v362 = vmax.f32 %v330, 0.0
      %v363 = vmax.f32 %v331, 0.0
      %v364 = vmax.f32 %v332, 0.0
      %v365 = vmax.f32 %v333, 0.0
      %v366 = vmax.f32 %v334, 0.0
      %v367 = vmax.f32 %v335, 0.0
      %v368 = vmax.f32 %v336, 0.0
      %v369 = vmax.f32 %v337, 0.0
      %v370 = vmax.f32 %v338, 0.0
      %v371 = vmax.f32 %v339, 0.0
      %v372 = vmax.f32 %v340, 0.0
      %v373 = vmax.f32 %v341, 0.0
      %v374 = vmax.f32 %v342, 0.0
      %v375 = vmax.f32 %v343, 0.0
      %v376 = vmax.f32 %v344, 0.0
      %v377 = vmax.f32 %v345, 0.0
      %v378 = vmax.f32 %v346, 0.0
      %v379 = vmax.f32 %v347, 0.0
      %v380 = vmax.f32 %v348, 0.0
      %v381 = vmax.f32 %v349, 0.0
      %v382 = vmax.f32 %v350, 0.0
      %v383 = vmax.f32 %v351, 0.0
      %v384 = vmax.f32 %v352, 0.0
      %v385 = vmax.f32 %v353, 0.0
      %v386 = vmax.f32 %v354, 0.0
      %v387 = vmax.f32 %v355, 0.0
      %v388 = vmax.f32 %v356, 0.0
      %389 = vst [vmem:[%s213] sm:$0xff] %v357
      %390 = vst [vmem:[%s213 + $0x8] sm:$0xff] %v358
      %391 = vst [vmem:[%s213 + $0x10] sm:$0xff] %v359
      %392 = vst [vmem:[%s213 + $0x18] sm:$0xff] %v360
      %393 = vst [vmem:[%s213 + $0x20] sm:$0xff] %v361
      %394 = vst [vmem:[%s213 + $0x28] sm:$0xff] %v362
      %395 = vst [vmem:[%s213 + $0x30] sm:$0xff] %v363
      %396 = vst [vmem:[%s213 + $0x38] sm:$0xff] %v364
      %397 = vst [vmem:[%s213 + $0x40] sm:$0xff] %v365
      %398 = vst [vmem:[%s213 + $0x48] sm:$0xff] %v366
      %399 = vst [vmem:[%s213 + $0x50] sm:$0xff] %v367
      %400 = vst [vmem:[%s213 + $0x58] sm:$0xff] %v368
      %401 = vst [vmem:[%s213 + $0x60] sm:$0xff] %v369
      %402 = vst [vmem:[%s213 + $0x68] sm:$0xff] %v370
      %403 = vst [vmem:[%s213 + $0x70] sm:$0xff] %v371
      %404 = vst [vmem:[%s213 + $0x78] sm:$0xff] %v372
      %405 = vst [vmem:[%s213 + $0x80] sm:$0xff] %v373
      %406 = vst [vmem:[%s213 + $0x88] sm:$0xff] %v374
      %407 = vst [vmem:[%s213 + $0x90] sm:$0xff] %v375
      %408 = vst [vmem:[%s213 + $0x98] sm:$0xff] %v376
      %409 = vst [vmem:[%s213 + $0xa0] sm:$0xff] %v377
      %410 = vst [vmem:[%s213 + $0xa8] sm:$0xff] %v378
      %411 = vst [vmem:[%s213 + $0xb0] sm:$0xff] %v379
      %412 = vst [vmem:[%s213 + $0xb8] sm:$0xff] %v380
      %413 = vst [vmem:[%s213 + $0xc0] sm:$0xff] %v381
      %414 = vst [vmem:[%s213 + $0xc8] sm:$0xff] %v382
      %415 = vst [vmem:[%s213 + $0xd0] sm:$0xff] %v383
      %416 = vst [vmem:[%s213 + $0xd8] sm:$0xff] %v384
      %417 = vst [vmem:[%s213 + $0xe0] sm:$0xff] %v385
      %418 = vst [vmem:[%s213 + $0xe8] sm:$0xff] %v386
      %419 = vst [vmem:[%s213 + $0xf0] sm:$0xff] %v387
      %420 = vst [vmem:[%s213 + $0xf8] sm:$0xff] %v388
      %s421 = smul.u32 16, %s19
      %p422 = scmp.lt.s32.totalorder %s18, 1
      %s423 = scalar_select %p422, %s18, 1
      %p424 = scmp.lt.s32.totalorder %s421, 15
      %s425 = scalar_select %p424, %s421, 15
      %s426 = smul.addr %s425, 2
      %s427 = smul.addr %s423, 32
      %s428 = sadd.s32 %s426, %s427
      %s429 = smul.addr %s428, 8
      %s430 = scalar_lea.vmem %s3, %s429
      // Predicated region
      $region33: #{conv_block_forward.7} parent=31 // pred_check
        %p431 = pneg %p116
      $region34: #{conv_block_forward.7} parent=31 // pred_check_branch
        %433 = sbr.rel (%p431) target = $region36
      $region35: #{conv_block_forward.7} parent=31 // pred_region
        %s434 = smul.u32 16, %s19
      $region36: #{conv_block_forward.7} parent=31 // pred_fallthru
        _
    $region32: #{conv_block_forward.7} parent=5 // pred_fallthru
      _
    %p435 = scmp.le.s32.totalorder 2, %s9
    // Predicated region
    $region37: #{conv_block_forward.7} parent=5 // pred_check
      %p436 = pneg %p435
    $region38: #{conv_block_forward.7} parent=5 // pred_check_branch
      %438 = sbr.rel (%p436) target = $region40
    $region39: #{conv_block_forward.7} parent=5 // pred_region
      %s439 = ssub.s32 %s9, 2
      // Predicated region
      $region41: #{conv_block_forward.7} parent=39 // pred_check
        %p440 = pneg %p122
      $region42: #{conv_block_forward.7} parent=39 // pred_check_branch
        %442 = sbr.rel (%p440) target = $region44
      $region43: #{conv_block_forward.7} parent=39 // pred_region
        %s443 = smul.u32 16, %s21
        %p444 = scmp.lt.s32.totalorder %s20, 1
        %s445 = scalar_select %p444, %s20, 1
        %p446 = scmp.lt.s32.totalorder %s443, 15
        %s447 = scalar_select %p446, %s443, 15
        %s448 = smul.addr %s447, 2
        %s449 = smul.addr %s445, 32
        %s450 = sadd.s32 %s448, %s449
        %s451 = smul.addr %s450, 8
        %s452 = scalar_lea.vmem %s3, %s451
      $region44: #{conv_block_forward.7} parent=39 // pred_fallthru
        _
    $region40: #{conv_block_forward.7} parent=5 // pred_fallthru
      _
  $region6: #{conv_block_forward.7} parent=0 // loop_footer
    %s13 = sadd.s32 1, %s9
  $region7: #{conv_block_forward.7} parent=0 // loop_footer_branch
    %8 = sbr.rel target = $region3
  $region8: #{conv_block_forward.7} parent=0 // loop_exit
    _

// kernel: conv_block_forward.5
$region0: #{conv_block_forward.5}
  #allocation0 [shape = 'u32[]', space=smem, size = 0x4, offset = 0x4, fixed_abs, tag = 'smem constant byte address 0x4 - core index']
  #allocation1 [shape = 'u32[144,128]{1,0:T(1,128)}', space=vmem, size = 0x12000, scoped, tag = 'internal scratch']
  %s0 = inlined_call_operand.vmem [shape: bf16[2,16,16,128], index: 0, kind: input, shape index: {}]
  %s1 = inlined_call_operand.vmem [shape: f32[1,128], index: 1, kind: input, shape index: {}]
  %s2 = inlined_call_operand.vmem [shape: f32[1,128], index: 2, kind: input, shape index: {}]
  %s3 = inlined_call_operand.vmem [shape: bf16[2,16,16,128], index: 3, kind: output, shape index: {}]
  %s4 = sld [smem:[#allocation0]]
  $region45: #{conv_block_forward.5} parent=0
    _
  %s6 = ssub.s32 1, %s4
  %s7 = scalar_select 0, %s6, %s4
  loop: start=0, step=1, limit=4
  $region2: #{conv_block_forward.5} parent=0 // loop_pre_header
    _
  $region3: #{conv_block_forward.5} parent=0 // loop_header
    %s9 = sphi 0, %s13
    %p10 = scmp.ge.s32.totalorder %s9, 4
    %s16 = sphi 0, %s28
    %s17 = sphi 0, %s24
    %s18 = sphi 0, %s16
    %s19 = sphi 0, %s17
    %s20 = sphi 0, %s18
    %s21 = sphi 0, %s19
    %s33 = sphi 0, %s35
    %s36 = sphi 0, %s33
    %s37 = sphi 0, %s36
    %s53 = sphi 0, %s37
    %s57 = sphi 0, %s57
    %s59 = sphi 0, %s57
    %s60 = sphi 0, %s59
    %s74 = sphi 0, %s60
    %s78 = sphi 0, %s78
    %s80 = sphi 0, %s78
    %s81 = sphi 0, %s80
    %s95 = sphi 0, %s81
    %s103 = sphi 0, %s105
    %s106 = sphi 0, %s103
    %s107 = sphi 0, %s106
    %s123 = sphi 0, %s107
  $region4: #{conv_block_forward.5} parent=0 // loop_header_branch
    %12 = sbr.rel (%p10) target = $region8
  $region5: #{conv_block_forward.5} parent=0 // loop_body
    %s14 = ssub.s32 %s9, 1
    %s15 = ssub.s32 %s9, 2
    %s22 = sadd.s32 1, %s17
    %p23 = scmp.ge.s32.totalorder %s22, 1
    %s24 = scalar_select %p23, 0, %s22
    %s25 = sadd.s32 1, %s16
    %s26 = scalar_select %p23, %s25, %s16
    %p27 = scmp.ge.s32.totalorder %s26, 2
    %s28 = scalar_select %p27, 0, %s26
    %s29 = ssub.s32 %s16, %s28
    %s30 = ssub.s32 %s17, %s24
    %s31 = sor.u32 %s29, %s30
    %p32 = scmp.eq.s32.totalorder %s31, 0
    %s34 = sadd.s32 %s33, 1
    %s35 = scalar_select %p32, %s33, %s34
    %p38 = pneg %p32
    %p39 = scmp.eq.s32.totalorder %s9, 1
    %p40 = por %p38, %p39
    %p41 = scmp.ne.s32.totalorder %s33, %s36
    %p42 = scmp.eq.s32.totalorder %s9, 0
    %p43 = por %p41, %p42
    %p44 = scmp.ne.s32.totalorder %s33, %s36
    %p45 = scmp.eq.s32.totalorder %s14, 1
    %p46 = por %p44, %p45
    %p47 = scmp.ne.s32.totalorder %s36, %s37
    %p48 = scmp.eq.s32.totalorder %s14, 0
    %p49 = por %p47, %p48
    %p50 = scmp.ne.s32.totalorder %s36, %s37
    %p51 = scmp.eq.s32.totalorder %s15, 1
    %p52 = por %p50, %p51
    %p54 = scmp.ne.s32.totalorder %s37, %s53
    %p55 = scmp.eq.s32.totalorder %s15, 0
    %p56 = por %p54, %p55
    %s58 = sadd.s32 %s57, 1
    %p61 = scmp.eq.s32.totalorder %s9, 1
    %p62 = scmp.ne.s32.totalorder %s57, %s59
    %p63 = scmp.eq.s32.totalorder %s9, 0
    %p64 = por %p62, %p63
    %p65 = scmp.ne.s32.totalorder %s57, %s59
    %p66 = scmp.eq.s32.totalorder %s14, 1
    %p67 = por %p65, %p66
    %p68 = scmp.ne.s32.totalorder %s59, %s60
    %p69 = scmp.eq.s32.totalorder %s14, 0
    %p70 = por %p68, %p69
    %p71 = scmp.ne.s32.totalorder %s59, %s60
    %p72 = scmp.eq.s32.totalorder %s15, 1
    %p73 = por %p71, %p72
    %p75 = scmp.ne.s32.totalorder %s60, %s74
    %p76 = scmp.eq.s32.totalorder %s15, 0
    %p77 = por %p75, %p76
    %s79 = sadd.s32 %s78, 1
    %p82 = scmp.eq.s32.totalorder %s9, 1
    %p83 = scmp.ne.s32.totalorder %s78, %s80
    %p84 = scmp.eq.s32.totalorder %s9, 0
    %p85 = por %p83, %p84
    %p86 = scmp.ne.s32.totalorder %s78, %s80
    %p87 = scmp.eq.s32.totalorder %s14, 1
    %p88 = por %p86, %p87
    %p89 = scmp.ne.s32.totalorder %s80, %s81
    %p90 = scmp.eq.s32.totalorder %s14, 0
    %p91 = por %p89, %p90
    %p92 = scmp.ne.s32.totalorder %s80, %s81
    %p93 = scmp.eq.s32.totalorder %s15, 1
    %p94 = por %p92, %p93
    %p96 = scmp.ne.s32.totalorder %s81, %s95
    %p97 = scmp.eq.s32.totalorder %s15, 0
    %p98 = por %p96, %p97
    %s99 = ssub.s32 %s16, %s28
    %s100 = ssub.s32 %s17, %s24
    %s101 = sor.u32 %s99, %s100
    %p102 = scmp.eq.s32.totalorder %s101, 0
    %s104 = sadd.s32 %s103, 1
    %s105 = scalar_select %p102, %s103, %s104
    %p108 = pneg %p102
    %p109 = scmp.eq.s32.totalorder %s9, 1
    %p110 = por %p108, %p109
    %p111 = scmp.ne.s32.totalorder %s103, %s106
    %p112 = scmp.eq.s32.totalorder %s9, 0
    %p113 = por %p111, %p112
    %p114 = scmp.ne.s32.totalorder %s103, %s106
    %p115 = scmp.eq.s32.totalorder %s14, 1
    %p116 = por %p114, %p115
    %p117 = scmp.ne.s32.totalorder %s106, %s107
    %p118 = scmp.eq.s32.totalorder %s14, 0
    %p119 = por %p117, %p118
    %p120 = scmp.ne.s32.totalorder %s106, %s107
    %p121 = scmp.eq.s32.totalorder %s15, 1
    %p122 = por %p120, %p121
    %p124 = scmp.ne.s32.totalorder %s107, %s123
    %p125 = scmp.eq.s32.totalorder %s15, 0
    %p126 = por %p124, %p125
    %p127 = scmp.le.s32.totalorder 1, %s9
    %p128 = scmp.lt.s32.totalorder %s9, 3
    %p129 = pnand %p127, %p128
    %p130 = pneg %p129
    // Predicated region
    $region9: #{conv_block_forward.5} parent=5 // pred_check
      _
    $region10: #{conv_block_forward.5} parent=5 // pred_check_branch
      %132 = sbr.rel (%p129) target = $region12
    $region11: #{conv_block_forward.5} parent=5 // pred_region
      %s133 = ssub.s32 %s9, 1
      // Predicated region
      $region13: #{conv_block_forward.5} parent=11 // pred_check
        %p134 = pneg %p70
      $region14: #{conv_block_forward.5} parent=11 // pred_check_branch
        %136 = sbr.rel (%p134) target = $region16
      $region15: #{conv_block_forward.5} parent=11 // pred_region
        _
      $region16: #{conv_block_forward.5} parent=11 // pred_fallthru
        _
      // Predicated region
      $region17: #{conv_block_forward.5} parent=11 // pred_check
        %p137 = pneg %p91
      $region18: #{conv_block_forward.5} parent=11 // pred_check_branch
        %139 = sbr.rel (%p137) target = $region20
      $region19: #{conv_block_forward.5} parent=11 // pred_region
        _
      $region20: #{conv_block_forward.5} parent=11 // pred_fallthru
        _
    $region12: #{conv_block_forward.5} parent=5 // pred_fallthru
      _
    %p140 = scmp.lt.s32.totalorder %s9, 2
    // Predicated region
    $region21: #{conv_block_forward.5} parent=5 // pred_check
      %p141 = pneg %p140
    $region22: #{conv_block_forward.5} parent=5 // pred_check_branch
      %143 = sbr.rel (%p141) target = $region24
    $region23: #{conv_block_forward.5} parent=5 // pred_region
      // Predicated region
      $region25: #{conv_block_forward.5} parent=23 // pred_check
        %p144 = pneg %p43
      $region26: #{conv_block_forward.5} parent=23 // pred_check_branch
        %146 = sbr.rel (%p144) target = $region28
      $region27: #{conv_block_forward.5} parent=23 // pred_region
        %s147 = smul.u32 16, %s17
        %p148 = scmp.lt.s32.totalorder %s16, 1
        %s149 = scalar_select %p148, %s16, 1
        %p150 = scmp.lt.s32.totalorder %s147, 15
        %s151 = scalar_select %p150, %s147, 15
        %s152 = smul.addr %s151, 2
        %s153 = smul.addr %s149, 32
        %s154 = sadd.s32 %s152, %s153
        %s155 = smul.addr %s154, 4
        %s156 = scalar_lea.vmem %s0, %s155
        %s157 = smul.u32 16, %s17
      $region28: #{conv_block_forward.5} parent=23 // pred_fallthru
        _
    $region24: #{conv_block_forward.5} parent=5 // pred_fallthru
      _
    %p158 = scmp.le.s32.totalorder 1, %s9
    %p159 = scmp.lt.s32.totalorder %s9, 3
    %p160 = pnand %p158, %p159
    %p161 = pneg %p160
    // Predicated region
    $region29: #{conv_block_forward.5} parent=5 // pred_check
      _
    $region30: #{conv_block_forward.5} parent=5 // pred_check_branch
      %163 = sbr.rel (%p160) target = $region32
    $region31: #{conv_block_forward.5} parent=5 // pred_region
      %s164 = ssub.s32 %s9, 1
      %s165 = smul.u32 16, %s19
      %p166 = scmp.lt.s32.totalorder %s18, 1
      %s167 = scalar_select %p166, %s18, 1
      %p168 = scmp.lt.s32.totalorder %s165, 15
      %s169 = scalar_select %p168, %s165, 15
      %s170 = smul.addr %s169, 2
      %s171 = smul.addr %s167, 32
      %s172 = sadd.s32 %s170, %s171
      %s173 = smul.addr %s172, 4
      %s174 = scalar_lea.vmem %s0, %s173
      %p175 = pneg %p49
      %p176 = pneg %p46
      %p177 = pneg %p70
      %p178 = pneg %p67
      %p179 = pneg %p91
      %p180 = pneg %p88
      %p181 = pneg %p119
      %p182 = pneg %p116
      %s183 = smul.u32 16, %s19
      %p184 = scmp.lt.s32.totalorder %s18, 1
      %s185 = scalar_select %p184, %s18, 1
      %p186 = scmp.lt.s32.totalorder %s183, 15
      %s187 = scalar_select %p186, %s183, 15
      %s188 = smul.addr %s187, 2
      %s189 = smul.addr %s185, 32
      %s190 = sadd.s32 %s188, %s189
      %s191 = smul.addr %s190, 4
      %s192 = scalar_lea.vmem %s3, %s191
      %s193 = smul.u32 16, %s19
      %p194 = scmp.lt.s32.totalorder %s18, 1
      %s195 = scalar_select %p194, %s18, 1
      %p196 = scmp.lt.s32.totalorder %s193, 15
      %s197 = scalar_select %p196, %s193, 15
      %s198 = smul.addr %s197, 2
      %s199 = smul.addr %s195, 32
      %s200 = sadd.s32 %s198, %s199
      %s201 = smul.addr %s200, 4
      %s202 = scalar_lea.vmem %s0, %s201
      %s203 = smul.u32 16, %s19
      %s204 = smul.u32 16, %s19
      %p205 = scmp.lt.s32.totalorder %s18, 1
      %s206 = scalar_select %p205, %s18, 1
      %p207 = scmp.lt.s32.totalorder %s204, 15
      %s208 = scalar_select %p207, %s204, 15
      %s209 = smul.addr %s208, 2
      %s210 = smul.addr %s206, 32
      %s211 = sadd.s32 %s209, %s210
      %s212 = smul.addr %s211, 4
      %s213 = scalar_lea.vmem %s3, %s212
      %s214 = smul.u32 16, %s19
      %v215 = vld [vmem:[%s202] sm:$0xf]
      %v216 = vld [vmem:[%s202 + $0x4] sm:$0xf]
      %v217 = vld [vmem:[%s202 + $0x8] sm:$0xf]
      %v218 = vld [vmem:[%s202 + $0xc] sm:$0xf]
      %v219 = vld [vmem:[%s202 + $0x10] sm:$0xf]
      %v220 = vld [vmem:[%s202 + $0x14] sm:$0xf]
      %v221 = vld [vmem:[%s202 + $0x18] sm:$0xf]
      %v222 = vld [vmem:[%s202 + $0x1c] sm:$0xf]
      %v223 = vld [vmem:[%s202 + $0x20] sm:$0xf]
      %v224 = vld [vmem:[%s202 + $0x24] sm:$0xf]
      %v225 = vld [vmem:[%s202 + $0x28] sm:$0xf]
      %v226 = vld [vmem:[%s202 + $0x2c] sm:$0xf]
      %v227 = vld [vmem:[%s202 + $0x30] sm:$0xf]
      %v228 = vld [vmem:[%s202 + $0x34] sm:$0xf]
      %v229 = vld [vmem:[%s202 + $0x38] sm:$0xf]
      %v230 = vld [vmem:[%s202 + $0x3c] sm:$0xf]
      %v231 = vld [vmem:[%s202 + $0x40] sm:$0xf]
      %v232 = vld [vmem:[%s202 + $0x44] sm:$0xf]
      %v233 = vld [vmem:[%s202 + $0x48] sm:$0xf]
      %v234 = vld [vmem:[%s202 + $0x4c] sm:$0xf]
      %v235 = vld [vmem:[%s202 + $0x50] sm:$0xf]
      %v236 = vld [vmem:[%s202 + $0x54] sm:$0xf]
      %v237 = vld [vmem:[%s202 + $0x58] sm:$0xf]
      %v238 = vld [vmem:[%s202 + $0x5c] sm:$0xf]
      %v239 = vld [vmem:[%s202 + $0x60] sm:$0xf]
      %v240 = vld [vmem:[%s202 + $0x64] sm:$0xf]
      %v241 = vld [vmem:[%s202 + $0x68] sm:$0xf]
      %v242 = vld [vmem:[%s202 + $0x6c] sm:$0xf]
      %v243 = vld [vmem:[%s202 + $0x70] sm:$0xf]
      %v244 = vld [vmem:[%s202 + $0x74] sm:$0xf]
      %v245 = vld [vmem:[%s202 + $0x78] sm:$0xf]
      %v246 = vld [vmem:[%s202 + $0x7c] sm:$0xf]
      %v247 = vunpack.c.l.bf16 %v215
      %v248 = vunpack.c.l.bf16 %v216
      %v249 = vunpack.c.l.bf16 %v217
      %v250 = vunpack.c.l.bf16 %v218
      %v251 = vunpack.c.l.bf16 %v219
      %v252 = vunpack.c.l.bf16 %v220
      %v253 = vunpack.c.l.bf16 %v221
      %v254 = vunpack.c.l.bf16 %v222
      %v255 = vunpack.c.l.bf16 %v223
      %v256 = vunpack.c.l.bf16 %v224
      %v257 = vunpack.c.l.bf16 %v225
      %v258 = vunpack.c.l.bf16 %v226
      %v259 = vunpack.c.l.bf16 %v227
      %v260 = vunpack.c.l.bf16 %v228
      %v261 = vunpack.c.l.bf16 %v229
      %v262 = vunpack.c.l.bf16 %v230
      %v263 = vunpack.c.l.bf16 %v231
      %v264 = vunpack.c.l.bf16 %v232
      %v265 = vunpack.c.l.bf16 %v233
      %v266 = vunpack.c.l.bf16 %v234
      %v267 = vunpack.c.l.bf16 %v235
      %v268 = vunpack.c.l.bf16 %v236
      %v269 = vunpack.c.l.bf16 %v237
      %v270 = vunpack.c.l.bf16 %v238
      %v271 = vunpack.c.l.bf16 %v239
      %v272 = vunpack.c.l.bf16 %v240
      %v273 = vunpack.c.l.bf16 %v241
      %v274 = vunpack.c.l.bf16 %v242
      %v275 = vunpack.c.l.bf16 %v243
      %v276 = vunpack.c.l.bf16 %v244
      %v277 = vunpack.c.l.bf16 %v245
      %v278 = vunpack.c.l.bf16 %v246
      %v279 = vld [vmem:[%s1] sm:$0x1]
      %v281 = vlaneseq
      %v282 = vshrl.u32 %v281, 7
      %v283 = vsub.s32 0, %v282
      %v284 = vrot.slane %v279, %v283
      %v286 = vmul.f32 %v247, %v284
      %v287 = vmul.f32 %v248, %v284
      %v288 = vmul.f32 %v249, %v284
      %v289 = vmul.f32 %v250, %v284
      %v290 = vmul.f32 %v251, %v284
      %v291 = vmul.f32 %v252, %v284
      %v292 = vmul.f32 %v253, %v284
      %v293 = vmul.f32 %v254, %v284
      %v294 = vmul.f32 %v255, %v284
      %v295 = vmul.f32 %v256, %v284
      %v296 = vmul.f32 %v257, %v284
      %v297 = vmul.f32 %v258, %v284
      %v298 = vmul.f32 %v259, %v284
      %v299 = vmul.f32 %v260, %v284
      %v300 = vmul.f32 %v261, %v284
      %v301 = vmul.f32 %v262, %v284
      %v302 = vmul.f32 %v263, %v284
      %v303 = vmul.f32 %v264, %v284
      %v304 = vmul.f32 %v265, %v284
      %v305 = vmul.f32 %v266, %v284
      %v306 = vmul.f32 %v267, %v284
      %v307 = vmul.f32 %v268, %v284
      %v308 = vmul.f32 %v269, %v284
      %v309 = vmul.f32 %v270, %v284
      %v310 = vmul.f32 %v271, %v284
      %v311 = vmul.f32 %v272, %v284
      %v312 = vmul.f32 %v273, %v284
      %v313 = vmul.f32 %v274, %v284
      %v314 = vmul.f32 %v275, %v284
      %v315 = vmul.f32 %v276, %v284
      %v316 = vmul.f32 %v277, %v284
      %v317 = vmul.f32 %v278, %v284
      %v318 = vld [vmem:[%s2] sm:$0x1]
      %v320 = vlaneseq
      %v321 = vshrl.u32 %v320, 7
      %v322 = vsub.s32 0, %v321
      %v323 = vrot.slane %v318, %v322
      %v325 = vadd.f32 %v286, %v323
      %v326 = vadd.f32 %v287, %v323
      %v327 = vadd.f32 %v288, %v323
      %v328 = vadd.f32 %v289, %v323
      %v329 = vadd.f32 %v290, %v323
      %v330 = vadd.f32 %v291, %v323
      %v331 = vadd.f32 %v292, %v323
      %v332 = vadd.f32 %v293, %v323
      %v333 = vadd.f32 %v294, %v323
      %v334 = vadd.f32 %v295, %v323
      %v335 = vadd.f32 %v296, %v323
      %v336 = vadd.f32 %v297, %v323
      %v337 = vadd.f32 %v298, %v323
      %v338 = vadd.f32 %v299, %v323
      %v339 = vadd.f32 %v300, %v323
      %v340 = vadd.f32 %v301, %v323
      %v341 = vadd.f32 %v302, %v323
      %v342 = vadd.f32 %v303, %v323
      %v343 = vadd.f32 %v304, %v323
      %v344 = vadd.f32 %v305, %v323
      %v345 = vadd.f32 %v306, %v323
      %v346 = vadd.f32 %v307, %v323
      %v347 = vadd.f32 %v308, %v323
      %v348 = vadd.f32 %v309, %v323
      %v349 = vadd.f32 %v310, %v323
      %v350 = vadd.f32 %v311, %v323
      %v351 = vadd.f32 %v312, %v323
      %v352 = vadd.f32 %v313, %v323
      %v353 = vadd.f32 %v314, %v323
      %v354 = vadd.f32 %v315, %v323
      %v355 = vadd.f32 %v316, %v323
      %v356 = vadd.f32 %v317, %v323
      %v357 = vmax.f32 %v325, 0.0
      %v358 = vmax.f32 %v326, 0.0
      %v359 = vmax.f32 %v327, 0.0
      %v360 = vmax.f32 %v328, 0.0
      %v361 = vmax.f32 %v329, 0.0
      %v362 = vmax.f32 %v330, 0.0
      %v363 = vmax.f32 %v331, 0.0
      %v364 = vmax.f32 %v332, 0.0
      %v365 = vmax.f32 %v333, 0.0
      %v366 = vmax.f32 %v334, 0.0
      %v367 = vmax.f32 %v335, 0.0
      %v368 = vmax.f32 %v336, 0.0
      %v369 = vmax.f32 %v337, 0.0
      %v370 = vmax.f32 %v338, 0.0
      %v371 = vmax.f32 %v339, 0.0
      %v372 = vmax.f32 %v340, 0.0
      %v373 = vmax.f32 %v341, 0.0
      %v374 = vmax.f32 %v342, 0.0
      %v375 = vmax.f32 %v343, 0.0
      %v376 = vmax.f32 %v344, 0.0
      %v377 = vmax.f32 %v345, 0.0
      %v378 = vmax.f32 %v346, 0.0
      %v379 = vmax.f32 %v347, 0.0
      %v380 = vmax.f32 %v348, 0.0
      %v381 = vmax.f32 %v349, 0.0
      %v382 = vmax.f32 %v350, 0.0
      %v383 = vmax.f32 %v351, 0.0
      %v384 = vmax.f32 %v352, 0.0
      %v385 = vmax.f32 %v353, 0.0
      %v386 = vmax.f32 %v354, 0.0
      %v387 = vmax.f32 %v355, 0.0
      %v388 = vmax.f32 %v356, 0.0
      %v389 = vpack.c.bf16 %v358, %v357
      %v390 = vpack.c.bf16 %v360, %v359
      %v391 = vpack.c.bf16 %v362, %v361
      %v392 = vpack.c.bf16 %v364, %v363
      %v393 = vpack.c.bf16 %v366, %v365
      %v394 = vpack.c.bf16 %v368, %v367
      %v395 = vpack.c.bf16 %v370, %v369
      %v396 = vpack.c.bf16 %v372, %v371
      %v397 = vpack.c.bf16 %v374, %v373
      %v398 = vpack.c.bf16 %v376, %v375
      %v399 = vpack.c.bf16 %v378, %v377
      %v400 = vpack.c.bf16 %v380, %v379
      %v401 = vpack.c.bf16 %v382, %v381
      %v402 = vpack.c.bf16 %v384, %v383
      %v403 = vpack.c.bf16 %v386, %v385
      %v404 = vpack.c.bf16 %v388, %v387
      %v421 = vunpack.c.l.b16 %v389
      %v422 = vunpack.c.h.b16 %v389
      %v423 = vunpack.c.l.b16 %v390
      %v424 = vunpack.c.h.b16 %v390
      %v425 = vunpack.c.l.b16 %v391
      %v426 = vunpack.c.h.b16 %v391
      %v427 = vunpack.c.l.b16 %v392
      %v428 = vunpack.c.h.b16 %v392
      %v429 = vunpack.c.l.b16 %v393
      %v430 = vunpack.c.h.b16 %v393
      %v431 = vunpack.c.l.b16 %v394
      %v432 = vunpack.c.h.b16 %v394
      %v433 = vunpack.c.l.b16 %v395
      %v434 = vunpack.c.h.b16 %v395
      %v435 = vunpack.c.l.b16 %v396
      %v436 = vunpack.c.h.b16 %v396
      %v437 = vunpack.c.l.b16 %v397
      %v438 = vunpack.c.h.b16 %v397
      %v439 = vunpack.c.l.b16 %v398
      %v440 = vunpack.c.h.b16 %v398
      %v441 = vunpack.c.l.b16 %v399
      %v442 = vunpack.c.h.b16 %v399
      %v443 = vunpack.c.l.b16 %v400
      %v444 = vunpack.c.h.b16 %v400
      %v445 = vunpack.c.l.b16 %v401
      %v446 = vunpack.c.h.b16 %v401
      %v447 = vunpack.c.l.b16 %v402
      %v448 = vunpack.c.h.b16 %v402
      %v449 = vunpack.c.l.b16 %v403
      %v450 = vunpack.c.h.b16 %v403
      %v451 = vunpack.c.l.b16 %v404
      %v452 = vunpack.c.h.b16 %v404
      %v453 = vpack.c.b16 %v421, %v421
      %v454 = vpack.c.b16 %v422, %v422
      %v455 = vpack.c.b16 %v423, %v423
      %v456 = vpack.c.b16 %v424, %v424
      %v457 = vpack.c.b16 %v425, %v425
      %v458 = vpack.c.b16 %v426, %v426
      %v459 = vpack.c.b16 %v427, %v427
      %v460 = vpack.c.b16 %v428, %v428
      %v461 = vpack.c.b16 %v429, %v429
      %v462 = vpack.c.b16 %v430, %v430
      %v463 = vpack.c.b16 %v431, %v431
      %v464 = vpack.c.b16 %v432, %v432
      %v465 = vpack.c.b16 %v433, %v433
      %v466 = vpack.c.b16 %v434, %v434
      %v467 = vpack.c.b16 %v435, %v435
      %v468 = vpack.c.b16 %v436, %v436
      %v469 = vpack.c.b16 %v437, %v437
      %v470 = vpack.c.b16 %v438, %v438
      %v471 = vpack.c.b16 %v439, %v439
      %v472 = vpack.c.b16 %v440, %v440
      %v473 = vpack.c.b16 %v441, %v441
      %v474 = vpack.c.b16 %v442, %v442
      %v475 = vpack.c.b16 %v443, %v443
      %v476 = vpack.c.b16 %v444, %v444
      %v477 = vpack.c.b16 %v445, %v445
      %v478 = vpack.c.b16 %v446, %v446
      %v479 = vpack.c.b16 %v447, %v447
      %v480 = vpack.c.b16 %v448, %v448
      %v481 = vpack.c.b16 %v449, %v449
      %v482 = vpack.c.b16 %v450, %v450
      %v483 = vpack.c.b16 %v451, %v451
      %v484 = vpack.c.b16 %v452, %v452
      %517 = vst [vmem:[%s213] sm:$0xf] %v453
      %518 = vst [vmem:[%s213 + $0x4] sm:$0xf] %v454
      %519 = vst [vmem:[%s213 + $0x8] sm:$0xf] %v455
      %520 = vst [vmem:[%s213 + $0xc] sm:$0xf] %v456
      %521 = vst [vmem:[%s213 + $0x10] sm:$0xf] %v457
      %522 = vst [vmem:[%s213 + $0x14] sm:$0xf] %v458
      %523 = vst [vmem:[%s213 + $0x18] sm:$0xf] %v459
      %524 = vst [vmem:[%s213 + $0x1c] sm:$0xf] %v460
      %525 = vst [vmem:[%s213 + $0x20] sm:$0xf] %v461
      %526 = vst [vmem:[%s213 + $0x24] sm:$0xf] %v462
      %527 = vst [vmem:[%s213 + $0x28] sm:$0xf] %v463
      %528 = vst [vmem:[%s213 + $0x2c] sm:$0xf] %v464
      %529 = vst [vmem:[%s213 + $0x30] sm:$0xf] %v465
      %530 = vst [vmem:[%s213 + $0x34] sm:$0xf] %v466
      %531 = vst [vmem:[%s213 + $0x38] sm:$0xf] %v467
      %532 = vst [vmem:[%s213 + $0x3c] sm:$0xf] %v468
      %533 = vst [vmem:[%s213 + $0x40] sm:$0xf] %v469
      %534 = vst [vmem:[%s213 + $0x44] sm:$0xf] %v470
      %535 = vst [vmem:[%s213 + $0x48] sm:$0xf] %v471
      %536 = vst [vmem:[%s213 + $0x4c] sm:$0xf] %v472
      %537 = vst [vmem:[%s213 + $0x50] sm:$0xf] %v473
      %538 = vst [vmem:[%s213 + $0x54] sm:$0xf] %v474
      %539 = vst [vmem:[%s213 + $0x58] sm:$0xf] %v475
      %540 = vst [vmem:[%s213 + $0x5c] sm:$0xf] %v476
      %541 = vst [vmem:[%s213 + $0x60] sm:$0xf] %v477
      %542 = vst [vmem:[%s213 + $0x64] sm:$0xf] %v478
      %543 = vst [vmem:[%s213 + $0x68] sm:$0xf] %v479
      %544 = vst [vmem:[%s213 + $0x6c] sm:$0xf] %v480
      %545 = vst [vmem:[%s213 + $0x70] sm:$0xf] %v481
      %546 = vst [vmem:[%s213 + $0x74] sm:$0xf] %v482
      %547 = vst [vmem:[%s213 + $0x78] sm:$0xf] %v483
      %548 = vst [vmem:[%s213 + $0x7c] sm:$0xf] %v484
      %s549 = smul.u32 16, %s19
      %p550 = scmp.lt.s32.totalorder %s18, 1
      %s551 = scalar_select %p550, %s18, 1
      %p552 = scmp.lt.s32.totalorder %s549, 15
      %s553 = scalar_select %p552, %s549, 15
      %s554 = smul.addr %s553, 2
      %s555 = smul.addr %s551, 32
      %s556 = sadd.s32 %s554, %s555
      %s557 = smul.addr %s556, 4
      %s558 = scalar_lea.vmem %s3, %s557
      // Predicated region
      $region33: #{conv_block_forward.5} parent=31 // pred_check
        %p559 = pneg %p116
      $region34: #{conv_block_forward.5} parent=31 // pred_check_branch
        %561 = sbr.rel (%p559) target = $region36
      $region35: #{conv_block_forward.5} parent=31 // pred_region
        %s562 = smul.u32 16, %s19
      $region36: #{conv_block_forward.5} parent=31 // pred_fallthru
        _
    $region32: #{conv_block_forward.5} parent=5 // pred_fallthru
      _
    %p563 = scmp.le.s32.totalorder 2, %s9
    // Predicated region
    $region37: #{conv_block_forward.5} parent=5 // pred_check
      %p564 = pneg %p563
    $region38: #{conv_block_forward.5} parent=5 // pred_check_branch
      %566 = sbr.rel (%p564) target = $region40
    $region39: #{conv_block_forward.5} parent=5 // pred_region
      %s567 = ssub.s32 %s9, 2
      // Predicated region
      $region41: #{conv_block_forward.5} parent=39 // pred_check
        %p568 = pneg %p122
      $region42: #{conv_block_forward.5} parent=39 // pred_check_branch
        %570 = sbr.rel (%p568) target = $region44
      $region43: #{conv_block_forward.5} parent=39 // pred_region
        %s571 = smul.u32 16, %s21
        %p572 = scmp.lt.s32.totalorder %s20, 1
        %s573 = scalar_select %p572, %s20, 1
        %p574 = scmp.lt.s32.totalorder %s571, 15
        %s575 = scalar_select %p574, %s571, 15
        %s576 = smul.addr %s575, 2
        %s577 = smul.addr %s573, 32
        %s578 = sadd.s32 %s576, %s577
        %s579 = smul.addr %s578, 4
        %s580 = scalar_lea.vmem %s3, %s579
      $region44: #{conv_block_forward.5} parent=39 // pred_fallthru
        _
    $region40: #{conv_block_forward.5} parent=5 // pred_fallthru
      _
  $region6: #{conv_block_forward.5} parent=0 // loop_footer
    %s13 = sadd.s32 1, %s9
  $region7: #{conv_block_forward.5} parent=0 // loop_footer_branch
    %8 = sbr.rel target = $region3
  $region8: #{conv_block_forward.5} parent=0 // loop_exit
    _

// kernel: conv_block_forward.4
$region0: #{conv_block_forward.4}
  #allocation0 [shape = 'u32[]', space=smem, size = 0x4, offset = 0x4, fixed_abs, tag = 'smem constant byte address 0x4 - core index']
  #allocation1 [shape = 'u32[144,128]{1,0:T(1,128)}', space=vmem, size = 0x12000, scoped, tag = 'internal scratch']
  #allocation2 [shape = 'f32[512,128]{1,0:T(8,128)}', space=vmem, size = 0x40000, scoped, tag = 'scratch operand']
  %s0 = inlined_call_operand.vmem [shape: bf16[2,18,32,128], index: 0, kind: input, shape index: {}]
  %s1 = inlined_call_operand.vmem [shape: bf16[3,3,128,128], index: 1, kind: input, shape index: {}]
  %s2 = inlined_call_operand.vmem [shape: f32[1,128], index: 2, kind: input, shape index: {}]
  %s3 = inlined_call_operand.vmem [shape: bf16[2,16,16,128], index: 3, kind: output, shape index: {0}]
  %s4 = inlined_call_operand.vmem [shape: f32[2,1,128], index: 4, kind: output, shape index: {1}]
  %s5 = inlined_call_operand.vmem [shape: f32[2,1,128], index: 5, kind: output, shape index: {2}]
  %6 = xla_tuple %s3, %s4, %s5
  %s7 = sld [smem:[#allocation0]]
  $region61: #{conv_block_forward.4} parent=0
    _
  %s9 = ssub.s32 1, %s7
  %s10 = scalar_select 0, %s9, %s7
  loop: start=0, step=1, limit=4
  $region2: #{conv_block_forward.4} parent=0 // loop_pre_header
    _
  $region3: #{conv_block_forward.4} parent=0 // loop_header
    %s12 = sphi 0, %s16
    %p13 = scmp.ge.s32.totalorder %s12, 4
    %s19 = sphi 0, %s31
    %s20 = sphi 0, %s27
    %s21 = sphi 0, %s19
    %s22 = sphi 0, %s20
    %s23 = sphi 0, %s21
    %s24 = sphi 0, %s22
    %s34 = sphi 0, %s36
    %s37 = sphi 0, %s34
    %s38 = sphi 0, %s37
    %s54 = sphi 0, %s38
    %s58 = sphi 0, %s58
    %s60 = sphi 0, %s58
    %s61 = sphi 0, %s60
    %s75 = sphi 0, %s61
    %s79 = sphi 0, %s79
    %s81 = sphi 0, %s79
    %s82 = sphi 0, %s81
    %s96 = sphi 0, %s82
    %s104 = sphi 0, %s106
    %s107 = sphi 0, %s104
    %s108 = sphi 0, %s107
    %s124 = sphi 0, %s108
    %s132 = sphi 0, %s134
    %s135 = sphi 0, %s132
    %s136 = sphi 0, %s135
    %s152 = sphi 0, %s136
    %s160 = sphi 0, %s162
    %s163 = sphi 0, %s160
    %s164 = sphi 0, %s163
    %s180 = sphi 0, %s164
  $region4: #{conv_block_forward.4} parent=0 // loop_header_branch
    %15 = sbr.rel (%p13) target = $region8
  $region5: #{conv_block_forward.4} parent=0 // loop_body
    %s17 = ssub.s32 %s12, 1
    %s18 = ssub.s32 %s12, 2
    %s25 = sadd.s32 1, %s20
    %p26 = scmp.ge.s32.totalorder %s25, 1
    %s27 = scalar_select %p26, 0, %s25
    %s28 = sadd.s32 1, %s19
    %s29 = scalar_select %p26, %s28, %s19
    %p30 = scmp.ge.s32.totalorder %s29, 2
    %s31 = scalar_select %p30, 0, %s29
    %s32 = ssub.s32 %s19, %s31
    %p33 = scmp.eq.s32.totalorder %s32, 0
    %s35 = sadd.s32 %s34, 1
    %s36 = scalar_select %p33, %s34, %s35
    %p39 = pneg %p33
    %p40 = scmp.eq.s32.totalorder %s12, 1
    %p41 = por %p39, %p40
    %p42 = scmp.ne.s32.totalorder %s34, %s37
    %p43 = scmp.eq.s32.totalorder %s12, 0
    %p44 = por %p42, %p43
    %p45 = scmp.ne.s32.totalorder %s34, %s37
    %p46 = scmp.eq.s32.totalorder %s17, 1
    %p47 = por %p45, %p46
    %p48 = scmp.ne.s32.totalorder %s37, %s38
    %p49 = scmp.eq.s32.totalorder %s17, 0
    %p50 = por %p48, %p49
    %p51 = scmp.ne.s32.totalorder %s37, %s38
    %p52 = scmp.eq.s32.totalorder %s18, 1
    %p53 = por %p51, %p52
    %p55 = scmp.ne.s32.totalorder %s38, %s54
    %p56 = scmp.eq.s32.totalorder %s18, 0
    %p57 = por %p55, %p56
    %s59 = sadd.s32 %s58, 1
    %p62 = scmp.eq.s32.totalorder %s12, 1
    %p63 = scmp.ne.s32.totalorder %s58, %s60
    %p64 = scmp.eq.s32.totalorder %s12, 0
    %p65 = por %p63, %p64
    %p66 = scmp.ne.s32.totalorder %s58, %s60
    %p67 = scmp.eq.s32.totalorder %s17, 1
    %p68 = por %p66, %p67
    %p69 = scmp.ne.s32.totalorder %s60, %s61
    %p70 = scmp.eq.s32.totalorder %s17, 0
    %p71 = por %p69, %p70
    %p72 = scmp.ne.s32.totalorder %s60, %s61
    %p73 = scmp.eq.s32.totalorder %s18, 1
    %p74 = por %p72, %p73
    %p76 = scmp.ne.s32.totalorder %s61, %s75
    %p77 = scmp.eq.s32.totalorder %s18, 0
    %p78 = por %p76, %p77
    %s80 = sadd.s32 %s79, 1
    %p83 = scmp.eq.s32.totalorder %s12, 1
    %p84 = scmp.ne.s32.totalorder %s79, %s81
    %p85 = scmp.eq.s32.totalorder %s12, 0
    %p86 = por %p84, %p85
    %p87 = scmp.ne.s32.totalorder %s79, %s81
    %p88 = scmp.eq.s32.totalorder %s17, 1
    %p89 = por %p87, %p88
    %p90 = scmp.ne.s32.totalorder %s81, %s82
    %p91 = scmp.eq.s32.totalorder %s17, 0
    %p92 = por %p90, %p91
    %p93 = scmp.ne.s32.totalorder %s81, %s82
    %p94 = scmp.eq.s32.totalorder %s18, 1
    %p95 = por %p93, %p94
    %p97 = scmp.ne.s32.totalorder %s82, %s96
    %p98 = scmp.eq.s32.totalorder %s18, 0
    %p99 = por %p97, %p98
    %s100 = ssub.s32 %s19, %s31
    %s101 = ssub.s32 %s20, %s27
    %s102 = sor.u32 %s100, %s101
    %p103 = scmp.eq.s32.totalorder %s102, 0
    %s105 = sadd.s32 %s104, 1
    %s106 = scalar_select %p103, %s104, %s105
    %p109 = pneg %p103
    %p110 = scmp.eq.s32.totalorder %s12, 1
    %p111 = por %p109, %p110
    %p112 = scmp.ne.s32.totalorder %s104, %s107
    %p113 = scmp.eq.s32.totalorder %s12, 0
    %p114 = por %p112, %p113
    %p115 = scmp.ne.s32.totalorder %s104, %s107
    %p116 = scmp.eq.s32.totalorder %s17, 1
    %p117 = por %p115, %p116
    %p118 = scmp.ne.s32.totalorder %s107, %s108
    %p119 = scmp.eq.s32.totalorder %s17, 0
    %p120 = por %p118, %p119
    %p121 = scmp.ne.s32.totalorder %s107, %s108
    %p122 = scmp.eq.s32.totalorder %s18, 1
    %p123 = por %p121, %p122
    %p125 = scmp.ne.s32.totalorder %s108, %s124
    %p126 = scmp.eq.s32.totalorder %s18, 0
    %p127 = por %p125, %p126
    %s128 = sadd.s32 %s19, %s20
    %s129 = sadd.s32 %s31, %s27
    %s130 = ssub.s32 %s128, %s129
    %p131 = scmp.eq.s32.totalorder %s130, 0
    %s133 = sadd.s32 %s132, 1
    %s134 = scalar_select %p131, %s132, %s133
    %p137 = pneg %p131
    %p138 = scmp.eq.s32.totalorder %s12, 1
    %p139 = por %p137, %p138
    %p140 = scmp.ne.s32.totalorder %s132, %s135
    %p141 = scmp.eq.s32.totalorder %s12, 0
    %p142 = por %p140, %p141
    %p143 = scmp.ne.s32.totalorder %s132, %s135
    %p144 = scmp.eq.s32.totalorder %s17, 1
    %p145 = por %p143, %p144
    %p146 = scmp.ne.s32.totalorder %s135, %s136
    %p147 = scmp.eq.s32.totalorder %s17, 0
    %p148 = por %p146, %p147
    %p149 = scmp.ne.s32.totalorder %s135, %s136
    %p150 = scmp.eq.s32.totalorder %s18, 1
    %p151 = por %p149, %p150
    %p153 = scmp.ne.s32.totalorder %s136, %s152
    %p154 = scmp.eq.s32.totalorder %s18, 0
    %p155 = por %p153, %p154
    %s156 = sadd.s32 %s19, %s20
    %s157 = sadd.s32 %s31, %s27
    %s158 = ssub.s32 %s156, %s157
    %p159 = scmp.eq.s32.totalorder %s158, 0
    %s161 = sadd.s32 %s160, 1
    %s162 = scalar_select %p159, %s160, %s161
    %p165 = pneg %p159
    %p166 = scmp.eq.s32.totalorder %s12, 1
    %p167 = por %p165, %p166
    %p168 = scmp.ne.s32.totalorder %s160, %s163
    %p169 = scmp.eq.s32.totalorder %s12, 0
    %p170 = por %p168, %p169
    %p171 = scmp.ne.s32.totalorder %s160, %s163
    %p172 = scmp.eq.s32.totalorder %s17, 1
    %p173 = por %p171, %p172
    %p174 = scmp.ne.s32.totalorder %s163, %s164
    %p175 = scmp.eq.s32.totalorder %s17, 0
    %p176 = por %p174, %p175
    %p177 = scmp.ne.s32.totalorder %s163, %s164
    %p178 = scmp.eq.s32.totalorder %s18, 1
    %p179 = por %p177, %p178
    %p181 = scmp.ne.s32.totalorder %s164, %s180
    %p182 = scmp.eq.s32.totalorder %s18, 0
    %p183 = por %p181, %p182
    %p184 = scmp.le.s32.totalorder 1, %s12
    %p185 = scmp.lt.s32.totalorder %s12, 3
    %p186 = pnand %p184, %p185
    %p187 = pneg %p186
    // Predicated region
    $region9: #{conv_block_forward.4} parent=5 // pred_check
      _
    $region10: #{conv_block_forward.4} parent=5 // pred_check_branch
      %189 = sbr.rel (%p186) target = $region12
    $region11: #{conv_block_forward.4} parent=5 // pred_region
      %s190 = ssub.s32 %s12, 1
      // Predicated region
      $region13: #{conv_block_forward.4} parent=11 // pred_check
        %p191 = pneg %p71
      $region14: #{conv_block_forward.4} parent=11 // pred_check_branch
        %193 = sbr.rel (%p191) target = $region16
      $region15: #{conv_block_forward.4} parent=11 // pred_region
        _
      $region16: #{conv_block_forward.4} parent=11 // pred_fallthru
        _
      // Predicated region
      $region17: #{conv_block_forward.4} parent=11 // pred_check
        %p194 = pneg %p92
      $region18: #{conv_block_forward.4} parent=11 // pred_check_branch
        %196 = sbr.rel (%p194) target = $region20
      $region19: #{conv_block_forward.4} parent=11 // pred_region
        _
      $region20: #{conv_block_forward.4} parent=11 // pred_fallthru
        _
    $region12: #{conv_block_forward.4} parent=5 // pred_fallthru
      _
    %p197 = scmp.lt.s32.totalorder %s12, 2
    // Predicated region
    $region21: #{conv_block_forward.4} parent=5 // pred_check
      %p198 = pneg %p197
    $region22: #{conv_block_forward.4} parent=5 // pred_check_branch
      %200 = sbr.rel (%p198) target = $region24
    $region23: #{conv_block_forward.4} parent=5 // pred_region
      // Predicated region
      $region25: #{conv_block_forward.4} parent=23 // pred_check
        %p201 = pneg %p44
      $region26: #{conv_block_forward.4} parent=23 // pred_check_branch
        %203 = sbr.rel (%p201) target = $region28
      $region27: #{conv_block_forward.4} parent=23 // pred_region
        %p204 = scmp.lt.s32.totalorder %s19, 1
        %s205 = scalar_select %p204, %s19, 1
        %s206 = smul.addr %s205, 72
        %s207 = smul.addr %s206, 4
        %s208 = scalar_lea.vmem %s0, %s207
      $region28: #{conv_block_forward.4} parent=23 // pred_fallthru
        _
    $region24: #{conv_block_forward.4} parent=5 // pred_fallthru
      _
    %p209 = scmp.le.s32.totalorder 1, %s12
    %p210 = scmp.lt.s32.totalorder %s12, 3
    %p211 = pnand %p209, %p210
    %p212 = pneg %p211
    // Predicated region
    $region29: #{conv_block_forward.4} parent=5 // pred_check
      _
    $region30: #{conv_block_forward.4} parent=5 // pred_check_branch
      %214 = sbr.rel (%p211) target = $region32
    $region31: #{conv_block_forward.4} parent=5 // pred_region
      %s215 = ssub.s32 %s12, 1
      %p216 = scmp.lt.s32.totalorder %s21, 1
      %s217 = scalar_select %p216, %s21, 1
      %s218 = smul.addr %s217, 72
      %s219 = smul.addr %s218, 4
      %s220 = scalar_lea.vmem %s0, %s219
      %p221 = pneg %p50
      %p222 = pneg %p47
      %p223 = pneg %p71
      %p224 = pneg %p68
      %p225 = pneg %p92
      %p226 = pneg %p89
      %p227 = pneg %p120
      %p228 = pneg %p117
      %s229 = smul.u32 16, %s22
      %p230 = scmp.lt.s32.totalorder %s21, 1
      %s231 = scalar_select %p230, %s21, 1
      %p232 = scmp.lt.s32.totalorder %s229, 15
      %s233 = scalar_select %p232, %s229, 15
      %s234 = smul.addr %s233, 2
      %s235 = smul.addr %s231, 32
      %s236 = sadd.s32 %s234, %s235
      %s237 = smul.addr %s236, 4
      %s238 = scalar_lea.vmem %s3, %s237
      %p239 = pneg %p148
      %p240 = pneg %p145
      %s241 = sadd.s32 %s21, %s22
      %p242 = scmp.lt.s32.totalorder %s241, 1
      %s243 = scalar_select %p242, %s241, 1
      %s244 = scalar_lea.vmem %s4, %s243
      %p245 = pneg %p176
      %p246 = pneg %p173
      %s247 = sadd.s32 %s21, %s22
      %p248 = scmp.lt.s32.totalorder %s247, 1
      %s249 = scalar_select %p248, %s247, 1
      %s250 = scalar_lea.vmem %s5, %s249
      %p251 = scmp.lt.s32.totalorder %s21, 1
      %s252 = scalar_select %p251, %s21, 1
      %s253 = smul.addr %s252, 72
      %s254 = smul.addr %s253, 4
      %s255 = scalar_lea.vmem %s0, %s254
      %s256 = smul.u32 16, %s22
      %p257 = scmp.lt.s32.totalorder %s21, 1
      %s258 = scalar_select %p257, %s21, 1
      %p259 = scmp.lt.s32.totalorder %s256, 15
      %s260 = scalar_select %p259, %s256, 15
      %s261 = smul.addr %s260, 2
      %s262 = smul.addr %s258, 32
      %s263 = sadd.s32 %s261, %s262
      %s264 = smul.addr %s263, 4
      %s265 = scalar_lea.vmem %s3, %s264
      %s266 = smul.u32 16, %s22
      %s267 = sadd.s32 %s21, %s22
      %p268 = scmp.lt.s32.totalorder %s267, 1
      %s269 = scalar_select %p268, %s267, 1
      %s270 = scalar_lea.vmem %s4, %s269
      %s271 = sadd.s32 %s21, %s22
      %s272 = sadd.s32 %s21, %s22
      %p273 = scmp.lt.s32.totalorder %s272, 1
      %s274 = scalar_select %p273, %s272, 1
      %s275 = scalar_lea.vmem %s5, %s274
      %s276 = sadd.s32 %s21, %s22
      %s278 = smul.u32 %s22, 16
      %s279 = smul.u32 %s278, 4
      %s280 = smul.addr %s279, 4
      %s281 = scalar_lea.vmem %s255, %s280
      %v282 = vld [vmem:[%s281] sm:$0xf]
      %v283 = vld [vmem:[%s281 + $0x4] sm:$0xf]
      %v284 = vld [vmem:[%s281 + $0x8] sm:$0xf]
      %v285 = vld [vmem:[%s281 + $0xc] sm:$0xf]
      %v286 = vld [vmem:[%s281 + $0x10] sm:$0xf]
      %v287 = vld [vmem:[%s281 + $0x14] sm:$0xf]
      %v288 = vld [vmem:[%s281 + $0x18] sm:$0xf]
      %v289 = vld [vmem:[%s281 + $0x1c] sm:$0xf]
      %v290 = vld [vmem:[%s281 + $0x20] sm:$0xf]
      %v291 = vld [vmem:[%s281 + $0x24] sm:$0xf]
      %v292 = vld [vmem:[%s281 + $0x28] sm:$0xf]
      %v293 = vld [vmem:[%s281 + $0x2c] sm:$0xf]
      %v294 = vld [vmem:[%s281 + $0x30] sm:$0xf]
      %v295 = vld [vmem:[%s281 + $0x34] sm:$0xf]
      %v296 = vld [vmem:[%s281 + $0x38] sm:$0xf]
      %v297 = vld [vmem:[%s281 + $0x3c] sm:$0xf]
      %v298 = vld [vmem:[%s281 + $0x40] sm:$0xf]
      %v299 = vld [vmem:[%s281 + $0x44] sm:$0xf]
      %v300 = vld [vmem:[%s281 + $0x48] sm:$0xf]
      %v301 = vld [vmem:[%s281 + $0x4c] sm:$0xf]
      %v302 = vld [vmem:[%s281 + $0x50] sm:$0xf]
      %v303 = vld [vmem:[%s281 + $0x54] sm:$0xf]
      %v304 = vld [vmem:[%s281 + $0x58] sm:$0xf]
      %v305 = vld [vmem:[%s281 + $0x5c] sm:$0xf]
      %v306 = vld [vmem:[%s281 + $0x60] sm:$0xf]
      %v307 = vld [vmem:[%s281 + $0x64] sm:$0xf]
      %v308 = vld [vmem:[%s281 + $0x68] sm:$0xf]
      %v309 = vld [vmem:[%s281 + $0x6c] sm:$0xf]
      %v310 = vld [vmem:[%s281 + $0x70] sm:$0xf]
      %v311 = vld [vmem:[%s281 + $0x74] sm:$0xf]
      %v312 = vld [vmem:[%s281 + $0x78] sm:$0xf]
      %v313 = vld [vmem:[%s281 + $0x7c] sm:$0xf]
      %v314 = vld [vmem:[%s281 + $0x80] sm:$0xf]
      %v315 = vld [vmem:[%s281 + $0x84] sm:$0xf]
      %v316 = vld [vmem:[%s281 + $0x88] sm:$0xf]
      %v317 = vld [vmem:[%s281 + $0x8c] sm:$0xf]
      %v318 = vld [vmem:[%s281 + $0x90] sm:$0xf]
      %v319 = vld [vmem:[%s281 + $0x94] sm:$0xf]
      %v320 = vld [vmem:[%s281 + $0x98] sm:$0xf]
      %v321 = vld [vmem:[%s281 + $0x9c] sm:$0xf]
      %v322 = vld [vmem:[%s281 + $0xa0] sm:$0xf]
      %v323 = vld [vmem:[%s281 + $0xa4] sm:$0xf]
      %v324 = vld [vmem:[%s281 + $0xa8] sm:$0xf]
      %v325 = vld [vmem:[%s281 + $0xac] sm:$0xf]
      %v326 = vld [vmem:[%s281 + $0xb0] sm:$0xf]
      %v327 = vld [vmem:[%s281 + $0xb4] sm:$0xf]
      %v328 = vld [vmem:[%s281 + $0xb8] sm:$0xf]
      %v329 = vld [vmem:[%s281 + $0xbc] sm:$0xf]
      %v330 = vld [vmem:[%s281 + $0xc0] sm:$0xf]
      %v331 = vld [vmem:[%s281 + $0xc4] sm:$0xf]
      %v332 = vld [vmem:[%s281 + $0xc8] sm:$0xf]
      %v333 = vld [vmem:[%s281 + $0xcc] sm:$0xf]
      %v334 = vld [vmem:[%s281 + $0xd0] sm:$0xf]
      %v335 = vld [vmem:[%s281 + $0xd4] sm:$0xf]
      %v336 = vld [vmem:[%s281 + $0xd8] sm:$0xf]
      %v337 = vld [vmem:[%s281 + $0xdc] sm:$0xf]
      %v338 = vld [vmem:[%s281 + $0xe0] sm:$0xf]
      %v339 = vld [vmem:[%s281 + $0xe4] sm:$0xf]
      %v340 = vld [vmem:[%s281 + $0xe8] sm:$0xf]
      %v341 = vld [vmem:[%s281 + $0xec] sm:$0xf]
      %v342 = vld [vmem:[%s281 + $0xf0] sm:$0xf]
      %v343 = vld [vmem:[%s281 + $0xf4] sm:$0xf]
      %v344 = vld [vmem:[%s281 + $0xf8] sm:$0xf]
      %v345 = vld [vmem:[%s281 + $0xfc] sm:$0xf]
      %v346 = vld [vmem:[%s1] sm:$0xf]
      %v347 = vld [vmem:[%s1 + $0x4] sm:$0xf]
      %v348 = vld [vmem:[%s1 + $0x8] sm:$0xf]
      %v349 = vld [vmem:[%s1 + $0xc] sm:$0xf]
      %v350 = vld [vmem:[%s1 + $0x10] sm:$0xf]
      %v351 = vld [vmem:[%s1 + $0x14] sm:$0xf]
      %v352 = vld [vmem:[%s1 + $0x18] sm:$0xf]
      %v353 = vld [vmem:[%s1 + $0x1c] sm:$0xf]
      %v354 = vld [vmem:[%s1 + $0x20] sm:$0xf]
      %v355 = vld [vmem:[%s1 + $0x24] sm:$0xf]
      %v356 = vld [vmem:[%s1 + $0x28] sm:$0xf]
      %v357 = vld [vmem:[%s1 + $0x2c] sm:$0xf]
      %v358 = vld [vmem:[%s1 + $0x30] sm:$0xf]
      %v359 = vld [vmem:[%s1 + $0x34] sm:$0xf]
      %v360 = vld [vmem:[%s1 + $0x38] sm:$0xf]
      %v361 = vld [vmem:[%s1 + $0x3c] sm:$0xf]
      %s362 = scalar_lea.vmem %s1, 64
      %v363 = vld [vmem:[%s362] sm:$0xf]
      %v364 = vld [vmem:[%s362 + $0x4] sm:$0xf]
      %v365 = vld [vmem:[%s362 + $0x8] sm:$0xf]
      %v366 = vld [vmem:[%s362 + $0xc] sm:$0xf]
      %v367 = vld [vmem:[%s362 + $0x10] sm:$0xf]
      %v368 = vld [vmem:[%s362 + $0x14] sm:$0xf]
      %v369 = vld [vmem:[%s362 + $0x18] sm:$0xf]
      %v370 = vld [vmem:[%s362 + $0x1c] sm:$0xf]
      %v371 = vld [vmem:[%s362 + $0x20] sm:$0xf]
      %v372 = vld [vmem:[%s362 + $0x24] sm:$0xf]
      %v373 = vld [vmem:[%s362 + $0x28] sm:$0xf]
      %v374 = vld [vmem:[%s362 + $0x2c] sm:$0xf]
      %v375 = vld [vmem:[%s362 + $0x30] sm:$0xf]
      %v376 = vld [vmem:[%s362 + $0x34] sm:$0xf]
      %v377 = vld [vmem:[%s362 + $0x38] sm:$0xf]
      %v378 = vld [vmem:[%s362 + $0x3c] sm:$0xf]
      %v443 = vunpack.c.l.b16 %v282
      %v444 = vunpack.c.l.b16 %v283
      %v445 = vunpack.c.l.b16 %v284
      %v446 = vunpack.c.l.b16 %v285
      %v447 = vunpack.c.l.b16 %v286
      %v448 = vunpack.c.l.b16 %v287
      %v449 = vunpack.c.l.b16 %v288
      %v450 = vunpack.c.l.b16 %v289
      %v451 = vunpack.c.l.b16 %v290
      %v452 = vunpack.c.l.b16 %v291
      %v453 = vunpack.c.l.b16 %v292
      %v454 = vunpack.c.l.b16 %v293
      %v455 = vunpack.c.l.b16 %v294
      %v456 = vunpack.c.l.b16 %v295
      %v457 = vunpack.c.l.b16 %v296
      %v458 = vunpack.c.l.b16 %v297
      %v459 = vunpack.c.l.b16 %v298
      %v460 = vunpack.c.l.b16 %v299
      %v461 = vunpack.c.l.b16 %v300
      %v462 = vunpack.c.l.b16 %v301
      %v463 = vunpack.c.l.b16 %v302
      %v464 = vunpack.c.l.b16 %v303
      %v465 = vunpack.c.l.b16 %v304
      %v466 = vunpack.c.l.b16 %v305
      %v467 = vunpack.c.l.b16 %v306
      %v468 = vunpack.c.l.b16 %v307
      %v469 = vunpack.c.l.b16 %v308
      %v470 = vunpack.c.l.b16 %v309
      %v471 = vunpack.c.l.b16 %v310
      %v472 = vunpack.c.l.b16 %v311
      %v473 = vunpack.c.l.b16 %v312
      %v474 = vunpack.c.l.b16 %v313
      %v475 = vunpack.c.l.b16 %v314
      %v476 = vunpack.c.l.b16 %v315
      %v477 = vunpack.c.l.b16 %v316
      %v478 = vunpack.c.l.b16 %v317
      %v479 = vunpack.c.l.b16 %v318
      %v480 = vunpack.c.l.b16 %v319
      %v481 = vunpack.c.l.b16 %v320
      %v482 = vunpack.c.l.b16 %v321
      %v483 = vunpack.c.l.b16 %v322
      %v484 = vunpack.c.l.b16 %v323
      %v485 = vunpack.c.l.b16 %v324
      %v486 = vunpack.c.l.b16 %v325
      %v487 = vunpack.c.l.b16 %v326
      %v488 = vunpack.c.l.b16 %v327
      %v489 = vunpack.c.l.b16 %v328
      %v490 = vunpack.c.l.b16 %v329
      %v491 = vunpack.c.l.b16 %v330
      %v492 = vunpack.c.l.b16 %v331
      %v493 = vunpack.c.l.b16 %v332
      %v494 = vunpack.c.l.b16 %v333
      %v495 = vunpack.c.l.b16 %v334
      %v496 = vunpack.c.l.b16 %v335
      %v497 = vunpack.c.l.b16 %v336
      %v498 = vunpack.c.l.b16 %v337
      %v499 = vunpack.c.l.b16 %v338
      %v500 = vunpack.c.l.b16 %v339
      %v501 = vunpack.c.l.b16 %v340
      %v502 = vunpack.c.l.b16 %v341
      %v503 = vunpack.c.l.b16 %v342
      %v504 = vunpack.c.l.b16 %v343
      %v505 = vunpack.c.l.b16 %v344
      %v506 = vunpack.c.l.b16 %v345
      %v507 = vpack.c.b16 %v444, %v443
      %v508 = vpack.c.b16 %v446, %v445
      %v509 = vpack.c.b16 %v448, %v447
      %v510 = vpack.c.b16 %v450, %v449
      %v511 = vpack.c.b16 %v452, %v451
      %v512 = vpack.c.b16 %v454, %v453
      %v513 = vpack.c.b16 %v456, %v455
      %v514 = vpack.c.b16 %v458, %v457
      %v515 = vpack.c.b16 %v460, %v459
      %v516 = vpack.c.b16 %v462, %v461
      %v517 = vpack.c.b16 %v464, %v463
      %v518 = vpack.c.b16 %v466, %v465
      %v519 = vpack.c.b16 %v468, %v467
      %v520 = vpack.c.b16 %v470, %v469
      %v521 = vpack.c.b16 %v472, %v471
      %v522 = vpack.c.b16 %v474, %v473
      %v523 = vpack.c.b16 %v476, %v475
      %v524 = vpack.c.b16 %v478, %v477
      %v525 = vpack.c.b16 %v480, %v479
      %v526 = vpack.c.b16 %v482, %v481
      %v527 = vpack.c.b16 %v484, %v483
      %v528 = vpack.c.b16 %v486, %v485
      %v529 = vpack.c.b16 %v488, %v487
      %v530 = vpack.c.b16 %v490, %v489
      %v531 = vpack.c.b16 %v492, %v491
      %v532 = vpack.c.b16 %v494, %v493
      %v533 = vpack.c.b16 %v496, %v495
      %v534 = vpack.c.b16 %v498, %v497
      %v535 = vpack.c.b16 %v500, %v499
      %v536 = vpack.c.b16 %v502, %v501
      %v537 = vpack.c.b16 %v504, %v503
      %v538 = vpack.c.b16 %v506, %v505
      %v587 = vunpack.c.l.b16 %v363
      %v588 = vunpack.c.l.b16 %v364
      %v589 = vunpack.c.l.b16 %v365
      %v590 = vunpack.c.l.b16 %v366
      %v591 = vunpack.c.l.b16 %v367
      %v592 = vunpack.c.l.b16 %v368
      %v593 = vunpack.c.l.b16 %v369
      %v594 = vunpack.c.l.b16 %v370
      %v595 = vunpack.c.l.b16 %v371
      %v596 = vunpack.c.l.b16 %v372
      %v597 = vunpack.c.l.b16 %v373
      %v598 = vunpack.c.l.b16 %v374
      %v599 = vunpack.c.l.b16 %v375
      %v600 = vunpack.c.l.b16 %v376
      %v601 = vunpack.c.l.b16 %v377
      %v602 = vunpack.c.l.b16 %v378
      %v603 = vpack.c.b16 %v588, %v587
      %v604 = vpack.c.b16 %v590, %v589
      %v605 = vpack.c.b16 %v592, %v591
      %v606 = vpack.c.b16 %v594, %v593
      %v607 = vpack.c.b16 %v596, %v595
      %v608 = vpack.c.b16 %v598, %v597
      %v609 = vpack.c.b16 %v600, %v599
      %v610 = vpack.c.b16 %v602, %v601
      %619 = vmatprep.subr.bf16.mxu0 0
      %620 = vmatpush1.bf16.msra.mxu0 %v603
      %621 = vmatprep.subr.bf16.mxu0 0
      %622 = vmatpush1.bf16.msra.mxu0 %v604
      %623 = vmatprep.subr.bf16.mxu0 0
      %624 = vmatpush1.bf16.msra.mxu0 %v605
      %625 = vmatprep.subr.bf16.mxu0 0
      %626 = vmatpush1.bf16.msra.mxu0 %v606
      %627 = vmatprep.subr.bf16.mxu0 0
      %628 = vmatpush1.bf16.msra.mxu0 %v607
      %629 = vmatprep.subr.bf16.mxu0 0
      %630 = vmatpush1.bf16.msra.mxu0 %v608
      %631 = vmatprep.subr.bf16.mxu0 0
      %632 = vmatpush1.bf16.msra.mxu0 %v609
      %633 = vmatprep.subr.bf16.mxu0 0
      %634 = vmatpush1.bf16.msra.mxu0 %v610
      %635 = vmatprep.subr.bf16.mxu0 0
      %636 = vmatpush1.bf16.msra.mxu0 0
      %637 = vmatprep.subr.bf16.mxu0 0
      %638 = vmatpush1.bf16.msra.mxu0 0
      %639 = vmatprep.subr.bf16.mxu0 0
      %640 = vmatpush1.bf16.msra.mxu0 0
      %641 = vmatprep.subr.bf16.mxu0 0
      %642 = vmatpush1.bf16.msra.mxu0 0
      %643 = vmatprep.subr.bf16.mxu0 0
      %644 = vmatpush1.bf16.msra.mxu0 0
      %645 = vmatprep.subr.bf16.mxu0 0
      %646 = vmatpush1.bf16.msra.mxu0 0
      %647 = vmatprep.subr.bf16.mxu0 0
      %648 = vmatpush1.bf16.msra.mxu0 0
      %649 = vmatprep.subr.bf16.mxu0 0
      %650 = vmatpush1.bf16.msra.mxu0 0
      %651 = vmatprep.mubr.bf16.mxu0 0
      %652 = vmatmul.mubr.bf16.gmra.mrb[0].mxu0 %v507
      %v653 = vpop.f32.mrb[0].mxu0
      %v654 = vadd.f32 0.0, %v653
      %v655 = vpop.f32.mrb[0].mxu0
      %v656 = vpop.f32.mrb[0].mxu0
      %v657 = vadd.f32 0.0, %v656
      %v658 = vpop.f32.mrb[0].mxu0
      %659 = vmatprep.mubr.bf16.mxu0 0
      %660 = vmatmul.mubr.bf16.gmra.mrb[0].mxu0 %v508
      %v661 = vpop.f32.mrb[0].mxu0
      %v662 = vadd.f32 0.0, %v661
      %v663 = vpop.f32.mrb[0].mxu0
      %v664 = vpop.f32.mrb[0].mxu0
      %v665 = vadd.f32 0.0, %v664
      %v666 = vpop.f32.mrb[0].mxu0
      %667 = vmatprep.mubr.bf16.mxu0 0
      %668 = vmatmul.mubr.bf16.gmra.mrb[0].mxu0 %v509
      %v669 = vpop.f32.mrb[0].mxu0
      %v670 = vadd.f32 0.0, %v669
      %v671 = vpop.f32.mrb[0].mxu0
      %v672 = vpop.f32.mrb[0].mxu0
      %v673 = vadd.f32 0.0, %v672
      %v674 = vpop.f32.mrb[0].mxu0
      %675 = vmatprep.mubr.bf16.mxu0 0
      %676 = vmatmul.mubr.bf16.gmra.mrb[0].mxu0 %v510
      %v677 = vpop.f32.mrb[0].mxu0
      %v678 = vadd.f32 0.0, %v677
      %v679 = vpop.f32.mrb[0].mxu0
      %v680 = vpop.f32.mrb[0].mxu0
      %v681 = vadd.f32 0.0, %v680
      %v682 = vpop.f32.mrb[0].mxu0
      %683 = vmatprep.mubr.bf16.mxu0 0
      %684 = vmatmul.mubr.bf16.gmra.mrb[0].mxu0 %v511
      %v685 = vpop.f32.mrb[0].mxu0
      %v686 = vadd.f32 0.0, %v685
      %v687 = vpop.f32.mrb[0].mxu0
      %v688 = vpop.f32.mrb[0].mxu0
      %v689 = vadd.f32 0.0, %v688
      %v690 = vpop.f32.mrb[0].mxu0
      %691 = vmatprep.mubr.bf16.mxu0 0
      %692 = vmatmul.mubr.bf16.gmra.mrb[0].mxu0 %v512
      %v693 = vpop.f32.mrb[0].mxu0
      %v694 = vadd.f32 0.0, %v693
      %v695 = vpop.f32.mrb[0].mxu0
      %v696 = vpop.f32.mrb[0].mxu0
      %v697 = vadd.f32 0.0, %v696
      %v698 = vpop.f32.mrb[0].mxu0
      %699 = vmatprep.mubr.bf16.mxu0 0
      %700 = vmatmul.mubr.bf16.gmra.mrb[0].mxu0 %v513
      %v701 = vpop.f32.mrb[0].mxu0
      %v702 = vadd.f32 0.0, %v701
      %v703 = vpop.f32.mrb[0].mxu0
      %v704 = vpop.f32.mrb[0].mxu0
      %v705 = vadd.f32 0.0, %v704
      %v706 = vpop.f32.mrb[0].mxu0
      %707 = vmatprep.mubr.bf16.mxu0 0
      %708 = vmatmul.mubr.bf16.gmra.mrb[0].mxu0 %v514
      %v709 = vpop.f32.mrb[0].mxu0
      %v710 = vadd.f32 0.0, %v709
      %v711 = vpop.f32.mrb[0].mxu0
      %v712 = vpop.f32.mrb[0].mxu0
      %v713 = vadd.f32 0.0, %v712
      %v714 = vpop.f32.mrb[0].mxu0
      %715 = vmatprep.mubr.bf16.mxu0 0
      %716 = vmatmul.mubr.bf16.gmra.mrb[0].mxu0 %v515
      %v717 = vpop.f32.mrb[0].mxu0
      %v718 = vadd.f32 0.0, %v717
      %v719 = vpop.f32.mrb[0].mxu0
      %v720 = vpop.f32.mrb[0].mxu0
      %v721 = vadd.f32 0.0, %v720
      %v722 = vpop.f32.mrb[0].mxu0
      %723 = vmatprep.mubr.bf16.mxu0 0
      %724 = vmatmul.mubr.bf16.gmra.mrb[0].mxu0 %v516
      %v725 = vpop.f32.mrb[0].mxu0
      %v726 = vadd.f32 0.0, %v725
      %v727 = vpop.f32.mrb[0].mxu0
      %v728 = vpop.f32.mrb[0].mxu0
      %v729 = vadd.f32 0.0, %v728
      %v730 = vpop.f32.mrb[0].mxu0
      %731 = vmatprep.mubr.bf16.mxu0 0
      %732 = vmatmul.mubr.bf16.gmra.mrb[0].mxu0 %v517
      %v733 = vpop.f32.mrb[0].mxu0
      %v734 = vadd.f32 0.0, %v733
      %v735 = vpop.f32.mrb[0].mxu0
      %v736 = vpop.f32.mrb[0].mxu0
      %v737 = vadd.f32 0.0, %v736
      %v738 = vpop.f32.mrb[0].mxu0
      %739 = vmatprep.mubr.bf16.mxu0 0
      %740 = vmatmul.mubr.bf16.gmra.mrb[0].mxu0 %v518
      %v741 = vpop.f32.mrb[0].mxu0
      %v742 = vadd.f32 0.0, %v741
      %v743 = vpop.f32.mrb[0].mxu0
      %v744 = vpop.f32.mrb[0].mxu0
      %v745 = vadd.f32 0.0, %v744
      %v746 = vpop.f32.mrb[0].mxu0
      %747 = vmatprep.mubr.bf16.mxu0 0
      %748 = vmatmul.mubr.bf16.gmra.mrb[0].mxu0 %v519
      %v749 = vpop.f32.mrb[0].mxu0
      %v750 = vadd.f32 0.0, %v749
      %v751 = vpop.f32.mrb[0].mxu0
      %v752 = vpop.f32.mrb[0].mxu0
      %v753 = vadd.f32 0.0, %v752
      %v754 = vpop.f32.mrb[0].mxu0
      %755 = vmatprep.mubr.bf16.mxu0 0
      %756 = vmatmul.mubr.bf16.gmra.mrb[0].mxu0 %v520
      %v757 = vpop.f32.mrb[0].mxu0
      %v758 = vadd.f32 0.0, %v757
      %v759 = vpop.f32.mrb[0].mxu0
      %v760 = vpop.f32.mrb[0].mxu0
      %v761 = vadd.f32 0.0, %v760
      %v762 = vpop.f32.mrb[0].mxu0
      %763 = vmatprep.mubr.bf16.mxu0 0
      %764 = vmatmul.mubr.bf16.gmra.mrb[0].mxu0 %v521
      %v765 = vpop.f32.mrb[0].mxu0
      %v766 = vadd.f32 0.0, %v765
      %v767 = vpop.f32.mrb[0].mxu0
      %v768 = vpop.f32.mrb[0].mxu0
      %v769 = vadd.f32 0.0, %v768
      %v770 = vpop.f32.mrb[0].mxu0
      %771 = vmatprep.mubr.bf16.mxu0 0
      %772 = vmatmul.mubr.bf16.gmra.mrb[0].mxu0 %v522
      %v773 = vpop.f32.mrb[0].mxu0
      %v774 = vadd.f32 0.0, %v773
      %v775 = vpop.f32.mrb[0].mxu0
      %v776 = vpop.f32.mrb[0].mxu0
      %v777 = vadd.f32 0.0, %v776
      %v778 = vpop.f32.mrb[0].mxu0
      %779 = vmatprep.mubr.bf16.mxu0 0
      %780 = vmatmul.mubr.bf16.gmra.mrb[0].mxu0 %v523
      %v781 = vpop.f32.mrb[0].mxu0
      %v782 = vadd.f32 0.0, %v781
      %v783 = vpop.f32.mrb[0].mxu0
      %v784 = vpop.f32.mrb[0].mxu0
      %v785 = vadd.f32 0.0, %v784
      %v786 = vpop.f32.mrb[0].mxu0
      %787 = vmatprep.mubr.bf16.mxu0 0
      %788 = vmatmul.mubr.bf16.gmra.mrb[0].mxu0 %v524
      %v789 = vpop.f32.mrb[0].mxu0
      %v790 = vadd.f32 0.0, %v789
      %v791 = vpop.f32.mrb[0].mxu0
      %v792 = vpop.f32.mrb[0].mxu0
      %v793 = vadd.f32 0.0, %v792
      %v794 = vpop.f32.mrb[0].mxu0
      %795 = vmatprep.mubr.bf16.mxu0 0
      %796 = vmatmul.mubr.bf16.gmra.mrb[0].mxu0 %v525
      %v797 = vpop.f32.mrb[0].mxu0
      %v798 = vadd.f32 0.0, %v797
      %v799 = vpop.f32.mrb[0].mxu0
      %v800 = vpop.f32.mrb[0].mxu0
      %v801 = vadd.f32 0.0, %v800
      %v802 = vpop.f32.mrb[0].mxu0
      %803 = vmatprep.mubr.bf16.mxu0 0
      %804 = vmatmul.mubr.bf16.gmra.mrb[0].mxu0 %v526
      %v805 = vpop.f32.mrb[0].mxu0
      %v806 = vadd.f32 0.0, %v805
      %v807 = vpop.f32.mrb[0].mxu0
      %v808 = vpop.f32.mrb[0].mxu0
      %v809 = vadd.f32 0.0, %v808
      %v810 = vpop.f32.mrb[0].mxu0
      %811 = vmatprep.mubr.bf16.mxu0 0
      %812 = vmatmul.mubr.bf16.gmra.mrb[0].mxu0 %v527
      %v813 = vpop.f32.mrb[0].mxu0
      %v814 = vadd.f32 0.0, %v813
      %v815 = vpop.f32.mrb[0].mxu0
      %v816 = vpop.f32.mrb[0].mxu0
      %v817 = vadd.f32 0.0, %v816
      %v818 = vpop.f32.mrb[0].mxu0
      %819 = vmatprep.mubr.bf16.mxu0 0
      %820 = vmatmul.mubr.bf16.gmra.mrb[0].mxu0 %v528
      %v821 = vpop.f32.mrb[0].mxu0
      %v822 = vadd.f32 0.0, %v821
      %v823 = vpop.f32.mrb[0].mxu0
      %v824 = vpop.f32.mrb[0].mxu0
      %v825 = vadd.f32 0.0, %v824
      %v826 = vpop.f32.mrb[0].mxu0
      %827 = vmatprep.mubr.bf16.mxu0 0
      %828 = vmatmul.mubr.bf16.gmra.mrb[0].mxu0 %v529
      %v829 = vpop.f32.mrb[0].mxu0
      %v830 = vadd.f32 0.0, %v829
      %v831 = vpop.f32.mrb[0].mxu0
      %v832 = vpop.f32.mrb[0].mxu0
      %v833 = vadd.f32 0.0, %v832
      %v834 = vpop.f32.mrb[0].mxu0
      %835 = vmatprep.mubr.bf16.mxu0 0
      %836 = vmatmul.mubr.bf16.gmra.mrb[0].mxu0 %v530
      %v837 = vpop.f32.mrb[0].mxu0
      %v838 = vadd.f32 0.0, %v837
      %v839 = vpop.f32.mrb[0].mxu0
      %v840 = vpop.f32.mrb[0].mxu0
      %v841 = vadd.f32 0.0, %v840
      %v842 = vpop.f32.mrb[0].mxu0
      %843 = vmatprep.mubr.bf16.mxu0 0
      %844 = vmatmul.mubr.bf16.gmra.mrb[0].mxu0 %v531
      %v845 = vpop.f32.mrb[0].mxu0
      %v846 = vadd.f32 0.0, %v845
      %v847 = vpop.f32.mrb[0].mxu0
      %v848 = vpop.f32.mrb[0].mxu0
      %v849 = vadd.f32 0.0, %v848
      %v850 = vpop.f32.mrb[0].mxu0
      %851 = vmatprep.mubr.bf16.mxu0 0
      %852 = vmatmul.mubr.bf16.gmra.mrb[0].mxu0 %v532
      %v853 = vpop.f32.mrb[0].mxu0
      %v854 = vadd.f32 0.0, %v853
      %v855 = vpop.f32.mrb[0].mxu0
      %v856 = vpop.f32.mrb[0].mxu0
      %v857 = vadd.f32 0.0, %v856
      %v858 = vpop.f32.mrb[0].mxu0
      %859 = vmatprep.mubr.bf16.mxu0 0
      %860 = vmatmul.mubr.bf16.gmra.mrb[0].mxu0 %v533
      %v861 = vpop.f32.mrb[0].mxu0
      %v862 = vadd.f32 0.0, %v861
      %v863 = vpop.f32.mrb[0].mxu0
      %v864 = vpop.f32.mrb[0].mxu0
      %v865 = vadd.f32 0.0, %v864
      %v866 = vpop.f32.mrb[0].mxu0
      %867 = vmatprep.mubr.bf16.mxu0 0
      %868 = vmatmul.mubr.bf16.gmra.mrb[0].mxu0 %v534
      %v869 = vpop.f32.mrb[0].mxu0
      %v870 = vadd.f32 0.0, %v869
      %v871 = vpop.f32.mrb[0].mxu0
      %v872 = vpop.f32.mrb[0].mxu0
      %v873 = vadd.f32 0.0, %v872
      %v874 = vpop.f32.mrb[0].mxu0
      %875 = vmatprep.mubr.bf16.mxu0 0
      %876 = vmatmul.mubr.bf16.gmra.mrb[0].mxu0 %v535
      %v877 = vpop.f32.mrb[0].mxu0
      %v878 = vadd.f32 0.0, %v877
      %v879 = vpop.f32.mrb[0].mxu0
      %v880 = vpop.f32.mrb[0].mxu0
      %v881 = vadd.f32 0.0, %v880
      %v882 = vpop.f32.mrb[0].mxu0
      %883 = vmatprep.mubr.bf16.mxu0 0
      %884 = vmatmul.mubr.bf16.gmra.mrb[0].mxu0 %v536
      %v885 = vpop.f32.mrb[0].mxu0
      %v886 = vadd.f32 0.0, %v885
      %v887 = vpop.f32.mrb[0].mxu0
      %v888 = vpop.f32.mrb[0].mxu0
      %v889 = vadd.f32 0.0, %v888
      %v890 = vpop.f32.mrb[0].mxu0
      %891 = vmatprep.mubr.bf16.mxu0 0
      %892 = vmatmul.mubr.bf16.gmra.mrb[0].mxu0 %v537
      %v893 = vpop.f32.mrb[0].mxu0
      %v894 = vadd.f32 0.0, %v893
      %v895 = vpop.f32.mrb[0].mxu0
      %v896 = vpop.f32.mrb[0].mxu0
      %v897 = vadd.f32 0.0, %v896
      %v898 = vpop.f32.mrb[0].mxu0
      %899 = vmatprep.mubr.bf16.mxu0 0
      %900 = vmatmul.mubr.bf16.gmra.mrb[0].mxu0 %v538
      %v901 = vpop.f32.mrb[0].mxu0
      %v902 = vadd.f32 0.0, %v901
      %v903 = vpop.f32.mrb[0].mxu0
      %v904 = vpop.f32.mrb[0].mxu0
      %v905 = vadd.f32 0.0, %v904
      %v906 = vpop.f32.mrb[0].mxu0
      %907 = vdwg.mxu0
      %v908 = vrot.slane %v654, 1
      %v909 = vrot.slane %v657, 1
      %v910 = vrot.slane %v662, 1
      %v911 = vrot.slane %v665, 1
      %v912 = vrot.slane %v670, 1
      %v913 = vrot.slane %v673, 1
      %v914 = vrot.slane %v678, 1
      %v915 = vrot.slane %v681, 1
      %v916 = vrot.slane %v686, 1
      %v917 = vrot.slane %v689, 1
      %v918 = vrot.slane %v694, 1
      %v919 = vrot.slane %v697, 1
      %v920 = vrot.slane %v702, 1
      %v921 = vrot.slane %v705, 1
      %v922 = vrot.slane %v710, 1
      %v923 = vrot.slane %v713, 1
      %v924 = vrot.slane %v718, 1
      %v925 = vrot.slane %v721, 1
      %v926 = vrot.slane %v726, 1
      %v927 = vrot.slane %v729, 1
      %v928 = vrot.slane %v734, 1
      %v929 = vrot.slane %v737, 1
      %v930 = vrot.slane %v742, 1
      %v931 = vrot.slane %v745, 1
      %v932 = vrot.slane %v750, 1
      %v933 = vrot.slane %v753, 1
      %v934 = vrot.slane %v758, 1
      %v935 = vrot.slane %v761, 1
      %v936 = vrot.slane %v766, 1
      %v937 = vrot.slane %v769, 1
      %v938 = vrot.slane %v774, 1
      %v939 = vrot.slane %v777, 1
      %v940 = vrot.slane %v782, 1
      %v941 = vrot.slane %v785, 1
      %v942 = vrot.slane %v790, 1
      %v943 = vrot.slane %v793, 1
      %v944 = vrot.slane %v798, 1
      %v945 = vrot.slane %v801, 1
      %v946 = vrot.slane %v806, 1
      %v947 = vrot.slane %v809, 1
      %v948 = vrot.slane %v814, 1
      %v949 = vrot.slane %v817, 1
      %v950 = vrot.slane %v822, 1
      %v951 = vrot.slane %v825, 1
      %v952 = vrot.slane %v830, 1
      %v953 = vrot.slane %v833, 1
      %v954 = vrot.slane %v838, 1
      %v955 = vrot.slane %v841, 1
      %v956 = vrot.slane %v846, 1
      %v957 = vrot.slane %v849, 1
      %v958 = vrot.slane %v854, 1
      %v959 = vrot.slane %v857, 1
      %v960 = vrot.slane %v862, 1
      %v961 = vrot.slane %v865, 1
      %v962 = vrot.slane %v870, 1
      %v963 = vrot.slane %v873, 1
      %v964 = vrot.slane %v878, 1
      %v965 = vrot.slane %v881, 1
      %v966 = vrot.slane %v886, 1
      %v967 = vrot.slane %v889, 1
      %v968 = vrot.slane %v894, 1
      %v969 = vrot.slane %v897, 1
      %v970 = vrot.slane %v902, 1
      %v971 = vrot.slane %v905, 1
      %v972 = vlaneseq
      %v973 = vshrl.u32 %v972, 7
      %vm974 = vcmp.lt.s32.totalorder %v973, 7
      %v975 = vsel %vm974, %v970, %v971
      %v976 = vsel %vm974, %v969, %v970
      %v977 = vsel %vm974, %v968, %v969
      %v978 = vsel %vm974, %v967, %v968
      %v979 = vsel %vm974, %v966, %v967
      %v980 = vsel %vm974, %v965, %v966
      %v981 = vsel %vm974, %v964, %v965
      %v982 = vsel %vm974, %v963, %v964
      %v983 = vsel %vm974, %v962, %v963
      %v984 = vsel %vm974, %v961, %v962
      %v985 = vsel %vm974, %v960, %v961
      %v986 = vsel %vm974, %v959, %v960
      %v987 = vsel %vm974, %v958, %v959
      %v988 = vsel %vm974, %v957, %v958
      %v989 = vsel %vm974, %v956, %v957
      %v990 = vsel %vm974, %v955, %v956
      %v991 = vsel %vm974, %v954, %v955
      %v992 = vsel %vm974, %v953, %v954
      %v993 = vsel %vm974, %v952, %v953
      %v994 = vsel %vm974, %v951, %v952
      %v995 = vsel %vm974, %v950, %v951
      %v996 = vsel %vm974, %v949, %v950
      %v997 = vsel %vm974, %v948, %v949
      %v998 = vsel %vm974, %v947, %v948
      %v999 = vsel %vm974, %v946, %v947
      %v1000 = vsel %vm974, %v945, %v946
      %v1001 = vsel %vm974, %v944, %v945
      %v1002 = vsel %vm974, %v943, %v944
      %v1003 = vsel %vm974, %v942, %v943
      %v1004 = vsel %vm974, %v941, %v942
      %v1005 = vsel %vm974, %v940, %v941
      %v1006 = vsel %vm974, %v939, %v940
      %v1007 = vsel %vm974, %v938, %v939
      %v1008 = vsel %vm974, %v937, %v938
      %v1009 = vsel %vm974, %v936, %v937
      %v1010 = vsel %vm974, %v935, %v936
      %v1011 = vsel %vm974, %v934, %v935
      %v1012 = vsel %vm974, %v933, %v934
      %v1013 = vsel %vm974, %v932, %v933
      %v1014 = vsel %vm974, %v931, %v932
      %v1015 = vsel %vm974, %v930, %v931
      %v1016 = vsel %vm974, %v929, %v930
      %v1017 = vsel %vm974, %v928, %v929
      %v1018 = vsel %vm974, %v927, %v928
      %v1019 = vsel %vm974, %v926, %v927
      %v1020 = vsel %vm974, %v925, %v926
      %v1021 = vsel %vm974, %v924, %v925
      %v1022 = vsel %vm974, %v923, %v924
      %v1023 = vsel %vm974, %v922, %v923
      %v1024 = vsel %vm974, %v921, %v922
      %v1025 = vsel %vm974, %v920, %v921
      %v1026 = vsel %vm974, %v919, %v920
      %v1027 = vsel %vm974, %v918, %v919
      %v1028 = vsel %vm974, %v917, %v918
      %v1029 = vsel %vm974, %v916, %v917
      %v1030 = vsel %vm974, %v915, %v916
      %v1031 = vsel %vm974, %v914, %v915
      %v1032 = vsel %vm974, %v913, %v914
      %v1033 = vsel %vm974, %v912, %v913
      %v1034 = vsel %vm974, %v911, %v912
      %v1035 = vsel %vm974, %v910, %v911
      %v1036 = vsel %vm974, %v909, %v910
      %v1037 = vsel %vm974, %v908, %v909
      %v1038 = vsel %vm974, %v971, %v908
      %v1055 = vunpack.c.l.b16 %v346
      %v1056 = vunpack.c.l.b16 %v347
      %v1057 = vunpack.c.l.b16 %v348
      %v1058 = vunpack.c.l.b16 %v349
      %v1059 = vunpack.c.l.b16 %v350
      %v1060 = vunpack.c.l.b16 %v351
      %v1061 = vunpack.c.l.b16 %v352
      %v1062 = vunpack.c.l.b16 %v353
      %v1063 = vunpack.c.l.b16 %v354
      %v1064 = vunpack.c.l.b16 %v355
      %v1065 = vunpack.c.l.b16 %v356
      %v1066 = vunpack.c.l.b16 %v357
      %v1067 = vunpack.c.l.b16 %v358
      %v1068 = vunpack.c.l.b16 %v359
      %v1069 = vunpack.c.l.b16 %v360
      %v1070 = vunpack.c.l.b16 %v361
      %v1071 = vpack.c.b16 %v1056, %v1055
      %v1072 = vpack.c.b16 %v1058, %v1057
      %v1073 = vpack.c.b16 %v1060, %v1059
      %v1074 = vpack.c.b16 %v1062, %v1061
      %v1075 = vpack.c.b16 %v1064, %v1063
      %v1076 = vpack.c.b16 %v1066, %v1065
      %v1077 = vpack.c.b16 %v1068, %v1067
      %v1078 = vpack.c.b16 %v1070, %v1069
      %1087 = vmatprep.subr.bf16.mxu0 0
      %1088 = vmatpush1.bf16.msra.mxu0 %v1071
      %1089 = vmatprep.subr.bf16.mxu0 0
      %1090 = vmatpush1.bf16.msra.mxu0 %v1072
      %1091 = vmatprep.subr.bf16.mxu0 0
      %1092 = vmatpush1.bf16.msra.mxu0 %v1073
      %1093 = vmatprep.subr.bf16.mxu0 0
      %1094 = vmatpush1.bf16.msra.mxu0 %v1074
      %1095 = vmatprep.subr.bf16.mxu0 0
      %1096 = vmatpush1.bf16.msra.mxu0 %v1075
      %1097 = vmatprep.subr.bf16.mxu0 0
      %1098 = vmatpush1.bf16.msra.mxu0 %v1076
      %1099 = vmatprep.subr.bf16.mxu0 0
      %1100 = vmatpush1.bf16.msra.mxu0 %v1077
      %1101 = vmatprep.subr.bf16.mxu0 0
      %1102 = vmatpush1.bf16.msra.mxu0 %v1078
      %1103 = vmatprep.subr.bf16.mxu0 0
      %1104 = vmatpush1.bf16.msra.mxu0 0
      %1105 = vmatprep.subr.bf16.mxu0 0
      %1106 = vmatpush1.bf16.msra.mxu0 0
      %1107 = vmatprep.subr.bf16.mxu0 0
      %1108 = vmatpush1.bf16.msra.mxu0 0
      %1109 = vmatprep.subr.bf16.mxu0 0
      %1110 = vmatpush1.bf16.msra.mxu0 0
      %1111 = vmatprep.subr.bf16.mxu0 0
      %1112 = vmatpush1.bf16.msra.mxu0 0
      %1113 = vmatprep.subr.bf16.mxu0 0
      %1114 = vmatpush1.bf16.msra.mxu0 0
      %1115 = vmatprep.subr.bf16.mxu0 0
      %1116 = vmatpush1.bf16.msra.mxu0 0
      %1117 = vmatprep.subr.bf16.mxu0 0
      %1118 = vmatpush1.bf16.msra.mxu0 0
      %1119 = vmatprep.mubr.bf16.mxu0 0
      %1120 = vmatmul.mubr.bf16.gmra.mrb[0].mxu0 %v507
      %v1121 = vpop.f32.mrb[0].mxu0
      %v1122 = vadd.f32 %v1037, %v1121
      %v1123 = vpop.f32.mrb[0].mxu0
      %v1124 = vpop.f32.mrb[0].mxu0
      %v1125 = vadd.f32 %v1036, %v1124
      %v1126 = vpop.f32.mrb[0].mxu0
      %1127 = vmatprep.mubr.bf16.mxu0 0
      %1128 = vmatmul.mubr.bf16.gmra.mrb[0].mxu0 %v508
      %v1129 = vpop.f32.mrb[0].mxu0
      %v1130 = vadd.f32 %v1035, %v1129
      %v1131 = vpop.f32.mrb[0].mxu0
      %v1132 = vpop.f32.mrb[0].mxu0
      %v1133 = vadd.f32 %v1034, %v1132
      %v1134 = vpop.f32.mrb[0].mxu0
      %1135 = vmatprep.mubr.bf16.mxu0 0
      %1136 = vmatmul.mubr.bf16.gmra.mrb[0].mxu0 %v509
      %v1137 = vpop.f32.mrb[0].mxu0
      %v1138 = vadd.f32 %v1033, %v1137
      %v1139 = vpop.f32.mrb[0].mxu0
      %v1140 = vpop.f32.mrb[0].mxu0
      %v1141 = vadd.f32 %v1032, %v1140
      %v1142 = vpop.f32.mrb[0].mxu0
      %1143 = vmatprep.mubr.bf16.mxu0 0
      %1144 = vmatmul.mubr.bf16.gmra.mrb[0].mxu0 %v510
      %v1145 = vpop.f32.mrb[0].mxu0
      %v1146 = vadd.f32 %v1031, %v1145
      %v1147 = vpop.f32.mrb[0].mxu0
      %v1148 = vpop.f32.mrb[0].mxu0
      %v1149 = vadd.f32 %v1030, %v1148
      %v1150 = vpop.f32.mrb[0].mxu0
      %1151 = vmatprep.mubr.bf16.mxu0 0
      %1152 = vmatmul.mubr.bf16.gmra.mrb[0].mxu0 %v511
      %v1153 = vpop.f32.mrb[0].mxu0
      %v1154 = vadd.f32 %v1029, %v1153
      %v1155 = vpop.f32.mrb[0].mxu0
      %v1156 = vpop.f32.mrb[0].mxu0
      %v1157 = vadd.f32 %v1028, %v1156
      %v1158 = vpop.f32.mrb[0].mxu0
      %1159 = vmatprep.mubr.bf16.mxu0 0
      %1160 = vmatmul.mubr.bf16.gmra.mrb[0].mxu0 %v512
      %v1161 = vpop.f32.mrb[0].mxu0
      %v1162 = vadd.f32 %v1027, %v1161
      %v1163 = vpop.f32.mrb[0].mxu0
      %v1164 = vpop.f32.mrb[0].mxu0
      %v1165 = vadd.f32 %v1026, %v1164
      %v1166 = vpop.f32.mrb[0].mxu0
      %1167 = vmatprep.mubr.bf16.mxu0 0
      %1168 = vmatmul.mubr.bf16.gmra.mrb[0].mxu0 %v513
      %v1169 = vpop.f32.mrb[0].mxu0
      %v1170 = vadd.f32 %v1025, %v1169
      %v1171 = vpop.f32.mrb[0].mxu0
      %v1172 = vpop.f32.mrb[0].mxu0
      %v1173 = vadd.f32 %v1024, %v1172
      %v1174 = vpop.f32.mrb[0].mxu0
      %1175 = vmatprep.mubr.bf16.mxu0 0
      %1176 = vmatmul.mubr.bf16.gmra.mrb[0].mxu0 %v514
      %v1177 = vpop.f32.mrb[0].mxu0
      %v1178 = vadd.f32 %v1023, %v1177
      %v1179 = vpop.f32.mrb[0].mxu0
      %v1180 = vpop.f32.mrb[0].mxu0
      %v1181 = vadd.f32 %v1022, %v1180
      %v1182 = vpop.f32.mrb[0].mxu0
      %1183 = vmatprep.mubr.bf16.mxu0 0
      %1184 = vmatmul.mubr.bf16.gmra.mrb[0].mxu0 %v515
      %v1185 = vpop.f32.mrb[0].mxu0
      %v1186 = vadd.f32 %v1021, %v1185
      %v1187 = vpop.f32.mrb[0].mxu0
      %v1188 = vpop.f32.mrb[0].mxu0
      %v1189 = vadd.f32 %v1020, %v1188
      %v1190 = vpop.f32.mrb[0].mxu0
      %1191 = vmatprep.mubr.bf16.mxu0 0
      %1192 = vmatmul.mubr.bf16.gmra.mrb[0].mxu0 %v516
      %v1193 = vpop.f32.mrb[0].mxu0
      %v1194 = vadd.f32 %v1019, %v1193
      %v1195 = vpop.f32.mrb[0].mxu0
      %v1196 = vpop.f32.mrb[0].mxu0
      %v1197 = vadd.f32 %v1018, %v1196
      %v1198 = vpop.f32.mrb[0].mxu0
      %1199 = vmatprep.mubr.bf16.mxu0 0
      %1200 = vmatmul.mubr.bf16.gmra.mrb[0].mxu0 %v517
      %v1201 = vpop.f32.mrb[0].mxu0
      %v1202 = vadd.f32 %v1017, %v1201
      %v1203 = vpop.f32.mrb[0].mxu0
      %v1204 = vpop.f32.mrb[0].mxu0
      %v1205 = vadd.f32 %v1016, %v1204
      %v1206 = vpop.f32.mrb[0].mxu0
      %1207 = vmatprep.mubr.bf16.mxu0 0
      %1208 = vmatmul.mubr.bf16.gmra.mrb[0].mxu0 %v518
      %v1209 = vpop.f32.mrb[0].mxu0
      %v1210 = vadd.f32 %v1015, %v1209
      %v1211 = vpop.f32.mrb[0].mxu0
      %v1212 = vpop.f32.mrb[0].mxu0
      %v1213 = vadd.f32 %v1014, %v1212
      %v1214 = vpop.f32.mrb[0].mxu0
      %1215 = vmatprep.mubr.bf16.mxu0 0
      %1216 = vmatmul.mubr.bf16.gmra.mrb[0].mxu0 %v519
      %v1217 = vpop.f32.mrb[0].mxu0
      %v1218 = vadd.f32 %v1013, %v1217
      %v1219 = vpop.f32.mrb[0].mxu0
      %v1220 = vpop.f32.mrb[0].mxu0
      %v1221 = vadd.f32 %v1012, %v1220
      %v1222 = vpop.f32.mrb[0].mxu0
      %1223 = vmatprep.mubr.bf16.mxu0 0
      %1224 = vmatmul.mubr.bf16.gmra.mrb[0].mxu0 %v520
      %v1225 = vpop.f32.mrb[0].mxu0
      %v1226 = vadd.f32 %v1011, %v1225
      %v1227 = vpop.f32.mrb[0].mxu0
      %v1228 = vpop.f32.mrb[0].mxu0
      %v1229 = vadd.f32 %v1010, %v1228
      %v1230 = vpop.f32.mrb[0].mxu0
      %1231 = vmatprep.mubr.bf16.mxu0 0
      %1232 = vmatmul.mubr.bf16.gmra.mrb[0].mxu0 %v521
      %v1233 = vpop.f32.mrb[0].mxu0
      %v1234 = vadd.f32 %v1009, %v1233
      %v1235 = vpop.f32.mrb[0].mxu0
      %v1236 = vpop.f32.mrb[0].mxu0
      %v1237 = vadd.f32 %v1008, %v1236
      %v1238 = vpop.f32.mrb[0].mxu0
      %1239 = vmatprep.mubr.bf16.mxu0 0
      %1240 = vmatmul.mubr.bf16.gmra.mrb[0].mxu0 %v522
      %v1241 = vpop.f32.mrb[0].mxu0
      %v1242 = vadd.f32 %v1007, %v1241
      %v1243 = vpop.f32.mrb[0].mxu0
      %v1244 = vpop.f32.mrb[0].mxu0
      %v1245 = vadd.f32 %v1006, %v1244
      %v1246 = vpop.f32.mrb[0].mxu0
      %1247 = vmatprep.mubr.bf16.mxu0 0
      %1248 = vmatmul.mubr.bf16.gmra.mrb[0].mxu0 %v523
      %v1249 = vpop.f32.mrb[0].mxu0
      %v1250 = vadd.f32 %v1005, %v1249
      %v1251 = vpop.f32.mrb[0].mxu0
      %v1252 = vpop.f32.mrb[0].mxu0
      %v1253 = vadd.f32 %v1004, %v1252
      %v1254 = vpop.f32.mrb[0].mxu0
      %1255 = vmatprep.mubr.bf16.mxu0 0
      %1256 = vmatmul.mubr.bf16.gmra.mrb[0].mxu0 %v524
      %v1257 = vpop.f32.mrb[0].mxu0
      %v1258 = vadd.f32 %v1003, %v1257
      %v1259 = vpop.f32.mrb[0].mxu0
      %v1260 = vpop.f32.mrb[0].mxu0
      %v1261 = vadd.f32 %v1002, %v1260
      %v1262 = vpop.f32.mrb[0].mxu0
      %1263 = vmatprep.mubr.bf16.mxu0 0
      %1264 = vmatmul.mubr.bf16.gmra.mrb[0].mxu0 %v525
      %v1265 = vpop.f32.mrb[0].mxu0
      %v1266 = vadd.f32 %v1001, %v1265
      %v1267 = vpop.f32.mrb[0].mxu0
      %v1268 = vpop.f32.mrb[0].mxu0
      %v1269 = vadd.f32 %v1000, %v1268
      %v1270 = vpop.f32.mrb[0].mxu0
      %1271 = vmatprep.mubr.bf16.mxu0 0
      %1272 = vmatmul.mubr.bf16.gmra.mrb[0].mxu0 %v526
      %v1273 = vpop.f32.mrb[0].mxu0
      %v1274 = vadd.f32 %v999, %v1273
      %v1275 = vpop.f32.mrb[0].mxu0
      %v1276 = vpop.f32.mrb[0].mxu0
      %v1277 = vadd.f32 %v998, %v1276
      %v1278 = vpop.f32.mrb[0].mxu0
      %1279 = vmatprep.mubr.bf16.mxu0 0
      %1280 = vmatmul.mubr.bf16.gmra.mrb[0].mxu0 %v527
      %v1281 = vpop.f32.mrb[0].mxu0
      %v1282 = vadd.f32 %v997, %v1281
      %v1283 = vpop.f32.mrb[0].mxu0
      %v1284 = vpop.f32.mrb[0].mxu0
      %v1285 = vadd.f32 %v996, %v1284
      %v1286 = vpop.f32.mrb[0].mxu0
      %1287 = vmatprep.mubr.bf16.mxu0 0
      %1288 = vmatmul.mubr.bf16.gmra.mrb[0].mxu0 %v528
      %v1289 = vpop.f32.mrb[0].mxu0
      %v1290 = vadd.f32 %v995, %v1289
      %v1291 = vpop.f32.mrb[0].mxu0
      %v1292 = vpop.f32.mrb[0].mxu0
      %v1293 = vadd.f32 %v994, %v1292
      %v1294 = vpop.f32.mrb[0].mxu0
      %1295 = vmatprep.mubr.bf16.mxu0 0
      %1296 = vmatmul.mubr.bf16.gmra.mrb[0].mxu0 %v529
      %v1297 = vpop.f32.mrb[0].mxu0
      %v1298 = vadd.f32 %v993, %v1297
      %v1299 = vpop.f32.mrb[0].mxu0
      %v1300 = vpop.f32.mrb[0].mxu0
      %v1301 = vadd.f32 %v992, %v1300
      %v1302 = vpop.f32.mrb[0].mxu0
      %1303 = vmatprep.mubr.bf16.mxu0 0
      %1304 = vmatmul.mubr.bf16.gmra.mrb[0].mxu0 %v530
      %v1305 = vpop.f32.mrb[0].mxu0
      %v1306 = vadd.f32 %v991, %v1305
      %v1307 = vpop.f32.mrb[0].mxu0
      %v1308 = vpop.f32.mrb[0].mxu0
      %v1309 = vadd.f32 %v990, %v1308
      %v1310 = vpop.f32.mrb[0].mxu0
      %1311 = vmatprep.mubr.bf16.mxu0 0
      %1312 = vmatmul.mubr.bf16.gmra.mrb[0].mxu0 %v531
      %v1313 = vpop.f32.mrb[0].mxu0
      %v1314 = vadd.f32 %v989, %v1313
      %v1315 = vpop.f32.mrb[0].mxu0
      %v1316 = vpop.f32.mrb[0].mxu0
      %v1317 = vadd.f32 %v988, %v1316
      %v1318 = vpop.f32.mrb[0].mxu0
      %1319 = vmatprep.mubr.bf16.mxu0 0
      %1320 = vmatmul.mubr.bf16.gmra.mrb[0].mxu0 %v532
      %v1321 = vpop.f32.mrb[0].mxu0
      %v1322 = vadd.f32 %v987, %v1321
      %v1323 = vpop.f32.mrb[0].mxu0
      %v1324 = vpop.f32.mrb[0].mxu0
      %v1325 = vadd.f32 %v986, %v1324
      %v1326 = vpop.f32.mrb[0].mxu0
      %1327 = vmatprep.mubr.bf16.mxu0 0
      %1328 = vmatmul.mubr.bf16.gmra.mrb[0].mxu0 %v533
      %v1329 = vpop.f32.mrb[0].mxu0
      %v1330 = vadd.f32 %v985, %v1329
      %v1331 = vpop.f32.mrb[0].mxu0
      %v1332 = vpop.f32.mrb[0].mxu0
      %v1333 = vadd.f32 %v984, %v1332
      %v1334 = vpop.f32.mrb[0].mxu0
      %1335 = vmatprep.mubr.bf16.mxu0 0
      %1336 = vmatmul.mubr.bf16.gmra.mrb[0].mxu0 %v534
      %v1337 = vpop.f32.mrb[0].mxu0
      %v1338 = vadd.f32 %v983, %v1337
      %v1339 = vpop.f32.mrb[0].mxu0
      %v1340 = vpop.f32.mrb[0].mxu0
      %v1341 = vadd.f32 %v982, %v1340
      %v1342 = vpop.f32.mrb[0].mxu0
      %1343 = vmatprep.mubr.bf16.mxu0 0
      %1344 = vmatmul.mubr.bf16.gmra.mrb[0].mxu0 %v535
      %v1345 = vpop.f32.mrb[0].mxu0
      %v1346 = vadd.f32 %v981, %v1345
      %v1347 = vpop.f32.mrb[0].mxu0
      %v1348 = vpop.f32.mrb[0].mxu0
      %v1349 = vadd.f32 %v980, %v1348
      %v1350 = vpop.f32.mrb[0].mxu0
      %1351 = vmatprep.mubr.bf16.mxu0 0
      %1352 = vmatmul.mubr.bf16.gmra.mrb[0].mxu0 %v536
      %v1353 = vpop.f32.mrb[0].mxu0
      %v1354 = vadd.f32 %v979, %v1353
      %v1355 = vpop.f32.mrb[0].mxu0
      %v1356 = vpop.f32.mrb[0].mxu0
      %v1357 = vadd.f32 %v978, %v1356
      %v1358 = vpop.f32.mrb[0].mxu0
      %1359 = vmatprep.mubr.bf16.mxu0 0
      %1360 = vmatmul.mubr.bf16.gmra.mrb[0].mxu0 %v537
      %v1361 = vpop.f32.mrb[0].mxu0
      %v1362 = vadd.f32 %v977, %v1361
      %v1363 = vpop.f32.mrb[0].mxu0
      %v1364 = vpop.f32.mrb[0].mxu0
      %v1365 = vadd.f32 %v976, %v1364
      %v1366 = vpop.f32.mrb[0].mxu0
      %1367 = vmatprep.mubr.bf16.mxu0 0
      %1368 = vmatmul.mubr.bf16.gmra.mrb[0].mxu0 %v538
      %v1369 = vpop.f32.mrb[0].mxu0
      %v1370 = vadd.f32 %v975, %v1369
      %v1371 = vpop.f32.mrb[0].mxu0
      %v1372 = vpop.f32.mrb[0].mxu0
      %v1373 = vadd.f32 %v1038, %v1372
      %v1374 = vpop.f32.mrb[0].mxu0
      %1375 = vdwg.mxu0
      %s1376 = scalar_lea.vmem %s1, 128
      %v1377 = vld [vmem:[%s1376] sm:$0xf]
      %v1378 = vld [vmem:[%s1376 + $0x4] sm:$0xf]
      %v1379 = vld [vmem:[%s1376 + $0x8] sm:$0xf]
      %v1380 = vld [vmem:[%s1376 + $0xc] sm:$0xf]
      %v1381 = vld [vmem:[%s1376 + $0x10] sm:$0xf]
      %v1382 = vld [vmem:[%s1376 + $0x14] sm:$0xf]
      %v1383 = vld [vmem:[%s1376 + $0x18] sm:$0xf]
      %v1384 = vld [vmem:[%s1376 + $0x1c] sm:$0xf]
      %v1385 = vld [vmem:[%s1376 + $0x20] sm:$0xf]
      %v1386 = vld [vmem:[%s1376 + $0x24] sm:$0xf]
      %v1387 = vld [vmem:[%s1376 + $0x28] sm:$0xf]
      %v1388 = vld [vmem:[%s1376 + $0x2c] sm:$0xf]
      %v1389 = vld [vmem:[%s1376 + $0x30] sm:$0xf]
      %v1390 = vld [vmem:[%s1376 + $0x34] sm:$0xf]
      %v1391 = vld [vmem:[%s1376 + $0x38] sm:$0xf]
      %v1392 = vld [vmem:[%s1376 + $0x3c] sm:$0xf]
      %v1409 = vunpack.c.l.b16 %v1377
      %v1410 = vunpack.c.l.b16 %v1378
      %v1411 = vunpack.c.l.b16 %v1379
      %v1412 = vunpack.c.l.b16 %v1380
      %v1413 = vunpack.c.l.b16 %v1381
      %v1414 = vunpack.c.l.b16 %v1382
      %v1415 = vunpack.c.l.b16 %v1383
      %v1416 = vunpack.c.l.b16 %v1384
      %v1417 = vunpack.c.l.b16 %v1385
      %v1418 = vunpack.c.l.b16 %v1386
      %v1419 = vunpack.c.l.b16 %v1387
      %v1420 = vunpack.c.l.b16 %v1388
      %v1421 = vunpack.c.l.b16 %v1389
      %v1422 = vunpack.c.l.b16 %v1390
      %v1423 = vunpack.c.l.b16 %v1391
      %v1424 = vunpack.c.l.b16 %v1392
      %v1425 = vpack.c.b16 %v1410, %v1409
      %v1426 = vpack.c.b16 %v1412, %v1411
      %v1427 = vpack.c.b16 %v1414, %v1413
      %v1428 = vpack.c.b16 %v1416, %v1415
      %v1429 = vpack.c.b16 %v1418, %v1417
      %v1430 = vpack.c.b16 %v1420, %v1419
      %v1431 = vpack.c.b16 %v1422, %v1421
      %v1432 = vpack.c.b16 %v1424, %v1423
      %1441 = vmatprep.subr.bf16.mxu0 0
      %1442 = vmatpush1.bf16.msra.mxu0 %v1425
      %1443 = vmatprep.subr.bf16.mxu0 0
      %1444 = vmatpush1.bf16.msra.mxu0 %v1426
      %1445 = vmatprep.subr.bf16.mxu0 0
      %1446 = vmatpush1.bf16.msra.mxu0 %v1427
      %1447 = vmatprep.subr.bf16.mxu0 0
      %1448 = vmatpush1.bf16.msra.mxu0 %v1428
      %1449 = vmatprep.subr.bf16.mxu0 0
      %1450 = vmatpush1.bf16.msra.mxu0 %v1429
      %1451 = vmatprep.subr.bf16.mxu0 0
      %1452 = vmatpush1.bf16.msra.mxu0 %v1430
      %1453 = vmatprep.subr.bf16.mxu0 0
      %1454 = vmatpush1.bf16.msra.mxu0 %v1431
      %1455 = vmatprep.subr.bf16.mxu0 0
      %1456 = vmatpush1.bf16.msra.mxu0 %v1432
      %1457 = vmatprep.subr.bf16.mxu0 0
      %1458 = vmatpush1.bf16.msra.mxu0 0
      %1459 = vmatprep.subr.bf16.mxu0 0
      %1460 = vmatpush1.bf16.msra.mxu0 0
      %1461 = vmatprep.subr.bf16.mxu0 0
      %1462 = vmatpush1.bf16.msra.mxu0 0
      %1463 = vmatprep.subr.bf16.mxu0 0
      %1464 = vmatpush1.bf16.msra.mxu0 0
      %1465 = vmatprep.subr.bf16.mxu0 0
      %1466 = vmatpush1.bf16.msra.mxu0 0
      %1467 = vmatprep.subr.bf16.mxu0 0
      %1468 = vmatpush1.bf16.msra.mxu0 0
      %1469 = vmatprep.subr.bf16.mxu0 0
      %1470 = vmatpush1.bf16.msra.mxu0 0
      %1471 = vmatprep.subr.bf16.mxu0 0
      %1472 = vmatpush1.bf16.msra.mxu0 0
      %1473 = vmatprep.mubr.bf16.mxu0 0
      %1474 = vmatmul.mubr.bf16.gmra.mrb[0].mxu0 %v507
      %v1475 = vpop.f32.mrb[0].mxu0
      %v1476 = vadd.f32 0.0, %v1475
      %v1477 = vpop.f32.mrb[0].mxu0
      %v1478 = vpop.f32.mrb[0].mxu0
      %v1479 = vadd.f32 0.0, %v1478
      %v1480 = vpop.f32.mrb[0].mxu0
      %1481 = vmatprep.mubr.bf16.mxu0 0
      %1482 = vmatmul.mubr.bf16.gmra.mrb[0].mxu0 %v508
      %v1483 = vpop.f32.mrb[0].mxu0
      %v1484 = vadd.f32 0.0, %v1483
      %v1485 = vpop.f32.mrb[0].mxu0
      %v1486 = vpop.f32.mrb[0].mxu0
      %v1487 = vadd.f32 0.0, %v1486
      %v1488 = vpop.f32.mrb[0].mxu0
      %1489 = vmatprep.mubr.bf16.mxu0 0
      %1490 = vmatmul.mubr.bf16.gmra.mrb[0].mxu0 %v509
      %v1491 = vpop.f32.mrb[0].mxu0
      %v1492 = vadd.f32 0.0, %v1491
      %v1493 = vpop.f32.mrb[0].mxu0
      %v1494 = vpop.f32.mrb[0].mxu0
      %v1495 = vadd.f32 0.0, %v1494
      %v1496 = vpop.f32.mrb[0].mxu0
      %1497 = vmatprep.mubr.bf16.mxu0 0
      %1498 = vmatmul.mubr.bf16.gmra.mrb[0].mxu0 %v510
      %v1499 = vpop.f32.mrb[0].mxu0
      %v1500 = vadd.f32 0.0, %v1499
      %v1501 = vpop.f32.mrb[0].mxu0
      %v1502 = vpop.f32.mrb[0].mxu0
      %v1503 = vadd.f32 0.0, %v1502
      %v1504 = vpop.f32.mrb[0].mxu0
      %1505 = vmatprep.mubr.bf16.mxu0 0
      %1506 = vmatmul.mubr.bf16.gmra.mrb[0].mxu0 %v511
      %v1507 = vpop.f32.mrb[0].mxu0
      %v1508 = vadd.f32 0.0, %v1507
      %v1509 = vpop.f32.mrb[0].mxu0
      %v1510 = vpop.f32.mrb[0].mxu0
      %v1511 = vadd.f32 0.0, %v1510
      %v1512 = vpop.f32.mrb[0].mxu0
      %1513 = vmatprep.mubr.bf16.mxu0 0
      %1514 = vmatmul.mubr.bf16.gmra.mrb[0].mxu0 %v512
      %v1515 = vpop.f32.mrb[0].mxu0
      %v1516 = vadd.f32 0.0, %v1515
      %v1517 = vpop.f32.mrb[0].mxu0
      %v1518 = vpop.f32.mrb[0].mxu0
      %v1519 = vadd.f32 0.0, %v1518
      %v1520 = vpop.f32.mrb[0].mxu0
      %1521 = vmatprep.mubr.bf16.mxu0 0
      %1522 = vmatmul.mubr.bf16.gmra.mrb[0].mxu0 %v513
      %v1523 = vpop.f32.mrb[0].mxu0
      %v1524 = vadd.f32 0.0, %v1523
      %v1525 = vpop.f32.mrb[0].mxu0
      %v1526 = vpop.f32.mrb[0].mxu0
      %v1527 = vadd.f32 0.0, %v1526
      %v1528 = vpop.f32.mrb[0].mxu0
      %1529 = vmatprep.mubr.bf16.mxu0 0
      %1530 = vmatmul.mubr.bf16.gmra.mrb[0].mxu0 %v514
      %v1531 = vpop.f32.mrb[0].mxu0
      %v1532 = vadd.f32 0.0, %v1531
      %v1533 = vpop.f32.mrb[0].mxu0
      %v1534 = vpop.f32.mrb[0].mxu0
      %v1535 = vadd.f32 0.0, %v1534
      %v1536 = vpop.f32.mrb[0].mxu0
      %1537 = vmatprep.mubr.bf16.mxu0 0
      %1538 = vmatmul.mubr.bf16.gmra.mrb[0].mxu0 %v515
      %v1539 = vpop.f32.mrb[0].mxu0
      %v1540 = vadd.f32 0.0, %v1539
      %v1541 = vpop.f32.mrb[0].mxu0
      %v1542 = vpop.f32.mrb[0].mxu0
      %v1543 = vadd.f32 0.0, %v1542
      %v1544 = vpop.f32.mrb[0].mxu0
      %1545 = vmatprep.mubr.bf16.mxu0 0
      %1546 = vmatmul.mubr.bf16.gmra.mrb[0].mxu0 %v516
      %v1547 = vpop.f32.mrb[0].mxu0
      %v1548 = vadd.f32 0.0, %v1547
      %v1549 = vpop.f32.mrb[0].mxu0
      %v1550 = vpop.f32.mrb[0].mxu0
      %v1551 = vadd.f32 0.0, %v1550
      %v1552 = vpop.f32.mrb[0].mxu0
      %1553 = vmatprep.mubr.bf16.mxu0 0
      %1554 = vmatmul.mubr.bf16.gmra.mrb[0].mxu0 %v517
      %v1555 = vpop.f32.mrb[0].mxu0
      %v1556 = vadd.f32 0.0, %v1555
      %v1557 = vpop.f32.mrb[0].mxu0
      %v1558 = vpop.f32.mrb[0].mxu0
      %v1559 = vadd.f32 0.0, %v1558
      %v1560 = vpop.f32.mrb[0].mxu0
      %1561 = vmatprep.mubr.bf16.mxu0 0
      %1562 = vmatmul.mubr.bf16.gmra.mrb[0].mxu0 %v518
      %v1563 = vpop.f32.mrb[0].mxu0
      %v1564 = vadd.f32 0.0, %v1563
      %v1565 = vpop.f32.mrb[0].mxu0
      %v1566 = vpop.f32.mrb[0].mxu0
      %v1567 = vadd.f32 0.0, %v1566
      %v1568 = vpop.f32.mrb[0].mxu0
      %1569 = vmatprep.mubr.bf16.mxu0 0
      %1570 = vmatmul.mubr.bf16.gmra.mrb[0].mxu0 %v519
      %v1571 = vpop.f32.mrb[0].mxu0
      %v1572 = vadd.f32 0.0, %v1571
      %v1573 = vpop.f32.mrb[0].mxu0
      %v1574 = vpop.f32.mrb[0].mxu0
      %v1575 = vadd.f32 0.0, %v1574
      %v1576 = vpop.f32.mrb[0].mxu0
      %1577 = vmatprep.mubr.bf16.mxu0 0
      %1578 = vmatmul.mubr.bf16.gmra.mrb[0].mxu0 %v520
      %v1579 = vpop.f32.mrb[0].mxu0
      %v1580 = vadd.f32 0.0, %v1579
      %v1581 = vpop.f32.mrb[0].mxu0
      %v1582 = vpop.f32.mrb[0].mxu0
      %v1583 = vadd.f32 0.0, %v1582
      %v1584 = vpop.f32.mrb[0].mxu0
      %1585 = vmatprep.mubr.bf16.mxu0 0
      %1586 = vmatmul.mubr.bf16.gmra.mrb[0].mxu0 %v521
      %v1587 = vpop.f32.mrb[0].mxu0
      %v1588 = vadd.f32 0.0, %v1587
      %v1589 = vpop.f32.mrb[0].mxu0
      %v1590 = vpop.f32.mrb[0].mxu0
      %v1591 = vadd.f32 0.0, %v1590
      %v1592 = vpop.f32.mrb[0].mxu0
      %1593 = vmatprep.mubr.bf16.mxu0 0
      %1594 = vmatmul.mubr.bf16.gmra.mrb[0].mxu0 %v522
      %v1595 = vpop.f32.mrb[0].mxu0
      %v1596 = vadd.f32 0.0, %v1595
      %v1597 = vpop.f32.mrb[0].mxu0
      %v1598 = vpop.f32.mrb[0].mxu0
      %v1599 = vadd.f32 0.0, %v1598
      %v1600 = vpop.f32.mrb[0].mxu0
      %1601 = vmatprep.mubr.bf16.mxu0 0
      %1602 = vmatmul.mubr.bf16.gmra.mrb[0].mxu0 %v523
      %v1603 = vpop.f32.mrb[0].mxu0
      %v1604 = vadd.f32 0.0, %v1603
      %v1605 = vpop.f32.mrb[0].mxu0
      %v1606 = vpop.f32.mrb[0].mxu0
      %v1607 = vadd.f32 0.0, %v1606
      %v1608 = vpop.f32.mrb[0].mxu0
      %1609 = vmatprep.mubr.bf16.mxu0 0
      %1610 = vmatmul.mubr.bf16.gmra.mrb[0].mxu0 %v524
      %v1611 = vpop.f32.mrb[0].mxu0
      %v1612 = vadd.f32 0.0, %v1611
      %v1613 = vpop.f32.mrb[0].mxu0
      %v1614 = vpop.f32.mrb[0].mxu0
      %v1615 = vadd.f32 0.0, %v1614
      %v1616 = vpop.f32.mrb[0].mxu0
      %1617 = vmatprep.mubr.bf16.mxu0 0
      %1618 = vmatmul.mubr.bf16.gmra.mrb[0].mxu0 %v525
      %v1619 = vpop.f32.mrb[0].mxu0
      %v1620 = vadd.f32 0.0, %v1619
      %v1621 = vpop.f32.mrb[0].mxu0
      %v1622 = vpop.f32.mrb[0].mxu0
      %v1623 = vadd.f32 0.0, %v1622
      %v1624 = vpop.f32.mrb[0].mxu0
      %1625 = vmatprep.mubr.bf16.mxu0 0
      %1626 = vmatmul.mubr.bf16.gmra.mrb[0].mxu0 %v526
      %v1627 = vpop.f32.mrb[0].mxu0
      %v1628 = vadd.f32 0.0, %v1627
      %v1629 = vpop.f32.mrb[0].mxu0
      %v1630 = vpop.f32.mrb[0].mxu0
      %v1631 = vadd.f32 0.0, %v1630
      %v1632 = vpop.f32.mrb[0].mxu0
      %1633 = vmatprep.mubr.bf16.mxu0 0
      %1634 = vmatmul.mubr.bf16.gmra.mrb[0].mxu0 %v527
      %v1635 = vpop.f32.mrb[0].mxu0
      %v1636 = vadd.f32 0.0, %v1635
      %v1637 = vpop.f32.mrb[0].mxu0
      %v1638 = vpop.f32.mrb[0].mxu0
      %v1639 = vadd.f32 0.0, %v1638
      %v1640 = vpop.f32.mrb[0].mxu0
      %1641 = vmatprep.mubr.bf16.mxu0 0
      %1642 = vmatmul.mubr.bf16.gmra.mrb[0].mxu0 %v528
      %v1643 = vpop.f32.mrb[0].mxu0
      %v1644 = vadd.f32 0.0, %v1643
      %v1645 = vpop.f32.mrb[0].mxu0
      %v1646 = vpop.f32.mrb[0].mxu0
      %v1647 = vadd.f32 0.0, %v1646
      %v1648 = vpop.f32.mrb[0].mxu0
      %1649 = vmatprep.mubr.bf16.mxu0 0
      %1650 = vmatmul.mubr.bf16.gmra.mrb[0].mxu0 %v529
      %v1651 = vpop.f32.mrb[0].mxu0
      %v1652 = vadd.f32 0.0, %v1651
      %v1653 = vpop.f32.mrb[0].mxu0
      %v1654 = vpop.f32.mrb[0].mxu0
      %v1655 = vadd.f32 0.0, %v1654
      %v1656 = vpop.f32.mrb[0].mxu0
      %1657 = vmatprep.mubr.bf16.mxu0 0
      %1658 = vmatmul.mubr.bf16.gmra.mrb[0].mxu0 %v530
      %v1659 = vpop.f32.mrb[0].mxu0
      %v1660 = vadd.f32 0.0, %v1659
      %v1661 = vpop.f32.mrb[0].mxu0
      %v1662 = vpop.f32.mrb[0].mxu0
      %v1663 = vadd.f32 0.0, %v1662
      %v1664 = vpop.f32.mrb[0].mxu0
      %1665 = vmatprep.mubr.bf16.mxu0 0
      %1666 = vmatmul.mubr.bf16.gmra.mrb[0].mxu0 %v531
      %v1667 = vpop.f32.mrb[0].mxu0
      %v1668 = vadd.f32 0.0, %v1667
      %v1669 = vpop.f32.mrb[0].mxu0
      %v1670 = vpop.f32.mrb[0].mxu0
      %v1671 = vadd.f32 0.0, %v1670
      %v1672 = vpop.f32.mrb[0].mxu0
      %1673 = vmatprep.mubr.bf16.mxu0 0
      %1674 = vmatmul.mubr.bf16.gmra.mrb[0].mxu0 %v532
      %v1675 = vpop.f32.mrb[0].mxu0
      %v1676 = vadd.f32 0.0, %v1675
      %v1677 = vpop.f32.mrb[0].mxu0
      %v1678 = vpop.f32.mrb[0].mxu0
      %v1679 = vadd.f32 0.0, %v1678
      %v1680 = vpop.f32.mrb[0].mxu0
      %1681 = vmatprep.mubr.bf16.mxu0 0
      %1682 = vmatmul.mubr.bf16.gmra.mrb[0].mxu0 %v533
      %v1683 = vpop.f32.mrb[0].mxu0
      %v1684 = vadd.f32 0.0, %v1683
      %v1685 = vpop.f32.mrb[0].mxu0
      %v1686 = vpop.f32.mrb[0].mxu0
      %v1687 = vadd.f32 0.0, %v1686
      %v1688 = vpop.f32.mrb[0].mxu0
      %1689 = vmatprep.mubr.bf16.mxu0 0
      %1690 = vmatmul.mubr.bf16.gmra.mrb[0].mxu0 %v534
      %v1691 = vpop.f32.mrb[0].mxu0
      %v1692 = vadd.f32 0.0, %v1691
      %v1693 = vpop.f32.mrb[0].mxu0
      %v1694 = vpop.f32.mrb[0].mxu0
      %v1695 = vadd.f32 0.0, %v1694
      %v1696 = vpop.f32.mrb[0].mxu0
      %1697 = vmatprep.mubr.bf16.mxu0 0
      %1698 = vmatmul.mubr.bf16.gmra.mrb[0].mxu0 %v535
      %v1699 = vpop.f32.mrb[0].mxu0
      %v1700 = vadd.f32 0.0, %v1699
      %v1701 = vpop.f32.mrb[0].mxu0
      %v1702 = vpop.f32.mrb[0].mxu0
      %v1703 = vadd.f32 0.0, %v1702
      %v1704 = vpop.f32.mrb[0].mxu0
      %1705 = vmatprep.mubr.bf16.mxu0 0
      %1706 = vmatmul.mubr.bf16.gmra.mrb[0].mxu0 %v536
      %v1707 = vpop.f32.mrb[0].mxu0
      %v1708 = vadd.f32 0.0, %v1707
      %v1709 = vpop.f32.mrb[0].mxu0
      %v1710 = vpop.f32.mrb[0].mxu0
      %v1711 = vadd.f32 0.0, %v1710
      %v1712 = vpop.f32.mrb[0].mxu0
      %1713 = vmatprep.mubr.bf16.mxu0 0
      %1714 = vmatmul.mubr.bf16.gmra.mrb[0].mxu0 %v537
      %v1715 = vpop.f32.mrb[0].mxu0
      %v1716 = vadd.f32 0.0, %v1715
      %v1717 = vpop.f32.mrb[0].mxu0
      %v1718 = vpop.f32.mrb[0].mxu0
      %v1719 = vadd.f32 0.0, %v1718
      %v1720 = vpop.f32.mrb[0].mxu0
      %1721 = vmatprep.mubr.bf16.mxu0 0
      %1722 = vmatmul.mubr.bf16.gmra.mrb[0].mxu0 %v538
      %v1723 = vpop.f32.mrb[0].mxu0
      %v1724 = vadd.f32 0.0, %v1723
      %v1725 = vpop.f32.mrb[0].mxu0
      %v1726 = vpop.f32.mrb[0].mxu0
      %v1727 = vadd.f32 0.0, %v1726
      %v1728 = vpop.f32.mrb[0].mxu0
      %1729 = vdwg.mxu0
      %v1730 = vrot.slane %v1476, 2
      %v1731 = vrot.slane %v1479, 2
      %v1732 = vrot.slane %v1484, 2
      %v1733 = vrot.slane %v1487, 2
      %v1734 = vrot.slane %v1492, 2
      %v1735 = vrot.slane %v1495, 2
      %v1736 = vrot.slane %v1500, 2
      %v1737 = vrot.slane %v1503, 2
      %v1738 = vrot.slane %v1508, 2
      %v1739 = vrot.slane %v1511, 2
      %v1740 = vrot.slane %v1516, 2
      %v1741 = vrot.slane %v1519, 2
      %v1742 = vrot.slane %v1524, 2
      %v1743 = vrot.slane %v1527, 2
      %v1744 = vrot.slane %v1532, 2
      %v1745 = vrot.slane %v1535, 2
      %v1746 = vrot.slane %v1540, 2
      %v1747 = vrot.slane %v1543, 2
      %v1748 = vrot.slane %v1548, 2
      %v1749 = vrot.slane %v1551, 2
      %v1750 = vrot.slane %v1556, 2
      %v1751 = vrot.slane %v1559, 2
      %v1752 = vrot.slane %v1564, 2
      %v1753 = vrot.slane %v1567, 2
      %v1754 = vrot.slane %v1572, 2
      %v1755 = vrot.slane %v1575, 2
      %v1756 = vrot.slane %v1580, 2
      %v1757 = vrot.slane %v1583, 2
      %v1758 = vrot.slane %v1588, 2
      %v1759 = vrot.slane %v1591, 2
      %v1760 = vrot.slane %v1596, 2
      %v1761 = vrot.slane %v1599, 2
      %v1762 = vrot.slane %v1604, 2
      %v1763 = vrot.slane %v1607, 2
      %v1764 = vrot.slane %v1612, 2
      %v1765 = vrot.slane %v1615, 2
      %v1766 = vrot.slane %v1620, 2
      %v1767 = vrot.slane %v1623, 2
      %v1768 = vrot.slane %v1628, 2
      %v1769 = vrot.slane %v1631, 2
      %v1770 = vrot.slane %v1636, 2
      %v1771 = vrot.slane %v1639, 2
      %v1772 = vrot.slane %v1644, 2
      %v1773 = vrot.slane %v1647, 2
      %v1774 = vrot.slane %v1652, 2
      %v1775 = vrot.slane %v1655, 2
      %v1776 = vrot.slane %v1660, 2
      %v1777 = vrot.slane %v1663, 2
      %v1778 = vrot.slane %v1668, 2
      %v1779 = vrot.slane %v1671, 2
      %v1780 = vrot.slane %v1676, 2
      %v1781 = vrot.slane %v1679, 2
      %v1782 = vrot.slane %v1684, 2
      %v1783 = vrot.slane %v1687, 2
      %v1784 = vrot.slane %v1692, 2
      %v1785 = vrot.slane %v1695, 2
      %v1786 = vrot.slane %v1700, 2
      %v1787 = vrot.slane %v1703, 2
      %v1788 = vrot.slane %v1708, 2
      %v1789 = vrot.slane %v1711, 2
      %v1790 = vrot.slane %v1716, 2
      %v1791 = vrot.slane %v1719, 2
      %v1792 = vrot.slane %v1724, 2
      %v1793 = vrot.slane %v1727, 2
      %vm1794 = vcmp.lt.s32.totalorder %v973, 6
      %v1795 = vsel %vm1794, %v1792, %v1793
      %v1796 = vsel %vm1794, %v1791, %v1792
      %v1797 = vsel %vm1794, %v1790, %v1791
      %v1798 = vsel %vm1794, %v1789, %v1790
      %v1799 = vsel %vm1794, %v1788, %v1789
      %v1800 = vsel %vm1794, %v1787, %v1788
      %v1801 = vsel %vm1794, %v1786, %v1787
      %v1802 = vsel %vm1794, %v1785, %v1786
      %v1803 = vsel %vm1794, %v1784, %v1785
      %v1804 = vsel %vm1794, %v1783, %v1784
      %v1805 = vsel %vm1794, %v1782, %v1783
      %v1806 = vsel %vm1794, %v1781, %v1782
      %v1807 = vsel %vm1794, %v1780, %v1781
      %v1808 = vsel %vm1794, %v1779, %v1780
      %v1809 = vsel %vm1794, %v1778, %v1779
      %v1810 = vsel %vm1794, %v1777, %v1778
      %v1811 = vsel %vm1794, %v1776, %v1777
      %v1812 = vsel %vm1794, %v1775, %v1776
      %v1813 = vsel %vm1794, %v1774, %v1775
      %v1814 = vsel %vm1794, %v1773, %v1774
      %v1815 = vsel %vm1794, %v1772, %v1773
      %v1816 = vsel %vm1794, %v1771, %v1772
      %v1817 = vsel %vm1794, %v1770, %v1771
      %v1818 = vsel %vm1794, %v1769, %v1770
      %v1819 = vsel %vm1794, %v1768, %v1769
      %v1820 = vsel %vm1794, %v1767, %v1768
      %v1821 = vsel %vm1794, %v1766, %v1767
      %v1822 = vsel %vm1794, %v1765, %v1766
      %v1823 = vsel %vm1794, %v1764, %v1765
      %v1824 = vsel %vm1794, %v1763, %v1764
      %v1825 = vsel %vm1794, %v1762, %v1763
      %v1826 = vsel %vm1794, %v1761, %v1762
      %v1827 = vsel %vm1794, %v1760, %v1761
      %v1828 = vsel %vm1794, %v1759, %v1760
      %v1829 = vsel %vm1794, %v1758, %v1759
      %v1830 = vsel %vm1794, %v1757, %v1758
      %v1831 = vsel %vm1794, %v1756, %v1757
      %v1832 = vsel %vm1794, %v1755, %v1756
      %v1833 = vsel %vm1794, %v1754, %v1755
      %v1834 = vsel %vm1794, %v1753, %v1754
      %v1835 = vsel %vm1794, %v1752, %v1753
      %v1836 = vsel %vm1794, %v1751, %v1752
      %v1837 = vsel %vm1794, %v1750, %v1751
      %v1838 = vsel %vm1794, %v1749, %v1750
      %v1839 = vsel %vm1794, %v1748, %v1749
      %v1840 = vsel %vm1794, %v1747, %v1748
      %v1841 = vsel %vm1794, %v1746, %v1747
      %v1842 = vsel %vm1794, %v1745, %v1746
      %v1843 = vsel %vm1794, %v1744, %v1745
      %v1844 = vsel %vm1794, %v1743, %v1744
      %v1845 = vsel %vm1794, %v1742, %v1743
      %v1846 = vsel %vm1794, %v1741, %v1742
      %v1847 = vsel %vm1794, %v1740, %v1741
      %v1848 = vsel %vm1794, %v1739, %v1740
      %v1849 = vsel %vm1794, %v1738, %v1739
      %v1850 = vsel %vm1794, %v1737, %v1738
      %v1851 = vsel %vm1794, %v1736, %v1737
      %v1852 = vsel %vm1794, %v1735, %v1736
      %v1853 = vsel %vm1794, %v1734, %v1735
      %v1854 = vsel %vm1794, %v1733, %v1734
      %v1855 = vsel %vm1794, %v1732, %v1733
      %v1856 = vsel %vm1794, %v1731, %v1732
      %v1857 = vsel %vm1794, %v1730, %v1731
      %v1858 = vsel %vm1794, %v1793, %v1730
      %v1859 = vadd.f32 %v1122, %v1857
      %v1860 = vadd.f32 %v1125, %v1856
      %v1861 = vadd.f32 %v1130, %v1855
      %v1862 = vadd.f32 %v1133, %v1854
      %v1863 = vadd.f32 %v1138, %v1853
      %v1864 = vadd.f32 %v1141, %v1852
      %v1865 = vadd.f32 %v1146, %v1851
      %v1866 = vadd.f32 %v1149, %v1850
      %v1867 = vadd.f32 %v1154, %v1849
      %v1868 = vadd.f32 %v1157, %v1848
      %v1869 = vadd.f32 %v1162, %v1847
      %v1870 = vadd.f32 %v1165, %v1846
      %v1871 = vadd.f32 %v1170, %v1845
      %v1872 = vadd.f32 %v1173, %v1844
      %v1873 = vadd.f32 %v1178, %v1843
      %v1874 = vadd.f32 %v1181, %v1842
      %v1875 = vadd.f32 %v1186, %v1841
      %v1876 = vadd.f32 %v1189, %v1840
      %v1877 = vadd.f32 %v1194, %v1839
      %v1878 = vadd.f32 %v1197, %v1838
      %v1879 = vadd.f32 %v1202, %v1837
      %v1880 = vadd.f32 %v1205, %v1836
      %v1881 = vadd.f32 %v1210, %v1835
      %v1882 = vadd.f32 %v1213, %v1834
      %v1883 = vadd.f32 %v1218, %v1833
      %v1884 = vadd.f32 %v1221, %v1832
      %v1885 = vadd.f32 %v1226, %v1831
      %v1886 = vadd.f32 %v1229, %v1830
      %v1887 = vadd.f32 %v1234, %v1829
      %v1888 = vadd.f32 %v1237, %v1828
      %v1889 = vadd.f32 %v1242, %v1827
      %v1890 = vadd.f32 %v1245, %v1826
      %v1891 = vadd.f32 %v1250, %v1825
      %v1892 = vadd.f32 %v1253, %v1824
      %v1893 = vadd.f32 %v1258, %v1823
      %v1894 = vadd.f32 %v1261, %v1822
      %v1895 = vadd.f32 %v1266, %v1821
      %v1896 = vadd.f32 %v1269, %v1820
      %v1897 = vadd.f32 %v1274, %v1819
      %v1898 = vadd.f32 %v1277, %v1818
      %v1899 = vadd.f32 %v1282, %v1817
      %v1900 = vadd.f32 %v1285, %v1816
      %v1901 = vadd.f32 %v1290, %v1815
      %v1902 = vadd.f32 %v1293, %v1814
      %v1903 = vadd.f32 %v1298, %v1813
      %v1904 = vadd.f32 %v1301, %v1812
      %v1905 = vadd.f32 %v1306, %v1811
      %v1906 = vadd.f32 %v1309, %v1810
      %v1907 = vadd.f32 %v1314, %v1809
      %v1908 = vadd.f32 %v1317, %v1808
      %v1909 = vadd.f32 %v1322, %v1807
      %v1910 = vadd.f32 %v1325, %v1806
      %v1911 = vadd.f32 %v1330, %v1805
      %v1912 = vadd.f32 %v1333, %v1804
      %v1913 = vadd.f32 %v1338, %v1803
      %v1914 = vadd.f32 %v1341, %v1802
      %v1915 = vadd.f32 %v1346, %v1801
      %v1916 = vadd.f32 %v1349, %v1800
      %v1917 = vadd.f32 %v1354, %v1799
      %v1918 = vadd.f32 %v1357, %v1798
      %v1919 = vadd.f32 %v1362, %v1797
      %v1920 = vadd.f32 %v1365, %v1796
      %v1921 = vadd.f32 %v1370, %v1795
      %v1922 = vadd.f32 %v1373, %v1858
      %1923 = vst [vmem:[#allocation2] sm:$0xff] %v1859
      %1924 = vst [vmem:[#allocation2 + $0x8] sm:$0xff] %v1860
      %1925 = vst [vmem:[#allocation2 + $0x10] sm:$0xff] %v1861
      %1926 = vst [vmem:[#allocation2 + $0x18] sm:$0xff] %v1862
      %1927 = vst [vmem:[#allocation2 + $0x20] sm:$0xff] %v1863
      %1928 = vst [vmem:[#allocation2 + $0x28] sm:$0xff] %v1864
      %1929 = vst [vmem:[#allocation2 + $0x30] sm:$0xff] %v1865
      %1930 = vst [vmem:[#allocation2 + $0x38] sm:$0xff] %v1866
      %1931 = vst [vmem:[#allocation2 + $0x40] sm:$0xff] %v1867
      %1932 = vst [vmem:[#allocation2 + $0x48] sm:$0xff] %v1868
      %1933 = vst [vmem:[#allocation2 + $0x50] sm:$0xff] %v1869
      %1934 = vst [vmem:[#allocation2 + $0x58] sm:$0xff] %v1870
      %1935 = vst [vmem:[#allocation2 + $0x60] sm:$0xff] %v1871
      %1936 = vst [vmem:[#allocation2 + $0x68] sm:$0xff] %v1872
      %1937 = vst [vmem:[#allocation2 + $0x70] sm:$0xff] %v1873
      %1938 = vst [vmem:[#allocation2 + $0x78] sm:$0xff] %v1874
      %1939 = vst [vmem:[#allocation2 + $0x80] sm:$0xff] %v1875
      %1940 = vst [vmem:[#allocation2 + $0x88] sm:$0xff] %v1876
      %1941 = vst [vmem:[#allocation2 + $0x90] sm:$0xff] %v1877
      %1942 = vst [vmem:[#allocation2 + $0x98] sm:$0xff] %v1878
      %1943 = vst [vmem:[#allocation2 + $0xa0] sm:$0xff] %v1879
      %1944 = vst [vmem:[#allocation2 + $0xa8] sm:$0xff] %v1880
      %1945 = vst [vmem:[#allocation2 + $0xb0] sm:$0xff] %v1881
      %1946 = vst [vmem:[#allocation2 + $0xb8] sm:$0xff] %v1882
      %1947 = vst [vmem:[#allocation2 + $0xc0] sm:$0xff] %v1883
      %1948 = vst [vmem:[#allocation2 + $0xc8] sm:$0xff] %v1884
      %1949 = vst [vmem:[#allocation2 + $0xd0] sm:$0xff] %v1885
      %1950 = vst [vmem:[#allocation2 + $0xd8] sm:$0xff] %v1886
      %1951 = vst [vmem:[#allocation2 + $0xe0] sm:$0xff] %v1887
      %1952 = vst [vmem:[#allocation2 + $0xe8] sm:$0xff] %v1888
      %1953 = vst [vmem:[#allocation2 + $0xf0] sm:$0xff] %v1889
      %1954 = vst [vmem:[#allocation2 + $0xf8] sm:$0xff] %v1890
      %1955 = vst [vmem:[#allocation2 + $0x100] sm:$0xff] %v1891
      %1956 = vst [vmem:[#allocation2 + $0x108] sm:$0xff] %v1892
      %1957 = vst [vmem:[#allocation2 + $0x110] sm:$0xff] %v1893
      %1958 = vst [vmem:[#allocation2 + $0x118] sm:$0xff] %v1894
      %1959 = vst [vmem:[#allocation2 + $0x120] sm:$0xff] %v1895
      %1960 = vst [vmem:[#allocation2 + $0x128] sm:$0xff] %v1896
      %1961 = vst [vmem:[#allocation2 + $0x130] sm:$0xff] %v1897
      %1962 = vst [vmem:[#allocation2 + $0x138] sm:$0xff] %v1898
      %1963 = vst [vmem:[#allocation2 + $0x140] sm:$0xff] %v1899
      %1964 = vst [vmem:[#allocation2 + $0x148] sm:$0xff] %v1900
      %1965 = vst [vmem:[#allocation2 + $0x150] sm:$0xff] %v1901
      %1966 = vst [vmem:[#allocation2 + $0x158] sm:$0xff] %v1902
      %1967 = vst [vmem:[#allocation2 + $0x160] sm:$0xff] %v1903
      %1968 = vst [vmem:[#allocation2 + $0x168] sm:$0xff] %v1904
      %1969 = vst [vmem:[#allocation2 + $0x170] sm:$0xff] %v1905
      %1970 = vst [vmem:[#allocation2 + $0x178] sm:$0xff] %v1906
      %1971 = vst [vmem:[#allocation2 + $0x180] sm:$0xff] %v1907
      %1972 = vst [vmem:[#allocation2 + $0x188] sm:$0xff] %v1908
      %1973 = vst [vmem:[#allocation2 + $0x190] sm:$0xff] %v1909
      %1974 = vst [vmem:[#allocation2 + $0x198] sm:$0xff] %v1910
      %1975 = vst [vmem:[#allocation2 + $0x1a0] sm:$0xff] %v1911
      %1976 = vst [vmem:[#allocation2 + $0x1a8] sm:$0xff] %v1912
      %1977 = vst [vmem:[#allocation2 + $0x1b0] sm:$0xff] %v1913
      %1978 = vst [vmem:[#allocation2 + $0x1b8] sm:$0xff] %v1914
      %1979 = vst [vmem:[#allocation2 + $0x1c0] sm:$0xff] %v1915
      %1980 = vst [vmem:[#allocation2 + $0x1c8] sm:$0xff] %v1916
      %1981 = vst [vmem:[#allocation2 + $0x1d0] sm:$0xff] %v1917
      %1982 = vst [vmem:[#allocation2 + $0x1d8] sm:$0xff] %v1918
      %1983 = vst [vmem:[#allocation2 + $0x1e0] sm:$0xff] %v1919
      %1984 = vst [vmem:[#allocation2 + $0x1e8] sm:$0xff] %v1920
      %1985 = vst [vmem:[#allocation2 + $0x1f0] sm:$0xff] %v1921
      %1986 = vst [vmem:[#allocation2 + $0x1f8] sm:$0xff] %v1922
      %s1987 = sadd.s32 %s278, 1
      %s1988 = smul.u32 %s1987, 4
      %s1989 = smul.addr %s1988, 4
      %s1990 = scalar_lea.vmem %s255, %s1989
      %v1991 = vld [vmem:[%s1990] sm:$0xf]
      %v1992 = vld [vmem:[%s1990 + $0x4] sm:$0xf]
      %v1993 = vld [vmem:[%s1990 + $0x8] sm:$0xf]
      %v1994 = vld [vmem:[%s1990 + $0xc] sm:$0xf]
      %v1995 = vld [vmem:[%s1990 + $0x10] sm:$0xf]
      %v1996 = vld [vmem:[%s1990 + $0x14] sm:$0xf]
      %v1997 = vld [vmem:[%s1990 + $0x18] sm:$0xf]
      %v1998 = vld [vmem:[%s1990 + $0x1c] sm:$0xf]
      %v1999 = vld [vmem:[%s1990 + $0x20] sm:$0xf]
      %v2000 = vld [vmem:[%s1990 + $0x24] sm:$0xf]
      %v2001 = vld [vmem:[%s1990 + $0x28] sm:$0xf]
      %v2002 = vld [vmem:[%s1990 + $0x2c] sm:$0xf]
      %v2003 = vld [vmem:[%s1990 + $0x30] sm:$0xf]
      %v2004 = vld [vmem:[%s1990 + $0x34] sm:$0xf]
      %v2005 = vld [vmem:[%s1990 + $0x38] sm:$0xf]
      %v2006 = vld [vmem:[%s1990 + $0x3c] sm:$0xf]
      %v2007 = vld [vmem:[%s1990 + $0x40] sm:$0xf]
      %v2008 = vld [vmem:[%s1990 + $0x44] sm:$0xf]
      %v2009 = vld [vmem:[%s1990 + $0x48] sm:$0xf]
      %v2010 = vld [vmem:[%s1990 + $0x4c] sm:$0xf]
      %v2011 = vld [vmem:[%s1990 + $0x50] sm:$0xf]
      %v2012 = vld [vmem:[%s1990 + $0x54] sm:$0xf]
      %v2013 = vld [vmem:[%s1990 + $0x58] sm:$0xf]
      %v2014 = vld [vmem:[%s1990 + $0x5c] sm:$0xf]
      %v2015 = vld [vmem:[%s1990 + $0x60] sm:$0xf]
      %v2016 = vld [vmem:[%s1990 + $0x64] sm:$0xf]
      %v2017 = vld [vmem:[%s1990 + $0x68] sm:$0xf]
      %v2018 = vld [vmem:[%s1990 + $0x6c] sm:$0xf]
      %v2019 = vld [vmem:[%s1990 + $0x70] sm:$0xf]
      %v2020 = vld [vmem:[%s1990 + $0x74] sm:$0xf]
      %v2021 = vld [vmem:[%s1990 + $0x78] sm:$0xf]
      %v2022 = vld [vmem:[%s1990 + $0x7c] sm:$0xf]
      %v2023 = vld [vmem:[%s1990 + $0x80] sm:$0xf]
      %v2024 = vld [vmem:[%s1990 + $0x84] sm:$0xf]
      %v2025 = vld [vmem:[%s1990 + $0x88] sm:$0xf]
      %v2026 = vld [vmem:[%s1990 + $0x8c] sm:$0xf]
      %v2027 = vld [vmem:[%s1990 + $0x90] sm:$0xf]
      %v2028 = vld [vmem:[%s1990 + $0x94] sm:$0xf]
      %v2029 = vld [vmem:[%s1990 + $0x98] sm:$0xf]
      %v2030 = vld [vmem:[%s1990 + $0x9c] sm:$0xf]
      %v2031 = vld [vmem:[%s1990 + $0xa0] sm:$0xf]
      %v2032 = vld [vmem:[%s1990 + $0xa4] sm:$0xf]
      %v2033 = vld [vmem:[%s1990 + $0xa8] sm:$0xf]
      %v2034 = vld [vmem:[%s1990 + $0xac] sm:$0xf]
      %v2035 = vld [vmem:[%s1990 + $0xb0] sm:$0xf]
      %v2036 = vld [vmem:[%s1990 + $0xb4] sm:$0xf]
      %v2037 = vld [vmem:[%s1990 + $0xb8] sm:$0xf]
      %v2038 = vld [vmem:[%s1990 + $0xbc] sm:$0xf]
      %v2039 = vld [vmem:[%s1990 + $0xc0] sm:$0xf]
      %v2040 = vld [vmem:[%s1990 + $0xc4] sm:$0xf]
      %v2041 = vld [vmem:[%s1990 + $0xc8] sm:$0xf]
      %v2042 = vld [vmem:[%s1990 + $0xcc] sm:$0xf]
      %v2043 = vld [vmem:[%s1990 + $0xd0] sm:$0xf]
      %v2044 = vld [vmem:[%s1990 + $0xd4] sm:$0xf]
      %v2045 = vld [vmem:[%s1990 + $0xd8] sm:$0xf]
      %v2046 = vld [vmem:[%s1990 + $0xdc] sm:$0xf]
      %v2047 = vld [vmem:[%s1990 + $0xe0] sm:$0xf]
      %v2048 = vld [vmem:[%s1990 + $0xe4] sm:$0xf]
      %v2049 = vld [vmem:[%s1990 + $0xe8] sm:$0xf]
      %v2050 = vld [vmem:[%s1990 + $0xec] sm:$0xf]
      %v2051 = vld [vmem:[%s1990 + $0xf0] sm:$0xf]
      %v2052 = vld [vmem:[%s1990 + $0xf4] sm:$0xf]
      %v2053 = vld [vmem:[%s1990 + $0xf8] sm:$0xf]
      %v2054 = vld [vmem:[%s1990 + $0xfc] sm:$0xf]
      %s2055 = scalar_lea.vmem %s1, 192
      %v2056 = vld [vmem:[%s2055] sm:$0xf]
      %v2057 = vld [vmem:[%s2055 + $0x4] sm:$0xf]
      %v2058 = vld [vmem:[%s2055 + $0x8] sm:$0xf]
      %v2059 = vld [vmem:[%s2055 + $0xc] sm:$0xf]
      %v2060 = vld [vmem:[%s2055 + $0x10] sm:$0xf]
      %v2061 = vld [vmem:[%s2055 + $0x14] sm:$0xf]
      %v2062 = vld [vmem:[%s2055 + $0x18] sm:$0xf]
      %v2063 = vld [vmem:[%s2055 + $0x1c] sm:$0xf]
      %v2064 = vld [vmem:[%s2055 + $0x20] sm:$0xf]
      %v2065 = vld [vmem:[%s2055 + $0x24] sm:$0xf]
      %v2066 = vld [vmem:[%s2055 + $0x28] sm:$0xf]
      %v2067 = vld [vmem:[%s2055 + $0x2c] sm:$0xf]
      %v2068 = vld [vmem:[%s2055 + $0x30] sm:$0xf]
      %v2069 = vld [vmem:[%s2055 + $0x34] sm:$0xf]
      %v2070 = vld [vmem:[%s2055 + $0x38] sm:$0xf]
      %v2071 = vld [vmem:[%s2055 + $0x3c] sm:$0xf]
      %s2072 = scalar_lea.vmem %s1, 256
      %v2073 = vld [vmem:[%s2072] sm:$0xf]
      %v2074 = vld [vmem:[%s2072 + $0x4] sm:$0xf]
      %v2075 = vld [vmem:[%s2072 + $0x8] sm:$0xf]
      %v2076 = vld [vmem:[%s2072 + $0xc] sm:$0xf]
      %v2077 = vld [vmem:[%s2072 + $0x10] sm:$0xf]
      %v2078 = vld [vmem:[%s2072 + $0x14] sm:$0xf]
      %v2079 = vld [vmem:[%s2072 + $0x18] sm:$0xf]
      %v2080 = vld [vmem:[%s2072 + $0x1c] sm:$0xf]
      %v2081 = vld [vmem:[%s2072 + $0x20] sm:$0xf]
      %v2082 = vld [vmem:[%s2072 + $0x24] sm:$0xf]
      %v2083 = vld [vmem:[%s2072 + $0x28] sm:$0xf]
      %v2084 = vld [vmem:[%s2072 + $0x2c] sm:$0xf]
      %v2085 = vld [vmem:[%s2072 + $0x30] sm:$0xf]
      %v2086 = vld [vmem:[%s2072 + $0x34] sm:$0xf]
      %v2087 = vld [vmem:[%s2072 + $0x38] sm:$0xf]
      %v2088 = vld [vmem:[%s2072 + $0x3c] sm:$0xf]
      %v2153 = vunpack.c.l.b16 %v1991
      %v2154 = vunpack.c.l.b16 %v1992
      %v2155 = vunpack.c.l.b16 %v1993
      %v2156 = vunpack.c.l.b16 %v1994
      %v2157 = vunpack.c.l.b16 %v1995
      %v2158 = vunpack.c.l.b16 %v1996
      %v2159 = vunpack.c.l.b16 %v1997
      %v2160 = vunpack.c.l.b16 %v1998
      %v2161 = vunpack.c.l.b16 %v1999
      %v2162 = vunpack.c.l.b16 %v2000
      %v2163 = vunpack.c.l.b16 %v2001
      %v2164 = vunpack.c.l.b16 %v2002
      %v2165 = vunpack.c.l.b16 %v2003
      %v2166 = vunpack.c.l.b16 %v2004
      %v2167 = vunpack.c.l.b16 %v2005
      %v2168 = vunpack.c.l.b16 %v2006
      %v2169 = vunpack.c.l.b16 %v2007
      %v2170 = vunpack.c.l.b16 %v2008
      %v2171 = vunpack.c.l.b16 %v2009
      %v2172 = vunpack.c.l.b16 %v2010
      %v2173 = vunpack.c.l.b16 %v2011
      %v2174 = vunpack.c.l.b16 %v2012
      %v2175 = vunpack.c.l.b16 %v2013
      %v2176 = vunpack.c.l.b16 %v2014
      %v2177 = vunpack.c.l.b16 %v2015
      %v2178 = vunpack.c.l.b16 %v2016
      %v2179 = vunpack.c.l.b16 %v2017
      %v2180 = vunpack.c.l.b16 %v2018
      %v2181 = vunpack.c.l.b16 %v2019
      %v2182 = vunpack.c.l.b16 %v2020
      %v2183 = vunpack.c.l.b16 %v2021
      %v2184 = vunpack.c.l.b16 %v2022
      %v2185 = vunpack.c.l.b16 %v2023
      %v2186 = vunpack.c.l.b16 %v2024
      %v2187 = vunpack.c.l.b16 %v2025
      %v2188 = vunpack.c.l.b16 %v2026
      %v2189 = vunpack.c.l.b16 %v2027
      %v2190 = vunpack.c.l.b16 %v2028
      %v2191 = vunpack.c.l.b16 %v2029
      %v2192 = vunpack.c.l.b16 %v2030
      %v2193 = vunpack.c.l.b16 %v2031
      %v2194 = vunpack.c.l.b16 %v2032
      %v2195 = vunpack.c.l.b16 %v2033
      %v2196 = vunpack.c.l.b16 %v2034
      %v2197 = vunpack.c.l.b16 %v2035
      %v2198 = vunpack.c.l.b16 %v2036
      %v2199 = vunpack.c.l.b16 %v2037
      %v2200 = vunpack.c.l.b16 %v2038
      %v2201 = vunpack.c.l.b16 %v2039
      %v2202 = vunpack.c.l.b16 %v2040
      %v2203 = vunpack.c.l.b16 %v2041
      %v2204 = vunpack.c.l.b16 %v2042
      %v2205 = vunpack.c.l.b16 %v2043
      %v2206 = vunpack.c.l.b16 %v2044
      %v2207 = vunpack.c.l.b16 %v2045
      %v2208 = vunpack.c.l.b16 %v2046
      %v2209 = vunpack.c.l.b16 %v2047
      %v2210 = vunpack.c.l.b16 %v2048
      %v2211 = vunpack.c.l.b16 %v2049
      %v2212 = vunpack.c.l.b16 %v2050
      %v2213 = vunpack.c.l.b16 %v2051
      %v2214 = vunpack.c.l.b16 %v2052
      %v2215 = vunpack.c.l.b16 %v2053
      %v2216 = vunpack.c.l.b16 %v2054
      %v2217 = vpack.c.b16 %v2154, %v2153
      %v2218 = vpack.c.b16 %v2156, %v2155
      %v2219 = vpack.c.b16 %v2158, %v2157
      %v2220 = vpack.c.b16 %v2160, %v2159
      %v2221 = vpack.c.b16 %v2162, %v2161
      %v2222 = vpack.c.b16 %v2164, %v2163
      %v2223 = vpack.c.b16 %v2166, %v2165
      %v2224 = vpack.c.b16 %v2168, %v2167
      %v2225 = vpack.c.b16 %v2170, %v2169
      %v2226 = vpack.c.b16 %v2172, %v2171
      %v2227 = vpack.c.b16 %v2174, %v2173
      %v2228 = vpack.c.b16 %v2176, %v2175
      %v2229 = vpack.c.b16 %v2178, %v2177
      %v2230 = vpack.c.b16 %v2180, %v2179
      %v2231 = vpack.c.b16 %v2182, %v2181
      %v2232 = vpack.c.b16 %v2184, %v2183
      %v2233 = vpack.c.b16 %v2186, %v2185
      %v2234 = vpack.c.b16 %v2188, %v2187
      %v2235 = vpack.c.b16 %v2190, %v2189
      %v2236 = vpack.c.b16 %v2192, %v2191
      %v2237 = vpack.c.b16 %v2194, %v2193
      %v2238 = vpack.c.b16 %v2196, %v2195
      %v2239 = vpack.c.b16 %v2198, %v2197
      %v2240 = vpack.c.b16 %v2200, %v2199
      %v2241 = vpack.c.b16 %v2202, %v2201
      %v2242 = vpack.c.b16 %v2204, %v2203
      %v2243 = vpack.c.b16 %v2206, %v2205
      %v2244 = vpack.c.b16 %v2208, %v2207
      %v2245 = vpack.c.b16 %v2210, %v2209
      %v2246 = vpack.c.b16 %v2212, %v2211
      %v2247 = vpack.c.b16 %v2214, %v2213
      %v2248 = vpack.c.b16 %v2216, %v2215
      %v2297 = vunpack.c.l.b16 %v2073
      %v2298 = vunpack.c.l.b16 %v2074
      %v2299 = vunpack.c.l.b16 %v2075
      %v2300 = vunpack.c.l.b16 %v2076
      %v2301 = vunpack.c.l.b16 %v2077
      %v2302 = vunpack.c.l.b16 %v2078
      %v2303 = vunpack.c.l.b16 %v2079
      %v2304 = vunpack.c.l.b16 %v2080
      %v2305 = vunpack.c.l.b16 %v2081
      %v2306 = vunpack.c.l.b16 %v2082
      %v2307 = vunpack.c.l.b16 %v2083
      %v2308 = vunpack.c.l.b16 %v2084
      %v2309 = vunpack.c.l.b16 %v2085
      %v2310 = vunpack.c.l.b16 %v2086
      %v2311 = vunpack.c.l.b16 %v2087
      %v2312 = vunpack.c.l.b16 %v2088
      %v2313 = vpack.c.b16 %v2298, %v2297
      %v2314 = vpack.c.b16 %v2300, %v2299
      %v2315 = vpack.c.b16 %v2302, %v2301
      %v2316 = vpack.c.b16 %v2304, %v2303
      %v2317 = vpack.c.b16 %v2306, %v2305
      %v2318 = vpack.c.b16 %v2308, %v2307
      %v2319 = vpack.c.b16 %v2310, %v2309
      %v2320 = vpack.c.b16 %v2312, %v2311
      %2329 = vmatprep.subr.bf16.mxu0 0
      %2330 = vmatpush1.bf16.msra.mxu0 %v2313
      %2331 = vmatprep.subr.bf16.mxu0 0
      %2332 = vmatpush1.bf16.msra.mxu0 %v2314
      %2333 = vmatprep.subr.bf16.mxu0 0
      %2334 = vmatpush1.bf16.msra.mxu0 %v2315
      %2335 = vmatprep.subr.bf16.mxu0 0
      %2336 = vmatpush1.bf16.msra.mxu0 %v2316
      %2337 = vmatprep.subr.bf16.mxu0 0
      %2338 = vmatpush1.bf16.msra.mxu0 %v2317
      %2339 = vmatprep.subr.bf16.mxu0 0
      %2340 = vmatpush1.bf16.msra.mxu0 %v2318
      %2341 = vmatprep.subr.bf16.mxu0 0
      %2342 = vmatpush1.bf16.msra.mxu0 %v2319
      %2343 = vmatprep.subr.bf16.mxu0 0
      %2344 = vmatpush1.bf16.msra.mxu0 %v2320
      %2345 = vmatprep.subr.bf16.mxu0 0
      %2346 = vmatpush1.bf16.msra.mxu0 0
      %2347 = vmatprep.subr.bf16.mxu0 0
      %2348 = vmatpush1.bf16.msra.mxu0 0
      %2349 = vmatprep.subr.bf16.mxu0 0
      %2350 = vmatpush1.bf16.msra.mxu0 0
      %2351 = vmatprep.subr.bf16.mxu0 0
      %2352 = vmatpush1.bf16.msra.mxu0 0
      %2353 = vmatprep.subr.bf16.mxu0 0
      %2354 = vmatpush1.bf16.msra.mxu0 0
      %2355 = vmatprep.subr.bf16.mxu0 0
      %2356 = vmatpush1.bf16.msra.mxu0 0
      %2357 = vmatprep.subr.bf16.mxu0 0
      %2358 = vmatpush1.bf16.msra.mxu0 0
      %2359 = vmatprep.subr.bf16.mxu0 0
      %2360 = vmatpush1.bf16.msra.mxu0 0
      %2361 = vmatprep.mubr.bf16.mxu0 0
      %2362 = vmatmul.mubr.bf16.gmra.mrb[0].mxu0 %v2217
      %v2363 = vpop.f32.mrb[0].mxu0
      %v2364 = vadd.f32 0.0, %v2363
      %v2365 = vpop.f32.mrb[0].mxu0
      %v2366 = vpop.f32.mrb[0].mxu0
      %v2367 = vadd.f32 0.0, %v2366
      %v2368 = vpop.f32.mrb[0].mxu0
      %2369 = vmatprep.mubr.bf16.mxu0 0
      %2370 = vmatmul.mubr.bf16.gmra.mrb[0].mxu0 %v2218
      %v2371 = vpop.f32.mrb[0].mxu0
      %v2372 = vadd.f32 0.0, %v2371
      %v2373 = vpop.f32.mrb[0].mxu0
      %v2374 = vpop.f32.mrb[0].mxu0
      %v2375 = vadd.f32 0.0, %v2374
      %v2376 = vpop.f32.mrb[0].mxu0
      %2377 = vmatprep.mubr.bf16.mxu0 0
      %2378 = vmatmul.mubr.bf16.gmra.mrb[0].mxu0 %v2219
      %v2379 = vpop.f32.mrb[0].mxu0
      %v2380 = vadd.f32 0.0, %v2379
      %v2381 = vpop.f32.mrb[0].mxu0
      %v2382 = vpop.f32.mrb[0].mxu0
      %v2383 = vadd.f32 0.0, %v2382
      %v2384 = vpop.f32.mrb[0].mxu0
      %2385 = vmatprep.mubr.bf16.mxu0 0
      %2386 = vmatmul.mubr.bf16.gmra.mrb[0].mxu0 %v2220
      %v2387 = vpop.f32.mrb[0].mxu0
      %v2388 = vadd.f32 0.0, %v2387
      %v2389 = vpop.f32.mrb[0].mxu0
      %v2390 = vpop.f32.mrb[0].mxu0
      %v2391 = vadd.f32 0.0, %v2390
      %v2392 = vpop.f32.mrb[0].mxu0
      %2393 = vmatprep.mubr.bf16.mxu0 0
      %2394 = vmatmul.mubr.bf16.gmra.mrb[0].mxu0 %v2221
      %v2395 = vpop.f32.mrb[0].mxu0
      %v2396 = vadd.f32 0.0, %v2395
      %v2397 = vpop.f32.mrb[0].mxu0
      %v2398 = vpop.f32.mrb[0].mxu0
      %v2399 = vadd.f32 0.0, %v2398
      %v2400 = vpop.f32.mrb[0].mxu0
      %2401 = vmatprep.mubr.bf16.mxu0 0
      %2402 = vmatmul.mubr.bf16.gmra.mrb[0].mxu0 %v2222
      %v2403 = vpop.f32.mrb[0].mxu0
      %v2404 = vadd.f32 0.0, %v2403
      %v2405 = vpop.f32.mrb[0].mxu0
      %v2406 = vpop.f32.mrb[0].mxu0
      %v2407 = vadd.f32 0.0, %v2406
      %v2408 = vpop.f32.mrb[0].mxu0
      %2409 = vmatprep.mubr.bf16.mxu0 0
      %2410 = vmatmul.mubr.bf16.gmra.mrb[0].mxu0 %v2223
      %v2411 = vpop.f32.mrb[0].mxu0
      %v2412 = vadd.f32 0.0, %v2411
      %v2413 = vpop.f32.mrb[0].mxu0
      %v2414 = vpop.f32.mrb[0].mxu0
      %v2415 = vadd.f32 0.0, %v2414
      %v2416 = vpop.f32.mrb[0].mxu0
      %2417 = vmatprep.mubr.bf16.mxu0 0
      %2418 = vmatmul.mubr.bf16.gmra.mrb[0].mxu0 %v2224
      %v2419 = vpop.f32.mrb[0].mxu0
      %v2420 = vadd.f32 0.0, %v2419
      %v2421 = vpop.f32.mrb[0].mxu0
      %v2422 = vpop.f32.mrb[0].mxu0
      %v2423 = vadd.f32 0.0, %v2422
      %v2424 = vpop.f32.mrb[0].mxu0
      %2425 = vmatprep.mubr.bf16.mxu0 0
      %2426 = vmatmul.mubr.bf16.gmra.mrb[0].mxu0 %v2225
      %v2427 = vpop.f32.mrb[0].mxu0
      %v2428 = vadd.f32 0.0, %v2427
      %v2429 = vpop.f32.mrb[0].mxu0
      %v2430 = vpop.f32.mrb[0].mxu0
      %v2431 = vadd.f32 0.0, %v2430
      %v2432 = vpop.f32.mrb[0].mxu0
      %2433 = vmatprep.mubr.bf16.mxu0 0
      %2434 = vmatmul.mubr.bf16.gmra.mrb[0].mxu0 %v2226
      %v2435 = vpop.f32.mrb[0].mxu0
      %v2436 = vadd.f32 0.0, %v2435
      %v2437 = vpop.f32.mrb[0].mxu0
      %v2438 = vpop.f32.mrb[0].mxu0
      %v2439 = vadd.f32 0.0, %v2438
      %v2440 = vpop.f32.mrb[0].mxu0
      %2441 = vmatprep.mubr.bf16.mxu0 0
      %2442 = vmatmul.mubr.bf16.gmra.mrb[0].mxu0 %v2227
      %v2443 = vpop.f32.mrb[0].mxu0
      %v2444 = vadd.f32 0.0, %v2443
      %v2445 = vpop.f32.mrb[0].mxu0
      %v2446 = vpop.f32.mrb[0].mxu0
      %v2447 = vadd.f32 0.0, %v2446
      %v2448 = vpop.f32.mrb[0].mxu0
      %2449 = vmatprep.mubr.bf16.mxu0 0
      %2450 = vmatmul.mubr.bf16.gmra.mrb[0].mxu0 %v2228
      %v2451 = vpop.f32.mrb[0].mxu0
      %v2452 = vadd.f32 0.0, %v2451
      %v2453 = vpop.f32.mrb[0].mxu0
      %v2454 = vpop.f32.mrb[0].mxu0
      %v2455 = vadd.f32 0.0, %v2454
      %v2456 = vpop.f32.mrb[0].mxu0
      %2457 = vmatprep.mubr.bf16.mxu0 0
      %2458 = vmatmul.mubr.bf16.gmra.mrb[0].mxu0 %v2229
      %v2459 = vpop.f32.mrb[0].mxu0
      %v2460 = vadd.f32 0.0, %v2459
      %v2461 = vpop.f32.mrb[0].mxu0
      %v2462 = vpop.f32.mrb[0].mxu0
      %v2463 = vadd.f32 0.0, %v2462
      %v2464 = vpop.f32.mrb[0].mxu0
      %2465 = vmatprep.mubr.bf16.mxu0 0
      %2466 = vmatmul.mubr.bf16.gmra.mrb[0].mxu0 %v2230
      %v2467 = vpop.f32.mrb[0].mxu0
      %v2468 = vadd.f32 0.0, %v2467
      %v2469 = vpop.f32.mrb[0].mxu0
      %v2470 = vpop.f32.mrb[0].mxu0
      %v2471 = vadd.f32 0.0, %v2470
      %v2472 = vpop.f32.mrb[0].mxu0
      %2473 = vmatprep.mubr.bf16.mxu0 0
      %2474 = vmatmul.mubr.bf16.gmra.mrb[0].mxu0 %v2231
      %v2475 = vpop.f32.mrb[0].mxu0
      %v2476 = vadd.f32 0.0, %v2475
      %v2477 = vpop.f32.mrb[0].mxu0
      %v2478 = vpop.f32.mrb[0].mxu0
      %v2479 = vadd.f32 0.0, %v2478
      %v2480 = vpop.f32.mrb[0].mxu0
      %2481 = vmatprep.mubr.bf16.mxu0 0
      %2482 = vmatmul.mubr.bf16.gmra.mrb[0].mxu0 %v2232
      %v2483 = vpop.f32.mrb[0].mxu0
      %v2484 = vadd.f32 0.0, %v2483
      %v2485 = vpop.f32.mrb[0].mxu0
      %v2486 = vpop.f32.mrb[0].mxu0
      %v2487 = vadd.f32 0.0, %v2486
      %v2488 = vpop.f32.mrb[0].mxu0
      %2489 = vmatprep.mubr.bf16.mxu0 0
      %2490 = vmatmul.mubr.bf16.gmra.mrb[0].mxu0 %v2233
      %v2491 = vpop.f32.mrb[0].mxu0
      %v2492 = vadd.f32 0.0, %v2491
      %v2493 = vpop.f32.mrb[0].mxu0
      %v2494 = vpop.f32.mrb[0].mxu0
      %v2495 = vadd.f32 0.0, %v2494
      %v2496 = vpop.f32.mrb[0].mxu0
      %2497 = vmatprep.mubr.bf16.mxu0 0
      %2498 = vmatmul.mubr.bf16.gmra.mrb[0].mxu0 %v2234
      %v2499 = vpop.f32.mrb[0].mxu0
      %v2500 = vadd.f32 0.0, %v2499
      %v2501 = vpop.f32.mrb[0].mxu0
      %v2502 = vpop.f32.mrb[0].mxu0
      %v2503 = vadd.f32 0.0, %v2502
      %v2504 = vpop.f32.mrb[0].mxu0
      %2505 = vmatprep.mubr.bf16.mxu0 0
      %2506 = vmatmul.mubr.bf16.gmra.mrb[0].mxu0 %v2235
      %v2507 = vpop.f32.mrb[0].mxu0
      %v2508 = vadd.f32 0.0, %v2507
      %v2509 = vpop.f32.mrb[0].mxu0
      %v2510 = vpop.f32.mrb[0].mxu0
      %v2511 = vadd.f32 0.0, %v2510
      %v2512 = vpop.f32.mrb[0].mxu0
      %2513 = vmatprep.mubr.bf16.mxu0 0
      %2514 = vmatmul.mubr.bf16.gmra.mrb[0].mxu0 %v2236
      %v2515 = vpop.f32.mrb[0].mxu0
      %v2516 = vadd.f32 0.0, %v2515
      %v2517 = vpop.f32.mrb[0].mxu0
      %v2518 = vpop.f32.mrb[0].mxu0
      %v2519 = vadd.f32 0.0, %v2518
      %v2520 = vpop.f32.mrb[0].mxu0
      %2521 = vmatprep.mubr.bf16.mxu0 0
      %2522 = vmatmul.mubr.bf16.gmra.mrb[0].mxu0 %v2237
      %v2523 = vpop.f32.mrb[0].mxu0
      %v2524 = vadd.f32 0.0, %v2523
      %v2525 = vpop.f32.mrb[0].mxu0
      %v2526 = vpop.f32.mrb[0].mxu0
      %v2527 = vadd.f32 0.0, %v2526
      %v2528 = vpop.f32.mrb[0].mxu0
      %2529 = vmatprep.mubr.bf16.mxu0 0
      %2530 = vmatmul.mubr.bf16.gmra.mrb[0].mxu0 %v2238
      %v2531 = vpop.f32.mrb[0].mxu0
      %v2532 = vadd.f32 0.0, %v2531
      %v2533 = vpop.f32.mrb[0].mxu0
      %v2534 = vpop.f32.mrb[0].mxu0
      %v2535 = vadd.f32 0.0, %v2534
      %v2536 = vpop.f32.mrb[0].mxu0
      %2537 = vmatprep.mubr.bf16.mxu0 0
      %2538 = vmatmul.mubr.bf16.gmra.mrb[0].mxu0 %v2239
      %v2539 = vpop.f32.mrb[0].mxu0
      %v2540 = vadd.f32 0.0, %v2539
      %v2541 = vpop.f32.mrb[0].mxu0
      %v2542 = vpop.f32.mrb[0].mxu0
      %v2543 = vadd.f32 0.0, %v2542
      %v2544 = vpop.f32.mrb[0].mxu0
      %2545 = vmatprep.mubr.bf16.mxu0 0
      %2546 = vmatmul.mubr.bf16.gmra.mrb[0].mxu0 %v2240
      %v2547 = vpop.f32.mrb[0].mxu0
      %v2548 = vadd.f32 0.0, %v2547
      %v2549 = vpop.f32.mrb[0].mxu0
      %v2550 = vpop.f32.mrb[0].mxu0
      %v2551 = vadd.f32 0.0, %v2550
      %v2552 = vpop.f32.mrb[0].mxu0
      %2553 = vmatprep.mubr.bf16.mxu0 0
      %2554 = vmatmul.mubr.bf16.gmra.mrb[0].mxu0 %v2241
      %v2555 = vpop.f32.mrb[0].mxu0
      %v2556 = vadd.f32 0.0, %v2555
      %v2557 = vpop.f32.mrb[0].mxu0
      %v2558 = vpop.f32.mrb[0].mxu0
      %v2559 = vadd.f32 0.0, %v2558
      %v2560 = vpop.f32.mrb[0].mxu0
      %2561 = vmatprep.mubr.bf16.mxu0 0
      %2562 = vmatmul.mubr.bf16.gmra.mrb[0].mxu0 %v2242
      %v2563 = vpop.f32.mrb[0].mxu0
      %v2564 = vadd.f32 0.0, %v2563
      %v2565 = vpop.f32.mrb[0].mxu0
      %v2566 = vpop.f32.mrb[0].mxu0
      %v2567 = vadd.f32 0.0, %v2566
      %v2568 = vpop.f32.mrb[0].mxu0
      %2569 = vmatprep.mubr.bf16.mxu0 0
      %2570 = vmatmul.mubr.bf16.gmra.mrb[0].mxu0 %v2243
      %v2571 = vpop.f32.mrb[0].mxu0
      %v2572 = vadd.f32 0.0, %v2571
      %v2573 = vpop.f32.mrb[0].mxu0
      %v2574 = vpop.f32.mrb[0].mxu0
      %v2575 = vadd.f32 0.0, %v2574
      %v2576 = vpop.f32.mrb[0].mxu0
      %2577 = vmatprep.mubr.bf16.mxu0 0
      %2578 = vmatmul.mubr.bf16.gmra.mrb[0].mxu0 %v2244
      %v2579 = vpop.f32.mrb[0].mxu0
      %v2580 = vadd.f32 0.0, %v2579
      %v2581 = vpop.f32.mrb[0].mxu0
      %v2582 = vpop.f32.mrb[0].mxu0
      %v2583 = vadd.f32 0.0, %v2582
      %v2584 = vpop.f32.mrb[0].mxu0
      %2585 = vmatprep.mubr.bf16.mxu0 0
      %2586 = vmatmul.mubr.bf16.gmra.mrb[0].mxu0 %v2245
      %v2587 = vpop.f32.mrb[0].mxu0
      %v2588 = vadd.f32 0.0, %v2587
      %v2589 = vpop.f32.mrb[0].mxu0
      %v2590 = vpop.f32.mrb[0].mxu0
      %v2591 = vadd.f32 0.0, %v2590
      %v2592 = vpop.f32.mrb[0].mxu0
      %2593 = vmatprep.mubr.bf16.mxu0 0
      %2594 = vmatmul.mubr.bf16.gmra.mrb[0].mxu0 %v2246
      %v2595 = vpop.f32.mrb[0].mxu0
      %v2596 = vadd.f32 0.0, %v2595
      %v2597 = vpop.f32.mrb[0].mxu0
      %v2598 = vpop.f32.mrb[0].mxu0
      %v2599 = vadd.f32 0.0, %v2598
      %v2600 = vpop.f32.mrb[0].mxu0
      %2601 = vmatprep.mubr.bf16.mxu0 0
      %2602 = vmatmul.mubr.bf16.gmra.mrb[0].mxu0 %v2247
      %v2603 = vpop.f32.mrb[0].mxu0
      %v2604 = vadd.f32 0.0, %v2603
      %v2605 = vpop.f32.mrb[0].mxu0
      %v2606 = vpop.f32.mrb[0].mxu0
      %v2607 = vadd.f32 0.0, %v2606
      %v2608 = vpop.f32.mrb[0].mxu0
      %2609 = vmatprep.mubr.bf16.mxu0 0
      %2610 = vmatmul.mubr.bf16.gmra.mrb[0].mxu0 %v2248
      %v2611 = vpop.f32.mrb[0].mxu0
      %v2612 = vadd.f32 0.0, %v2611
      %v2613 = vpop.f32.mrb[0].mxu0
      %v2614 = vpop.f32.mrb[0].mxu0
      %v2615 = vadd.f32 0.0, %v2614
      %v2616 = vpop.f32.mrb[0].mxu0
      %2617 = vdwg.mxu0
      %v2618 = vrot.slane %v2364, 1
      %v2619 = vrot.slane %v2367, 1
      %v2620 = vrot.slane %v2372, 1
      %v2621 = vrot.slane %v2375, 1
      %v2622 = vrot.slane %v2380, 1
      %v2623 = vrot.slane %v2383, 1
      %v2624 = vrot.slane %v2388, 1
      %v2625 = vrot.slane %v2391, 1
      %v2626 = vrot.slane %v2396, 1
      %v2627 = vrot.slane %v2399, 1
      %v2628 = vrot.slane %v2404, 1
      %v2629 = vrot.slane %v2407, 1
      %v2630 = vrot.slane %v2412, 1
      %v2631 = vrot.slane %v2415, 1
      %v2632 = vrot.slane %v2420, 1
      %v2633 = vrot.slane %v2423, 1
      %v2634 = vrot.slane %v2428, 1
      %v2635 = vrot.slane %v2431, 1
      %v2636 = vrot.slane %v2436, 1
      %v2637 = vrot.slane %v2439, 1
      %v2638 = vrot.slane %v2444, 1
      %v2639 = vrot.slane %v2447, 1
      %v2640 = vrot.slane %v2452, 1
      %v2641 = vrot.slane %v2455, 1
      %v2642 = vrot.slane %v2460, 1
      %v2643 = vrot.slane %v2463, 1
      %v2644 = vrot.slane %v2468, 1
      %v2645 = vrot.slane %v2471, 1
      %v2646 = vrot.slane %v2476, 1
      %v2647 = vrot.slane %v2479, 1
      %v2648 = vrot.slane %v2484, 1
      %v2649 = vrot.slane %v2487, 1
      %v2650 = vrot.slane %v2492, 1
      %v2651 = vrot.slane %v2495, 1
      %v2652 = vrot.slane %v2500, 1
      %v2653 = vrot.slane %v2503, 1
      %v2654 = vrot.slane %v2508, 1
      %v2655 = vrot.slane %v2511, 1
      %v2656 = vrot.slane %v2516, 1
      %v2657 = vrot.slane %v2519, 1
      %v2658 = vrot.slane %v2524, 1
      %v2659 = vrot.slane %v2527, 1
      %v2660 = vrot.slane %v2532, 1
      %v2661 = vrot.slane %v2535, 1
      %v2662 = vrot.slane %v2540, 1
      %v2663 = vrot.slane %v2543, 1
      %v2664 = vrot.slane %v2548, 1
      %v2665 = vrot.slane %v2551, 1
      %v2666 = vrot.slane %v2556, 1
      %v2667 = vrot.slane %v2559, 1
      %v2668 = vrot.slane %v2564, 1
      %v2669 = vrot.slane %v2567, 1
      %v2670 = vrot.slane %v2572, 1
      %v2671 = vrot.slane %v2575, 1
      %v2672 = vrot.slane %v2580, 1
      %v2673 = vrot.slane %v2583, 1
      %v2674 = vrot.slane %v2588, 1
      %v2675 = vrot.slane %v2591, 1
      %v2676 = vrot.slane %v2596, 1
      %v2677 = vrot.slane %v2599, 1
      %v2678 = vrot.slane %v2604, 1
      %v2679 = vrot.slane %v2607, 1
      %v2680 = vrot.slane %v2612, 1
      %v2681 = vrot.slane %v2615, 1
      %v2682 = vsel %vm974, %v2680, %v2681
      %v2683 = vsel %vm974, %v2679, %v2680
      %v2684 = vsel %vm974, %v2678, %v2679
      %v2685 = vsel %vm974, %v2677, %v2678
      %v2686 = vsel %vm974, %v2676, %v2677
      %v2687 = vsel %vm974, %v2675, %v2676
      %v2688 = vsel %vm974, %v2674, %v2675
      %v2689 = vsel %vm974, %v2673, %v2674
      %v2690 = vsel %vm974, %v2672, %v2673
      %v2691 = vsel %vm974, %v2671, %v2672
      %v2692 = vsel %vm974, %v2670, %v2671
      %v2693 = vsel %vm974, %v2669, %v2670
      %v2694 = vsel %vm974, %v2668, %v2669
      %v2695 = vsel %vm974, %v2667, %v2668
      %v2696 = vsel %vm974, %v2666, %v2667
      %v2697 = vsel %vm974, %v2665, %v2666
      %v2698 = vsel %vm974, %v2664, %v2665
      %v2699 = vsel %vm974, %v2663, %v2664
      %v2700 = vsel %vm974, %v2662, %v2663
      %v2701 = vsel %vm974, %v2661, %v2662
      %v2702 = vsel %vm974, %v2660, %v2661
      %v2703 = vsel %vm974, %v2659, %v2660
      %v2704 = vsel %vm974, %v2658, %v2659
      %v2705 = vsel %vm974, %v2657, %v2658
      %v2706 = vsel %vm974, %v2656, %v2657
      %v2707 = vsel %vm974, %v2655, %v2656
      %v2708 = vsel %vm974, %v2654, %v2655
      %v2709 = vsel %vm974, %v2653, %v2654
      %v2710 = vsel %vm974, %v2652, %v2653
      %v2711 = vsel %vm974, %v2651, %v2652
      %v2712 = vsel %vm974, %v2650, %v2651
      %v2713 = vsel %vm974, %v2649, %v2650
      %v2714 = vsel %vm974, %v2648, %v2649
      %v2715 = vsel %vm974, %v2647, %v2648
      %v2716 = vsel %vm974, %v2646, %v2647
      %v2717 = vsel %vm974, %v2645, %v2646
      %v2718 = vsel %vm974, %v2644, %v2645
      %v2719 = vsel %vm974, %v2643, %v2644
      %v2720 = vsel %vm974, %v2642, %v2643
      %v2721 = vsel %vm974, %v2641, %v2642
      %v2722 = vsel %vm974, %v2640, %v2641
      %v2723 = vsel %vm974, %v2639, %v2640
      %v2724 = vsel %vm974, %v2638, %v2639
      %v2725 = vsel %vm974, %v2637, %v2638
      %v2726 = vsel %vm974, %v2636, %v2637
      %v2727 = vsel %vm974, %v2635, %v2636
      %v2728 = vsel %vm974, %v2634, %v2635
      %v2729 = vsel %vm974, %v2633, %v2634
      %v2730 = vsel %vm974, %v2632, %v2633
      %v2731 = vsel %vm974, %v2631, %v2632
      %v2732 = vsel %vm974, %v2630, %v2631
      %v2733 = vsel %vm974, %v2629, %v2630
      %v2734 = vsel %vm974, %v2628, %v2629
      %v2735 = vsel %vm974, %v2627, %v2628
      %v2736 = vsel %vm974, %v2626, %v2627
      %v2737 = vsel %vm974, %v2625, %v2626
      %v2738 = vsel %vm974, %v2624, %v2625
      %v2739 = vsel %vm974, %v2623, %v2624
      %v2740 = vsel %vm974, %v2622, %v2623
      %v2741 = vsel %vm974, %v2621, %v2622
      %v2742 = vsel %vm974, %v2620, %v2621
      %v2743 = vsel %vm974, %v2619, %v2620
      %v2744 = vsel %vm974, %v2618, %v2619
      %v2745 = vsel %vm974, %v2681, %v2618
      %v2762 = vunpack.c.l.b16 %v2056
      %v2763 = vunpack.c.l.b16 %v2057
      %v2764 = vunpack.c.l.b16 %v2058
      %v2765 = vunpack.c.l.b16 %v2059
      %v2766 = vunpack.c.l.b16 %v2060
      %v2767 = vunpack.c.l.b16 %v2061
      %v2768 = vunpack.c.l.b16 %v2062
      %v2769 = vunpack.c.l.b16 %v2063
      %v2770 = vunpack.c.l.b16 %v2064
      %v2771 = vunpack.c.l.b16 %v2065
      %v2772 = vunpack.c.l.b16 %v2066
      %v2773 = vunpack.c.l.b16 %v2067
      %v2774 = vunpack.c.l.b16 %v2068
      %v2775 = vunpack.c.l.b16 %v2069
      %v2776 = vunpack.c.l.b16 %v2070
      %v2777 = vunpack.c.l.b16 %v2071
      %v2778 = vpack.c.b16 %v2763, %v2762
      %v2779 = vpack.c.b16 %v2765, %v2764
      %v2780 = vpack.c.b16 %v2767, %v2766
      %v2781 = vpack.c.b16 %v2769, %v2768
      %v2782 = vpack.c.b16 %v2771, %v2770
      %v2783 = vpack.c.b16 %v2773, %v2772
      %v2784 = vpack.c.b16 %v2775, %v2774
      %v2785 = vpack.c.b16 %v2777, %v2776
      %2794 = vmatprep.subr.bf16.mxu0 0
      %2795 = vmatpush1.bf16.msra.mxu0 %v2778
      %2796 = vmatprep.subr.bf16.mxu0 0
      %2797 = vmatpush1.bf16.msra.mxu0 %v2779
      %2798 = vmatprep.subr.bf16.mxu0 0
      %2799 = vmatpush1.bf16.msra.mxu0 %v2780
      %2800 = vmatprep.subr.bf16.mxu0 0
      %2801 = vmatpush1.bf16.msra.mxu0 %v2781
      %2802 = vmatprep.subr.bf16.mxu0 0
      %2803 = vmatpush1.bf16.msra.mxu0 %v2782
      %2804 = vmatprep.subr.bf16.mxu0 0
      %2805 = vmatpush1.bf16.msra.mxu0 %v2783
      %2806 = vmatprep.subr.bf16.mxu0 0
      %2807 = vmatpush1.bf16.msra.mxu0 %v2784
      %2808 = vmatprep.subr.bf16.mxu0 0
      %2809 = vmatpush1.bf16.msra.mxu0 %v2785
      %2810 = vmatprep.subr.bf16.mxu0 0
      %2811 = vmatpush1.bf16.msra.mxu0 0
      %2812 = vmatprep.subr.bf16.mxu0 0
      %2813 = vmatpush1.bf16.msra.mxu0 0
      %2814 = vmatprep.subr.bf16.mxu0 0
      %2815 = vmatpush1.bf16.msra.mxu0 0
      %2816 = vmatprep.subr.bf16.mxu0 0
      %2817 = vmatpush1.bf16.msra.mxu0 0
      %2818 = vmatprep.subr.bf16.mxu0 0
      %2819 = vmatpush1.bf16.msra.mxu0 0
      %2820 = vmatprep.subr.bf16.mxu0 0
      %2821 = vmatpush1.bf16.msra.mxu0 0
      %2822 = vmatprep.subr.bf16.mxu0 0
      %2823 = vmatpush1.bf16.msra.mxu0 0
      %2824 = vmatprep.subr.bf16.mxu0 0
      %2825 = vmatpush1.bf16.msra.mxu0 0
      %2826 = vmatprep.mubr.bf16.mxu0 0
      %2827 = vmatmul.mubr.bf16.gmra.mrb[0].mxu0 %v2217
      %v2828 = vpop.f32.mrb[0].mxu0
      %v2829 = vadd.f32 %v2744, %v2828
      %v2830 = vpop.f32.mrb[0].mxu0
      %v2831 = vpop.f32.mrb[0].mxu0
      %v2832 = vadd.f32 %v2743, %v2831
      %v2833 = vpop.f32.mrb[0].mxu0
      %2834 = vmatprep.mubr.bf16.mxu0 0
      %2835 = vmatmul.mubr.bf16.gmra.mrb[0].mxu0 %v2218
      %v2836 = vpop.f32.mrb[0].mxu0
      %v2837 = vadd.f32 %v2742, %v2836
      %v2838 = vpop.f32.mrb[0].mxu0
      %v2839 = vpop.f32.mrb[0].mxu0
      %v2840 = vadd.f32 %v2741, %v2839
      %v2841 = vpop.f32.mrb[0].mxu0
      %2842 = vmatprep.mubr.bf16.mxu0 0
      %2843 = vmatmul.mubr.bf16.gmra.mrb[0].mxu0 %v2219
      %v2844 = vpop.f32.mrb[0].mxu0
      %v2845 = vadd.f32 %v2740, %v2844
      %v2846 = vpop.f32.mrb[0].mxu0
      %v2847 = vpop.f32.mrb[0].mxu0
      %v2848 = vadd.f32 %v2739, %v2847
      %v2849 = vpop.f32.mrb[0].mxu0
      %2850 = vmatprep.mubr.bf16.mxu0 0
      %2851 = vmatmul.mubr.bf16.gmra.mrb[0].mxu0 %v2220
      %v2852 = vpop.f32.mrb[0].mxu0
      %v2853 = vadd.f32 %v2738, %v2852
      %v2854 = vpop.f32.mrb[0].mxu0
      %v2855 = vpop.f32.mrb[0].mxu0
      %v2856 = vadd.f32 %v2737, %v2855
      %v2857 = vpop.f32.mrb[0].mxu0
      %2858 = vmatprep.mubr.bf16.mxu0 0
      %2859 = vmatmul.mubr.bf16.gmra.mrb[0].mxu0 %v2221
      %v2860 = vpop.f32.mrb[0].mxu0
      %v2861 = vadd.f32 %v2736, %v2860
      %v2862 = vpop.f32.mrb[0].mxu0
      %v2863 = vpop.f32.mrb[0].mxu0
      %v2864 = vadd.f32 %v2735, %v2863
      %v2865 = vpop.f32.mrb[0].mxu0
      %2866 = vmatprep.mubr.bf16.mxu0 0
      %2867 = vmatmul.mubr.bf16.gmra.mrb[0].mxu0 %v2222
      %v2868 = vpop.f32.mrb[0].mxu0
      %v2869 = vadd.f32 %v2734, %v2868
      %v2870 = vpop.f32.mrb[0].mxu0
      %v2871 = vpop.f32.mrb[0].mxu0
      %v2872 = vadd.f32 %v2733, %v2871
      %v2873 = vpop.f32.mrb[0].mxu0
      %2874 = vmatprep.mubr.bf16.mxu0 0
      %2875 = vmatmul.mubr.bf16.gmra.mrb[0].mxu0 %v2223
      %v2876 = vpop.f32.mrb[0].mxu0
      %v2877 = vadd.f32 %v2732, %v2876
      %v2878 = vpop.f32.mrb[0].mxu0
      %v2879 = vpop.f32.mrb[0].mxu0
      %v2880 = vadd.f32 %v2731, %v2879
      %v2881 = vpop.f32.mrb[0].mxu0
      %2882 = vmatprep.mubr.bf16.mxu0 0
      %2883 = vmatmul.mubr.bf16.gmra.mrb[0].mxu0 %v2224
      %v2884 = vpop.f32.mrb[0].mxu0
      %v2885 = vadd.f32 %v2730, %v2884
      %v2886 = vpop.f32.mrb[0].mxu0
      %v2887 = vpop.f32.mrb[0].mxu0
      %v2888 = vadd.f32 %v2729, %v2887
      %v2889 = vpop.f32.mrb[0].mxu0
      %2890 = vmatprep.mubr.bf16.mxu0 0
      %2891 = vmatmul.mubr.bf16.gmra.mrb[0].mxu0 %v2225
      %v2892 = vpop.f32.mrb[0].mxu0
      %v2893 = vadd.f32 %v2728, %v2892
      %v2894 = vpop.f32.mrb[0].mxu0
      %v2895 = vpop.f32.mrb[0].mxu0
      %v2896 = vadd.f32 %v2727, %v2895
      %v2897 = vpop.f32.mrb[0].mxu0
      %2898 = vmatprep.mubr.bf16.mxu0 0
      %2899 = vmatmul.mubr.bf16.gmra.mrb[0].mxu0 %v2226
      %v2900 = vpop.f32.mrb[0].mxu0
      %v2901 = vadd.f32 %v2726, %v2900
      %v2902 = vpop.f32.mrb[0].mxu0
      %v2903 = vpop.f32.mrb[0].mxu0
      %v2904 = vadd.f32 %v2725, %v2903
      %v2905 = vpop.f32.mrb[0].mxu0
      %2906 = vmatprep.mubr.bf16.mxu0 0
      %2907 = vmatmul.mubr.bf16.gmra.mrb[0].mxu0 %v2227
      %v2908 = vpop.f32.mrb[0].mxu0
      %v2909 = vadd.f32 %v2724, %v2908
      %v2910 = vpop.f32.mrb[0].mxu0
      %v2911 = vpop.f32.mrb[0].mxu0
      %v2912 = vadd.f32 %v2723, %v2911
      %v2913 = vpop.f32.mrb[0].mxu0
      %2914 = vmatprep.mubr.bf16.mxu0 0
      %2915 = vmatmul.mubr.bf16.gmra.mrb[0].mxu0 %v2228
      %v2916 = vpop.f32.mrb[0].mxu0
      %v2917 = vadd.f32 %v2722, %v2916
      %v2918 = vpop.f32.mrb[0].mxu0
      %v2919 = vpop.f32.mrb[0].mxu0
      %v2920 = vadd.f32 %v2721, %v2919
      %v2921 = vpop.f32.mrb[0].mxu0
      %2922 = vmatprep.mubr.bf16.mxu0 0
      %2923 = vmatmul.mubr.bf16.gmra.mrb[0].mxu0 %v2229
      %v2924 = vpop.f32.mrb[0].mxu0
      %v2925 = vadd.f32 %v2720, %v2924
      %v2926 = vpop.f32.mrb[0].mxu0
      %v2927 = vpop.f32.mrb[0].mxu0
      %v2928 = vadd.f32 %v2719, %v2927
      %v2929 = vpop.f32.mrb[0].mxu0
      %2930 = vmatprep.mubr.bf16.mxu0 0
      %2931 = vmatmul.mubr.bf16.gmra.mrb[0].mxu0 %v2230
      %v2932 = vpop.f32.mrb[0].mxu0
      %v2933 = vadd.f32 %v2718, %v2932
      %v2934 = vpop.f32.mrb[0].mxu0
      %v2935 = vpop.f32.mrb[0].mxu0
      %v2936 = vadd.f32 %v2717, %v2935
      %v2937 = vpop.f32.mrb[0].mxu0
      %2938 = vmatprep.mubr.bf16.mxu0 0
      %2939 = vmatmul.mubr.bf16.gmra.mrb[0].mxu0 %v2231
      %v2940 = vpop.f32.mrb[0].mxu0
      %v2941 = vadd.f32 %v2716, %v2940
      %v2942 = vpop.f32.mrb[0].mxu0
      %v2943 = vpop.f32.mrb[0].mxu0
      %v2944 = vadd.f32 %v2715, %v2943
      %v2945 = vpop.f32.mrb[0].mxu0
      %2946 = vmatprep.mubr.bf16.mxu0 0
      %2947 = vmatmul.mubr.bf16.gmra.mrb[0].mxu0 %v2232
      %v2948 = vpop.f32.mrb[0].mxu0
      %v2949 = vadd.f32 %v2714, %v2948
      %v2950 = vpop.f32.mrb[0].mxu0
      %v2951 = vpop.f32.mrb[0].mxu0
      %v2952 = vadd.f32 %v2713, %v2951
      %v2953 = vpop.f32.mrb[0].mxu0
      %2954 = vmatprep.mubr.bf16.mxu0 0
      %2955 = vmatmul.mubr.bf16.gmra.mrb[0].mxu0 %v2233
      %v2956 = vpop.f32.mrb[0].mxu0
      %v2957 = vadd.f32 %v2712, %v2956
      %v2958 = vpop.f32.mrb[0].mxu0
      %v2959 = vpop.f32.mrb[0].mxu0
      %v2960 = vadd.f32 %v2711, %v2959
      %v2961 = vpop.f32.mrb[0].mxu0
      %2962 = vmatprep.mubr.bf16.mxu0 0
      %2963 = vmatmul.mubr.bf16.gmra.mrb[0].mxu0 %v2234
      %v2964 = vpop.f32.mrb[0].mxu0
      %v2965 = vadd.f32 %v2710, %v2964
      %v2966 = vpop.f32.mrb[0].mxu0
      %v2967 = vpop.f32.mrb[0].mxu0
      %v2968 = vadd.f32 %v2709, %v2967
      %v2969 = vpop.f32.mrb[0].mxu0
      %2970 = vmatprep.mubr.bf16.mxu0 0
      %2971 = vmatmul.mubr.bf16.gmra.mrb[0].mxu0 %v2235
      %v2972 = vpop.f32.mrb[0].mxu0
      %v2973 = vadd.f32 %v2708, %v2972
      %v2974 = vpop.f32.mrb[0].mxu0
      %v2975 = vpop.f32.mrb[0].mxu0
      %v2976 = vadd.f32 %v2707, %v2975
      %v2977 = vpop.f32.mrb[0].mxu0
      %2978 = vmatprep.mubr.bf16.mxu0 0
      %2979 = vmatmul.mubr.bf16.gmra.mrb[0].mxu0 %v2236
      %v2980 = vpop.f32.mrb[0].mxu0
      %v2981 = vadd.f32 %v2706, %v2980
      %v2982 = vpop.f32.mrb[0].mxu0
      %v2983 = vpop.f32.mrb[0].mxu0
      %v2984 = vadd.f32 %v2705, %v2983
      %v2985 = vpop.f32.mrb[0].mxu0
      %2986 = vmatprep.mubr.bf16.mxu0 0
      %2987 = vmatmul.mubr.bf16.gmra.mrb[0].mxu0 %v2237
      %v2988 = vpop.f32.mrb[0].mxu0
      %v2989 = vadd.f32 %v2704, %v2988
      %v2990 = vpop.f32.mrb[0].mxu0
      %v2991 = vpop.f32.mrb[0].mxu0
      %v2992 = vadd.f32 %v2703, %v2991
      %v2993 = vpop.f32.mrb[0].mxu0
      %2994 = vmatprep.mubr.bf16.mxu0 0
      %2995 = vmatmul.mubr.bf16.gmra.mrb[0].mxu0 %v2238
      %v2996 = vpop.f32.mrb[0].mxu0
      %v2997 = vadd.f32 %v2702, %v2996
      %v2998 = vpop.f32.mrb[0].mxu0
      %v2999 = vpop.f32.mrb[0].mxu0
      %v3000 = vadd.f32 %v2701, %v2999
      %v3001 = vpop.f32.mrb[0].mxu0
      %3002 = vmatprep.mubr.bf16.mxu0 0
      %3003 = vmatmul.mubr.bf16.gmra.mrb[0].mxu0 %v2239
      %v3004 = vpop.f32.mrb[0].mxu0
      %v3005 = vadd.f32 %v2700, %v3004
      %v3006 = vpop.f32.mrb[0].mxu0
      %v3007 = vpop.f32.mrb[0].mxu0
      %v3008 = vadd.f32 %v2699, %v3007
      %v3009 = vpop.f32.mrb[0].mxu0
      %3010 = vmatprep.mubr.bf16.mxu0 0
      %3011 = vmatmul.mubr.bf16.gmra.mrb[0].mxu0 %v2240
      %v3012 = vpop.f32.mrb[0].mxu0
      %v3013 = vadd.f32 %v2698, %v3012
      %v3014 = vpop.f32.mrb[0].mxu0
      %v3015 = vpop.f32.mrb[0].mxu0
      %v3016 = vadd.f32 %v2697, %v3015
      %v3017 = vpop.f32.mrb[0].mxu0
      %3018 = vmatprep.mubr.bf16.mxu0 0
      %3019 = vmatmul.mubr.bf16.gmra.mrb[0].mxu0 %v2241
      %v3020 = vpop.f32.mrb[0].mxu0
      %v3021 = vadd.f32 %v2696, %v3020
      %v3022 = vpop.f32.mrb[0].mxu0
      %v3023 = vpop.f32.mrb[0].mxu0
      %v3024 = vadd.f32 %v2695, %v3023
      %v3025 = vpop.f32.mrb[0].mxu0
      %3026 = vmatprep.mubr.bf16.mxu0 0
      %3027 = vmatmul.mubr.bf16.gmra.mrb[0].mxu0 %v2242
      %v3028 = vpop.f32.mrb[0].mxu0
      %v3029 = vadd.f32 %v2694, %v3028
      %v3030 = vpop.f32.mrb[0].mxu0
      %v3031 = vpop.f32.mrb[0].mxu0
      %v3032 = vadd.f32 %v2693, %v3031
      %v3033 = vpop.f32.mrb[0].mxu0
      %3034 = vmatprep.mubr.bf16.mxu0 0
      %3035 = vmatmul.mubr.bf16.gmra.mrb[0].mxu0 %v2243
      %v3036 = vpop.f32.mrb[0].mxu0
      %v3037 = vadd.f32 %v2692, %v3036
      %v3038 = vpop.f32.mrb[0].mxu0
      %v3039 = vpop.f32.mrb[0].mxu0
      %v3040 = vadd.f32 %v2691, %v3039
      %v3041 = vpop.f32.mrb[0].mxu0
      %3042 = vmatprep.mubr.bf16.mxu0 0
      %3043 = vmatmul.mubr.bf16.gmra.mrb[0].mxu0 %v2244
      %v3044 = vpop.f32.mrb[0].mxu0
      %v3045 = vadd.f32 %v2690, %v3044
      %v3046 = vpop.f32.mrb[0].mxu0
      %v3047 = vpop.f32.mrb[0].mxu0
      %v3048 = vadd.f32 %v2689, %v3047
      %v3049 = vpop.f32.mrb[0].mxu0
      %3050 = vmatprep.mubr.bf16.mxu0 0
      %3051 = vmatmul.mubr.bf16.gmra.mrb[0].mxu0 %v2245
      %v3052 = vpop.f32.mrb[0].mxu0
      %v3053 = vadd.f32 %v2688, %v3052
      %v3054 = vpop.f32.mrb[0].mxu0
      %v3055 = vpop.f32.mrb[0].mxu0
      %v3056 = vadd.f32 %v2687, %v3055
      %v3057 = vpop.f32.mrb[0].mxu0
      %3058 = vmatprep.mubr.bf16.mxu0 0
      %3059 = vmatmul.mubr.bf16.gmra.mrb[0].mxu0 %v2246
      %v3060 = vpop.f32.mrb[0].mxu0
      %v3061 = vadd.f32 %v2686, %v3060
      %v3062 = vpop.f32.mrb[0].mxu0
      %v3063 = vpop.f32.mrb[0].mxu0
      %v3064 = vadd.f32 %v2685, %v3063
      %v3065 = vpop.f32.mrb[0].mxu0
      %3066 = vmatprep.mubr.bf16.mxu0 0
      %3067 = vmatmul.mubr.bf16.gmra.mrb[0].mxu0 %v2247
      %v3068 = vpop.f32.mrb[0].mxu0
      %v3069 = vadd.f32 %v2684, %v3068
      %v3070 = vpop.f32.mrb[0].mxu0
      %v3071 = vpop.f32.mrb[0].mxu0
      %v3072 = vadd.f32 %v2683, %v3071
      %v3073 = vpop.f32.mrb[0].mxu0
      %3074 = vmatprep.mubr.bf16.mxu0 0
      %3075 = vmatmul.mubr.bf16.gmra.mrb[0].mxu0 %v2248
      %v3076 = vpop.f32.mrb[0].mxu0
      %v3077 = vadd.f32 %v2682, %v3076
      %v3078 = vpop.f32.mrb[0].mxu0
      %v3079 = vpop.f32.mrb[0].mxu0
      %v3080 = vadd.f32 %v2745, %v3079
      %v3081 = vpop.f32.mrb[0].mxu0
      %3082 = vdwg.mxu0
      %s3083 = scalar_lea.vmem %s1, 320
      %v3084 = vld [vmem:[%s3083] sm:$0xf]
      %v3085 = vld [vmem:[%s3083 + $0x4] sm:$0xf]
      %v3086 = vld [vmem:[%s3083 + $0x8] sm:$0xf]
      %v3087 = vld [vmem:[%s3083 + $0xc] sm:$0xf]
      %v3088 = vld [vmem:[%s3083 + $0x10] sm:$0xf]
      %v3089 = vld [vmem:[%s3083 + $0x14] sm:$0xf]
      %v3090 = vld [vmem:[%s3083 + $0x18] sm:$0xf]
      %v3091 = vld [vmem:[%s3083 + $0x1c] sm:$0xf]
      %v3092 = vld [vmem:[%s3083 + $0x20] sm:$0xf]
      %v3093 = vld [vmem:[%s3083 + $0x24] sm:$0xf]
      %v3094 = vld [vmem:[%s3083 + $0x28] sm:$0xf]
      %v3095 = vld [vmem:[%s3083 + $0x2c] sm:$0xf]
      %v3096 = vld [vmem:[%s3083 + $0x30] sm:$0xf]
      %v3097 = vld [vmem:[%s3083 + $0x34] sm:$0xf]
      %v3098 = vld [vmem:[%s3083 + $0x38] sm:$0xf]
      %v3099 = vld [vmem:[%s3083 + $0x3c] sm:$0xf]
      %v3116 = vunpack.c.l.b16 %v3084
      %v3117 = vunpack.c.l.b16 %v3085
      %v3118 = vunpack.c.l.b16 %v3086
      %v3119 = vunpack.c.l.b16 %v3087
      %v3120 = vunpack.c.l.b16 %v3088
      %v3121 = vunpack.c.l.b16 %v3089
      %v3122 = vunpack.c.l.b16 %v3090
      %v3123 = vunpack.c.l.b16 %v3091
      %v3124 = vunpack.c.l.b16 %v3092
      %v3125 = vunpack.c.l.b16 %v3093
      %v3126 = vunpack.c.l.b16 %v3094
      %v3127 = vunpack.c.l.b16 %v3095
      %v3128 = vunpack.c.l.b16 %v3096
      %v3129 = vunpack.c.l.b16 %v3097
      %v3130 = vunpack.c.l.b16 %v3098
      %v3131 = vunpack.c.l.b16 %v3099
      %v3132 = vpack.c.b16 %v3117, %v3116
      %v3133 = vpack.c.b16 %v3119, %v3118
      %v3134 = vpack.c.b16 %v3121, %v3120
      %v3135 = vpack.c.b16 %v3123, %v3122
      %v3136 = vpack.c.b16 %v3125, %v3124
      %v3137 = vpack.c.b16 %v3127, %v3126
      %v3138 = vpack.c.b16 %v3129, %v3128
      %v3139 = vpack.c.b16 %v3131, %v3130
      %3148 = vmatprep.subr.bf16.mxu0 0
      %3149 = vmatpush1.bf16.msra.mxu0 %v3132
      %3150 = vmatprep.subr.bf16.mxu0 0
      %3151 = vmatpush1.bf16.msra.mxu0 %v3133
      %3152 = vmatprep.subr.bf16.mxu0 0
      %3153 = vmatpush1.bf16.msra.mxu0 %v3134
      %3154 = vmatprep.subr.bf16.mxu0 0
      %3155 = vmatpush1.bf16.msra.mxu0 %v3135
      %3156 = vmatprep.subr.bf16.mxu0 0
      %3157 = vmatpush1.bf16.msra.mxu0 %v3136
      %3158 = vmatprep.subr.bf16.mxu0 0
      %3159 = vmatpush1.bf16.msra.mxu0 %v3137
      %3160 = vmatprep.subr.bf16.mxu0 0
      %3161 = vmatpush1.bf16.msra.mxu0 %v3138
      %3162 = vmatprep.subr.bf16.mxu0 0
      %3163 = vmatpush1.bf16.msra.mxu0 %v3139
      %3164 = vmatprep.subr.bf16.mxu0 0
      %3165 = vmatpush1.bf16.msra.mxu0 0
      %3166 = vmatprep.subr.bf16.mxu0 0
      %3167 = vmatpush1.bf16.msra.mxu0 0
      %3168 = vmatprep.subr.bf16.mxu0 0
      %3169 = vmatpush1.bf16.msra.mxu0 0
      %3170 = vmatprep.subr.bf16.mxu0 0
      %3171 = vmatpush1.bf16.msra.mxu0 0
      %3172 = vmatprep.subr.bf16.mxu0 0
      %3173 = vmatpush1.bf16.msra.mxu0 0
      %3174 = vmatprep.subr.bf16.mxu0 0
      %3175 = vmatpush1.bf16.msra.mxu0 0
      %3176 = vmatprep.subr.bf16.mxu0 0
      %3177 = vmatpush1.bf16.msra.mxu0 0
      %3178 = vmatprep.subr.bf16.mxu0 0
      %3179 = vmatpush1.bf16.msra.mxu0 0
      %3180 = vmatprep.mubr.bf16.mxu0 0
      %3181 = vmatmul.mubr.bf16.gmra.mrb[0].mxu0 %v2217
      %v3182 = vpop.f32.mrb[0].mxu0
      %v3183 = vadd.f32 0.0, %v3182
      %v3184 = vpop.f32.mrb[0].mxu0
      %v3185 = vpop.f32.mrb[0].mxu0
      %v3186 = vadd.f32 0.0, %v3185
      %v3187 = vpop.f32.mrb[0].mxu0
      %3188 = vmatprep.mubr.bf16.mxu0 0
      %3189 = vmatmul.mubr.bf16.gmra.mrb[0].mxu0 %v2218
      %v3190 = vpop.f32.mrb[0].mxu0
      %v3191 = vadd.f32 0.0, %v3190
      %v3192 = vpop.f32.mrb[0].mxu0
      %v3193 = vpop.f32.mrb[0].mxu0
      %v3194 = vadd.f32 0.0, %v3193
      %v3195 = vpop.f32.mrb[0].mxu0
      %3196 = vmatprep.mubr.bf16.mxu0 0
      %3197 = vmatmul.mubr.bf16.gmra.mrb[0].mxu0 %v2219
      %v3198 = vpop.f32.mrb[0].mxu0
      %v3199 = vadd.f32 0.0, %v3198
      %v3200 = vpop.f32.mrb[0].mxu0
      %v3201 = vpop.f32.mrb[0].mxu0
      %v3202 = vadd.f32 0.0, %v3201
      %v3203 = vpop.f32.mrb[0].mxu0
      %3204 = vmatprep.mubr.bf16.mxu0 0
      %3205 = vmatmul.mubr.bf16.gmra.mrb[0].mxu0 %v2220
      %v3206 = vpop.f32.mrb[0].mxu0
      %v3207 = vadd.f32 0.0, %v3206
      %v3208 = vpop.f32.mrb[0].mxu0
      %v3209 = vpop.f32.mrb[0].mxu0
      %v3210 = vadd.f32 0.0, %v3209
      %v3211 = vpop.f32.mrb[0].mxu0
      %3212 = vmatprep.mubr.bf16.mxu0 0
      %3213 = vmatmul.mubr.bf16.gmra.mrb[0].mxu0 %v2221
      %v3214 = vpop.f32.mrb[0].mxu0
      %v3215 = vadd.f32 0.0, %v3214
      %v3216 = vpop.f32.mrb[0].mxu0
      %v3217 = vpop.f32.mrb[0].mxu0
      %v3218 = vadd.f32 0.0, %v3217
      %v3219 = vpop.f32.mrb[0].mxu0
      %3220 = vmatprep.mubr.bf16.mxu0 0
      %3221 = vmatmul.mubr.bf16.gmra.mrb[0].mxu0 %v2222
      %v3222 = vpop.f32.mrb[0].mxu0
      %v3223 = vadd.f32 0.0, %v3222
      %v3224 = vpop.f32.mrb[0].mxu0
      %v3225 = vpop.f32.mrb[0].mxu0
      %v3226 = vadd.f32 0.0, %v3225
      %v3227 = vpop.f32.mrb[0].mxu0
      %3228 = vmatprep.mubr.bf16.mxu0 0
      %3229 = vmatmul.mubr.bf16.gmra.mrb[0].mxu0 %v2223
      %v3230 = vpop.f32.mrb[0].mxu0
      %v3231 = vadd.f32 0.0, %v3230
      %v3232 = vpop.f32.mrb[0].mxu0
      %v3233 = vpop.f32.mrb[0].mxu0
      %v3234 = vadd.f32 0.0, %v3233
      %v3235 = vpop.f32.mrb[0].mxu0
      %3236 = vmatprep.mubr.bf16.mxu0 0
      %3237 = vmatmul.mubr.bf16.gmra.mrb[0].mxu0 %v2224
      %v3238 = vpop.f32.mrb[0].mxu0
      %v3239 = vadd.f32 0.0, %v3238
      %v3240 = vpop.f32.mrb[0].mxu0
      %v3241 = vpop.f32.mrb[0].mxu0
      %v3242 = vadd.f32 0.0, %v3241
      %v3243 = vpop.f32.mrb[0].mxu0
      %3244 = vmatprep.mubr.bf16.mxu0 0
      %3245 = vmatmul.mubr.bf16.gmra.mrb[0].mxu0 %v2225
      %v3246 = vpop.f32.mrb[0].mxu0
      %v3247 = vadd.f32 0.0, %v3246
      %v3248 = vpop.f32.mrb[0].mxu0
      %v3249 = vpop.f32.mrb[0].mxu0
      %v3250 = vadd.f32 0.0, %v3249
      %v3251 = vpop.f32.mrb[0].mxu0
      %3252 = vmatprep.mubr.bf16.mxu0 0
      %3253 = vmatmul.mubr.bf16.gmra.mrb[0].mxu0 %v2226
      %v3254 = vpop.f32.mrb[0].mxu0
      %v3255 = vadd.f32 0.0, %v3254
      %v3256 = vpop.f32.mrb[0].mxu0
      %v3257 = vpop.f32.mrb[0].mxu0
      %v3258 = vadd.f32 0.0, %v3257
      %v3259 = vpop.f32.mrb[0].mxu0
      %3260 = vmatprep.mubr.bf16.mxu0 0
      %3261 = vmatmul.mubr.bf16.gmra.mrb[0].mxu0 %v2227
      %v3262 = vpop.f32.mrb[0].mxu0
      %v3263 = vadd.f32 0.0, %v3262
      %v3264 = vpop.f32.mrb[0].mxu0
      %v3265 = vpop.f32.mrb[0].mxu0
      %v3266 = vadd.f32 0.0, %v3265
      %v3267 = vpop.f32.mrb[0].mxu0
      %3268 = vmatprep.mubr.bf16.mxu0 0
      %3269 = vmatmul.mubr.bf16.gmra.mrb[0].mxu0 %v2228
      %v3270 = vpop.f32.mrb[0].mxu0
      %v3271 = vadd.f32 0.0, %v3270
      %v3272 = vpop.f32.mrb[0].mxu0
      %v3273 = vpop.f32.mrb[0].mxu0
      %v3274 = vadd.f32 0.0, %v3273
      %v3275 = vpop.f32.mrb[0].mxu0
      %3276 = vmatprep.mubr.bf16.mxu0 0
      %3277 = vmatmul.mubr.bf16.gmra.mrb[0].mxu0 %v2229
      %v3278 = vpop.f32.mrb[0].mxu0
      %v3279 = vadd.f32 0.0, %v3278
      %v3280 = vpop.f32.mrb[0].mxu0
      %v3281 = vpop.f32.mrb[0].mxu0
      %v3282 = vadd.f32 0.0, %v3281
      %v3283 = vpop.f32.mrb[0].mxu0
      %3284 = vmatprep.mubr.bf16.mxu0 0
      %3285 = vmatmul.mubr.bf16.gmra.mrb[0].mxu0 %v2230
      %v3286 = vpop.f32.mrb[0].mxu0
      %v3287 = vadd.f32 0.0, %v3286
      %v3288 = vpop.f32.mrb[0].mxu0
      %v3289 = vpop.f32.mrb[0].mxu0
      %v3290 = vadd.f32 0.0, %v3289
      %v3291 = vpop.f32.mrb[0].mxu0
      %3292 = vmatprep.mubr.bf16.mxu0 0
      %3293 = vmatmul.mubr.bf16.gmra.mrb[0].mxu0 %v2231
      %v3294 = vpop.f32.mrb[0].mxu0
      %v3295 = vadd.f32 0.0, %v3294
      %v3296 = vpop.f32.mrb[0].mxu0
      %v3297 = vpop.f32.mrb[0].mxu0
      %v3298 = vadd.f32 0.0, %v3297
      %v3299 = vpop.f32.mrb[0].mxu0
      %3300 = vmatprep.mubr.bf16.mxu0 0
      %3301 = vmatmul.mubr.bf16.gmra.mrb[0].mxu0 %v2232
      %v3302 = vpop.f32.mrb[0].mxu0
      %v3303 = vadd.f32 0.0, %v3302
      %v3304 = vpop.f32.mrb[0].mxu0
      %v3305 = vpop.f32.mrb[0].mxu0
      %v3306 = vadd.f32 0.0, %v3305
      %v3307 = vpop.f32.mrb[0].mxu0
      %3308 = vmatprep.mubr.bf16.mxu0 0
      %3309 = vmatmul.mubr.bf16.gmra.mrb[0].mxu0 %v2233
      %v3310 = vpop.f32.mrb[0].mxu0
      %v3311 = vadd.f32 0.0, %v3310
      %v3312 = vpop.f32.mrb[0].mxu0
      %v3313 = vpop.f32.mrb[0].mxu0
      %v3314 = vadd.f32 0.0, %v3313
      %v3315 = vpop.f32.mrb[0].mxu0
      %3316 = vmatprep.mubr.bf16.mxu0 0
      %3317 = vmatmul.mubr.bf16.gmra.mrb[0].mxu0 %v2234
      %v3318 = vpop.f32.mrb[0].mxu0
      %v3319 = vadd.f32 0.0, %v3318
      %v3320 = vpop.f32.mrb[0].mxu0
      %v3321 = vpop.f32.mrb[0].mxu0
      %v3322 = vadd.f32 0.0, %v3321
      %v3323 = vpop.f32.mrb[0].mxu0
      %3324 = vmatprep.mubr.bf16.mxu0 0
      %3325 = vmatmul.mubr.bf16.gmra.mrb[0].mxu0 %v2235
      %v3326 = vpop.f32.mrb[0].mxu0
      %v3327 = vadd.f32 0.0, %v3326
      %v3328 = vpop.f32.mrb[0].mxu0
      %v3329 = vpop.f32.mrb[0].mxu0
      %v3330 = vadd.f32 0.0, %v3329
      %v3331 = vpop.f32.mrb[0].mxu0
      %3332 = vmatprep.mubr.bf16.mxu0 0
      %3333 = vmatmul.mubr.bf16.gmra.mrb[0].mxu0 %v2236
      %v3334 = vpop.f32.mrb[0].mxu0
      %v3335 = vadd.f32 0.0, %v3334
      %v3336 = vpop.f32.mrb[0].mxu0
      %v3337 = vpop.f32.mrb[0].mxu0
      %v3338 = vadd.f32 0.0, %v3337
      %v3339 = vpop.f32.mrb[0].mxu0
      %3340 = vmatprep.mubr.bf16.mxu0 0
      %3341 = vmatmul.mubr.bf16.gmra.mrb[0].mxu0 %v2237
      %v3342 = vpop.f32.mrb[0].mxu0
      %v3343 = vadd.f32 0.0, %v3342
      %v3344 = vpop.f32.mrb[0].mxu0
      %v3345 = vpop.f32.mrb[0].mxu0
      %v3346 = vadd.f32 0.0, %v3345
      %v3347 = vpop.f32.mrb[0].mxu0
      %3348 = vmatprep.mubr.bf16.mxu0 0
      %3349 = vmatmul.mubr.bf16.gmra.mrb[0].mxu0 %v2238
      %v3350 = vpop.f32.mrb[0].mxu0
      %v3351 = vadd.f32 0.0, %v3350
      %v3352 = vpop.f32.mrb[0].mxu0
      %v3353 = vpop.f32.mrb[0].mxu0
      %v3354 = vadd.f32 0.0, %v3353
      %v3355 = vpop.f32.mrb[0].mxu0
      %3356 = vmatprep.mubr.bf16.mxu0 0
      %3357 = vmatmul.mubr.bf16.gmra.mrb[0].mxu0 %v2239
      %v3358 = vpop.f32.mrb[0].mxu0
      %v3359 = vadd.f32 0.0, %v3358
      %v3360 = vpop.f32.mrb[0].mxu0
      %v3361 = vpop.f32.mrb[0].mxu0
      %v3362 = vadd.f32 0.0, %v3361
      %v3363 = vpop.f32.mrb[0].mxu0
      %3364 = vmatprep.mubr.bf16.mxu0 0
      %3365 = vmatmul.mubr.bf16.gmra.mrb[0].mxu0 %v2240
      %v3366 = vpop.f32.mrb[0].mxu0
      %v3367 = vadd.f32 0.0, %v3366
      %v3368 = vpop.f32.mrb[0].mxu0
      %v3369 = vpop.f32.mrb[0].mxu0
      %v3370 = vadd.f32 0.0, %v3369
      %v3371 = vpop.f32.mrb[0].mxu0
      %3372 = vmatprep.mubr.bf16.mxu0 0
      %3373 = vmatmul.mubr.bf16.gmra.mrb[0].mxu0 %v2241
      %v3374 = vpop.f32.mrb[0].mxu0
      %v3375 = vadd.f32 0.0, %v3374
      %v3376 = vpop.f32.mrb[0].mxu0
      %v3377 = vpop.f32.mrb[0].mxu0
      %v3378 = vadd.f32 0.0, %v3377
      %v3379 = vpop.f32.mrb[0].mxu0
      %3380 = vmatprep.mubr.bf16.mxu0 0
      %3381 = vmatmul.mubr.bf16.gmra.mrb[0].mxu0 %v2242
      %v3382 = vpop.f32.mrb[0].mxu0
      %v3383 = vadd.f32 0.0, %v3382
      %v3384 = vpop.f32.mrb[0].mxu0
      %v3385 = vpop.f32.mrb[0].mxu0
      %v3386 = vadd.f32 0.0, %v3385
      %v3387 = vpop.f32.mrb[0].mxu0
      %3388 = vmatprep.mubr.bf16.mxu0 0
      %3389 = vmatmul.mubr.bf16.gmra.mrb[0].mxu0 %v2243
      %v3390 = vpop.f32.mrb[0].mxu0
      %v3391 = vadd.f32 0.0, %v3390
      %v3392 = vpop.f32.mrb[0].mxu0
      %v3393 = vpop.f32.mrb[0].mxu0
      %v3394 = vadd.f32 0.0, %v3393
      %v3395 = vpop.f32.mrb[0].mxu0
      %3396 = vmatprep.mubr.bf16.mxu0 0
      %3397 = vmatmul.mubr.bf16.gmra.mrb[0].mxu0 %v2244
      %v3398 = vpop.f32.mrb[0].mxu0
      %v3399 = vadd.f32 0.0, %v3398
      %v3400 = vpop.f32.mrb[0].mxu0
      %v3401 = vpop.f32.mrb[0].mxu0
      %v3402 = vadd.f32 0.0, %v3401
      %v3403 = vpop.f32.mrb[0].mxu0
      %3404 = vmatprep.mubr.bf16.mxu0 0
      %3405 = vmatmul.mubr.bf16.gmra.mrb[0].mxu0 %v2245
      %v3406 = vpop.f32.mrb[0].mxu0
      %v3407 = vadd.f32 0.0, %v3406
      %v3408 = vpop.f32.mrb[0].mxu0
      %v3409 = vpop.f32.mrb[0].mxu0
      %v3410 = vadd.f32 0.0, %v3409
      %v3411 = vpop.f32.mrb[0].mxu0
      %3412 = vmatprep.mubr.bf16.mxu0 0
      %3413 = vmatmul.mubr.bf16.gmra.mrb[0].mxu0 %v2246
      %v3414 = vpop.f32.mrb[0].mxu0
      %v3415 = vadd.f32 0.0, %v3414
      %v3416 = vpop.f32.mrb[0].mxu0
      %v3417 = vpop.f32.mrb[0].mxu0
      %v3418 = vadd.f32 0.0, %v3417
      %v3419 = vpop.f32.mrb[0].mxu0
      %3420 = vmatprep.mubr.bf16.mxu0 0
      %3421 = vmatmul.mubr.bf16.gmra.mrb[0].mxu0 %v2247
      %v3422 = vpop.f32.mrb[0].mxu0
      %v3423 = vadd.f32 0.0, %v3422
      %v3424 = vpop.f32.mrb[0].mxu0
      %v3425 = vpop.f32.mrb[0].mxu0
      %v3426 = vadd.f32 0.0, %v3425
      %v3427 = vpop.f32.mrb[0].mxu0
      %3428 = vmatprep.mubr.bf16.mxu0 0
      %3429 = vmatmul.mubr.bf16.gmra.mrb[0].mxu0 %v2248
      %v3430 = vpop.f32.mrb[0].mxu0
      %v3431 = vadd.f32 0.0, %v3430
      %v3432 = vpop.f32.mrb[0].mxu0
      %v3433 = vpop.f32.mrb[0].mxu0
      %v3434 = vadd.f32 0.0, %v3433
      %v3435 = vpop.f32.mrb[0].mxu0
      %3436 = vdwg.mxu0
      %v3437 = vrot.slane %v3183, 2
      %v3438 = vrot.slane %v3186, 2
      %v3439 = vrot.slane %v3191, 2
      %v3440 = vrot.slane %v3194, 2
      %v3441 = vrot.slane %v3199, 2
      %v3442 = vrot.slane %v3202, 2
      %v3443 = vrot.slane %v3207, 2
      %v3444 = vrot.slane %v3210, 2
      %v3445 = vrot.slane %v3215, 2
      %v3446 = vrot.slane %v3218, 2
      %v3447 = vrot.slane %v3223, 2
      %v3448 = vrot.slane %v3226, 2
      %v3449 = vrot.slane %v3231, 2
      %v3450 = vrot.slane %v3234, 2
      %v3451 = vrot.slane %v3239, 2
      %v3452 = vrot.slane %v3242, 2
      %v3453 = vrot.slane %v3247, 2
      %v3454 = vrot.slane %v3250, 2
      %v3455 = vrot.slane %v3255, 2
      %v3456 = vrot.slane %v3258, 2
      %v3457 = vrot.slane %v3263, 2
      %v3458 = vrot.slane %v3266, 2
      %v3459 = vrot.slane %v3271, 2
      %v3460 = vrot.slane %v3274, 2
      %v3461 = vrot.slane %v3279, 2
      %v3462 = vrot.slane %v3282, 2
      %v3463 = vrot.slane %v3287, 2
      %v3464 = vrot.slane %v3290, 2
      %v3465 = vrot.slane %v3295, 2
      %v3466 = vrot.slane %v3298, 2
      %v3467 = vrot.slane %v3303, 2
      %v3468 = vrot.slane %v3306, 2
      %v3469 = vrot.slane %v3311, 2
      %v3470 = vrot.slane %v3314, 2
      %v3471 = vrot.slane %v3319, 2
      %v3472 = vrot.slane %v3322, 2
      %v3473 = vrot.slane %v3327, 2
      %v3474 = vrot.slane %v3330, 2
      %v3475 = vrot.slane %v3335, 2
      %v3476 = vrot.slane %v3338, 2
      %v3477 = vrot.slane %v3343, 2
      %v3478 = vrot.slane %v3346, 2
      %v3479 = vrot.slane %v3351, 2
      %v3480 = vrot.slane %v3354, 2
      %v3481 = vrot.slane %v3359, 2
      %v3482 = vrot.slane %v3362, 2
      %v3483 = vrot.slane %v3367, 2
      %v3484 = vrot.slane %v3370, 2
      %v3485 = vrot.slane %v3375, 2
      %v3486 = vrot.slane %v3378, 2
      %v3487 = vrot.slane %v3383, 2
      %v3488 = vrot.slane %v3386, 2
      %v3489 = vrot.slane %v3391, 2
      %v3490 = vrot.slane %v3394, 2
      %v3491 = vrot.slane %v3399, 2
      %v3492 = vrot.slane %v3402, 2
      %v3493 = vrot.slane %v3407, 2
      %v3494 = vrot.slane %v3410, 2
      %v3495 = vrot.slane %v3415, 2
      %v3496 = vrot.slane %v3418, 2
      %v3497 = vrot.slane %v3423, 2
      %v3498 = vrot.slane %v3426, 2
      %v3499 = vrot.slane %v3431, 2
      %v3500 = vrot.slane %v3434, 2
      %v3501 = vsel %vm1794, %v3499, %v3500
      %v3502 = vsel %vm1794, %v3498, %v3499
      %v3503 = vsel %vm1794, %v3497, %v3498
      %v3504 = vsel %vm1794, %v3496, %v3497
      %v3505 = vsel %vm1794, %v3495, %v3496
      %v3506 = vsel %vm1794, %v3494, %v3495
      %v3507 = vsel %vm1794, %v3493, %v3494
      %v3508 = vsel %vm1794, %v3492, %v3493
      %v3509 = vsel %vm1794, %v3491, %v3492
      %v3510 = vsel %vm1794, %v3490, %v3491
      %v3511 = vsel %vm1794, %v3489, %v3490
      %v3512 = vsel %vm1794, %v3488, %v3489
      %v3513 = vsel %vm1794, %v3487, %v3488
      %v3514 = vsel %vm1794, %v3486, %v3487
      %v3515 = vsel %vm1794, %v3485, %v3486
      %v3516 = vsel %vm1794, %v3484, %v3485
      %v3517 = vsel %vm1794, %v3483, %v3484
      %v3518 = vsel %vm1794, %v3482, %v3483
      %v3519 = vsel %vm1794, %v3481, %v3482
      %v3520 = vsel %vm1794, %v3480, %v3481
      %v3521 = vsel %vm1794, %v3479, %v3480
      %v3522 = vsel %vm1794, %v3478, %v3479
      %v3523 = vsel %vm1794, %v3477, %v3478
      %v3524 = vsel %vm1794, %v3476, %v3477
      %v3525 = vsel %vm1794, %v3475, %v3476
      %v3526 = vsel %vm1794, %v3474, %v3475
      %v3527 = vsel %vm1794, %v3473, %v3474
      %v3528 = vsel %vm1794, %v3472, %v3473
      %v3529 = vsel %vm1794, %v3471, %v3472
      %v3530 = vsel %vm1794, %v3470, %v3471
      %v3531 = vsel %vm1794, %v3469, %v3470
      %v3532 = vsel %vm1794, %v3468, %v3469
      %v3533 = vsel %vm1794, %v3467, %v3468
      %v3534 = vsel %vm1794, %v3466, %v3467
      %v3535 = vsel %vm1794, %v3465, %v3466
      %v3536 = vsel %vm1794, %v3464, %v3465
      %v3537 = vsel %vm1794, %v3463, %v3464
      %v3538 = vsel %vm1794, %v3462, %v3463
      %v3539 = vsel %vm1794, %v3461, %v3462
      %v3540 = vsel %vm1794, %v3460, %v3461
      %v3541 = vsel %vm1794, %v3459, %v3460
      %v3542 = vsel %vm1794, %v3458, %v3459
      %v3543 = vsel %vm1794, %v3457, %v3458
      %v3544 = vsel %vm1794, %v3456, %v3457
      %v3545 = vsel %vm1794, %v3455, %v3456
      %v3546 = vsel %vm1794, %v3454, %v3455
      %v3547 = vsel %vm1794, %v3453, %v3454
      %v3548 = vsel %vm1794, %v3452, %v3453
      %v3549 = vsel %vm1794, %v3451, %v3452
      %v3550 = vsel %vm1794, %v3450, %v3451
      %v3551 = vsel %vm1794, %v3449, %v3450
      %v3552 = vsel %vm1794, %v3448, %v3449
      %v3553 = vsel %vm1794, %v3447, %v3448
      %v3554 = vsel %vm1794, %v3446, %v3447
      %v3555 = vsel %vm1794, %v3445, %v3446
      %v3556 = vsel %vm1794, %v3444, %v3445
      %v3557 = vsel %vm1794, %v3443, %v3444
      %v3558 = vsel %vm1794, %v3442, %v3443
      %v3559 = vsel %vm1794, %v3441, %v3442
      %v3560 = vsel %vm1794, %v3440, %v3441
      %v3561 = vsel %vm1794, %v3439, %v3440
      %v3562 = vsel %vm1794, %v3438, %v3439
      %v3563 = vsel %vm1794, %v3437, %v3438
      %v3564 = vsel %vm1794, %v3500, %v3437
      %v3565 = vadd.f32 %v2829, %v3563
      %v3566 = vadd.f32 %v2832, %v3562
      %v3567 = vadd.f32 %v2837, %v3561
      %v3568 = vadd.f32 %v2840, %v3560
      %v3569 = vadd.f32 %v2845, %v3559
      %v3570 = vadd.f32 %v2848, %v3558
      %v3571 = vadd.f32 %v2853, %v3557
      %v3572 = vadd.f32 %v2856, %v3556
      %v3573 = vadd.f32 %v2861, %v3555
      %v3574 = vadd.f32 %v2864, %v3554
      %v3575 = vadd.f32 %v2869, %v3553
      %v3576 = vadd.f32 %v2872, %v3552
      %v3577 = vadd.f32 %v2877, %v3551
      %v3578 = vadd.f32 %v2880, %v3550
      %v3579 = vadd.f32 %v2885, %v3549
      %v3580 = vadd.f32 %v2888, %v3548
      %v3581 = vadd.f32 %v2893, %v3547
      %v3582 = vadd.f32 %v2896, %v3546
      %v3583 = vadd.f32 %v2901, %v3545
      %v3584 = vadd.f32 %v2904, %v3544
      %v3585 = vadd.f32 %v2909, %v3543
      %v3586 = vadd.f32 %v2912, %v3542
      %v3587 = vadd.f32 %v2917, %v3541
      %v3588 = vadd.f32 %v2920, %v3540
      %v3589 = vadd.f32 %v2925, %v3539
      %v3590 = vadd.f32 %v2928, %v3538
      %v3591 = vadd.f32 %v2933, %v3537
      %v3592 = vadd.f32 %v2936, %v3536
      %v3593 = vadd.f32 %v2941, %v3535
      %v3594 = vadd.f32 %v2944, %v3534
      %v3595 = vadd.f32 %v2949, %v3533
      %v3596 = vadd.f32 %v2952, %v3532
      %v3597 = vadd.f32 %v2957, %v3531
      %v3598 = vadd.f32 %v2960, %v3530
      %v3599 = vadd.f32 %v2965, %v3529
      %v3600 = vadd.f32 %v2968, %v3528
      %v3601 = vadd.f32 %v2973, %v3527
      %v3602 = vadd.f32 %v2976, %v3526
      %v3603 = vadd.f32 %v2981, %v3525
      %v3604 = vadd.f32 %v2984, %v3524
      %v3605 = vadd.f32 %v2989, %v3523
      %v3606 = vadd.f32 %v2992, %v3522
      %v3607 = vadd.f32 %v2997, %v3521
      %v3608 = vadd.f32 %v3000, %v3520
      %v3609 = vadd.f32 %v3005, %v3519
      %v3610 = vadd.f32 %v3008, %v3518
      %v3611 = vadd.f32 %v3013, %v3517
      %v3612 = vadd.f32 %v3016, %v3516
      %v3613 = vadd.f32 %v3021, %v3515
      %v3614 = vadd.f32 %v3024, %v3514
      %v3615 = vadd.f32 %v3029, %v3513
      %v3616 = vadd.f32 %v3032, %v3512
      %v3617 = vadd.f32 %v3037, %v3511
      %v3618 = vadd.f32 %v3040, %v3510
      %v3619 = vadd.f32 %v3045, %v3509
      %v3620 = vadd.f32 %v3048, %v3508
      %v3621 = vadd.f32 %v3053, %v3507
      %v3622 = vadd.f32 %v3056, %v3506
      %v3623 = vadd.f32 %v3061, %v3505
      %v3624 = vadd.f32 %v3064, %v3504
      %v3625 = vadd.f32 %v3069, %v3503
      %v3626 = vadd.f32 %v3072, %v3502
      %v3627 = vadd.f32 %v3077, %v3501
      %v3628 = vadd.f32 %v3080, %v3564
      %v3629 = vld [vmem:[#allocation2] sm:$0xff]
      %v3630 = vld [vmem:[#allocation2 + $0x8] sm:$0xff]
      %v3631 = vld [vmem:[#allocation2 + $0x10] sm:$0xff]
      %v3632 = vld [vmem:[#allocation2 + $0x18] sm:$0xff]
      %v3633 = vld [vmem:[#allocation2 + $0x20] sm:$0xff]
      %v3634 = vld [vmem:[#allocation2 + $0x28] sm:$0xff]
      %v3635 = vld [vmem:[#allocation2 + $0x30] sm:$0xff]
      %v3636 = vld [vmem:[#allocation2 + $0x38] sm:$0xff]
      %v3637 = vld [vmem:[#allocation2 + $0x40] sm:$0xff]
      %v3638 = vld [vmem:[#allocation2 + $0x48] sm:$0xff]
      %v3639 = vld [vmem:[#allocation2 + $0x50] sm:$0xff]
      %v3640 = vld [vmem:[#allocation2 + $0x58] sm:$0xff]
      %v3641 = vld [vmem:[#allocation2 + $0x60] sm:$0xff]
      %v3642 = vld [vmem:[#allocation2 + $0x68] sm:$0xff]
      %v3643 = vld [vmem:[#allocation2 + $0x70] sm:$0xff]
      %v3644 = vld [vmem:[#allocation2 + $0x78] sm:$0xff]
      %v3645 = vld [vmem:[#allocation2 + $0x80] sm:$0xff]
      %v3646 = vld [vmem:[#allocation2 + $0x88] sm:$0xff]
      %v3647 = vld [vmem:[#allocation2 + $0x90] sm:$0xff]
      %v3648 = vld [vmem:[#allocation2 + $0x98] sm:$0xff]
      %v3649 = vld [vmem:[#allocation2 + $0xa0] sm:$0xff]
      %v3650 = vld [vmem:[#allocation2 + $0xa8] sm:$0xff]
      %v3651 = vld [vmem:[#allocation2 + $0xb0] sm:$0xff]
      %v3652 = vld [vmem:[#allocation2 + $0xb8] sm:$0xff]
      %v3653 = vld [vmem:[#allocation2 + $0xc0] sm:$0xff]
      %v3654 = vld [vmem:[#allocation2 + $0xc8] sm:$0xff]
      %v3655 = vld [vmem:[#allocation2 + $0xd0] sm:$0xff]
      %v3656 = vld [vmem:[#allocation2 + $0xd8] sm:$0xff]
      %v3657 = vld [vmem:[#allocation2 + $0xe0] sm:$0xff]
      %v3658 = vld [vmem:[#allocation2 + $0xe8] sm:$0xff]
      %v3659 = vld [vmem:[#allocation2 + $0xf0] sm:$0xff]
      %v3660 = vld [vmem:[#allocation2 + $0xf8] sm:$0xff]
      %v3661 = vld [vmem:[#allocation2 + $0x100] sm:$0xff]
      %v3662 = vld [vmem:[#allocation2 + $0x108] sm:$0xff]
      %v3663 = vld [vmem:[#allocation2 + $0x110] sm:$0xff]
      %v3664 = vld [vmem:[#allocation2 + $0x118] sm:$0xff]
      %v3665 = vld [vmem:[#allocation2 + $0x120] sm:$0xff]
      %v3666 = vld [vmem:[#allocation2 + $0x128] sm:$0xff]
      %v3667 = vld [vmem:[#allocation2 + $0x130] sm:$0xff]
      %v3668 = vld [vmem:[#allocation2 + $0x138] sm:$0xff]
      %v3669 = vld [vmem:[#allocation2 + $0x140] sm:$0xff]
      %v3670 = vld [vmem:[#allocation2 + $0x148] sm:$0xff]
      %v3671 = vld [vmem:[#allocation2 + $0x150] sm:$0xff]
      %v3672 = vld [vmem:[#allocation2 + $0x158] sm:$0xff]
      %v3673 = vld [vmem:[#allocation2 + $0x160] sm:$0xff]
      %v3674 = vld [vmem:[#allocation2 + $0x168] sm:$0xff]
      %v3675 = vld [vmem:[#allocation2 + $0x170] sm:$0xff]
      %v3676 = vld [vmem:[#allocation2 + $0x178] sm:$0xff]
      %v3677 = vld [vmem:[#allocation2 + $0x180] sm:$0xff]
      %v3678 = vld [vmem:[#allocation2 + $0x188] sm:$0xff]
      %v3679 = vld [vmem:[#allocation2 + $0x190] sm:$0xff]
      %v3680 = vld [vmem:[#allocation2 + $0x198] sm:$0xff]
      %v3681 = vld [vmem:[#allocation2 + $0x1a0] sm:$0xff]
      %v3682 = vld [vmem:[#allocation2 + $0x1a8] sm:$0xff]
      %v3683 = vld [vmem:[#allocation2 + $0x1b0] sm:$0xff]
      %v3684 = vld [vmem:[#allocation2 + $0x1b8] sm:$0xff]
      %v3685 = vld [vmem:[#allocation2 + $0x1c0] sm:$0xff]
      %v3686 = vld [vmem:[#allocation2 + $0x1c8] sm:$0xff]
      %v3687 = vld [vmem:[#allocation2 + $0x1d0] sm:$0xff]
      %v3688 = vld [vmem:[#allocation2 + $0x1d8] sm:$0xff]
      %v3689 = vld [vmem:[#allocation2 + $0x1e0] sm:$0xff]
      %v3690 = vld [vmem:[#allocation2 + $0x1e8] sm:$0xff]
      %v3691 = vld [vmem:[#allocation2 + $0x1f0] sm:$0xff]
      %v3692 = vld [vmem:[#allocation2 + $0x1f8] sm:$0xff]
      %v3693 = vadd.f32 %v3629, %v3565
      %v3694 = vadd.f32 %v3630, %v3566
      %v3695 = vadd.f32 %v3631, %v3567
      %v3696 = vadd.f32 %v3632, %v3568
      %v3697 = vadd.f32 %v3633, %v3569
      %v3698 = vadd.f32 %v3634, %v3570
      %v3699 = vadd.f32 %v3635, %v3571
      %v3700 = vadd.f32 %v3636, %v3572
      %v3701 = vadd.f32 %v3637, %v3573
      %v3702 = vadd.f32 %v3638, %v3574
      %v3703 = vadd.f32 %v3639, %v3575
      %v3704 = vadd.f32 %v3640, %v3576
      %v3705 = vadd.f32 %v3641, %v3577
      %v3706 = vadd.f32 %v3642, %v3578
      %v3707 = vadd.f32 %v3643, %v3579
      %v3708 = vadd.f32 %v3644, %v3580
      %v3709 = vadd.f32 %v3645, %v3581
      %v3710 = vadd.f32 %v3646, %v3582
      %v3711 = vadd.f32 %v3647, %v3583
      %v3712 = vadd.f32 %v3648, %v3584
      %v3713 = vadd.f32 %v3649, %v3585
      %v3714 = vadd.f32 %v3650, %v3586
      %v3715 = vadd.f32 %v3651, %v3587
      %v3716 = vadd.f32 %v3652, %v3588
      %v3717 = vadd.f32 %v3653, %v3589
      %v3718 = vadd.f32 %v3654, %v3590
      %v3719 = vadd.f32 %v3655, %v3591
      %v3720 = vadd.f32 %v3656, %v3592
      %v3721 = vadd.f32 %v3657, %v3593
      %v3722 = vadd.f32 %v3658, %v3594
      %v3723 = vadd.f32 %v3659, %v3595
      %v3724 = vadd.f32 %v3660, %v3596
      %v3725 = vadd.f32 %v3661, %v3597
      %v3726 = vadd.f32 %v3662, %v3598
      %v3727 = vadd.f32 %v3663, %v3599
      %v3728 = vadd.f32 %v3664, %v3600
      %v3729 = vadd.f32 %v3665, %v3601
      %v3730 = vadd.f32 %v3666, %v3602
      %v3731 = vadd.f32 %v3667, %v3603
      %v3732 = vadd.f32 %v3668, %v3604
      %v3733 = vadd.f32 %v3669, %v3605
      %v3734 = vadd.f32 %v3670, %v3606
      %v3735 = vadd.f32 %v3671, %v3607
      %v3736 = vadd.f32 %v3672, %v3608
      %v3737 = vadd.f32 %v3673, %v3609
      %v3738 = vadd.f32 %v3674, %v3610
      %v3739 = vadd.f32 %v3675, %v3611
      %v3740 = vadd.f32 %v3676, %v3612
      %v3741 = vadd.f32 %v3677, %v3613
      %v3742 = vadd.f32 %v3678, %v3614
      %v3743 = vadd.f32 %v3679, %v3615
      %v3744 = vadd.f32 %v3680, %v3616
      %v3745 = vadd.f32 %v3681, %v3617
      %v3746 = vadd.f32 %v3682, %v3618
      %v3747 = vadd.f32 %v3683, %v3619
      %v3748 = vadd.f32 %v3684, %v3620
      %v3749 = vadd.f32 %v3685, %v3621
      %v3750 = vadd.f32 %v3686, %v3622
      %v3751 = vadd.f32 %v3687, %v3623
      %v3752 = vadd.f32 %v3688, %v3624
      %v3753 = vadd.f32 %v3689, %v3625
      %v3754 = vadd.f32 %v3690, %v3626
      %v3755 = vadd.f32 %v3691, %v3627
      %v3756 = vadd.f32 %v3692, %v3628
      %3757 = vst [vmem:[#allocation2] sm:$0xff] %v3693
      %3758 = vst [vmem:[#allocation2 + $0x8] sm:$0xff] %v3694
      %3759 = vst [vmem:[#allocation2 + $0x10] sm:$0xff] %v3695
      %3760 = vst [vmem:[#allocation2 + $0x18] sm:$0xff] %v3696
      %3761 = vst [vmem:[#allocation2 + $0x20] sm:$0xff] %v3697
      %3762 = vst [vmem:[#allocation2 + $0x28] sm:$0xff] %v3698
      %3763 = vst [vmem:[#allocation2 + $0x30] sm:$0xff] %v3699
      %3764 = vst [vmem:[#allocation2 + $0x38] sm:$0xff] %v3700
      %3765 = vst [vmem:[#allocation2 + $0x40] sm:$0xff] %v3701
      %3766 = vst [vmem:[#allocation2 + $0x48] sm:$0xff] %v3702
      %3767 = vst [vmem:[#allocation2 + $0x50] sm:$0xff] %v3703
      %3768 = vst [vmem:[#allocation2 + $0x58] sm:$0xff] %v3704
      %3769 = vst [vmem:[#allocation2 + $0x60] sm:$0xff] %v3705
      %3770 = vst [vmem:[#allocation2 + $0x68] sm:$0xff] %v3706
      %3771 = vst [vmem:[#allocation2 + $0x70] sm:$0xff] %v3707
      %3772 = vst [vmem:[#allocation2 + $0x78] sm:$0xff] %v3708
      %3773 = vst [vmem:[#allocation2 + $0x80] sm:$0xff] %v3709
      %3774 = vst [vmem:[#allocation2 + $0x88] sm:$0xff] %v3710
      %3775 = vst [vmem:[#allocation2 + $0x90] sm:$0xff] %v3711
      %3776 = vst [vmem:[#allocation2 + $0x98] sm:$0xff] %v3712
      %3777 = vst [vmem:[#allocation2 + $0xa0] sm:$0xff] %v3713
      %3778 = vst [vmem:[#allocation2 + $0xa8] sm:$0xff] %v3714
      %3779 = vst [vmem:[#allocation2 + $0xb0] sm:$0xff] %v3715
      %3780 = vst [vmem:[#allocation2 + $0xb8] sm:$0xff] %v3716
      %3781 = vst [vmem:[#allocation2 + $0xc0] sm:$0xff] %v3717
      %3782 = vst [vmem:[#allocation2 + $0xc8] sm:$0xff] %v3718
      %3783 = vst [vmem:[#allocation2 + $0xd0] sm:$0xff] %v3719
      %3784 = vst [vmem:[#allocation2 + $0xd8] sm:$0xff] %v3720
      %3785 = vst [vmem:[#allocation2 + $0xe0] sm:$0xff] %v3721
      %3786 = vst [vmem:[#allocation2 + $0xe8] sm:$0xff] %v3722
      %3787 = vst [vmem:[#allocation2 + $0xf0] sm:$0xff] %v3723
      %3788 = vst [vmem:[#allocation2 + $0xf8] sm:$0xff] %v3724
      %3789 = vst [vmem:[#allocation2 + $0x100] sm:$0xff] %v3725
      %3790 = vst [vmem:[#allocation2 + $0x108] sm:$0xff] %v3726
      %3791 = vst [vmem:[#allocation2 + $0x110] sm:$0xff] %v3727
      %3792 = vst [vmem:[#allocation2 + $0x118] sm:$0xff] %v3728
      %3793 = vst [vmem:[#allocation2 + $0x120] sm:$0xff] %v3729
      %3794 = vst [vmem:[#allocation2 + $0x128] sm:$0xff] %v3730
      %3795 = vst [vmem:[#allocation2 + $0x130] sm:$0xff] %v3731
      %3796 = vst [vmem:[#allocation2 + $0x138] sm:$0xff] %v3732
      %3797 = vst [vmem:[#allocation2 + $0x140] sm:$0xff] %v3733
      %3798 = vst [vmem:[#allocation2 + $0x148] sm:$0xff] %v3734
      %3799 = vst [vmem:[#allocation2 + $0x150] sm:$0xff] %v3735
      %3800 = vst [vmem:[#allocation2 + $0x158] sm:$0xff] %v3736
      %3801 = vst [vmem:[#allocation2 + $0x160] sm:$0xff] %v3737
      %3802 = vst [vmem:[#allocation2 + $0x168] sm:$0xff] %v3738
      %3803 = vst [vmem:[#allocation2 + $0x170] sm:$0xff] %v3739
      %3804 = vst [vmem:[#allocation2 + $0x178] sm:$0xff] %v3740
      %3805 = vst [vmem:[#allocation2 + $0x180] sm:$0xff] %v3741
      %3806 = vst [vmem:[#allocation2 + $0x188] sm:$0xff] %v3742
      %3807 = vst [vmem:[#allocation2 + $0x190] sm:$0xff] %v3743
      %3808 = vst [vmem:[#allocation2 + $0x198] sm:$0xff] %v3744
      %3809 = vst [vmem:[#allocation2 + $0x1a0] sm:$0xff] %v3745
      %3810 = vst [vmem:[#allocation2 + $0x1a8] sm:$0xff] %v3746
      %3811 = vst [vmem:[#allocation2 + $0x1b0] sm:$0xff] %v3747
      %3812 = vst [vmem:[#allocation2 + $0x1b8] sm:$0xff] %v3748
      %3813 = vst [vmem:[#allocation2 + $0x1c0] sm:$0xff] %v3749
      %3814 = vst [vmem:[#allocation2 + $0x1c8] sm:$0xff] %v3750
      %3815 = vst [vmem:[#allocation2 + $0x1d0] sm:$0xff] %v3751
      %3816 = vst [vmem:[#allocation2 + $0x1d8] sm:$0xff] %v3752
      %3817 = vst [vmem:[#allocation2 + $0x1e0] sm:$0xff] %v3753
      %3818 = vst [vmem:[#allocation2 + $0x1e8] sm:$0xff] %v3754
      %3819 = vst [vmem:[#allocation2 + $0x1f0] sm:$0xff] %v3755
      %3820 = vst [vmem:[#allocation2 + $0x1f8] sm:$0xff] %v3756
      %s3821 = sadd.s32 %s278, 2
      %s3822 = smul.u32 %s3821, 4
      %s3823 = smul.addr %s3822, 4
      %s3824 = scalar_lea.vmem %s255, %s3823
      %v3825 = vld [vmem:[%s3824] sm:$0xf]
      %v3826 = vld [vmem:[%s3824 + $0x4] sm:$0xf]
      %v3827 = vld [vmem:[%s3824 + $0x8] sm:$0xf]
      %v3828 = vld [vmem:[%s3824 + $0xc] sm:$0xf]
      %v3829 = vld [vmem:[%s3824 + $0x10] sm:$0xf]
      %v3830 = vld [vmem:[%s3824 + $0x14] sm:$0xf]
      %v3831 = vld [vmem:[%s3824 + $0x18] sm:$0xf]
      %v3832 = vld [vmem:[%s3824 + $0x1c] sm:$0xf]
      %v3833 = vld [vmem:[%s3824 + $0x20] sm:$0xf]
      %v3834 = vld [vmem:[%s3824 + $0x24] sm:$0xf]
      %v3835 = vld [vmem:[%s3824 + $0x28] sm:$0xf]
      %v3836 = vld [vmem:[%s3824 + $0x2c] sm:$0xf]
      %v3837 = vld [vmem:[%s3824 + $0x30] sm:$0xf]
      %v3838 = vld [vmem:[%s3824 + $0x34] sm:$0xf]
      %v3839 = vld [vmem:[%s3824 + $0x38] sm:$0xf]
      %v3840 = vld [vmem:[%s3824 + $0x3c] sm:$0xf]
      %v3841 = vld [vmem:[%s3824 + $0x40] sm:$0xf]
      %v3842 = vld [vmem:[%s3824 + $0x44] sm:$0xf]
      %v3843 = vld [vmem:[%s3824 + $0x48] sm:$0xf]
      %v3844 = vld [vmem:[%s3824 + $0x4c] sm:$0xf]
      %v3845 = vld [vmem:[%s3824 + $0x50] sm:$0xf]
      %v3846 = vld [vmem:[%s3824 + $0x54] sm:$0xf]
      %v3847 = vld [vmem:[%s3824 + $0x58] sm:$0xf]
      %v3848 = vld [vmem:[%s3824 + $0x5c] sm:$0xf]
      %v3849 = vld [vmem:[%s3824 + $0x60] sm:$0xf]
      %v3850 = vld [vmem:[%s3824 + $0x64] sm:$0xf]
      %v3851 = vld [vmem:[%s3824 + $0x68] sm:$0xf]
      %v3852 = vld [vmem:[%s3824 + $0x6c] sm:$0xf]
      %v3853 = vld [vmem:[%s3824 + $0x70] sm:$0xf]
      %v3854 = vld [vmem:[%s3824 + $0x74] sm:$0xf]
      %v3855 = vld [vmem:[%s3824 + $0x78] sm:$0xf]
      %v3856 = vld [vmem:[%s3824 + $0x7c] sm:$0xf]
      %v3857 = vld [vmem:[%s3824 + $0x80] sm:$0xf]
      %v3858 = vld [vmem:[%s3824 + $0x84] sm:$0xf]
      %v3859 = vld [vmem:[%s3824 + $0x88] sm:$0xf]
      %v3860 = vld [vmem:[%s3824 + $0x8c] sm:$0xf]
      %v3861 = vld [vmem:[%s3824 + $0x90] sm:$0xf]
      %v3862 = vld [vmem:[%s3824 + $0x94] sm:$0xf]
      %v3863 = vld [vmem:[%s3824 + $0x98] sm:$0xf]
      %v3864 = vld [vmem:[%s3824 + $0x9c] sm:$0xf]
      %v3865 = vld [vmem:[%s3824 + $0xa0] sm:$0xf]
      %v3866 = vld [vmem:[%s3824 + $0xa4] sm:$0xf]
      %v3867 = vld [vmem:[%s3824 + $0xa8] sm:$0xf]
      %v3868 = vld [vmem:[%s3824 + $0xac] sm:$0xf]
      %v3869 = vld [vmem:[%s3824 + $0xb0] sm:$0xf]
      %v3870 = vld [vmem:[%s3824 + $0xb4] sm:$0xf]
      %v3871 = vld [vmem:[%s3824 + $0xb8] sm:$0xf]
      %v3872 = vld [vmem:[%s3824 + $0xbc] sm:$0xf]
      %v3873 = vld [vmem:[%s3824 + $0xc0] sm:$0xf]
      %v3874 = vld [vmem:[%s3824 + $0xc4] sm:$0xf]
      %v3875 = vld [vmem:[%s3824 + $0xc8] sm:$0xf]
      %v3876 = vld [vmem:[%s3824 + $0xcc] sm:$0xf]
      %v3877 = vld [vmem:[%s3824 + $0xd0] sm:$0xf]
      %v3878 = vld [vmem:[%s3824 + $0xd4] sm:$0xf]
      %v3879 = vld [vmem:[%s3824 + $0xd8] sm:$0xf]
      %v3880 = vld [vmem:[%s3824 + $0xdc] sm:$0xf]
      %v3881 = vld [vmem:[%s3824 + $0xe0] sm:$0xf]
      %v3882 = vld [vmem:[%s3824 + $0xe4] sm:$0xf]
      %v3883 = vld [vmem:[%s3824 + $0xe8] sm:$0xf]
      %v3884 = vld [vmem:[%s3824 + $0xec] sm:$0xf]
      %v3885 = vld [vmem:[%s3824 + $0xf0] sm:$0xf]
      %v3886 = vld [vmem:[%s3824 + $0xf4] sm:$0xf]
      %v3887 = vld [vmem:[%s3824 + $0xf8] sm:$0xf]
      %v3888 = vld [vmem:[%s3824 + $0xfc] sm:$0xf]
      %s3889 = scalar_lea.vmem %s1, 384
      %v3890 = vld [vmem:[%s3889] sm:$0xf]
      %v3891 = vld [vmem:[%s3889 + $0x4] sm:$0xf]
      %v3892 = vld [vmem:[%s3889 + $0x8] sm:$0xf]
      %v3893 = vld [vmem:[%s3889 + $0xc] sm:$0xf]
      %v3894 = vld [vmem:[%s3889 + $0x10] sm:$0xf]
      %v3895 = vld [vmem:[%s3889 + $0x14] sm:$0xf]
      %v3896 = vld [vmem:[%s3889 + $0x18] sm:$0xf]
      %v3897 = vld [vmem:[%s3889 + $0x1c] sm:$0xf]
      %v3898 = vld [vmem:[%s3889 + $0x20] sm:$0xf]
      %v3899 = vld [vmem:[%s3889 + $0x24] sm:$0xf]
      %v3900 = vld [vmem:[%s3889 + $0x28] sm:$0xf]
      %v3901 = vld [vmem:[%s3889 + $0x2c] sm:$0xf]
      %v3902 = vld [vmem:[%s3889 + $0x30] sm:$0xf]
      %v3903 = vld [vmem:[%s3889 + $0x34] sm:$0xf]
      %v3904 = vld [vmem:[%s3889 + $0x38] sm:$0xf]
      %v3905 = vld [vmem:[%s3889 + $0x3c] sm:$0xf]
      %s3906 = scalar_lea.vmem %s1, 448
      %v3907 = vld [vmem:[%s3906] sm:$0xf]
      %v3908 = vld [vmem:[%s3906 + $0x4] sm:$0xf]
      %v3909 = vld [vmem:[%s3906 + $0x8] sm:$0xf]
      %v3910 = vld [vmem:[%s3906 + $0xc] sm:$0xf]
      %v3911 = vld [vmem:[%s3906 + $0x10] sm:$0xf]
      %v3912 = vld [vmem:[%s3906 + $0x14] sm:$0xf]
      %v3913 = vld [vmem:[%s3906 + $0x18] sm:$0xf]
      %v3914 = vld [vmem:[%s3906 + $0x1c] sm:$0xf]
      %v3915 = vld [vmem:[%s3906 + $0x20] sm:$0xf]
      %v3916 = vld [vmem:[%s3906 + $0x24] sm:$0xf]
      %v3917 = vld [vmem:[%s3906 + $0x28] sm:$0xf]
      %v3918 = vld [vmem:[%s3906 + $0x2c] sm:$0xf]
      %v3919 = vld [vmem:[%s3906 + $0x30] sm:$0xf]
      %v3920 = vld [vmem:[%s3906 + $0x34] sm:$0xf]
      %v3921 = vld [vmem:[%s3906 + $0x38] sm:$0xf]
      %v3922 = vld [vmem:[%s3906 + $0x3c] sm:$0xf]
      %v3987 = vunpack.c.l.b16 %v3825
      %v3988 = vunpack.c.l.b16 %v3826
      %v3989 = vunpack.c.l.b16 %v3827
      %v3990 = vunpack.c.l.b16 %v3828
      %v3991 = vunpack.c.l.b16 %v3829
      %v3992 = vunpack.c.l.b16 %v3830
      %v3993 = vunpack.c.l.b16 %v3831
      %v3994 = vunpack.c.l.b16 %v3832
      %v3995 = vunpack.c.l.b16 %v3833
      %v3996 = vunpack.c.l.b16 %v3834
      %v3997 = vunpack.c.l.b16 %v3835
      %v3998 = vunpack.c.l.b16 %v3836
      %v3999 = vunpack.c.l.b16 %v3837
      %v4000 = vunpack.c.l.b16 %v3838
      %v4001 = vunpack.c.l.b16 %v3839
      %v4002 = vunpack.c.l.b16 %v3840
      %v4003 = vunpack.c.l.b16 %v3841
      %v4004 = vunpack.c.l.b16 %v3842
      %v4005 = vunpack.c.l.b16 %v3843
      %v4006 = vunpack.c.l.b16 %v3844
      %v4007 = vunpack.c.l.b16 %v3845
      %v4008 = vunpack.c.l.b16 %v3846
      %v4009 = vunpack.c.l.b16 %v3847
      %v4010 = vunpack.c.l.b16 %v3848
      %v4011 = vunpack.c.l.b16 %v3849
      %v4012 = vunpack.c.l.b16 %v3850
      %v4013 = vunpack.c.l.b16 %v3851
      %v4014 = vunpack.c.l.b16 %v3852
      %v4015 = vunpack.c.l.b16 %v3853
      %v4016 = vunpack.c.l.b16 %v3854
      %v4017 = vunpack.c.l.b16 %v3855
      %v4018 = vunpack.c.l.b16 %v3856
      %v4019 = vunpack.c.l.b16 %v3857
      %v4020 = vunpack.c.l.b16 %v3858
      %v4021 = vunpack.c.l.b16 %v3859
      %v4022 = vunpack.c.l.b16 %v3860
      %v4023 = vunpack.c.l.b16 %v3861
      %v4024 = vunpack.c.l.b16 %v3862
      %v4025 = vunpack.c.l.b16 %v3863
      %v4026 = vunpack.c.l.b16 %v3864
      %v4027 = vunpack.c.l.b16 %v3865
      %v4028 = vunpack.c.l.b16 %v3866
      %v4029 = vunpack.c.l.b16 %v3867
      %v4030 = vunpack.c.l.b16 %v3868
      %v4031 = vunpack.c.l.b16 %v3869
      %v4032 = vunpack.c.l.b16 %v3870
      %v4033 = vunpack.c.l.b16 %v3871
      %v4034 = vunpack.c.l.b16 %v3872
      %v4035 = vunpack.c.l.b16 %v3873
      %v4036 = vunpack.c.l.b16 %v3874
      %v4037 = vunpack.c.l.b16 %v3875
      %v4038 = vunpack.c.l.b16 %v3876
      %v4039 = vunpack.c.l.b16 %v3877
      %v4040 = vunpack.c.l.b16 %v3878
      %v4041 = vunpack.c.l.b16 %v3879
      %v4042 = vunpack.c.l.b16 %v3880
      %v4043 = vunpack.c.l.b16 %v3881
      %v4044 = vunpack.c.l.b16 %v3882
      %v4045 = vunpack.c.l.b16 %v3883
      %v4046 = vunpack.c.l.b16 %v3884
      %v4047 = vunpack.c.l.b16 %v3885
      %v4048 = vunpack.c.l.b16 %v3886
      %v4049 = vunpack.c.l.b16 %v3887
      %v4050 = vunpack.c.l.b16 %v3888
      %v4051 = vpack.c.b16 %v3988, %v3987
      %v4052 = vpack.c.b16 %v3990, %v3989
      %v4053 = vpack.c.b16 %v3992, %v3991
      %v4054 = vpack.c.b16 %v3994, %v3993
      %v4055 = vpack.c.b16 %v3996, %v3995
      %v4056 = vpack.c.b16 %v3998, %v3997
      %v4057 = vpack.c.b16 %v4000, %v3999
      %v4058 = vpack.c.b16 %v4002, %v4001
      %v4059 = vpack.c.b16 %v4004, %v4003
      %v4060 = vpack.c.b16 %v4006, %v4005
      %v4061 = vpack.c.b16 %v4008, %v4007
      %v4062 = vpack.c.b16 %v4010, %v4009
      %v4063 = vpack.c.b16 %v4012, %v4011
      %v4064 = vpack.c.b16 %v4014, %v4013
      %v4065 = vpack.c.b16 %v4016, %v4015
      %v4066 = vpack.c.b16 %v4018, %v4017
      %v4067 = vpack.c.b16 %v4020, %v4019
      %v4068 = vpack.c.b16 %v4022, %v4021
      %v4069 = vpack.c.b16 %v4024, %v4023
      %v4070 = vpack.c.b16 %v4026, %v4025
      %v4071 = vpack.c.b16 %v4028, %v4027
      %v4072 = vpack.c.b16 %v4030, %v4029
      %v4073 = vpack.c.b16 %v4032, %v4031
      %v4074 = vpack.c.b16 %v4034, %v4033
      %v4075 = vpack.c.b16 %v4036, %v4035
      %v4076 = vpack.c.b16 %v4038, %v4037
      %v4077 = vpack.c.b16 %v4040, %v4039
      %v4078 = vpack.c.b16 %v4042, %v4041
      %v4079 = vpack.c.b16 %v4044, %v4043
      %v4080 = vpack.c.b16 %v4046, %v4045
      %v4081 = vpack.c.b16 %v4048, %v4047
      %v4082 = vpack.c.b16 %v4050, %v4049
      %v4131 = vunpack.c.l.b16 %v3907
      %v4132 = vunpack.c.l.b16 %v3908
      %v4133 = vunpack.c.l.b16 %v3909
      %v4134 = vunpack.c.l.b16 %v3910
      %v4135 = vunpack.c.l.b16 %v3911
      %v4136 = vunpack.c.l.b16 %v3912
      %v4137 = vunpack.c.l.b16 %v3913
      %v4138 = vunpack.c.l.b16 %v3914
      %v4139 = vunpack.c.l.b16 %v3915
      %v4140 = vunpack.c.l.b16 %v3916
      %v4141 = vunpack.c.l.b16 %v3917
      %v4142 = vunpack.c.l.b16 %v3918
      %v4143 = vunpack.c.l.b16 %v3919
      %v4144 = vunpack.c.l.b16 %v3920
      %v4145 = vunpack.c.l.b16 %v3921
      %v4146 = vunpack.c.l.b16 %v3922
      %v4147 = vpack.c.b16 %v4132, %v4131
      %v4148 = vpack.c.b16 %v4134, %v4133
      %v4149 = vpack.c.b16 %v4136, %v4135
      %v4150 = vpack.c.b16 %v4138, %v4137
      %v4151 = vpack.c.b16 %v4140, %v4139
      %v4152 = vpack.c.b16 %v4142, %v4141
      %v4153 = vpack.c.b16 %v4144, %v4143
      %v4154 = vpack.c.b16 %v4146, %v4145
      %4163 = vmatprep.subr.bf16.mxu0 0
      %4164 = vmatpush1.bf16.msra.mxu0 %v4147
      %4165 = vmatprep.subr.bf16.mxu0 0
      %4166 = vmatpush1.bf16.msra.mxu0 %v4148
      %4167 = vmatprep.subr.bf16.mxu0 0
      %4168 = vmatpush1.bf16.msra.mxu0 %v4149
      %4169 = vmatprep.subr.bf16.mxu0 0
      %4170 = vmatpush1.bf16.msra.mxu0 %v4150
      %4171 = vmatprep.subr.bf16.mxu0 0
      %4172 = vmatpush1.bf16.msra.mxu0 %v4151
      %4173 = vmatprep.subr.bf16.mxu0 0
      %4174 = vmatpush1.bf16.msra.mxu0 %v4152
      %4175 = vmatprep.subr.bf16.mxu0 0
      %4176 = vmatpush1.bf16.msra.mxu0 %v4153
      %4177 = vmatprep.subr.bf16.mxu0 0
      %4178 = vmatpush1.bf16.msra.mxu0 %v4154
      %4179 = vmatprep.subr.bf16.mxu0 0
      %4180 = vmatpush1.bf16.msra.mxu0 0
      %4181 = vmatprep.subr.bf16.mxu0 0
      %4182 = vmatpush1.bf16.msra.mxu0 0
      %4183 = vmatprep.subr.bf16.mxu0 0
      %4184 = vmatpush1.bf16.msra.mxu0 0
      %4185 = vmatprep.subr.bf16.mxu0 0
      %4186 = vmatpush1.bf16.msra.mxu0 0
      %4187 = vmatprep.subr.bf16.mxu0 0
      %4188 = vmatpush1.bf16.msra.mxu0 0
      %4189 = vmatprep.subr.bf16.mxu0 0
      %4190 = vmatpush1.bf16.msra.mxu0 0
      %4191 = vmatprep.subr.bf16.mxu0 0
      %4192 = vmatpush1.bf16.msra.mxu0 0
      %4193 = vmatprep.subr.bf16.mxu0 0
      %4194 = vmatpush1.bf16.msra.mxu0 0
      %4195 = vmatprep.mubr.bf16.mxu0 0
      %4196 = vmatmul.mubr.bf16.gmra.mrb[0].mxu0 %v4051
      %v4197 = vpop.f32.mrb[0].mxu0
      %v4198 = vadd.f32 0.0, %v4197
      %v4199 = vpop.f32.mrb[0].mxu0
      %v4200 = vpop.f32.mrb[0].mxu0
      %v4201 = vadd.f32 0.0, %v4200
      %v4202 = vpop.f32.mrb[0].mxu0
      %4203 = vmatprep.mubr.bf16.mxu0 0
      %4204 = vmatmul.mubr.bf16.gmra.mrb[0].mxu0 %v4052
      %v4205 = vpop.f32.mrb[0].mxu0
      %v4206 = vadd.f32 0.0, %v4205
      %v4207 = vpop.f32.mrb[0].mxu0
      %v4208 = vpop.f32.mrb[0].mxu0
      %v4209 = vadd.f32 0.0, %v4208
      %v4210 = vpop.f32.mrb[0].mxu0
      %4211 = vmatprep.mubr.bf16.mxu0 0
      %4212 = vmatmul.mubr.bf16.gmra.mrb[0].mxu0 %v4053
      %v4213 = vpop.f32.mrb[0].mxu0
      %v4214 = vadd.f32 0.0, %v4213
      %v4215 = vpop.f32.mrb[0].mxu0
      %v4216 = vpop.f32.mrb[0].mxu0
      %v4217 = vadd.f32 0.0, %v4216
      %v4218 = vpop.f32.mrb[0].mxu0
      %4219 = vmatprep.mubr.bf16.mxu0 0
      %4220 = vmatmul.mubr.bf16.gmra.mrb[0].mxu0 %v4054
      %v4221 = vpop.f32.mrb[0].mxu0
      %v4222 = vadd.f32 0.0, %v4221
      %v4223 = vpop.f32.mrb[0].mxu0
      %v4224 = vpop.f32.mrb[0].mxu0
      %v4225 = vadd.f32 0.0, %v4224
      %v4226 = vpop.f32.mrb[0].mxu0
      %4227 = vmatprep.mubr.bf16.mxu0 0
      %4228 = vmatmul.mubr.bf16.gmra.mrb[0].mxu0 %v4055
      %v4229 = vpop.f32.mrb[0].mxu0
      %v4230 = vadd.f32 0.0, %v4229
      %v4231 = vpop.f32.mrb[0].mxu0
      %v4232 = vpop.f32.mrb[0].mxu0
      %v4233 = vadd.f32 0.0, %v4232
      %v4234 = vpop.f32.mrb[0].mxu0
      %4235 = vmatprep.mubr.bf16.mxu0 0
      %4236 = vmatmul.mubr.bf16.gmra.mrb[0].mxu0 %v4056
      %v4237 = vpop.f32.mrb[0].mxu0
      %v4238 = vadd.f32 0.0, %v4237
      %v4239 = vpop.f32.mrb[0].mxu0
      %v4240 = vpop.f32.mrb[0].mxu0
      %v4241 = vadd.f32 0.0, %v4240
      %v4242 = vpop.f32.mrb[0].mxu0
      %4243 = vmatprep.mubr.bf16.mxu0 0
      %4244 = vmatmul.mubr.bf16.gmra.mrb[0].mxu0 %v4057
      %v4245 = vpop.f32.mrb[0].mxu0
      %v4246 = vadd.f32 0.0, %v4245
      %v4247 = vpop.f32.mrb[0].mxu0
      %v4248 = vpop.f32.mrb[0].mxu0
      %v4249 = vadd.f32 0.0, %v4248
      %v4250 = vpop.f32.mrb[0].mxu0
      %4251 = vmatprep.mubr.bf16.mxu0 0
      %4252 = vmatmul.mubr.bf16.gmra.mrb[0].mxu0 %v4058
      %v4253 = vpop.f32.mrb[0].mxu0
      %v4254 = vadd.f32 0.0, %v4253
      %v4255 = vpop.f32.mrb[0].mxu0
      %v4256 = vpop.f32.mrb[0].mxu0
      %v4257 = vadd.f32 0.0, %v4256
      %v4258 = vpop.f32.mrb[0].mxu0
      %4259 = vmatprep.mubr.bf16.mxu0 0
      %4260 = vmatmul.mubr.bf16.gmra.mrb[0].mxu0 %v4059
      %v4261 = vpop.f32.mrb[0].mxu0
      %v4262 = vadd.f32 0.0, %v4261
      %v4263 = vpop.f32.mrb[0].mxu0
      %v4264 = vpop.f32.mrb[0].mxu0
      %v4265 = vadd.f32 0.0, %v4264
      %v4266 = vpop.f32.mrb[0].mxu0
      %4267 = vmatprep.mubr.bf16.mxu0 0
      %4268 = vmatmul.mubr.bf16.gmra.mrb[0].mxu0 %v4060
      %v4269 = vpop.f32.mrb[0].mxu0
      %v4270 = vadd.f32 0.0, %v4269
      %v4271 = vpop.f32.mrb[0].mxu0
      %v4272 = vpop.f32.mrb[0].mxu0
      %v4273 = vadd.f32 0.0, %v4272
      %v4274 = vpop.f32.mrb[0].mxu0
      %4275 = vmatprep.mubr.bf16.mxu0 0
      %4276 = vmatmul.mubr.bf16.gmra.mrb[0].mxu0 %v4061
      %v4277 = vpop.f32.mrb[0].mxu0
      %v4278 = vadd.f32 0.0, %v4277
      %v4279 = vpop.f32.mrb[0].mxu0
      %v4280 = vpop.f32.mrb[0].mxu0
      %v4281 = vadd.f32 0.0, %v4280
      %v4282 = vpop.f32.mrb[0].mxu0
      %4283 = vmatprep.mubr.bf16.mxu0 0
      %4284 = vmatmul.mubr.bf16.gmra.mrb[0].mxu0 %v4062
      %v4285 = vpop.f32.mrb[0].mxu0
      %v4286 = vadd.f32 0.0, %v4285
      %v4287 = vpop.f32.mrb[0].mxu0
      %v4288 = vpop.f32.mrb[0].mxu0
      %v4289 = vadd.f32 0.0, %v4288
      %v4290 = vpop.f32.mrb[0].mxu0
      %4291 = vmatprep.mubr.bf16.mxu0 0
      %4292 = vmatmul.mubr.bf16.gmra.mrb[0].mxu0 %v4063
      %v4293 = vpop.f32.mrb[0].mxu0
      %v4294 = vadd.f32 0.0, %v4293
      %v4295 = vpop.f32.mrb[0].mxu0
      %v4296 = vpop.f32.mrb[0].mxu0
      %v4297 = vadd.f32 0.0, %v4296
      %v4298 = vpop.f32.mrb[0].mxu0
      %4299 = vmatprep.mubr.bf16.mxu0 0
      %4300 = vmatmul.mubr.bf16.gmra.mrb[0].mxu0 %v4064
      %v4301 = vpop.f32.mrb[0].mxu0
      %v4302 = vadd.f32 0.0, %v4301
      %v4303 = vpop.f32.mrb[0].mxu0
      %v4304 = vpop.f32.mrb[0].mxu0
      %v4305 = vadd.f32 0.0, %v4304
      %v4306 = vpop.f32.mrb[0].mxu0
      %4307 = vmatprep.mubr.bf16.mxu0 0
      %4308 = vmatmul.mubr.bf16.gmra.mrb[0].mxu0 %v4065
      %v4309 = vpop.f32.mrb[0].mxu0
      %v4310 = vadd.f32 0.0, %v4309
      %v4311 = vpop.f32.mrb[0].mxu0
      %v4312 = vpop.f32.mrb[0].mxu0
      %v4313 = vadd.f32 0.0, %v4312
      %v4314 = vpop.f32.mrb[0].mxu0
      %4315 = vmatprep.mubr.bf16.mxu0 0
      %4316 = vmatmul.mubr.bf16.gmra.mrb[0].mxu0 %v4066
      %v4317 = vpop.f32.mrb[0].mxu0
      %v4318 = vadd.f32 0.0, %v4317
      %v4319 = vpop.f32.mrb[0].mxu0
      %v4320 = vpop.f32.mrb[0].mxu0
      %v4321 = vadd.f32 0.0, %v4320
      %v4322 = vpop.f32.mrb[0].mxu0
      %4323 = vmatprep.mubr.bf16.mxu0 0
      %4324 = vmatmul.mubr.bf16.gmra.mrb[0].mxu0 %v4067
      %v4325 = vpop.f32.mrb[0].mxu0
      %v4326 = vadd.f32 0.0, %v4325
      %v4327 = vpop.f32.mrb[0].mxu0
      %v4328 = vpop.f32.mrb[0].mxu0
      %v4329 = vadd.f32 0.0, %v4328
      %v4330 = vpop.f32.mrb[0].mxu0
      %4331 = vmatprep.mubr.bf16.mxu0 0
      %4332 = vmatmul.mubr.bf16.gmra.mrb[0].mxu0 %v4068
      %v4333 = vpop.f32.mrb[0].mxu0
      %v4334 = vadd.f32 0.0, %v4333
      %v4335 = vpop.f32.mrb[0].mxu0
      %v4336 = vpop.f32.mrb[0].mxu0
      %v4337 = vadd.f32 0.0, %v4336
      %v4338 = vpop.f32.mrb[0].mxu0
      %4339 = vmatprep.mubr.bf16.mxu0 0
      %4340 = vmatmul.mubr.bf16.gmra.mrb[0].mxu0 %v4069
      %v4341 = vpop.f32.mrb[0].mxu0
      %v4342 = vadd.f32 0.0, %v4341
      %v4343 = vpop.f32.mrb[0].mxu0
      %v4344 = vpop.f32.mrb[0].mxu0
      %v4345 = vadd.f32 0.0, %v4344
      %v4346 = vpop.f32.mrb[0].mxu0
      %4347 = vmatprep.mubr.bf16.mxu0 0
      %4348 = vmatmul.mubr.bf16.gmra.mrb[0].mxu0 %v4070
      %v4349 = vpop.f32.mrb[0].mxu0
      %v4350 = vadd.f32 0.0, %v4349
      %v4351 = vpop.f32.mrb[0].mxu0
      %v4352 = vpop.f32.mrb[0].mxu0
      %v4353 = vadd.f32 0.0, %v4352
      %v4354 = vpop.f32.mrb[0].mxu0
      %4355 = vmatprep.mubr.bf16.mxu0 0
      %4356 = vmatmul.mubr.bf16.gmra.mrb[0].mxu0 %v4071
      %v4357 = vpop.f32.mrb[0].mxu0
      %v4358 = vadd.f32 0.0, %v4357
      %v4359 = vpop.f32.mrb[0].mxu0
      %v4360 = vpop.f32.mrb[0].mxu0
      %v4361 = vadd.f32 0.0, %v4360
      %v4362 = vpop.f32.mrb[0].mxu0
      %4363 = vmatprep.mubr.bf16.mxu0 0
      %4364 = vmatmul.mubr.bf16.gmra.mrb[0].mxu0 %v4072
      %v4365 = vpop.f32.mrb[0].mxu0
      %v4366 = vadd.f32 0.0, %v4365
      %v4367 = vpop.f32.mrb[0].mxu0
      %v4368 = vpop.f32.mrb[0].mxu0
      %v4369 = vadd.f32 0.0, %v4368
      %v4370 = vpop.f32.mrb[0].mxu0
      %4371 = vmatprep.mubr.bf16.mxu0 0
      %4372 = vmatmul.mubr.bf16.gmra.mrb[0].mxu0 %v4073
      %v4373 = vpop.f32.mrb[0].mxu0
      %v4374 = vadd.f32 0.0, %v4373
      %v4375 = vpop.f32.mrb[0].mxu0
      %v4376 = vpop.f32.mrb[0].mxu0
      %v4377 = vadd.f32 0.0, %v4376
      %v4378 = vpop.f32.mrb[0].mxu0
      %4379 = vmatprep.mubr.bf16.mxu0 0
      %4380 = vmatmul.mubr.bf16.gmra.mrb[0].mxu0 %v4074
      %v4381 = vpop.f32.mrb[0].mxu0
      %v4382 = vadd.f32 0.0, %v4381
      %v4383 = vpop.f32.mrb[0].mxu0
      %v4384 = vpop.f32.mrb[0].mxu0
      %v4385 = vadd.f32 0.0, %v4384
      %v4386 = vpop.f32.mrb[0].mxu0
      %4387 = vmatprep.mubr.bf16.mxu0 0
      %4388 = vmatmul.mubr.bf16.gmra.mrb[0].mxu0 %v4075
      %v4389 = vpop.f32.mrb[0].mxu0
      %v4390 = vadd.f32 0.0, %v4389
      %v4391 = vpop.f32.mrb[0].mxu0
      %v4392 = vpop.f32.mrb[0].mxu0
      %v4393 = vadd.f32 0.0, %v4392
      %v4394 = vpop.f32.mrb[0].mxu0
      %4395 = vmatprep.mubr.bf16.mxu0 0
      %4396 = vmatmul.mubr.bf16.gmra.mrb[0].mxu0 %v4076
      %v4397 = vpop.f32.mrb[0].mxu0
      %v4398 = vadd.f32 0.0, %v4397
      %v4399 = vpop.f32.mrb[0].mxu0
      %v4400 = vpop.f32.mrb[0].mxu0
      %v4401 = vadd.f32 0.0, %v4400
      %v4402 = vpop.f32.mrb[0].mxu0
      %4403 = vmatprep.mubr.bf16.mxu0 0
      %4404 = vmatmul.mubr.bf16.gmra.mrb[0].mxu0 %v4077
      %v4405 = vpop.f32.mrb[0].mxu0
      %v4406 = vadd.f32 0.0, %v4405
      %v4407 = vpop.f32.mrb[0].mxu0
      %v4408 = vpop.f32.mrb[0].mxu0
      %v4409 = vadd.f32 0.0, %v4408
      %v4410 = vpop.f32.mrb[0].mxu0
      %4411 = vmatprep.mubr.bf16.mxu0 0
      %4412 = vmatmul.mubr.bf16.gmra.mrb[0].mxu0 %v4078
      %v4413 = vpop.f32.mrb[0].mxu0
      %v4414 = vadd.f32 0.0, %v4413
      %v4415 = vpop.f32.mrb[0].mxu0
      %v4416 = vpop.f32.mrb[0].mxu0
      %v4417 = vadd.f32 0.0, %v4416
      %v4418 = vpop.f32.mrb[0].mxu0
      %4419 = vmatprep.mubr.bf16.mxu0 0
      %4420 = vmatmul.mubr.bf16.gmra.mrb[0].mxu0 %v4079
      %v4421 = vpop.f32.mrb[0].mxu0
      %v4422 = vadd.f32 0.0, %v4421
      %v4423 = vpop.f32.mrb[0].mxu0
      %v4424 = vpop.f32.mrb[0].mxu0
      %v4425 = vadd.f32 0.0, %v4424
      %v4426 = vpop.f32.mrb[0].mxu0
      %4427 = vmatprep.mubr.bf16.mxu0 0
      %4428 = vmatmul.mubr.bf16.gmra.mrb[0].mxu0 %v4080
      %v4429 = vpop.f32.mrb[0].mxu0
      %v4430 = vadd.f32 0.0, %v4429
      %v4431 = vpop.f32.mrb[0].mxu0
      %v4432 = vpop.f32.mrb[0].mxu0
      %v4433 = vadd.f32 0.0, %v4432
      %v4434 = vpop.f32.mrb[0].mxu0
      %4435 = vmatprep.mubr.bf16.mxu0 0
      %4436 = vmatmul.mubr.bf16.gmra.mrb[0].mxu0 %v4081
      %v4437 = vpop.f32.mrb[0].mxu0
      %v4438 = vadd.f32 0.0, %v4437
      %v4439 = vpop.f32.mrb[0].mxu0
      %v4440 = vpop.f32.mrb[0].mxu0
      %v4441 = vadd.f32 0.0, %v4440
      %v4442 = vpop.f32.mrb[0].mxu0
      %4443 = vmatprep.mubr.bf16.mxu0 0
      %4444 = vmatmul.mubr.bf16.gmra.mrb[0].mxu0 %v4082
      %v4445 = vpop.f32.mrb[0].mxu0
      %v4446 = vadd.f32 0.0, %v4445
      %v4447 = vpop.f32.mrb[0].mxu0
      %v4448 = vpop.f32.mrb[0].mxu0
      %v4449 = vadd.f32 0.0, %v4448
      %v4450 = vpop.f32.mrb[0].mxu0
      %4451 = vdwg.mxu0
      %v4452 = vrot.slane %v4198, 1
      %v4453 = vrot.slane %v4201, 1
      %v4454 = vrot.slane %v4206, 1
      %v4455 = vrot.slane %v4209, 1
      %v4456 = vrot.slane %v4214, 1
      %v4457 = vrot.slane %v4217, 1
      %v4458 = vrot.slane %v4222, 1
      %v4459 = vrot.slane %v4225, 1
      %v4460 = vrot.slane %v4230, 1
      %v4461 = vrot.slane %v4233, 1
      %v4462 = vrot.slane %v4238, 1
      %v4463 = vrot.slane %v4241, 1
      %v4464 = vrot.slane %v4246, 1
      %v4465 = vrot.slane %v4249, 1
      %v4466 = vrot.slane %v4254, 1
      %v4467 = vrot.slane %v4257, 1
      %v4468 = vrot.slane %v4262, 1
      %v4469 = vrot.slane %v4265, 1
      %v4470 = vrot.slane %v4270, 1
      %v4471 = vrot.slane %v4273, 1
      %v4472 = vrot.slane %v4278, 1
      %v4473 = vrot.slane %v4281, 1
      %v4474 = vrot.slane %v4286, 1
      %v4475 = vrot.slane %v4289, 1
      %v4476 = vrot.slane %v4294, 1
      %v4477 = vrot.slane %v4297, 1
      %v4478 = vrot.slane %v4302, 1
      %v4479 = vrot.slane %v4305, 1
      %v4480 = vrot.slane %v4310, 1
      %v4481 = vrot.slane %v4313, 1
      %v4482 = vrot.slane %v4318, 1
      %v4483 = vrot.slane %v4321, 1
      %v4484 = vrot.slane %v4326, 1
      %v4485 = vrot.slane %v4329, 1
      %v4486 = vrot.slane %v4334, 1
      %v4487 = vrot.slane %v4337, 1
      %v4488 = vrot.slane %v4342, 1
      %v4489 = vrot.slane %v4345, 1
      %v4490 = vrot.slane %v4350, 1
      %v4491 = vrot.slane %v4353, 1
      %v4492 = vrot.slane %v4358, 1
      %v4493 = vrot.slane %v4361, 1
      %v4494 = vrot.slane %v4366, 1
      %v4495 = vrot.slane %v4369, 1
      %v4496 = vrot.slane %v4374, 1
      %v4497 = vrot.slane %v4377, 1
      %v4498 = vrot.slane %v4382, 1
      %v4499 = vrot.slane %v4385, 1
      %v4500 = vrot.slane %v4390, 1
      %v4501 = vrot.slane %v4393, 1
      %v4502 = vrot.slane %v4398, 1
      %v4503 = vrot.slane %v4401, 1
      %v4504 = vrot.slane %v4406, 1
      %v4505 = vrot.slane %v4409, 1
      %v4506 = vrot.slane %v4414, 1
      %v4507 = vrot.slane %v4417, 1
      %v4508 = vrot.slane %v4422, 1
      %v4509 = vrot.slane %v4425, 1
      %v4510 = vrot.slane %v4430, 1
      %v4511 = vrot.slane %v4433, 1
      %v4512 = vrot.slane %v4438, 1
      %v4513 = vrot.slane %v4441, 1
      %v4514 = vrot.slane %v4446, 1
      %v4515 = vrot.slane %v4449, 1
      %v4516 = vsel %vm974, %v4514, %v4515
      %v4517 = vsel %vm974, %v4513, %v4514
      %v4518 = vsel %vm974, %v4512, %v4513
      %v4519 = vsel %vm974, %v4511, %v4512
      %v4520 = vsel %vm974, %v4510, %v4511
      %v4521 = vsel %vm974, %v4509, %v4510
      %v4522 = vsel %vm974, %v4508, %v4509
      %v4523 = vsel %vm974, %v4507, %v4508
      %v4524 = vsel %vm974, %v4506, %v4507
      %v4525 = vsel %vm974, %v4505, %v4506
      %v4526 = vsel %vm974, %v4504, %v4505
      %v4527 = vsel %vm974, %v4503, %v4504
      %v4528 = vsel %vm974, %v4502, %v4503
      %v4529 = vsel %vm974, %v4501, %v4502
      %v4530 = vsel %vm974, %v4500, %v4501
      %v4531 = vsel %vm974, %v4499, %v4500
      %v4532 = vsel %vm974, %v4498, %v4499
      %v4533 = vsel %vm974, %v4497, %v4498
      %v4534 = vsel %vm974, %v4496, %v4497
      %v4535 = vsel %vm974, %v4495, %v4496
      %v4536 = vsel %vm974, %v4494, %v4495
      %v4537 = vsel %vm974, %v4493, %v4494
      %v4538 = vsel %vm974, %v4492, %v4493
      %v4539 = vsel %vm974, %v4491, %v4492
      %v4540 = vsel %vm974, %v4490, %v4491
      %v4541 = vsel %vm974, %v4489, %v4490
      %v4542 = vsel %vm974, %v4488, %v4489
      %v4543 = vsel %vm974, %v4487, %v4488
      %v4544 = vsel %vm974, %v4486, %v4487
      %v4545 = vsel %vm974, %v4485, %v4486
      %v4546 = vsel %vm974, %v4484, %v4485
      %v4547 = vsel %vm974, %v4483, %v4484
      %v4548 = vsel %vm974, %v4482, %v4483
      %v4549 = vsel %vm974, %v4481, %v4482
      %v4550 = vsel %vm974, %v4480, %v4481
      %v4551 = vsel %vm974, %v4479, %v4480
      %v4552 = vsel %vm974, %v4478, %v4479
      %v4553 = vsel %vm974, %v4477, %v4478
      %v4554 = vsel %vm974, %v4476, %v4477
      %v4555 = vsel %vm974, %v4475, %v4476
      %v4556 = vsel %vm974, %v4474, %v4475
      %v4557 = vsel %vm974, %v4473, %v4474
      %v4558 = vsel %vm974, %v4472, %v4473
      %v4559 = vsel %vm974, %v4471, %v4472
      %v4560 = vsel %vm974, %v4470, %v4471
      %v4561 = vsel %vm974, %v4469, %v4470
      %v4562 = vsel %vm974, %v4468, %v4469
      %v4563 = vsel %vm974, %v4467, %v4468
      %v4564 = vsel %vm974, %v4466, %v4467
      %v4565 = vsel %vm974, %v4465, %v4466
      %v4566 = vsel %vm974, %v4464, %v4465
      %v4567 = vsel %vm974, %v4463, %v4464
      %v4568 = vsel %vm974, %v4462, %v4463
      %v4569 = vsel %vm974, %v4461, %v4462
      %v4570 = vsel %vm974, %v4460, %v4461
      %v4571 = vsel %vm974, %v4459, %v4460
      %v4572 = vsel %vm974, %v4458, %v4459
      %v4573 = vsel %vm974, %v4457, %v4458
      %v4574 = vsel %vm974, %v4456, %v4457
      %v4575 = vsel %vm974, %v4455, %v4456
      %v4576 = vsel %vm974, %v4454, %v4455
      %v4577 = vsel %vm974, %v4453, %v4454
      %v4578 = vsel %vm974, %v4452, %v4453
      %v4579 = vsel %vm974, %v4515, %v4452
      %v4596 = vunpack.c.l.b16 %v3890
      %v4597 = vunpack.c.l.b16 %v3891
      %v4598 = vunpack.c.l.b16 %v3892
      %v4599 = vunpack.c.l.b16 %v3893
      %v4600 = vunpack.c.l.b16 %v3894
      %v4601 = vunpack.c.l.b16 %v3895
      %v4602 = vunpack.c.l.b16 %v3896
      %v4603 = vunpack.c.l.b16 %v3897
      %v4604 = vunpack.c.l.b16 %v3898
      %v4605 = vunpack.c.l.b16 %v3899
      %v4606 = vunpack.c.l.b16 %v3900
      %v4607 = vunpack.c.l.b16 %v3901
      %v4608 = vunpack.c.l.b16 %v3902
      %v4609 = vunpack.c.l.b16 %v3903
      %v4610 = vunpack.c.l.b16 %v3904
      %v4611 = vunpack.c.l.b16 %v3905
      %v4612 = vpack.c.b16 %v4597, %v4596
      %v4613 = vpack.c.b16 %v4599, %v4598
      %v4614 = vpack.c.b16 %v4601, %v4600
      %v4615 = vpack.c.b16 %v4603, %v4602
      %v4616 = vpack.c.b16 %v4605, %v4604
      %v4617 = vpack.c.b16 %v4607, %v4606
      %v4618 = vpack.c.b16 %v4609, %v4608
      %v4619 = vpack.c.b16 %v4611, %v4610
      %4628 = vmatprep.subr.bf16.mxu0 0
      %4629 = vmatpush1.bf16.msra.mxu0 %v4612
      %4630 = vmatprep.subr.bf16.mxu0 0
      %4631 = vmatpush1.bf16.msra.mxu0 %v4613
      %4632 = vmatprep.subr.bf16.mxu0 0
      %4633 = vmatpush1.bf16.msra.mxu0 %v4614
      %4634 = vmatprep.subr.bf16.mxu0 0
      %4635 = vmatpush1.bf16.msra.mxu0 %v4615
      %4636 = vmatprep.subr.bf16.mxu0 0
      %4637 = vmatpush1.bf16.msra.mxu0 %v4616
      %4638 = vmatprep.subr.bf16.mxu0 0
      %4639 = vmatpush1.bf16.msra.mxu0 %v4617
      %4640 = vmatprep.subr.bf16.mxu0 0
      %4641 = vmatpush1.bf16.msra.mxu0 %v4618
      %4642 = vmatprep.subr.bf16.mxu0 0
      %4643 = vmatpush1.bf16.msra.mxu0 %v4619
      %4644 = vmatprep.subr.bf16.mxu0 0
      %4645 = vmatpush1.bf16.msra.mxu0 0
      %4646 = vmatprep.subr.bf16.mxu0 0
      %4647 = vmatpush1.bf16.msra.mxu0 0
      %4648 = vmatprep.subr.bf16.mxu0 0
      %4649 = vmatpush1.bf16.msra.mxu0 0
      %4650 = vmatprep.subr.bf16.mxu0 0
      %4651 = vmatpush1.bf16.msra.mxu0 0
      %4652 = vmatprep.subr.bf16.mxu0 0
      %4653 = vmatpush1.bf16.msra.mxu0 0
      %4654 = vmatprep.subr.bf16.mxu0 0
      %4655 = vmatpush1.bf16.msra.mxu0 0
      %4656 = vmatprep.subr.bf16.mxu0 0
      %4657 = vmatpush1.bf16.msra.mxu0 0
      %4658 = vmatprep.subr.bf16.mxu0 0
      %4659 = vmatpush1.bf16.msra.mxu0 0
      %4660 = vmatprep.mubr.bf16.mxu0 0
      %4661 = vmatmul.mubr.bf16.gmra.mrb[0].mxu0 %v4051
      %v4662 = vpop.f32.mrb[0].mxu0
      %v4663 = vadd.f32 %v4578, %v4662
      %v4664 = vpop.f32.mrb[0].mxu0
      %v4665 = vpop.f32.mrb[0].mxu0
      %v4666 = vadd.f32 %v4577, %v4665
      %v4667 = vpop.f32.mrb[0].mxu0
      %4668 = vmatprep.mubr.bf16.mxu0 0
      %4669 = vmatmul.mubr.bf16.gmra.mrb[0].mxu0 %v4052
      %v4670 = vpop.f32.mrb[0].mxu0
      %v4671 = vadd.f32 %v4576, %v4670
      %v4672 = vpop.f32.mrb[0].mxu0
      %v4673 = vpop.f32.mrb[0].mxu0
      %v4674 = vadd.f32 %v4575, %v4673
      %v4675 = vpop.f32.mrb[0].mxu0
      %4676 = vmatprep.mubr.bf16.mxu0 0
      %4677 = vmatmul.mubr.bf16.gmra.mrb[0].mxu0 %v4053
      %v4678 = vpop.f32.mrb[0].mxu0
      %v4679 = vadd.f32 %v4574, %v4678
      %v4680 = vpop.f32.mrb[0].mxu0
      %v4681 = vpop.f32.mrb[0].mxu0
      %v4682 = vadd.f32 %v4573, %v4681
      %v4683 = vpop.f32.mrb[0].mxu0
      %4684 = vmatprep.mubr.bf16.mxu0 0
      %4685 = vmatmul.mubr.bf16.gmra.mrb[0].mxu0 %v4054
      %v4686 = vpop.f32.mrb[0].mxu0
      %v4687 = vadd.f32 %v4572, %v4686
      %v4688 = vpop.f32.mrb[0].mxu0
      %v4689 = vpop.f32.mrb[0].mxu0
      %v4690 = vadd.f32 %v4571, %v4689
      %v4691 = vpop.f32.mrb[0].mxu0
      %4692 = vmatprep.mubr.bf16.mxu0 0
      %4693 = vmatmul.mubr.bf16.gmra.mrb[0].mxu0 %v4055
      %v4694 = vpop.f32.mrb[0].mxu0
      %v4695 = vadd.f32 %v4570, %v4694
      %v4696 = vpop.f32.mrb[0].mxu0
      %v4697 = vpop.f32.mrb[0].mxu0
      %v4698 = vadd.f32 %v4569, %v4697
      %v4699 = vpop.f32.mrb[0].mxu0
      %4700 = vmatprep.mubr.bf16.mxu0 0
      %4701 = vmatmul.mubr.bf16.gmra.mrb[0].mxu0 %v4056
      %v4702 = vpop.f32.mrb[0].mxu0
      %v4703 = vadd.f32 %v4568, %v4702
      %v4704 = vpop.f32.mrb[0].mxu0
      %v4705 = vpop.f32.mrb[0].mxu0
      %v4706 = vadd.f32 %v4567, %v4705
      %v4707 = vpop.f32.mrb[0].mxu0
      %4708 = vmatprep.mubr.bf16.mxu0 0
      %4709 = vmatmul.mubr.bf16.gmra.mrb[0].mxu0 %v4057
      %v4710 = vpop.f32.mrb[0].mxu0
      %v4711 = vadd.f32 %v4566, %v4710
      %v4712 = vpop.f32.mrb[0].mxu0
      %v4713 = vpop.f32.mrb[0].mxu0
      %v4714 = vadd.f32 %v4565, %v4713
      %v4715 = vpop.f32.mrb[0].mxu0
      %4716 = vmatprep.mubr.bf16.mxu0 0
      %4717 = vmatmul.mubr.bf16.gmra.mrb[0].mxu0 %v4058
      %v4718 = vpop.f32.mrb[0].mxu0
      %v4719 = vadd.f32 %v4564, %v4718
      %v4720 = vpop.f32.mrb[0].mxu0
      %v4721 = vpop.f32.mrb[0].mxu0
      %v4722 = vadd.f32 %v4563, %v4721
      %v4723 = vpop.f32.mrb[0].mxu0
      %4724 = vmatprep.mubr.bf16.mxu0 0
      %4725 = vmatmul.mubr.bf16.gmra.mrb[0].mxu0 %v4059
      %v4726 = vpop.f32.mrb[0].mxu0
      %v4727 = vadd.f32 %v4562, %v4726
      %v4728 = vpop.f32.mrb[0].mxu0
      %v4729 = vpop.f32.mrb[0].mxu0
      %v4730 = vadd.f32 %v4561, %v4729
      %v4731 = vpop.f32.mrb[0].mxu0
      %4732 = vmatprep.mubr.bf16.mxu0 0
      %4733 = vmatmul.mubr.bf16.gmra.mrb[0].mxu0 %v4060
      %v4734 = vpop.f32.mrb[0].mxu0
      %v4735 = vadd.f32 %v4560, %v4734
      %v4736 = vpop.f32.mrb[0].mxu0
      %v4737 = vpop.f32.mrb[0].mxu0
      %v4738 = vadd.f32 %v4559, %v4737
      %v4739 = vpop.f32.mrb[0].mxu0
      %4740 = vmatprep.mubr.bf16.mxu0 0
      %4741 = vmatmul.mubr.bf16.gmra.mrb[0].mxu0 %v4061
      %v4742 = vpop.f32.mrb[0].mxu0
      %v4743 = vadd.f32 %v4558, %v4742
      %v4744 = vpop.f32.mrb[0].mxu0
      %v4745 = vpop.f32.mrb[0].mxu0
      %v4746 = vadd.f32 %v4557, %v4745
      %v4747 = vpop.f32.mrb[0].mxu0
      %4748 = vmatprep.mubr.bf16.mxu0 0
      %4749 = vmatmul.mubr.bf16.gmra.mrb[0].mxu0 %v4062
      %v4750 = vpop.f32.mrb[0].mxu0
      %v4751 = vadd.f32 %v4556, %v4750
      %v4752 = vpop.f32.mrb[0].mxu0
      %v4753 = vpop.f32.mrb[0].mxu0
      %v4754 = vadd.f32 %v4555, %v4753
      %v4755 = vpop.f32.mrb[0].mxu0
      %4756 = vmatprep.mubr.bf16.mxu0 0
      %4757 = vmatmul.mubr.bf16.gmra.mrb[0].mxu0 %v4063
      %v4758 = vpop.f32.mrb[0].mxu0
      %v4759 = vadd.f32 %v4554, %v4758
      %v4760 = vpop.f32.mrb[0].mxu0
      %v4761 = vpop.f32.mrb[0].mxu0
      %v4762 = vadd.f32 %v4553, %v4761
      %v4763 = vpop.f32.mrb[0].mxu0
      %4764 = vmatprep.mubr.bf16.mxu0 0
      %4765 = vmatmul.mubr.bf16.gmra.mrb[0].mxu0 %v4064
      %v4766 = vpop.f32.mrb[0].mxu0
      %v4767 = vadd.f32 %v4552, %v4766
      %v4768 = vpop.f32.mrb[0].mxu0
      %v4769 = vpop.f32.mrb[0].mxu0
      %v4770 = vadd.f32 %v4551, %v4769
      %v4771 = vpop.f32.mrb[0].mxu0
      %4772 = vmatprep.mubr.bf16.mxu0 0
      %4773 = vmatmul.mubr.bf16.gmra.mrb[0].mxu0 %v4065
      %v4774 = vpop.f32.mrb[0].mxu0
      %v4775 = vadd.f32 %v4550, %v4774
      %v4776 = vpop.f32.mrb[0].mxu0
      %v4777 = vpop.f32.mrb[0].mxu0
      %v4778 = vadd.f32 %v4549, %v4777
      %v4779 = vpop.f32.mrb[0].mxu0
      %4780 = vmatprep.mubr.bf16.mxu0 0
      %4781 = vmatmul.mubr.bf16.gmra.mrb[0].mxu0 %v4066
      %v4782 = vpop.f32.mrb[0].mxu0
      %v4783 = vadd.f32 %v4548, %v4782
      %v4784 = vpop.f32.mrb[0].mxu0
      %v4785 = vpop.f32.mrb[0].mxu0
      %v4786 = vadd.f32 %v4547, %v4785
      %v4787 = vpop.f32.mrb[0].mxu0
      %4788 = vmatprep.mubr.bf16.mxu0 0
      %4789 = vmatmul.mubr.bf16.gmra.mrb[0].mxu0 %v4067
      %v4790 = vpop.f32.mrb[0].mxu0
      %v4791 = vadd.f32 %v4546, %v4790
      %v4792 = vpop.f32.mrb[0].mxu0
      %v4793 = vpop.f32.mrb[0].mxu0
      %v4794 = vadd.f32 %v4545, %v4793
      %v4795 = vpop.f32.mrb[0].mxu0
      %4796 = vmatprep.mubr.bf16.mxu0 0
      %4797 = vmatmul.mubr.bf16.gmra.mrb[0].mxu0 %v4068
      %v4798 = vpop.f32.mrb[0].mxu0
      %v4799 = vadd.f32 %v4544, %v4798
      %v4800 = vpop.f32.mrb[0].mxu0
      %v4801 = vpop.f32.mrb[0].mxu0
      %v4802 = vadd.f32 %v4543, %v4801
      %v4803 = vpop.f32.mrb[0].mxu0
      %4804 = vmatprep.mubr.bf16.mxu0 0
      %4805 = vmatmul.mubr.bf16.gmra.mrb[0].mxu0 %v4069
      %v4806 = vpop.f32.mrb[0].mxu0
      %v4807 = vadd.f32 %v4542, %v4806
      %v4808 = vpop.f32.mrb[0].mxu0
      %v4809 = vpop.f32.mrb[0].mxu0
      %v4810 = vadd.f32 %v4541, %v4809
      %v4811 = vpop.f32.mrb[0].mxu0
      %4812 = vmatprep.mubr.bf16.mxu0 0
      %4813 = vmatmul.mubr.bf16.gmra.mrb[0].mxu0 %v4070
      %v4814 = vpop.f32.mrb[0].mxu0
      %v4815 = vadd.f32 %v4540, %v4814
      %v4816 = vpop.f32.mrb[0].mxu0
      %v4817 = vpop.f32.mrb[0].mxu0
      %v4818 = vadd.f32 %v4539, %v4817
      %v4819 = vpop.f32.mrb[0].mxu0
      %4820 = vmatprep.mubr.bf16.mxu0 0
      %4821 = vmatmul.mubr.bf16.gmra.mrb[0].mxu0 %v4071
      %v4822 = vpop.f32.mrb[0].mxu0
      %v4823 = vadd.f32 %v4538, %v4822
      %v4824 = vpop.f32.mrb[0].mxu0
      %v4825 = vpop.f32.mrb[0].mxu0
      %v4826 = vadd.f32 %v4537, %v4825
      %v4827 = vpop.f32.mrb[0].mxu0
      %4828 = vmatprep.mubr.bf16.mxu0 0
      %4829 = vmatmul.mubr.bf16.gmra.mrb[0].mxu0 %v4072
      %v4830 = vpop.f32.mrb[0].mxu0
      %v4831 = vadd.f32 %v4536, %v4830
      %v4832 = vpop.f32.mrb[0].mxu0
      %v4833 = vpop.f32.mrb[0].mxu0
      %v4834 = vadd.f32 %v4535, %v4833
      %v4835 = vpop.f32.mrb[0].mxu0
      %4836 = vmatprep.mubr.bf16.mxu0 0
      %4837 = vmatmul.mubr.bf16.gmra.mrb[0].mxu0 %v4073
      %v4838 = vpop.f32.mrb[0].mxu0
      %v4839 = vadd.f32 %v4534, %v4838
      %v4840 = vpop.f32.mrb[0].mxu0
      %v4841 = vpop.f32.mrb[0].mxu0
      %v4842 = vadd.f32 %v4533, %v4841
      %v4843 = vpop.f32.mrb[0].mxu0
      %4844 = vmatprep.mubr.bf16.mxu0 0
      %4845 = vmatmul.mubr.bf16.gmra.mrb[0].mxu0 %v4074
      %v4846 = vpop.f32.mrb[0].mxu0
      %v4847 = vadd.f32 %v4532, %v4846
      %v4848 = vpop.f32.mrb[0].mxu0
      %v4849 = vpop.f32.mrb[0].mxu0
      %v4850 = vadd.f32 %v4531, %v4849
      %v4851 = vpop.f32.mrb[0].mxu0
      %4852 = vmatprep.mubr.bf16.mxu0 0
      %4853 = vmatmul.mubr.bf16.gmra.mrb[0].mxu0 %v4075
      %v4854 = vpop.f32.mrb[0].mxu0
      %v4855 = vadd.f32 %v4530, %v4854
      %v4856 = vpop.f32.mrb[0].mxu0
      %v4857 = vpop.f32.mrb[0].mxu0
      %v4858 = vadd.f32 %v4529, %v4857
      %v4859 = vpop.f32.mrb[0].mxu0
      %4860 = vmatprep.mubr.bf16.mxu0 0
      %4861 = vmatmul.mubr.bf16.gmra.mrb[0].mxu0 %v4076
      %v4862 = vpop.f32.mrb[0].mxu0
      %v4863 = vadd.f32 %v4528, %v4862
      %v4864 = vpop.f32.mrb[0].mxu0
      %v4865 = vpop.f32.mrb[0].mxu0
      %v4866 = vadd.f32 %v4527, %v4865
      %v4867 = vpop.f32.mrb[0].mxu0
      %4868 = vmatprep.mubr.bf16.mxu0 0
      %4869 = vmatmul.mubr.bf16.gmra.mrb[0].mxu0 %v4077
      %v4870 = vpop.f32.mrb[0].mxu0
      %v4871 = vadd.f32 %v4526, %v4870
      %v4872 = vpop.f32.mrb[0].mxu0
      %v4873 = vpop.f32.mrb[0].mxu0
      %v4874 = vadd.f32 %v4525, %v4873
      %v4875 = vpop.f32.mrb[0].mxu0
      %4876 = vmatprep.mubr.bf16.mxu0 0
      %4877 = vmatmul.mubr.bf16.gmra.mrb[0].mxu0 %v4078
      %v4878 = vpop.f32.mrb[0].mxu0
      %v4879 = vadd.f32 %v4524, %v4878
      %v4880 = vpop.f32.mrb[0].mxu0
      %v4881 = vpop.f32.mrb[0].mxu0
      %v4882 = vadd.f32 %v4523, %v4881
      %v4883 = vpop.f32.mrb[0].mxu0
      %4884 = vmatprep.mubr.bf16.mxu0 0
      %4885 = vmatmul.mubr.bf16.gmra.mrb[0].mxu0 %v4079
      %v4886 = vpop.f32.mrb[0].mxu0
      %v4887 = vadd.f32 %v4522, %v4886
      %v4888 = vpop.f32.mrb[0].mxu0
      %v4889 = vpop.f32.mrb[0].mxu0
      %v4890 = vadd.f32 %v4521, %v4889
      %v4891 = vpop.f32.mrb[0].mxu0
      %4892 = vmatprep.mubr.bf16.mxu0 0
      %4893 = vmatmul.mubr.bf16.gmra.mrb[0].mxu0 %v4080
      %v4894 = vpop.f32.mrb[0].mxu0
      %v4895 = vadd.f32 %v4520, %v4894
      %v4896 = vpop.f32.mrb[0].mxu0
      %v4897 = vpop.f32.mrb[0].mxu0
      %v4898 = vadd.f32 %v4519, %v4897
      %v4899 = vpop.f32.mrb[0].mxu0
      %4900 = vmatprep.mubr.bf16.mxu0 0
      %4901 = vmatmul.mubr.bf16.gmra.mrb[0].mxu0 %v4081
      %v4902 = vpop.f32.mrb[0].mxu0
      %v4903 = vadd.f32 %v4518, %v4902
      %v4904 = vpop.f32.mrb[0].mxu0
      %v4905 = vpop.f32.mrb[0].mxu0
      %v4906 = vadd.f32 %v4517, %v4905
      %v4907 = vpop.f32.mrb[0].mxu0
      %4908 = vmatprep.mubr.bf16.mxu0 0
      %4909 = vmatmul.mubr.bf16.gmra.mrb[0].mxu0 %v4082
      %v4910 = vpop.f32.mrb[0].mxu0
      %v4911 = vadd.f32 %v4516, %v4910
      %v4912 = vpop.f32.mrb[0].mxu0
      %v4913 = vpop.f32.mrb[0].mxu0
      %v4914 = vadd.f32 %v4579, %v4913
      %v4915 = vpop.f32.mrb[0].mxu0
      %4916 = vdwg.mxu0
      %s4917 = scalar_lea.vmem %s1, 512
      %v4918 = vld [vmem:[%s4917] sm:$0xf]
      %v4919 = vld [vmem:[%s4917 + $0x4] sm:$0xf]
      %v4920 = vld [vmem:[%s4917 + $0x8] sm:$0xf]
      %v4921 = vld [vmem:[%s4917 + $0xc] sm:$0xf]
      %v4922 = vld [vmem:[%s4917 + $0x10] sm:$0xf]
      %v4923 = vld [vmem:[%s4917 + $0x14] sm:$0xf]
      %v4924 = vld [vmem:[%s4917 + $0x18] sm:$0xf]
      %v4925 = vld [vmem:[%s4917 + $0x1c] sm:$0xf]
      %v4926 = vld [vmem:[%s4917 + $0x20] sm:$0xf]
      %v4927 = vld [vmem:[%s4917 + $0x24] sm:$0xf]
      %v4928 = vld [vmem:[%s4917 + $0x28] sm:$0xf]
      %v4929 = vld [vmem:[%s4917 + $0x2c] sm:$0xf]
      %v4930 = vld [vmem:[%s4917 + $0x30] sm:$0xf]
      %v4931 = vld [vmem:[%s4917 + $0x34] sm:$0xf]
      %v4932 = vld [vmem:[%s4917 + $0x38] sm:$0xf]
      %v4933 = vld [vmem:[%s4917 + $0x3c] sm:$0xf]
      %v4950 = vunpack.c.l.b16 %v4918
      %v4951 = vunpack.c.l.b16 %v4919
      %v4952 = vunpack.c.l.b16 %v4920
      %v4953 = vunpack.c.l.b16 %v4921
      %v4954 = vunpack.c.l.b16 %v4922
      %v4955 = vunpack.c.l.b16 %v4923
      %v4956 = vunpack.c.l.b16 %v4924
      %v4957 = vunpack.c.l.b16 %v4925
      %v4958 = vunpack.c.l.b16 %v4926
      %v4959 = vunpack.c.l.b16 %v4927
      %v4960 = vunpack.c.l.b16 %v4928
      %v4961 = vunpack.c.l.b16 %v4929
      %v4962 = vunpack.c.l.b16 %v4930
      %v4963 = vunpack.c.l.b16 %v4931
      %v4964 = vunpack.c.l.b16 %v4932
      %v4965 = vunpack.c.l.b16 %v4933
      %v4966 = vpack.c.b16 %v4951, %v4950
      %v4967 = vpack.c.b16 %v4953, %v4952
      %v4968 = vpack.c.b16 %v4955, %v4954
      %v4969 = vpack.c.b16 %v4957, %v4956
      %v4970 = vpack.c.b16 %v4959, %v4958
      %v4971 = vpack.c.b16 %v4961, %v4960
      %v4972 = vpack.c.b16 %v4963, %v4962
      %v4973 = vpack.c.b16 %v4965, %v4964
      %4982 = vmatprep.subr.bf16.mxu0 0
      %4983 = vmatpush1.bf16.msra.mxu0 %v4966
      %4984 = vmatprep.subr.bf16.mxu0 0
      %4985 = vmatpush1.bf16.msra.mxu0 %v4967
      %4986 = vmatprep.subr.bf16.mxu0 0
      %4987 = vmatpush1.bf16.msra.mxu0 %v4968
      %4988 = vmatprep.subr.bf16.mxu0 0
      %4989 = vmatpush1.bf16.msra.mxu0 %v4969
      %4990 = vmatprep.subr.bf16.mxu0 0
      %4991 = vmatpush1.bf16.msra.mxu0 %v4970
      %4992 = vmatprep.subr.bf16.mxu0 0
      %4993 = vmatpush1.bf16.msra.mxu0 %v4971
      %4994 = vmatprep.subr.bf16.mxu0 0
      %4995 = vmatpush1.bf16.msra.mxu0 %v4972
      %4996 = vmatprep.subr.bf16.mxu0 0
      %4997 = vmatpush1.bf16.msra.mxu0 %v4973
      %4998 = vmatprep.subr.bf16.mxu0 0
      %4999 = vmatpush1.bf16.msra.mxu0 0
      %5000 = vmatprep.subr.bf16.mxu0 0
      %5001 = vmatpush1.bf16.msra.mxu0 0
      %5002 = vmatprep.subr.bf16.mxu0 0
      %5003 = vmatpush1.bf16.msra.mxu0 0
      %5004 = vmatprep.subr.bf16.mxu0 0
      %5005 = vmatpush1.bf16.msra.mxu0 0
      %5006 = vmatprep.subr.bf16.mxu0 0
      %5007 = vmatpush1.bf16.msra.mxu0 0
      %5008 = vmatprep.subr.bf16.mxu0 0
      %5009 = vmatpush1.bf16.msra.mxu0 0
      %5010 = vmatprep.subr.bf16.mxu0 0
      %5011 = vmatpush1.bf16.msra.mxu0 0
      %5012 = vmatprep.subr.bf16.mxu0 0
      %5013 = vmatpush1.bf16.msra.mxu0 0
      %5014 = vmatprep.mubr.bf16.mxu0 0
      %5015 = vmatmul.mubr.bf16.gmra.mrb[0].mxu0 %v4051
      %v5016 = vpop.f32.mrb[0].mxu0
      %v5017 = vadd.f32 0.0, %v5016
      %v5018 = vpop.f32.mrb[0].mxu0
      %v5019 = vpop.f32.mrb[0].mxu0
      %v5020 = vadd.f32 0.0, %v5019
      %v5021 = vpop.f32.mrb[0].mxu0
      %5022 = vmatprep.mubr.bf16.mxu0 0
      %5023 = vmatmul.mubr.bf16.gmra.mrb[0].mxu0 %v4052
      %v5024 = vpop.f32.mrb[0].mxu0
      %v5025 = vadd.f32 0.0, %v5024
      %v5026 = vpop.f32.mrb[0].mxu0
      %v5027 = vpop.f32.mrb[0].mxu0
      %v5028 = vadd.f32 0.0, %v5027
      %v5029 = vpop.f32.mrb[0].mxu0
      %5030 = vmatprep.mubr.bf16.mxu0 0
      %5031 = vmatmul.mubr.bf16.gmra.mrb[0].mxu0 %v4053
      %v5032 = vpop.f32.mrb[0].mxu0
      %v5033 = vadd.f32 0.0, %v5032
      %v5034 = vpop.f32.mrb[0].mxu0
      %v5035 = vpop.f32.mrb[0].mxu0
      %v5036 = vadd.f32 0.0, %v5035
      %v5037 = vpop.f32.mrb[0].mxu0
      %5038 = vmatprep.mubr.bf16.mxu0 0
      %5039 = vmatmul.mubr.bf16.gmra.mrb[0].mxu0 %v4054
      %v5040 = vpop.f32.mrb[0].mxu0
      %v5041 = vadd.f32 0.0, %v5040
      %v5042 = vpop.f32.mrb[0].mxu0
      %v5043 = vpop.f32.mrb[0].mxu0
      %v5044 = vadd.f32 0.0, %v5043
      %v5045 = vpop.f32.mrb[0].mxu0
      %5046 = vmatprep.mubr.bf16.mxu0 0
      %5047 = vmatmul.mubr.bf16.gmra.mrb[0].mxu0 %v4055
      %v5048 = vpop.f32.mrb[0].mxu0
      %v5049 = vadd.f32 0.0, %v5048
      %v5050 = vpop.f32.mrb[0].mxu0
      %v5051 = vpop.f32.mrb[0].mxu0
      %v5052 = vadd.f32 0.0, %v5051
      %v5053 = vpop.f32.mrb[0].mxu0
      %5054 = vmatprep.mubr.bf16.mxu0 0
      %5055 = vmatmul.mubr.bf16.gmra.mrb[0].mxu0 %v4056
      %v5056 = vpop.f32.mrb[0].mxu0
      %v5057 = vadd.f32 0.0, %v5056
      %v5058 = vpop.f32.mrb[0].mxu0
      %v5059 = vpop.f32.mrb[0].mxu0
      %v5060 = vadd.f32 0.0, %v5059
      %v5061 = vpop.f32.mrb[0].mxu0
      %5062 = vmatprep.mubr.bf16.mxu0 0
      %5063 = vmatmul.mubr.bf16.gmra.mrb[0].mxu0 %v4057
      %v5064 = vpop.f32.mrb[0].mxu0
      %v5065 = vadd.f32 0.0, %v5064
      %v5066 = vpop.f32.mrb[0].mxu0
      %v5067 = vpop.f32.mrb[0].mxu0
      %v5068 = vadd.f32 0.0, %v5067
      %v5069 = vpop.f32.mrb[0].mxu0
      %5070 = vmatprep.mubr.bf16.mxu0 0
      %5071 = vmatmul.mubr.bf16.gmra.mrb[0].mxu0 %v4058
      %v5072 = vpop.f32.mrb[0].mxu0
      %v5073 = vadd.f32 0.0, %v5072
      %v5074 = vpop.f32.mrb[0].mxu0
      %v5075 = vpop.f32.mrb[0].mxu0
      %v5076 = vadd.f32 0.0, %v5075
      %v5077 = vpop.f32.mrb[0].mxu0
      %5078 = vmatprep.mubr.bf16.mxu0 0
      %5079 = vmatmul.mubr.bf16.gmra.mrb[0].mxu0 %v4059
      %v5080 = vpop.f32.mrb[0].mxu0
      %v5081 = vadd.f32 0.0, %v5080
      %v5082 = vpop.f32.mrb[0].mxu0
      %v5083 = vpop.f32.mrb[0].mxu0
      %v5084 = vadd.f32 0.0, %v5083
      %v5085 = vpop.f32.mrb[0].mxu0
      %5086 = vmatprep.mubr.bf16.mxu0 0
      %5087 = vmatmul.mubr.bf16.gmra.mrb[0].mxu0 %v4060
      %v5088 = vpop.f32.mrb[0].mxu0
      %v5089 = vadd.f32 0.0, %v5088
      %v5090 = vpop.f32.mrb[0].mxu0
      %v5091 = vpop.f32.mrb[0].mxu0
      %v5092 = vadd.f32 0.0, %v5091
      %v5093 = vpop.f32.mrb[0].mxu0
      %5094 = vmatprep.mubr.bf16.mxu0 0
      %5095 = vmatmul.mubr.bf16.gmra.mrb[0].mxu0 %v4061
      %v5096 = vpop.f32.mrb[0].mxu0
      %v5097 = vadd.f32 0.0, %v5096
      %v5098 = vpop.f32.mrb[0].mxu0
      %v5099 = vpop.f32.mrb[0].mxu0
      %v5100 = vadd.f32 0.0, %v5099
      %v5101 = vpop.f32.mrb[0].mxu0
      %5102 = vmatprep.mubr.bf16.mxu0 0
      %5103 = vmatmul.mubr.bf16.gmra.mrb[0].mxu0 %v4062
      %v5104 = vpop.f32.mrb[0].mxu0
      %v5105 = vadd.f32 0.0, %v5104
      %v5106 = vpop.f32.mrb[0].mxu0
      %v5107 = vpop.f32.mrb[0].mxu0
      %v5108 = vadd.f32 0.0, %v5107
      %v5109 = vpop.f32.mrb[0].mxu0
      %5110 = vmatprep.mubr.bf16.mxu0 0
      %5111 = vmatmul.mubr.bf16.gmra.mrb[0].mxu0 %v4063
      %v5112 = vpop.f32.mrb[0].mxu0
      %v5113 = vadd.f32 0.0, %v5112
      %v5114 = vpop.f32.mrb[0].mxu0
      %v5115 = vpop.f32.mrb[0].mxu0
      %v5116 = vadd.f32 0.0, %v5115
      %v5117 = vpop.f32.mrb[0].mxu0
      %5118 = vmatprep.mubr.bf16.mxu0 0
      %5119 = vmatmul.mubr.bf16.gmra.mrb[0].mxu0 %v4064
      %v5120 = vpop.f32.mrb[0].mxu0
      %v5121 = vadd.f32 0.0, %v5120
      %v5122 = vpop.f32.mrb[0].mxu0
      %v5123 = vpop.f32.mrb[0].mxu0
      %v5124 = vadd.f32 0.0, %v5123
      %v5125 = vpop.f32.mrb[0].mxu0
      %5126 = vmatprep.mubr.bf16.mxu0 0
      %5127 = vmatmul.mubr.bf16.gmra.mrb[0].mxu0 %v4065
      %v5128 = vpop.f32.mrb[0].mxu0
      %v5129 = vadd.f32 0.0, %v5128
      %v5130 = vpop.f32.mrb[0].mxu0
      %v5131 = vpop.f32.mrb[0].mxu0
      %v5132 = vadd.f32 0.0, %v5131
      %v5133 = vpop.f32.mrb[0].mxu0
      %5134 = vmatprep.mubr.bf16.mxu0 0
      %5135 = vmatmul.mubr.bf16.gmra.mrb[0].mxu0 %v4066
      %v5136 = vpop.f32.mrb[0].mxu0
      %v5137 = vadd.f32 0.0, %v5136
      %v5138 = vpop.f32.mrb[0].mxu0
      %v5139 = vpop.f32.mrb[0].mxu0
      %v5140 = vadd.f32 0.0, %v5139
      %v5141 = vpop.f32.mrb[0].mxu0
      %5142 = vmatprep.mubr.bf16.mxu0 0
      %5143 = vmatmul.mubr.bf16.gmra.mrb[0].mxu0 %v4067
      %v5144 = vpop.f32.mrb[0].mxu0
      %v5145 = vadd.f32 0.0, %v5144
      %v5146 = vpop.f32.mrb[0].mxu0
      %v5147 = vpop.f32.mrb[0].mxu0
      %v5148 = vadd.f32 0.0, %v5147
      %v5149 = vpop.f32.mrb[0].mxu0
      %5150 = vmatprep.mubr.bf16.mxu0 0
      %5151 = vmatmul.mubr.bf16.gmra.mrb[0].mxu0 %v4068
      %v5152 = vpop.f32.mrb[0].mxu0
      %v5153 = vadd.f32 0.0, %v5152
      %v5154 = vpop.f32.mrb[0].mxu0
      %v5155 = vpop.f32.mrb[0].mxu0
      %v5156 = vadd.f32 0.0, %v5155
      %v5157 = vpop.f32.mrb[0].mxu0
      %5158 = vmatprep.mubr.bf16.mxu0 0
      %5159 = vmatmul.mubr.bf16.gmra.mrb[0].mxu0 %v4069
      %v5160 = vpop.f32.mrb[0].mxu0
      %v5161 = vadd.f32 0.0, %v5160
      %v5162 = vpop.f32.mrb[0].mxu0
      %v5163 = vpop.f32.mrb[0].mxu0
      %v5164 = vadd.f32 0.0, %v5163
      %v5165 = vpop.f32.mrb[0].mxu0
      %5166 = vmatprep.mubr.bf16.mxu0 0
      %5167 = vmatmul.mubr.bf16.gmra.mrb[0].mxu0 %v4070
      %v5168 = vpop.f32.mrb[0].mxu0
      %v5169 = vadd.f32 0.0, %v5168
      %v5170 = vpop.f32.mrb[0].mxu0
      %v5171 = vpop.f32.mrb[0].mxu0
      %v5172 = vadd.f32 0.0, %v5171
      %v5173 = vpop.f32.mrb[0].mxu0
      %5174 = vmatprep.mubr.bf16.mxu0 0
      %5175 = vmatmul.mubr.bf16.gmra.mrb[0].mxu0 %v4071
      %v5176 = vpop.f32.mrb[0].mxu0
      %v5177 = vadd.f32 0.0, %v5176
      %v5178 = vpop.f32.mrb[0].mxu0
      %v5179 = vpop.f32.mrb[0].mxu0
      %v5180 = vadd.f32 0.0, %v5179
      %v5181 = vpop.f32.mrb[0].mxu0
      %5182 = vmatprep.mubr.bf16.mxu0 0
      %5183 = vmatmul.mubr.bf16.gmra.mrb[0].mxu0 %v4072
      %v5184 = vpop.f32.mrb[0].mxu0
      %v5185 = vadd.f32 0.0, %v5184
      %v5186 = vpop.f32.mrb[0].mxu0
      %v5187 = vpop.f32.mrb[0].mxu0
      %v5188 = vadd.f32 0.0, %v5187
      %v5189 = vpop.f32.mrb[0].mxu0
      %5190 = vmatprep.mubr.bf16.mxu0 0
      %5191 = vmatmul.mubr.bf16.gmra.mrb[0].mxu0 %v4073
      %v5192 = vpop.f32.mrb[0].mxu0
      %v5193 = vadd.f32 0.0, %v5192
      %v5194 = vpop.f32.mrb[0].mxu0
      %v5195 = vpop.f32.mrb[0].mxu0
      %v5196 = vadd.f32 0.0, %v5195
      %v5197 = vpop.f32.mrb[0].mxu0
      %5198 = vmatprep.mubr.bf16.mxu0 0
      %5199 = vmatmul.mubr.bf16.gmra.mrb[0].mxu0 %v4074
      %v5200 = vpop.f32.mrb[0].mxu0
      %v5201 = vadd.f32 0.0, %v5200
      %v5202 = vpop.f32.mrb[0].mxu0
      %v5203 = vpop.f32.mrb[0].mxu0
      %v5204 = vadd.f32 0.0, %v5203
      %v5205 = vpop.f32.mrb[0].mxu0
      %5206 = vmatprep.mubr.bf16.mxu0 0
      %5207 = vmatmul.mubr.bf16.gmra.mrb[0].mxu0 %v4075
      %v5208 = vpop.f32.mrb[0].mxu0
      %v5209 = vadd.f32 0.0, %v5208
      %v5210 = vpop.f32.mrb[0].mxu0
      %v5211 = vpop.f32.mrb[0].mxu0
      %v5212 = vadd.f32 0.0, %v5211
      %v5213 = vpop.f32.mrb[0].mxu0
      %5214 = vmatprep.mubr.bf16.mxu0 0
      %5215 = vmatmul.mubr.bf16.gmra.mrb[0].mxu0 %v4076
      %v5216 = vpop.f32.mrb[0].mxu0
      %v5217 = vadd.f32 0.0, %v5216
      %v5218 = vpop.f32.mrb[0].mxu0
      %v5219 = vpop.f32.mrb[0].mxu0
      %v5220 = vadd.f32 0.0, %v5219
      %v5221 = vpop.f32.mrb[0].mxu0
      %5222 = vmatprep.mubr.bf16.mxu0 0
      %5223 = vmatmul.mubr.bf16.gmra.mrb[0].mxu0 %v4077
      %v5224 = vpop.f32.mrb[0].mxu0
      %v5225 = vadd.f32 0.0, %v5224
      %v5226 = vpop.f32.mrb[0].mxu0
      %v5227 = vpop.f32.mrb[0].mxu0
      %v5228 = vadd.f32 0.0, %v5227
      %v5229 = vpop.f32.mrb[0].mxu0
      %5230 = vmatprep.mubr.bf16.mxu0 0
      %5231 = vmatmul.mubr.bf16.gmra.mrb[0].mxu0 %v4078
      %v5232 = vpop.f32.mrb[0].mxu0
      %v5233 = vadd.f32 0.0, %v5232
      %v5234 = vpop.f32.mrb[0].mxu0
      %v5235 = vpop.f32.mrb[0].mxu0
      %v5236 = vadd.f32 0.0, %v5235
      %v5237 = vpop.f32.mrb[0].mxu0
      %5238 = vmatprep.mubr.bf16.mxu0 0
      %5239 = vmatmul.mubr.bf16.gmra.mrb[0].mxu0 %v4079
      %v5240 = vpop.f32.mrb[0].mxu0
      %v5241 = vadd.f32 0.0, %v5240
      %v5242 = vpop.f32.mrb[0].mxu0
      %v5243 = vpop.f32.mrb[0].mxu0
      %v5244 = vadd.f32 0.0, %v5243
      %v5245 = vpop.f32.mrb[0].mxu0
      %5246 = vmatprep.mubr.bf16.mxu0 0
      %5247 = vmatmul.mubr.bf16.gmra.mrb[0].mxu0 %v4080
      %v5248 = vpop.f32.mrb[0].mxu0
      %v5249 = vadd.f32 0.0, %v5248
      %v5250 = vpop.f32.mrb[0].mxu0
      %v5251 = vpop.f32.mrb[0].mxu0
      %v5252 = vadd.f32 0.0, %v5251
      %v5253 = vpop.f32.mrb[0].mxu0
      %5254 = vmatprep.mubr.bf16.mxu0 0
      %5255 = vmatmul.mubr.bf16.gmra.mrb[0].mxu0 %v4081
      %v5256 = vpop.f32.mrb[0].mxu0
      %v5257 = vadd.f32 0.0, %v5256
      %v5258 = vpop.f32.mrb[0].mxu0
      %v5259 = vpop.f32.mrb[0].mxu0
      %v5260 = vadd.f32 0.0, %v5259
      %v5261 = vpop.f32.mrb[0].mxu0
      %5262 = vmatprep.mubr.bf16.mxu0 0
      %5263 = vmatmul.mubr.bf16.gmra.mrb[0].mxu0 %v4082
      %v5264 = vpop.f32.mrb[0].mxu0
      %v5265 = vadd.f32 0.0, %v5264
      %v5266 = vpop.f32.mrb[0].mxu0
      %v5267 = vpop.f32.mrb[0].mxu0
      %v5268 = vadd.f32 0.0, %v5267
      %v5269 = vpop.f32.mrb[0].mxu0
      %5270 = vdwg.mxu0
      %v5271 = vrot.slane %v5017, 2
      %v5272 = vrot.slane %v5020, 2
      %v5273 = vrot.slane %v5025, 2
      %v5274 = vrot.slane %v5028, 2
      %v5275 = vrot.slane %v5033, 2
      %v5276 = vrot.slane %v5036, 2
      %v5277 = vrot.slane %v5041, 2
      %v5278 = vrot.slane %v5044, 2
      %v5279 = vrot.slane %v5049, 2
      %v5280 = vrot.slane %v5052, 2
      %v5281 = vrot.slane %v5057, 2
      %v5282 = vrot.slane %v5060, 2
      %v5283 = vrot.slane %v5065, 2
      %v5284 = vrot.slane %v5068, 2
      %v5285 = vrot.slane %v5073, 2
      %v5286 = vrot.slane %v5076, 2
      %v5287 = vrot.slane %v5081, 2
      %v5288 = vrot.slane %v5084, 2
      %v5289 = vrot.slane %v5089, 2
      %v5290 = vrot.slane %v5092, 2
      %v5291 = vrot.slane %v5097, 2
      %v5292 = vrot.slane %v5100, 2
      %v5293 = vrot.slane %v5105, 2
      %v5294 = vrot.slane %v5108, 2
      %v5295 = vrot.slane %v5113, 2
      %v5296 = vrot.slane %v5116, 2
      %v5297 = vrot.slane %v5121, 2
      %v5298 = vrot.slane %v5124, 2
      %v5299 = vrot.slane %v5129, 2
      %v5300 = vrot.slane %v5132, 2
      %v5301 = vrot.slane %v5137, 2
      %v5302 = vrot.slane %v5140, 2
      %v5303 = vrot.slane %v5145, 2
      %v5304 = vrot.slane %v5148, 2
      %v5305 = vrot.slane %v5153, 2
      %v5306 = vrot.slane %v5156, 2
      %v5307 = vrot.slane %v5161, 2
      %v5308 = vrot.slane %v5164, 2
      %v5309 = vrot.slane %v5169, 2
      %v5310 = vrot.slane %v5172, 2
      %v5311 = vrot.slane %v5177, 2
      %v5312 = vrot.slane %v5180, 2
      %v5313 = vrot.slane %v5185, 2
      %v5314 = vrot.slane %v5188, 2
      %v5315 = vrot.slane %v5193, 2
      %v5316 = vrot.slane %v5196, 2
      %v5317 = vrot.slane %v5201, 2
      %v5318 = vrot.slane %v5204, 2
      %v5319 = vrot.slane %v5209, 2
      %v5320 = vrot.slane %v5212, 2
      %v5321 = vrot.slane %v5217, 2
      %v5322 = vrot.slane %v5220, 2
      %v5323 = vrot.slane %v5225, 2
      %v5324 = vrot.slane %v5228, 2
      %v5325 = vrot.slane %v5233, 2
      %v5326 = vrot.slane %v5236, 2
      %v5327 = vrot.slane %v5241, 2
      %v5328 = vrot.slane %v5244, 2
      %v5329 = vrot.slane %v5249, 2
      %v5330 = vrot.slane %v5252, 2
      %v5331 = vrot.slane %v5257, 2
      %v5332 = vrot.slane %v5260, 2
      %v5333 = vrot.slane %v5265, 2
      %v5334 = vrot.slane %v5268, 2
      %v5335 = vsel %vm1794, %v5333, %v5334
      %v5336 = vsel %vm1794, %v5332, %v5333
      %v5337 = vsel %vm1794, %v5331, %v5332
      %v5338 = vsel %vm1794, %v5330, %v5331
      %v5339 = vsel %vm1794, %v5329, %v5330
      %v5340 = vsel %vm1794, %v5328, %v5329
      %v5341 = vsel %vm1794, %v5327, %v5328
      %v5342 = vsel %vm1794, %v5326, %v5327
      %v5343 = vsel %vm1794, %v5325, %v5326
      %v5344 = vsel %vm1794, %v5324, %v5325
      %v5345 = vsel %vm1794, %v5323, %v5324
      %v5346 = vsel %vm1794, %v5322, %v5323
      %v5347 = vsel %vm1794, %v5321, %v5322
      %v5348 = vsel %vm1794, %v5320, %v5321
      %v5349 = vsel %vm1794, %v5319, %v5320
      %v5350 = vsel %vm1794, %v5318, %v5319
      %v5351 = vsel %vm1794, %v5317, %v5318
      %v5352 = vsel %vm1794, %v5316, %v5317
      %v5353 = vsel %vm1794, %v5315, %v5316
      %v5354 = vsel %vm1794, %v5314, %v5315
      %v5355 = vsel %vm1794, %v5313, %v5314
      %v5356 = vsel %vm1794, %v5312, %v5313
      %v5357 = vsel %vm1794, %v5311, %v5312
      %v5358 = vsel %vm1794, %v5310, %v5311
      %v5359 = vsel %vm1794, %v5309, %v5310
      %v5360 = vsel %vm1794, %v5308, %v5309
      %v5361 = vsel %vm1794, %v5307, %v5308
      %v5362 = vsel %vm1794, %v5306, %v5307
      %v5363 = vsel %vm1794, %v5305, %v5306
      %v5364 = vsel %vm1794, %v5304, %v5305
      %v5365 = vsel %vm1794, %v5303, %v5304
      %v5366 = vsel %vm1794, %v5302, %v5303
      %v5367 = vsel %vm1794, %v5301, %v5302
      %v5368 = vsel %vm1794, %v5300, %v5301
      %v5369 = vsel %vm1794, %v5299, %v5300
      %v5370 = vsel %vm1794, %v5298, %v5299
      %v5371 = vsel %vm1794, %v5297, %v5298
      %v5372 = vsel %vm1794, %v5296, %v5297
      %v5373 = vsel %vm1794, %v5295, %v5296
      %v5374 = vsel %vm1794, %v5294, %v5295
      %v5375 = vsel %vm1794, %v5293, %v5294
      %v5376 = vsel %vm1794, %v5292, %v5293
      %v5377 = vsel %vm1794, %v5291, %v5292
      %v5378 = vsel %vm1794, %v5290, %v5291
      %v5379 = vsel %vm1794, %v5289, %v5290
      %v5380 = vsel %vm1794, %v5288, %v5289
      %v5381 = vsel %vm1794, %v5287, %v5288
      %v5382 = vsel %vm1794, %v5286, %v5287
      %v5383 = vsel %vm1794, %v5285, %v5286
      %v5384 = vsel %vm1794, %v5284, %v5285
      %v5385 = vsel %vm1794, %v5283, %v5284
      %v5386 = vsel %vm1794, %v5282, %v5283
      %v5387 = vsel %vm1794, %v5281, %v5282
      %v5388 = vsel %vm1794, %v5280, %v5281
      %v5389 = vsel %vm1794, %v5279, %v5280
      %v5390 = vsel %vm1794, %v5278, %v5279
      %v5391 = vsel %vm1794, %v5277, %v5278
      %v5392 = vsel %vm1794, %v5276, %v5277
      %v5393 = vsel %vm1794, %v5275, %v5276
      %v5394 = vsel %vm1794, %v5274, %v5275
      %v5395 = vsel %vm1794, %v5273, %v5274
      %v5396 = vsel %vm1794, %v5272, %v5273
      %v5397 = vsel %vm1794, %v5271, %v5272
      %v5398 = vsel %vm1794, %v5334, %v5271
      %v5399 = vadd.f32 %v4663, %v5397
      %v5400 = vadd.f32 %v4666, %v5396
      %v5401 = vadd.f32 %v4671, %v5395
      %v5402 = vadd.f32 %v4674, %v5394
      %v5403 = vadd.f32 %v4679, %v5393
      %v5404 = vadd.f32 %v4682, %v5392
      %v5405 = vadd.f32 %v4687, %v5391
      %v5406 = vadd.f32 %v4690, %v5390
      %v5407 = vadd.f32 %v4695, %v5389
      %v5408 = vadd.f32 %v4698, %v5388
      %v5409 = vadd.f32 %v4703, %v5387
      %v5410 = vadd.f32 %v4706, %v5386
      %v5411 = vadd.f32 %v4711, %v5385
      %v5412 = vadd.f32 %v4714, %v5384
      %v5413 = vadd.f32 %v4719, %v5383
      %v5414 = vadd.f32 %v4722, %v5382
      %v5415 = vadd.f32 %v4727, %v5381
      %v5416 = vadd.f32 %v4730, %v5380
      %v5417 = vadd.f32 %v4735, %v5379
      %v5418 = vadd.f32 %v4738, %v5378
      %v5419 = vadd.f32 %v4743, %v5377
      %v5420 = vadd.f32 %v4746, %v5376
      %v5421 = vadd.f32 %v4751, %v5375
      %v5422 = vadd.f32 %v4754, %v5374
      %v5423 = vadd.f32 %v4759, %v5373
      %v5424 = vadd.f32 %v4762, %v5372
      %v5425 = vadd.f32 %v4767, %v5371
      %v5426 = vadd.f32 %v4770, %v5370
      %v5427 = vadd.f32 %v4775, %v5369
      %v5428 = vadd.f32 %v4778, %v5368
      %v5429 = vadd.f32 %v4783, %v5367
      %v5430 = vadd.f32 %v4786, %v5366
      %v5431 = vadd.f32 %v4791, %v5365
      %v5432 = vadd.f32 %v4794, %v5364
      %v5433 = vadd.f32 %v4799, %v5363
      %v5434 = vadd.f32 %v4802, %v5362
      %v5435 = vadd.f32 %v4807, %v5361
      %v5436 = vadd.f32 %v4810, %v5360
      %v5437 = vadd.f32 %v4815, %v5359
      %v5438 = vadd.f32 %v4818, %v5358
      %v5439 = vadd.f32 %v4823, %v5357
      %v5440 = vadd.f32 %v4826, %v5356
      %v5441 = vadd.f32 %v4831, %v5355
      %v5442 = vadd.f32 %v4834, %v5354
      %v5443 = vadd.f32 %v4839, %v5353
      %v5444 = vadd.f32 %v4842, %v5352
      %v5445 = vadd.f32 %v4847, %v5351
      %v5446 = vadd.f32 %v4850, %v5350
      %v5447 = vadd.f32 %v4855, %v5349
      %v5448 = vadd.f32 %v4858, %v5348
      %v5449 = vadd.f32 %v4863, %v5347
      %v5450 = vadd.f32 %v4866, %v5346
      %v5451 = vadd.f32 %v4871, %v5345
      %v5452 = vadd.f32 %v4874, %v5344
      %v5453 = vadd.f32 %v4879, %v5343
      %v5454 = vadd.f32 %v4882, %v5342
      %v5455 = vadd.f32 %v4887, %v5341
      %v5456 = vadd.f32 %v4890, %v5340
      %v5457 = vadd.f32 %v4895, %v5339
      %v5458 = vadd.f32 %v4898, %v5338
      %v5459 = vadd.f32 %v4903, %v5337
      %v5460 = vadd.f32 %v4906, %v5336
      %v5461 = vadd.f32 %v4911, %v5335
      %v5462 = vadd.f32 %v4914, %v5398
      %v5463 = vld [vmem:[#allocation2] sm:$0xff]
      %v5464 = vld [vmem:[#allocation2 + $0x8] sm:$0xff]
      %v5465 = vld [vmem:[#allocation2 + $0x10] sm:$0xff]
      %v5466 = vld [vmem:[#allocation2 + $0x18] sm:$0xff]
      %v5467 = vld [vmem:[#allocation2 + $0x20] sm:$0xff]
      %v5468 = vld [vmem:[#allocation2 + $0x28] sm:$0xff]
      %v5469 = vld [vmem:[#allocation2 + $0x30] sm:$0xff]
      %v5470 = vld [vmem:[#allocation2 + $0x38] sm:$0xff]
      %v5471 = vld [vmem:[#allocation2 + $0x40] sm:$0xff]
      %v5472 = vld [vmem:[#allocation2 + $0x48] sm:$0xff]
      %v5473 = vld [vmem:[#allocation2 + $0x50] sm:$0xff]
      %v5474 = vld [vmem:[#allocation2 + $0x58] sm:$0xff]
      %v5475 = vld [vmem:[#allocation2 + $0x60] sm:$0xff]
      %v5476 = vld [vmem:[#allocation2 + $0x68] sm:$0xff]
      %v5477 = vld [vmem:[#allocation2 + $0x70] sm:$0xff]
      %v5478 = vld [vmem:[#allocation2 + $0x78] sm:$0xff]
      %v5479 = vld [vmem:[#allocation2 + $0x80] sm:$0xff]
      %v5480 = vld [vmem:[#allocation2 + $0x88] sm:$0xff]
      %v5481 = vld [vmem:[#allocation2 + $0x90] sm:$0xff]
      %v5482 = vld [vmem:[#allocation2 + $0x98] sm:$0xff]
      %v5483 = vld [vmem:[#allocation2 + $0xa0] sm:$0xff]
      %v5484 = vld [vmem:[#allocation2 + $0xa8] sm:$0xff]
      %v5485 = vld [vmem:[#allocation2 + $0xb0] sm:$0xff]
      %v5486 = vld [vmem:[#allocation2 + $0xb8] sm:$0xff]
      %v5487 = vld [vmem:[#allocation2 + $0xc0] sm:$0xff]
      %v5488 = vld [vmem:[#allocation2 + $0xc8] sm:$0xff]
      %v5489 = vld [vmem:[#allocation2 + $0xd0] sm:$0xff]
      %v5490 = vld [vmem:[#allocation2 + $0xd8] sm:$0xff]
      %v5491 = vld [vmem:[#allocation2 + $0xe0] sm:$0xff]
      %v5492 = vld [vmem:[#allocation2 + $0xe8] sm:$0xff]
      %v5493 = vld [vmem:[#allocation2 + $0xf0] sm:$0xff]
      %v5494 = vld [vmem:[#allocation2 + $0xf8] sm:$0xff]
      %v5495 = vld [vmem:[#allocation2 + $0x100] sm:$0xff]
      %v5496 = vld [vmem:[#allocation2 + $0x108] sm:$0xff]
      %v5497 = vld [vmem:[#allocation2 + $0x110] sm:$0xff]
      %v5498 = vld [vmem:[#allocation2 + $0x118] sm:$0xff]
      %v5499 = vld [vmem:[#allocation2 + $0x120] sm:$0xff]
      %v5500 = vld [vmem:[#allocation2 + $0x128] sm:$0xff]
      %v5501 = vld [vmem:[#allocation2 + $0x130] sm:$0xff]
      %v5502 = vld [vmem:[#allocation2 + $0x138] sm:$0xff]
      %v5503 = vld [vmem:[#allocation2 + $0x140] sm:$0xff]
      %v5504 = vld [vmem:[#allocation2 + $0x148] sm:$0xff]
      %v5505 = vld [vmem:[#allocation2 + $0x150] sm:$0xff]
      %v5506 = vld [vmem:[#allocation2 + $0x158] sm:$0xff]
      %v5507 = vld [vmem:[#allocation2 + $0x160] sm:$0xff]
      %v5508 = vld [vmem:[#allocation2 + $0x168] sm:$0xff]
      %v5509 = vld [vmem:[#allocation2 + $0x170] sm:$0xff]
      %v5510 = vld [vmem:[#allocation2 + $0x178] sm:$0xff]
      %v5511 = vld [vmem:[#allocation2 + $0x180] sm:$0xff]
      %v5512 = vld [vmem:[#allocation2 + $0x188] sm:$0xff]
      %v5513 = vld [vmem:[#allocation2 + $0x190] sm:$0xff]
      %v5514 = vld [vmem:[#allocation2 + $0x198] sm:$0xff]
      %v5515 = vld [vmem:[#allocation2 + $0x1a0] sm:$0xff]
      %v5516 = vld [vmem:[#allocation2 + $0x1a8] sm:$0xff]
      %v5517 = vld [vmem:[#allocation2 + $0x1b0] sm:$0xff]
      %v5518 = vld [vmem:[#allocation2 + $0x1b8] sm:$0xff]
      %v5519 = vld [vmem:[#allocation2 + $0x1c0] sm:$0xff]
      %v5520 = vld [vmem:[#allocation2 + $0x1c8] sm:$0xff]
      %v5521 = vld [vmem:[#allocation2 + $0x1d0] sm:$0xff]
      %v5522 = vld [vmem:[#allocation2 + $0x1d8] sm:$0xff]
      %v5523 = vld [vmem:[#allocation2 + $0x1e0] sm:$0xff]
      %v5524 = vld [vmem:[#allocation2 + $0x1e8] sm:$0xff]
      %v5525 = vld [vmem:[#allocation2 + $0x1f0] sm:$0xff]
      %v5526 = vld [vmem:[#allocation2 + $0x1f8] sm:$0xff]
      %v5527 = vadd.f32 %v5463, %v5399
      %v5528 = vadd.f32 %v5464, %v5400
      %v5529 = vadd.f32 %v5465, %v5401
      %v5530 = vadd.f32 %v5466, %v5402
      %v5531 = vadd.f32 %v5467, %v5403
      %v5532 = vadd.f32 %v5468, %v5404
      %v5533 = vadd.f32 %v5469, %v5405
      %v5534 = vadd.f32 %v5470, %v5406
      %v5535 = vadd.f32 %v5471, %v5407
      %v5536 = vadd.f32 %v5472, %v5408
      %v5537 = vadd.f32 %v5473, %v5409
      %v5538 = vadd.f32 %v5474, %v5410
      %v5539 = vadd.f32 %v5475, %v5411
      %v5540 = vadd.f32 %v5476, %v5412
      %v5541 = vadd.f32 %v5477, %v5413
      %v5542 = vadd.f32 %v5478, %v5414
      %v5543 = vadd.f32 %v5479, %v5415
      %v5544 = vadd.f32 %v5480, %v5416
      %v5545 = vadd.f32 %v5481, %v5417
      %v5546 = vadd.f32 %v5482, %v5418
      %v5547 = vadd.f32 %v5483, %v5419
      %v5548 = vadd.f32 %v5484, %v5420
      %v5549 = vadd.f32 %v5485, %v5421
      %v5550 = vadd.f32 %v5486, %v5422
      %v5551 = vadd.f32 %v5487, %v5423
      %v5552 = vadd.f32 %v5488, %v5424
      %v5553 = vadd.f32 %v5489, %v5425
      %v5554 = vadd.f32 %v5490, %v5426
      %v5555 = vadd.f32 %v5491, %v5427
      %v5556 = vadd.f32 %v5492, %v5428
      %v5557 = vadd.f32 %v5493, %v5429
      %v5558 = vadd.f32 %v5494, %v5430
      %v5559 = vadd.f32 %v5495, %v5431
      %v5560 = vadd.f32 %v5496, %v5432
      %v5561 = vadd.f32 %v5497, %v5433
      %v5562 = vadd.f32 %v5498, %v5434
      %v5563 = vadd.f32 %v5499, %v5435
      %v5564 = vadd.f32 %v5500, %v5436
      %v5565 = vadd.f32 %v5501, %v5437
      %v5566 = vadd.f32 %v5502, %v5438
      %v5567 = vadd.f32 %v5503, %v5439
      %v5568 = vadd.f32 %v5504, %v5440
      %v5569 = vadd.f32 %v5505, %v5441
      %v5570 = vadd.f32 %v5506, %v5442
      %v5571 = vadd.f32 %v5507, %v5443
      %v5572 = vadd.f32 %v5508, %v5444
      %v5573 = vadd.f32 %v5509, %v5445
      %v5574 = vadd.f32 %v5510, %v5446
      %v5575 = vadd.f32 %v5511, %v5447
      %v5576 = vadd.f32 %v5512, %v5448
      %v5577 = vadd.f32 %v5513, %v5449
      %v5578 = vadd.f32 %v5514, %v5450
      %v5579 = vadd.f32 %v5515, %v5451
      %v5580 = vadd.f32 %v5516, %v5452
      %v5581 = vadd.f32 %v5517, %v5453
      %v5582 = vadd.f32 %v5518, %v5454
      %v5583 = vadd.f32 %v5519, %v5455
      %v5584 = vadd.f32 %v5520, %v5456
      %v5585 = vadd.f32 %v5521, %v5457
      %v5586 = vadd.f32 %v5522, %v5458
      %v5587 = vadd.f32 %v5523, %v5459
      %v5588 = vadd.f32 %v5524, %v5460
      %v5589 = vadd.f32 %v5525, %v5461
      %v5590 = vadd.f32 %v5526, %v5462
      %5591 = vst [vmem:[#allocation2] sm:$0xff] %v5527
      %5592 = vst [vmem:[#allocation2 + $0x8] sm:$0xff] %v5528
      %5593 = vst [vmem:[#allocation2 + $0x10] sm:$0xff] %v5529
      %5594 = vst [vmem:[#allocation2 + $0x18] sm:$0xff] %v5530
      %5595 = vst [vmem:[#allocation2 + $0x20] sm:$0xff] %v5531
      %5596 = vst [vmem:[#allocation2 + $0x28] sm:$0xff] %v5532
      %5597 = vst [vmem:[#allocation2 + $0x30] sm:$0xff] %v5533
      %5598 = vst [vmem:[#allocation2 + $0x38] sm:$0xff] %v5534
      %5599 = vst [vmem:[#allocation2 + $0x40] sm:$0xff] %v5535
      %5600 = vst [vmem:[#allocation2 + $0x48] sm:$0xff] %v5536
      %5601 = vst [vmem:[#allocation2 + $0x50] sm:$0xff] %v5537
      %5602 = vst [vmem:[#allocation2 + $0x58] sm:$0xff] %v5538
      %5603 = vst [vmem:[#allocation2 + $0x60] sm:$0xff] %v5539
      %5604 = vst [vmem:[#allocation2 + $0x68] sm:$0xff] %v5540
      %5605 = vst [vmem:[#allocation2 + $0x70] sm:$0xff] %v5541
      %5606 = vst [vmem:[#allocation2 + $0x78] sm:$0xff] %v5542
      %5607 = vst [vmem:[#allocation2 + $0x80] sm:$0xff] %v5543
      %5608 = vst [vmem:[#allocation2 + $0x88] sm:$0xff] %v5544
      %5609 = vst [vmem:[#allocation2 + $0x90] sm:$0xff] %v5545
      %5610 = vst [vmem:[#allocation2 + $0x98] sm:$0xff] %v5546
      %5611 = vst [vmem:[#allocation2 + $0xa0] sm:$0xff] %v5547
      %5612 = vst [vmem:[#allocation2 + $0xa8] sm:$0xff] %v5548
      %5613 = vst [vmem:[#allocation2 + $0xb0] sm:$0xff] %v5549
      %5614 = vst [vmem:[#allocation2 + $0xb8] sm:$0xff] %v5550
      %5615 = vst [vmem:[#allocation2 + $0xc0] sm:$0xff] %v5551
      %5616 = vst [vmem:[#allocation2 + $0xc8] sm:$0xff] %v5552
      %5617 = vst [vmem:[#allocation2 + $0xd0] sm:$0xff] %v5553
      %5618 = vst [vmem:[#allocation2 + $0xd8] sm:$0xff] %v5554
      %5619 = vst [vmem:[#allocation2 + $0xe0] sm:$0xff] %v5555
      %5620 = vst [vmem:[#allocation2 + $0xe8] sm:$0xff] %v5556
      %5621 = vst [vmem:[#allocation2 + $0xf0] sm:$0xff] %v5557
      %5622 = vst [vmem:[#allocation2 + $0xf8] sm:$0xff] %v5558
      %5623 = vst [vmem:[#allocation2 + $0x100] sm:$0xff] %v5559
      %5624 = vst [vmem:[#allocation2 + $0x108] sm:$0xff] %v5560
      %5625 = vst [vmem:[#allocation2 + $0x110] sm:$0xff] %v5561
      %5626 = vst [vmem:[#allocation2 + $0x118] sm:$0xff] %v5562
      %5627 = vst [vmem:[#allocation2 + $0x120] sm:$0xff] %v5563
      %5628 = vst [vmem:[#allocation2 + $0x128] sm:$0xff] %v5564
      %5629 = vst [vmem:[#allocation2 + $0x130] sm:$0xff] %v5565
      %5630 = vst [vmem:[#allocation2 + $0x138] sm:$0xff] %v5566
      %5631 = vst [vmem:[#allocation2 + $0x140] sm:$0xff] %v5567
      %5632 = vst [vmem:[#allocation2 + $0x148] sm:$0xff] %v5568
      %5633 = vst [vmem:[#allocation2 + $0x150] sm:$0xff] %v5569
      %5634 = vst [vmem:[#allocation2 + $0x158] sm:$0xff] %v5570
      %5635 = vst [vmem:[#allocation2 + $0x160] sm:$0xff] %v5571
      %5636 = vst [vmem:[#allocation2 + $0x168] sm:$0xff] %v5572
      %5637 = vst [vmem:[#allocation2 + $0x170] sm:$0xff] %v5573
      %5638 = vst [vmem:[#allocation2 + $0x178] sm:$0xff] %v5574
      %5639 = vst [vmem:[#allocation2 + $0x180] sm:$0xff] %v5575
      %5640 = vst [vmem:[#allocation2 + $0x188] sm:$0xff] %v5576
      %5641 = vst [vmem:[#allocation2 + $0x190] sm:$0xff] %v5577
      %5642 = vst [vmem:[#allocation2 + $0x198] sm:$0xff] %v5578
      %5643 = vst [vmem:[#allocation2 + $0x1a0] sm:$0xff] %v5579
      %5644 = vst [vmem:[#allocation2 + $0x1a8] sm:$0xff] %v5580
      %5645 = vst [vmem:[#allocation2 + $0x1b0] sm:$0xff] %v5581
      %5646 = vst [vmem:[#allocation2 + $0x1b8] sm:$0xff] %v5582
      %5647 = vst [vmem:[#allocation2 + $0x1c0] sm:$0xff] %v5583
      %5648 = vst [vmem:[#allocation2 + $0x1c8] sm:$0xff] %v5584
      %5649 = vst [vmem:[#allocation2 + $0x1d0] sm:$0xff] %v5585
      %5650 = vst [vmem:[#allocation2 + $0x1d8] sm:$0xff] %v5586
      %5651 = vst [vmem:[#allocation2 + $0x1e0] sm:$0xff] %v5587
      %5652 = vst [vmem:[#allocation2 + $0x1e8] sm:$0xff] %v5588
      %5653 = vst [vmem:[#allocation2 + $0x1f0] sm:$0xff] %v5589
      %5654 = vst [vmem:[#allocation2 + $0x1f8] sm:$0xff] %v5590
      %v5655 = vld [vmem:[#allocation2] sm:$0xff]
      %v5656 = vld [vmem:[#allocation2 + $0x8] sm:$0xff]
      %v5657 = vld [vmem:[#allocation2 + $0x20] sm:$0xff]
      %v5658 = vld [vmem:[#allocation2 + $0x28] sm:$0xff]
      %v5659 = vld [vmem:[#allocation2 + $0x40] sm:$0xff]
      %v5660 = vld [vmem:[#allocation2 + $0x48] sm:$0xff]
      %v5661 = vld [vmem:[#allocation2 + $0x60] sm:$0xff]
      %v5662 = vld [vmem:[#allocation2 + $0x68] sm:$0xff]
      %v5663 = vld [vmem:[#allocation2 + $0x80] sm:$0xff]
      %v5664 = vld [vmem:[#allocation2 + $0x88] sm:$0xff]
      %v5665 = vld [vmem:[#allocation2 + $0xa0] sm:$0xff]
      %v5666 = vld [vmem:[#allocation2 + $0xa8] sm:$0xff]
      %v5667 = vld [vmem:[#allocation2 + $0xc0] sm:$0xff]
      %v5668 = vld [vmem:[#allocation2 + $0xc8] sm:$0xff]
      %v5669 = vld [vmem:[#allocation2 + $0xe0] sm:$0xff]
      %v5670 = vld [vmem:[#allocation2 + $0xe8] sm:$0xff]
      %v5671 = vld [vmem:[#allocation2 + $0x100] sm:$0xff]
      %v5672 = vld [vmem:[#allocation2 + $0x108] sm:$0xff]
      %v5673 = vld [vmem:[#allocation2 + $0x120] sm:$0xff]
      %v5674 = vld [vmem:[#allocation2 + $0x128] sm:$0xff]
      %v5675 = vld [vmem:[#allocation2 + $0x140] sm:$0xff]
      %v5676 = vld [vmem:[#allocation2 + $0x148] sm:$0xff]
      %v5677 = vld [vmem:[#allocation2 + $0x160] sm:$0xff]
      %v5678 = vld [vmem:[#allocation2 + $0x168] sm:$0xff]
      %v5679 = vld [vmem:[#allocation2 + $0x180] sm:$0xff]
      %v5680 = vld [vmem:[#allocation2 + $0x188] sm:$0xff]
      %v5681 = vld [vmem:[#allocation2 + $0x1a0] sm:$0xff]
      %v5682 = vld [vmem:[#allocation2 + $0x1a8] sm:$0xff]
      %v5683 = vld [vmem:[#allocation2 + $0x1c0] sm:$0xff]
      %v5684 = vld [vmem:[#allocation2 + $0x1c8] sm:$0xff]
      %v5685 = vld [vmem:[#allocation2 + $0x1e0] sm:$0xff]
      %v5686 = vld [vmem:[#allocation2 + $0x1e8] sm:$0xff]
      %v5687 = vld [vmem:[%s2] sm:$0x1]
      %v5689 = vlaneseq
      %v5690 = vshrl.u32 %v5689, 7
      %v5691 = vsub.s32 0, %v5690
      %v5692 = vrot.slane %v5687, %v5691
      %v5694 = vadd.f32 %v5655, %v5692
      %v5695 = vadd.f32 %v5656, %v5692
      %v5696 = vadd.f32 %v5657, %v5692
      %v5697 = vadd.f32 %v5658, %v5692
      %v5698 = vadd.f32 %v5659, %v5692
      %v5699 = vadd.f32 %v5660, %v5692
      %v5700 = vadd.f32 %v5661, %v5692
      %v5701 = vadd.f32 %v5662, %v5692
      %v5702 = vadd.f32 %v5663, %v5692
      %v5703 = vadd.f32 %v5664, %v5692
      %v5704 = vadd.f32 %v5665, %v5692
      %v5705 = vadd.f32 %v5666, %v5692
      %v5706 = vadd.f32 %v5667, %v5692
      %v5707 = vadd.f32 %v5668, %v5692
      %v5708 = vadd.f32 %v5669, %v5692
      %v5709 = vadd.f32 %v5670, %v5692
      %v5710 = vadd.f32 %v5671, %v5692
      %v5711 = vadd.f32 %v5672, %v5692
      %v5712 = vadd.f32 %v5673, %v5692
      %v5713 = vadd.f32 %v5674, %v5692
      %v5714 = vadd.f32 %v5675, %v5692
      %v5715 = vadd.f32 %v5676, %v5692
      %v5716 = vadd.f32 %v5677, %v5692
      %v5717 = vadd.f32 %v5678, %v5692
      %v5718 = vadd.f32 %v5679, %v5692
      %v5719 = vadd.f32 %v5680, %v5692
      %v5720 = vadd.f32 %v5681, %v5692
      %v5721 = vadd.f32 %v5682, %v5692
      %v5722 = vadd.f32 %v5683, %v5692
      %v5723 = vadd.f32 %v5684, %v5692
      %v5724 = vadd.f32 %v5685, %v5692
      %v5725 = vadd.f32 %v5686, %v5692
      %v5726 = vadd.f32 %v5694, %v5695
      %v5727 = vadd.f32 %v5726, %v5696
      %v5728 = vadd.f32 %v5727, %v5697
      %v5729 = vadd.f32 %v5728, %v5698
      %v5730 = vadd.f32 %v5729, %v5699
      %v5731 = vadd.f32 %v5730, %v5700
      %v5732 = vadd.f32 %v5731, %v5701
      %v5733 = vadd.f32 %v5732, %v5702
      %v5734 = vadd.f32 %v5733, %v5703
      %v5735 = vadd.f32 %v5734, %v5704
      %v5736 = vadd.f32 %v5735, %v5705
      %v5737 = vadd.f32 %v5736, %v5706
      %v5738 = vadd.f32 %v5737, %v5707
      %v5739 = vadd.f32 %v5738, %v5708
      %v5740 = vadd.f32 %v5739, %v5709
      %v5741 = vadd.f32 %v5740, %v5710
      %v5742 = vadd.f32 %v5741, %v5711
      %v5743 = vadd.f32 %v5742, %v5712
      %v5744 = vadd.f32 %v5743, %v5713
      %v5745 = vadd.f32 %v5744, %v5714
      %v5746 = vadd.f32 %v5745, %v5715
      %v5747 = vadd.f32 %v5746, %v5716
      %v5748 = vadd.f32 %v5747, %v5717
      %v5749 = vadd.f32 %v5748, %v5718
      %v5750 = vadd.f32 %v5749, %v5719
      %v5751 = vadd.f32 %v5750, %v5720
      %v5752 = vadd.f32 %v5751, %v5721
      %v5753 = vadd.f32 %v5752, %v5722
      %v5754 = vadd.f32 %v5753, %v5723
      %v5755 = vadd.f32 %v5754, %v5724
      %v5756 = vadd.f32 %v5755, %v5725
      %v5757 = vrot.slane %v5756, 4
      %v5758 = vadd.f32 %v5756, %v5757
      %v5759 = vrot.slane %v5758, 2
      %v5760 = vadd.f32 %v5758, %v5759
      %v5761 = vrot.slane %v5760, 1
      %v5762 = vadd.f32 %v5760, %v5761
      %5763 = vst [vmem:[%s270] sm:$0x1] %v5762
      %v5764 = vmul.f32 %v5694, %v5694
      %v5765 = vmul.f32 %v5695, %v5695
      %v5766 = vmul.f32 %v5696, %v5696
      %v5767 = vmul.f32 %v5697, %v5697
      %v5768 = vmul.f32 %v5698, %v5698
      %v5769 = vmul.f32 %v5699, %v5699
      %v5770 = vmul.f32 %v5700, %v5700
      %v5771 = vmul.f32 %v5701, %v5701
      %v5772 = vmul.f32 %v5702, %v5702
      %v5773 = vmul.f32 %v5703, %v5703
      %v5774 = vmul.f32 %v5704, %v5704
      %v5775 = vmul.f32 %v5705, %v5705
      %v5776 = vmul.f32 %v5706, %v5706
      %v5777 = vmul.f32 %v5707, %v5707
      %v5778 = vmul.f32 %v5708, %v5708
      %v5779 = vmul.f32 %v5709, %v5709
      %v5780 = vmul.f32 %v5710, %v5710
      %v5781 = vmul.f32 %v5711, %v5711
      %v5782 = vmul.f32 %v5712, %v5712
      %v5783 = vmul.f32 %v5713, %v5713
      %v5784 = vmul.f32 %v5714, %v5714
      %v5785 = vmul.f32 %v5715, %v5715
      %v5786 = vmul.f32 %v5716, %v5716
      %v5787 = vmul.f32 %v5717, %v5717
      %v5788 = vmul.f32 %v5718, %v5718
      %v5789 = vmul.f32 %v5719, %v5719
      %v5790 = vmul.f32 %v5720, %v5720
      %v5791 = vmul.f32 %v5721, %v5721
      %v5792 = vmul.f32 %v5722, %v5722
      %v5793 = vmul.f32 %v5723, %v5723
      %v5794 = vmul.f32 %v5724, %v5724
      %v5795 = vmul.f32 %v5725, %v5725
      %v5796 = vadd.f32 %v5764, %v5765
      %v5797 = vadd.f32 %v5796, %v5766
      %v5798 = vadd.f32 %v5797, %v5767
      %v5799 = vadd.f32 %v5798, %v5768
      %v5800 = vadd.f32 %v5799, %v5769
      %v5801 = vadd.f32 %v5800, %v5770
      %v5802 = vadd.f32 %v5801, %v5771
      %v5803 = vadd.f32 %v5802, %v5772
      %v5804 = vadd.f32 %v5803, %v5773
      %v5805 = vadd.f32 %v5804, %v5774
      %v5806 = vadd.f32 %v5805, %v5775
      %v5807 = vadd.f32 %v5806, %v5776
      %v5808 = vadd.f32 %v5807, %v5777
      %v5809 = vadd.f32 %v5808, %v5778
      %v5810 = vadd.f32 %v5809, %v5779
      %v5811 = vadd.f32 %v5810, %v5780
      %v5812 = vadd.f32 %v5811, %v5781
      %v5813 = vadd.f32 %v5812, %v5782
      %v5814 = vadd.f32 %v5813, %v5783
      %v5815 = vadd.f32 %v5814, %v5784
      %v5816 = vadd.f32 %v5815, %v5785
      %v5817 = vadd.f32 %v5816, %v5786
      %v5818 = vadd.f32 %v5817, %v5787
      %v5819 = vadd.f32 %v5818, %v5788
      %v5820 = vadd.f32 %v5819, %v5789
      %v5821 = vadd.f32 %v5820, %v5790
      %v5822 = vadd.f32 %v5821, %v5791
      %v5823 = vadd.f32 %v5822, %v5792
      %v5824 = vadd.f32 %v5823, %v5793
      %v5825 = vadd.f32 %v5824, %v5794
      %v5826 = vadd.f32 %v5825, %v5795
      %v5827 = vrot.slane %v5826, 4
      %v5828 = vadd.f32 %v5826, %v5827
      %v5829 = vrot.slane %v5828, 2
      %v5830 = vadd.f32 %v5828, %v5829
      %v5831 = vrot.slane %v5830, 1
      %v5832 = vadd.f32 %v5830, %v5831
      %5833 = vst [vmem:[%s275] sm:$0x1] %v5832
      %v5834 = vpack.c.bf16 %v5695, %v5694
      %v5835 = vpack.c.bf16 %v5697, %v5696
      %v5836 = vpack.c.bf16 %v5699, %v5698
      %v5837 = vpack.c.bf16 %v5701, %v5700
      %v5838 = vpack.c.bf16 %v5703, %v5702
      %v5839 = vpack.c.bf16 %v5705, %v5704
      %v5840 = vpack.c.bf16 %v5707, %v5706
      %v5841 = vpack.c.bf16 %v5709, %v5708
      %v5842 = vpack.c.bf16 %v5711, %v5710
      %v5843 = vpack.c.bf16 %v5713, %v5712
      %v5844 = vpack.c.bf16 %v5715, %v5714
      %v5845 = vpack.c.bf16 %v5717, %v5716
      %v5846 = vpack.c.bf16 %v5719, %v5718
      %v5847 = vpack.c.bf16 %v5721, %v5720
      %v5848 = vpack.c.bf16 %v5723, %v5722
      %v5849 = vpack.c.bf16 %v5725, %v5724
      %v5866 = vunpack.c.l.b16 %v5834
      %v5867 = vunpack.c.h.b16 %v5834
      %v5868 = vunpack.c.l.b16 %v5835
      %v5869 = vunpack.c.h.b16 %v5835
      %v5870 = vunpack.c.l.b16 %v5836
      %v5871 = vunpack.c.h.b16 %v5836
      %v5872 = vunpack.c.l.b16 %v5837
      %v5873 = vunpack.c.h.b16 %v5837
      %v5874 = vunpack.c.l.b16 %v5838
      %v5875 = vunpack.c.h.b16 %v5838
      %v5876 = vunpack.c.l.b16 %v5839
      %v5877 = vunpack.c.h.b16 %v5839
      %v5878 = vunpack.c.l.b16 %v5840
      %v5879 = vunpack.c.h.b16 %v5840
      %v5880 = vunpack.c.l.b16 %v5841
      %v5881 = vunpack.c.h.b16 %v5841
      %v5882 = vunpack.c.l.b16 %v5842
      %v5883 = vunpack.c.h.b16 %v5842
      %v5884 = vunpack.c.l.b16 %v5843
      %v5885 = vunpack.c.h.b16 %v5843
      %v5886 = vunpack.c.l.b16 %v5844
      %v5887 = vunpack.c.h.b16 %v5844
      %v5888 = vunpack.c.l.b16 %v5845
      %v5889 = vunpack.c.h.b16 %v5845
      %v5890 = vunpack.c.l.b16 %v5846
      %v5891 = vunpack.c.h.b16 %v5846
      %v5892 = vunpack.c.l.b16 %v5847
      %v5893 = vunpack.c.h.b16 %v5847
      %v5894 = vunpack.c.l.b16 %v5848
      %v5895 = vunpack.c.h.b16 %v5848
      %v5896 = vunpack.c.l.b16 %v5849
      %v5897 = vunpack.c.h.b16 %v5849
      %v5898 = vpack.c.b16 %v5866, %v5866
      %v5899 = vpack.c.b16 %v5867, %v5867
      %v5900 = vpack.c.b16 %v5868, %v5868
      %v5901 = vpack.c.b16 %v5869, %v5869
      %v5902 = vpack.c.b16 %v5870, %v5870
      %v5903 = vpack.c.b16 %v5871, %v5871
      %v5904 = vpack.c.b16 %v5872, %v5872
      %v5905 = vpack.c.b16 %v5873, %v5873
      %v5906 = vpack.c.b16 %v5874, %v5874
      %v5907 = vpack.c.b16 %v5875, %v5875
      %v5908 = vpack.c.b16 %v5876, %v5876
      %v5909 = vpack.c.b16 %v5877, %v5877
      %v5910 = vpack.c.b16 %v5878, %v5878
      %v5911 = vpack.c.b16 %v5879, %v5879
      %v5912 = vpack.c.b16 %v5880, %v5880
      %v5913 = vpack.c.b16 %v5881, %v5881
      %v5914 = vpack.c.b16 %v5882, %v5882
      %v5915 = vpack.c.b16 %v5883, %v5883
      %v5916 = vpack.c.b16 %v5884, %v5884
      %v5917 = vpack.c.b16 %v5885, %v5885
      %v5918 = vpack.c.b16 %v5886, %v5886
      %v5919 = vpack.c.b16 %v5887, %v5887
      %v5920 = vpack.c.b16 %v5888, %v5888
      %v5921 = vpack.c.b16 %v5889, %v5889
      %v5922 = vpack.c.b16 %v5890, %v5890
      %v5923 = vpack.c.b16 %v5891, %v5891
      %v5924 = vpack.c.b16 %v5892, %v5892
      %v5925 = vpack.c.b16 %v5893, %v5893
      %v5926 = vpack.c.b16 %v5894, %v5894
      %v5927 = vpack.c.b16 %v5895, %v5895
      %v5928 = vpack.c.b16 %v5896, %v5896
      %v5929 = vpack.c.b16 %v5897, %v5897
      %5962 = vst [vmem:[%s265] sm:$0xf] %v5898
      %5963 = vst [vmem:[%s265 + $0x4] sm:$0xf] %v5899
      %5964 = vst [vmem:[%s265 + $0x8] sm:$0xf] %v5900
      %5965 = vst [vmem:[%s265 + $0xc] sm:$0xf] %v5901
      %5966 = vst [vmem:[%s265 + $0x10] sm:$0xf] %v5902
      %5967 = vst [vmem:[%s265 + $0x14] sm:$0xf] %v5903
      %5968 = vst [vmem:[%s265 + $0x18] sm:$0xf] %v5904
      %5969 = vst [vmem:[%s265 + $0x1c] sm:$0xf] %v5905
      %5970 = vst [vmem:[%s265 + $0x20] sm:$0xf] %v5906
      %5971 = vst [vmem:[%s265 + $0x24] sm:$0xf] %v5907
      %5972 = vst [vmem:[%s265 + $0x28] sm:$0xf] %v5908
      %5973 = vst [vmem:[%s265 + $0x2c] sm:$0xf] %v5909
      %5974 = vst [vmem:[%s265 + $0x30] sm:$0xf] %v5910
      %5975 = vst [vmem:[%s265 + $0x34] sm:$0xf] %v5911
      %5976 = vst [vmem:[%s265 + $0x38] sm:$0xf] %v5912
      %5977 = vst [vmem:[%s265 + $0x3c] sm:$0xf] %v5913
      %5978 = vst [vmem:[%s265 + $0x40] sm:$0xf] %v5914
      %5979 = vst [vmem:[%s265 + $0x44] sm:$0xf] %v5915
      %5980 = vst [vmem:[%s265 + $0x48] sm:$0xf] %v5916
      %5981 = vst [vmem:[%s265 + $0x4c] sm:$0xf] %v5917
      %5982 = vst [vmem:[%s265 + $0x50] sm:$0xf] %v5918
      %5983 = vst [vmem:[%s265 + $0x54] sm:$0xf] %v5919
      %5984 = vst [vmem:[%s265 + $0x58] sm:$0xf] %v5920
      %5985 = vst [vmem:[%s265 + $0x5c] sm:$0xf] %v5921
      %5986 = vst [vmem:[%s265 + $0x60] sm:$0xf] %v5922
      %5987 = vst [vmem:[%s265 + $0x64] sm:$0xf] %v5923
      %5988 = vst [vmem:[%s265 + $0x68] sm:$0xf] %v5924
      %5989 = vst [vmem:[%s265 + $0x6c] sm:$0xf] %v5925
      %5990 = vst [vmem:[%s265 + $0x70] sm:$0xf] %v5926
      %5991 = vst [vmem:[%s265 + $0x74] sm:$0xf] %v5927
      %5992 = vst [vmem:[%s265 + $0x78] sm:$0xf] %v5928
      %5993 = vst [vmem:[%s265 + $0x7c] sm:$0xf] %v5929
      %s5994 = smul.u32 16, %s22
      %p5995 = scmp.lt.s32.totalorder %s21, 1
      %s5996 = scalar_select %p5995, %s21, 1
      %p5997 = scmp.lt.s32.totalorder %s5994, 15
      %s5998 = scalar_select %p5997, %s5994, 15
      %s5999 = smul.addr %s5998, 2
      %s6000 = smul.addr %s5996, 32
      %s6001 = sadd.s32 %s5999, %s6000
      %s6002 = smul.addr %s6001, 4
      %s6003 = scalar_lea.vmem %s3, %s6002
      %s6004 = sadd.s32 %s21, %s22
      %p6005 = scmp.lt.s32.totalorder %s6004, 1
      %s6006 = scalar_select %p6005, %s6004, 1
      %s6007 = scalar_lea.vmem %s4, %s6006
      %s6008 = sadd.s32 %s21, %s22
      %p6009 = scmp.lt.s32.totalorder %s6008, 1
      %s6010 = scalar_select %p6009, %s6008, 1
      %s6011 = scalar_lea.vmem %s5, %s6010
      // Predicated region
      $region33: #{conv_block_forward.4} parent=31 // pred_check
        %p6012 = pneg %p117
      $region34: #{conv_block_forward.4} parent=31 // pred_check_branch
        %6014 = sbr.rel (%p6012) target = $region36
      $region35: #{conv_block_forward.4} parent=31 // pred_region
        %s6015 = smul.u32 16, %s22
      $region36: #{conv_block_forward.4} parent=31 // pred_fallthru
        _
      // Predicated region
      $region37: #{conv_block_forward.4} parent=31 // pred_check
        %p6016 = pneg %p145
      $region38: #{conv_block_forward.4} parent=31 // pred_check_branch
        %6018 = sbr.rel (%p6016) target = $region40
      $region39: #{conv_block_forward.4} parent=31 // pred_region
        %s6019 = sadd.s32 %s21, %s22
      $region40: #{conv_block_forward.4} parent=31 // pred_fallthru
        _
      // Predicated region
      $region41: #{conv_block_forward.4} parent=31 // pred_check
        %p6020 = pneg %p173
      $region42: #{conv_block_forward.4} parent=31 // pred_check_branch
        %6022 = sbr.rel (%p6020) target = $region44
      $region43: #{conv_block_forward.4} parent=31 // pred_region
        %s6023 = sadd.s32 %s21, %s22
      $region44: #{conv_block_forward.4} parent=31 // pred_fallthru
        _
    $region32: #{conv_block_forward.4} parent=5 // pred_fallthru
      _
    %p6024 = scmp.le.s32.totalorder 2, %s12
    // Predicated region
    $region45: #{conv_block_forward.4} parent=5 // pred_check
      %p6025 = pneg %p6024
    $region46: #{conv_block_forward.4} parent=5 // pred_check_branch
      %6027 = sbr.rel (%p6025) target = $region48
    $region47: #{conv_block_forward.4} parent=5 // pred_region
      %s6028 = ssub.s32 %s12, 2
      // Predicated region
      $region49: #{conv_block_forward.4} parent=47 // pred_check
        %p6029 = pneg %p123
      $region50: #{conv_block_forward.4} parent=47 // pred_check_branch
        %6031 = sbr.rel (%p6029) target = $region52
      $region51: #{conv_block_forward.4} parent=47 // pred_region
        %s6032 = smul.u32 16, %s24
        %p6033 = scmp.lt.s32.totalorder %s23, 1
        %s6034 = scalar_select %p6033, %s23, 1
        %p6035 = scmp.lt.s32.totalorder %s6032, 15
        %s6036 = scalar_select %p6035, %s6032, 15
        %s6037 = smul.addr %s6036, 2
        %s6038 = smul.addr %s6034, 32
        %s6039 = sadd.s32 %s6037, %s6038
        %s6040 = smul.addr %s6039, 4
        %s6041 = scalar_lea.vmem %s3, %s6040
      $region52: #{conv_block_forward.4} parent=47 // pred_fallthru
        _
      // Predicated region
      $region53: #{conv_block_forward.4} parent=47 // pred_check
        %p6042 = pneg %p151
      $region54: #{conv_block_forward.4} parent=47 // pred_check_branch
        %6044 = sbr.rel (%p6042) target = $region56
      $region55: #{conv_block_forward.4} parent=47 // pred_region
        %s6045 = sadd.s32 %s23, %s24
        %p6046 = scmp.lt.s32.totalorder %s6045, 1
        %s6047 = scalar_select %p6046, %s6045, 1
        %s6048 = scalar_lea.vmem %s4, %s6047
      $region56: #{conv_block_forward.4} parent=47 // pred_fallthru
        _
      // Predicated region
      $region57: #{conv_block_forward.4} parent=47 // pred_check
        %p6049 = pneg %p179
      $region58: #{conv_block_forward.4} parent=47 // pred_check_branch
        %6051 = sbr.rel (%p6049) target = $region60
      $region59: #{conv_block_forward.4} parent=47 // pred_region
        %s6052 = sadd.s32 %s23, %s24
        %p6053 = scmp.lt.s32.totalorder %s6052, 1
        %s6054 = scalar_select %p6053, %s6052, 1
        %s6055 = scalar_lea.vmem %s5, %s6054
      $region60: #{conv_block_forward.4} parent=47 // pred_fallthru
        _
    $region48: #{conv_block_forward.4} parent=5 // pred_fallthru
      _
  $region6: #{conv_block_forward.4} parent=0 // loop_footer
    %s16 = sadd.s32 1, %s12
  $region7: #{conv_block_forward.4} parent=0 // loop_footer_branch
    %11 = sbr.rel target = $region3
  $region8: #{conv_block_forward.4} parent=0 // loop_exit
    _

</llo_original>
